<compile_context>
chip_gen: v6e
topology: v6e:2x2x1
jax: 0.10.0
libtpu: 0.0.40
codegen_flags: <defaults>
</compile_context>

<pallas_src>
import math
import numpy as np
import jax
import jax.numpy as jnp
from jax import lax
from jax.experimental import pallas as pl
from jax.experimental.pallas import tpu as pltpu  # noqa: F401  (kept for TPU-specific use)

# ------------------------- static config / derived shapes -------------------------
B = 2
L_IN = 512                      # input_dim (n_samples per waveform)
FS = 16000
C1, K1, P1 = 8, 65, 4           # layer 0: SincConv_fast(8 filters, len 65), maxpool 4
C2, K2, P2 = 8, 5, 4            # layer 1: Conv1d(8 -> 8, len 5), maxpool 4
L_OUT1 = L_IN - K1 + 1          # 448
LP1 = L_OUT1 // P1              # 112
L_OUT2 = LP1 - K2 + 1           # 108
LP2 = L_OUT2 // P2              # 27
EPS = 1e-6                      # custom LayerNorm eps
MIN_LOW_HZ = 50.0
MIN_BAND_HZ = 50.0

# TODO(synk): nn.Dropout layers use p=0.0 (eval-mode identity); RNG masking not implemented.


# ------------------------------ in-kernel helpers ---------------------------------
def _unbiased_layer_norm(y, gamma, beta, n):
    """Ravanelli LayerNorm: torch .std() is unbiased (/(n-1)); eps is added to std."""
    mean = jnp.sum(y, axis=-1, keepdims=True) * (1.0 / n)
    cent = y - mean
    denom = jnp.sqrt(jnp.sum(cent * cent, axis=-1, keepdims=True) * (1.0 / (n - 1))) + EPS
    inv = pl.reciprocal(denom, approx=True)          # EUP slot, off the VALU path
    inv = inv * (2.0 - denom * inv)                  # one Newton step -> full f32 accuracy
    return gamma * (cent * inv) + beta


def _maxpool_mxu(a, t_out, pool):
    """F.max_pool1d(kernel_size=stride=pool) over the last axis of a (B, C, T) tensor.

    The stride-`pool` column selection has no cheap lane-level primitive, so each pooling
    phase j is extracted with a 0/1 selection matmul on the (otherwise idle) MXU and the
    result is the elementwise max of the `pool` phases.  The bf16 hi/lo split makes the
    selection exact in f32 regardless of the backend's default matmul precision.
    """
    b, c, t_in = a.shape
    a2 = a.reshape(b * c, t_in)                       # leading-dim merge: layout no-op
    a_hi = a2.astype(jnp.bfloat16)
    a_lo = (a2 - a_hi.astype(jnp.float32)).astype(jnp.bfloat16)

    row = lax.broadcasted_iota(jnp.int32, (t_in, t_out), 0)
    col = lax.broadcasted_iota(jnp.int32, (t_in, t_out), 1)
    rc = row - pool * col                             # S_j = (rc == j)

    out = None
    for j in range(pool):
        sel = jnp.where(rc == j, 1.0, 0.0).astype(jnp.bfloat16)   # (t_in, t_out)
        ph = (jnp.dot(a_hi, sel, preferred_element_type=jnp.float32) +
              jnp.dot(a_lo, sel, preferred_element_type=jnp.float32))
        out = ph if out is None else jnp.maximum(out, ph)
    return out.reshape(b, c, t_out)


# --------------------------------- Pallas kernel ----------------------------------
def _sincnet_kernel(x_ref, ln0g_ref, ln0b_ref, w0b_ref, ln1g_ref, ln1b_ref,
                    w1b_ref, b1_ref, ln2g_ref, ln2b_ref, o_ref):
    """Fused: input LN -> SincConv -> |.| -> maxpool -> LN -> ReLU
                        -> Conv1d+bias ->     maxpool -> LN -> ReLU.

    x:(B,512)  w0b:(65,8,448) lane-dense pre-broadcast  w1b:(40,8,108)  b1:(8,1)
    ln0*:(1,512)  ln1*:(8,112)  ln2*:(8,27)  o:(B,8,27)
    """
    x = x_ref[...]
    bsz = x.shape[0]

    # ---- input LayerNorm over the raw waveform ------------------------------------
    xn = _unbiased_layer_norm(x, ln0g_ref[...], ln0b_ref[...], L_IN)        # (B, 512)

    # ---- layer 0: SincConv(1 -> 8, 65 taps), VPU broadcast-MAC --------------------
    # One hoisted sublane-broadcast of the waveform; per-tap weights arrive lane-dense
    # from w0b_ref (host pre-broadcast) -> no per-tap XLU extract/broadcast.
    xb = jnp.broadcast_to(xn[:, None, :], (bsz, C1, L_IN))                  # (B, 8, 512)
    acc0 = [xb[:, :, k:k + L_OUT1] * w0b_ref[k] for k in range(2)]          # 2 partial accs
    for k in range(2, K1):
        acc0[k & 1] = acc0[k & 1] + xb[:, :, k:k + L_OUT1] * w0b_ref[k]
    a1 = jnp.abs(acc0[0] + acc0[1])                                         # (B, 8, 448)

    # ---- |.| -> maxpool(4) -> LayerNorm([8,112]) -> ReLU --------------------------
    pooled1 = _maxpool_mxu(a1, LP1, P1)                                     # (B, 8, 112)
    y1 = jnp.maximum(
        _unbiased_layer_norm(pooled1, ln1g_ref[...], ln1b_ref[...], LP1), 0.0)

    # ---- layer 1: Conv1d(8 -> 8, 5 taps) + bias, VPU broadcast-MAC ----------------
    # All 8 input-channel sublane-broadcasts hoisted out of the (i, k) MAC loop.
    ybs = [jnp.broadcast_to(y1[:, i:i + 1, :], (bsz, C2, LP1)) for i in range(C1)]
    acc1 = [None] * 4                                                       # 4 partial accs
    for i in range(C1):
        for k in range(K2):
            t = i * K2 + k
            term = ybs[i][:, :, k:k + L_OUT2] * w1b_ref[t]
            acc1[t & 3] = term if acc1[t & 3] is None else acc1[t & 3] + term
    conv2 = (acc1[0] + acc1[1]) + (acc1[2] + acc1[3]) + b1_ref[...]         # (B, 8, 108)

    # ---- maxpool(4) -> LayerNorm([8,27]) -> ReLU -> output ------------------------
    pooled2 = _maxpool_mxu(conv2, LP2, P2)                                  # (B, 8, 27)
    y2 = jnp.maximum(
        _unbiased_layer_norm(pooled2, ln2g_ref[...], ln2b_ref[...], LP2), 0.0)
    o_ref[...] = y2.astype(o_ref.dtype)


# ------------------------------- pallas_call wrapper -------------------------------
def sincnet_forward(x, params):
    """x: (B, 512) float32 -> (B, 216) float32 (torch x.view(batch, -1) order)."""
    batch = x.shape[0]
    out = pl.pallas_call(
        _sincnet_kernel,
        out_shape=jax.ShapeDtypeStruct((batch, C2, LP2), jnp.float32),
        # Grid-less: the whole (~1 MB) problem is VMEM-resident in one invocation; both
        # conv layers and the B=2 batch are fused (no HBM round-trips, no grid overhead).
    )(x.astype(jnp.float32),
      params["ln0_g"], params["ln0_b"], params["w0b"],
      params["ln1_g"], params["ln1_b"], params["w1b"], params["b1"],
      params["ln2_g"], params["ln2_b"])
    # (B, C2, LP2) -> (B, C2*LP2): pure reshape, matches torch view on the (B, C, L) act.
    return out.reshape(batch, -1)


# -------------------- deterministic parameter construction (glue) --------------------
def build_sinc_filters():
    """Exactly SincConv_fast.__init__ + forward filter construction (at init values)."""
    to_mel = lambda hz: 2595.0 * np.log10(1.0 + hz / 700.0)
    to_hz = lambda mel: 700.0 * (10.0 ** (mel / 2595.0) - 1.0)
    low_hz, high_hz = 30.0, FS / 2 - (MIN_LOW_HZ + MIN_BAND_HZ)
    mel = np.linspace(to_mel(low_hz), to_mel(high_hz), C1 + 1)
    hz = to_hz(mel)
    low_hz_ = hz[:-1].reshape(-1, 1)                 # nn.Parameter init
    band_hz_ = np.diff(hz).reshape(-1, 1)            # nn.Parameter init
    n_lin = np.linspace(0.0, K1 / 2 - 1, int(K1 / 2))
    window = 0.54 - 0.46 * np.cos(2 * math.pi * n_lin / K1)
    n = (K1 - 1) / 2.0
    n_ = 2 * math.pi * np.arange(-n, 0).reshape(1, -1) / FS
    low = MIN_LOW_HZ + np.abs(low_hz_)
    high = np.clip(low + MIN_BAND_HZ + np.abs(band_hz_), MIN_LOW_HZ, FS / 2)
    band = (high - low)[:, 0]
    bp_left = (np.sin(high @ n_) - np.sin(low @ n_)) / (n_ / 2) * window
    bp_center = 2 * band.reshape(-1, 1)
    bp_right = bp_left[:, ::-1]
    bp = np.concatenate([bp_left, bp_center, bp_right], axis=1)
    bp = bp / (2 * band.reshape(-1, 1))
    return jnp.asarray(bp, dtype=jnp.float32)        # (C1, K1)


def build_params(filt0, w1, b1):
    """Lane-dense pre-broadcast of the conv weights (perf feedback item 2) + LN params."""
    w0b = jnp.broadcast_to(filt0.T[:, :, None], (K1, C1, L_OUT1)).astype(jnp.float32)
    w1_flat = jnp.transpose(w1, (1, 2, 0)).reshape(C1 * K2, C2)      # row = i*K2 + k
    w1b = jnp.broadcast_to(w1_flat[:, :, None], (C1 * K2, C2, L_OUT2)).astype(jnp.float32)
    return dict(
        ln0_g=jnp.ones((1, L_IN), jnp.float32), ln0_b=jnp.zeros((1, L_IN), jnp.float32),
        w0b=w0b,
        ln1_g=jnp.ones((C1, LP1), jnp.float32), ln1_b=jnp.zeros((C1, LP1), jnp.float32),
        w1b=w1b, b1=b1.reshape(C2, 1),
        ln2_g=jnp.ones((C2, LP2), jnp.float32), ln2_b=jnp.zeros((C2, LP2), jnp.float32),
    )


# --------------------------- pure-JAX reference (for checking) ---------------------------
def reference_forward(x, filt0, w1, b1):
    mean = jnp.mean(x, axis=-1, keepdims=True)
    std = jnp.sqrt(jnp.sum((x - mean) ** 2, axis=-1, keepdims=True) / (x.shape[-1] - 1))
    y = ((x - mean) / (std + EPS))[:, None, :]
    y = lax.conv_general_dilated(y, filt0[:, None, :], (1,), "VALID",
                                 dimension_numbers=("NCH", "OIH", "NCH"),
                                 precision=lax.Precision.HIGHEST)
    y = jnp.abs(y)
    y = y[..., :LP1 * P1].reshape(y.shape[0], C1, LP1, P1).max(axis=-1)
    m = jnp.mean(y, axis=-1, keepdims=True)
    s = jnp.sqrt(jnp.sum((y - m) ** 2, axis=-1, keepdims=True) / (LP1 - 1))
    y = jnp.maximum((y - m) / (s + EPS), 0.0)
    y = lax.conv_general_dilated(y, w1, (1,), "VALID",
                                 dimension_numbers=("NCH", "OIH", "NCH"),
                                 precision=lax.Precision.HIGHEST) + b1[None, :, None]
    y = y[..., :LP2 * P2].reshape(y.shape[0], C2, LP2, P2).max(axis=-1)
    m = jnp.mean(y, axis=-1, keepdims=True)
    s = jnp.sqrt(jnp.sum((y - m) ** 2, axis=-1, keepdims=True) / (LP2 - 1))
    y = jnp.maximum((y - m) / (s + EPS), 0.0)
    return y.reshape(y.shape[0], -1)


# ---------------------------------------- main ----------------------------------------
if __name__ == "__main__":
    key = jax.random.PRNGKey(0)
    kx, kw, kb = jax.random.split(key, 3)

    x = jax.random.normal(kx, (B, L_IN), dtype=jnp.float32)

    filt0 = build_sinc_filters()                                  # (C1, K1) sinc filters
    bound = 1.0 / math.sqrt(C1 * K2)                              # conv1d-style init
    w1 = jax.random.uniform(kw, (C2, C1, K2), jnp.float32, -bound, bound)
    b1 = jax.random.uniform(kb, (C2,), jnp.float32, -bound, bound)

    params = build_params(filt0, w1, b1)

    out = jax.block_until_ready(sincnet_forward(x, params))
    assert out.shape == (B, C2 * LP2), out.shape                  # (2, 216)

    ref = jax.block_until_ready(reference_forward(x, filt0, w1, b1))
    if not np.allclose(np.asarray(out), np.asarray(ref), rtol=1e-3, atol=1e-3):
        diff = float(np.max(np.abs(np.asarray(out) - np.asarray(ref))))
        raise AssertionError(f"Pallas SincNet mismatch vs reference, max abs diff = {diff}")

    print("KERNEL_OK")
</pallas_src>

<mosaic_0001>
module attributes {stable_mosaic.version = 11 : i64} {
  func.func @_sincnet_kernel(%arg0: memref<2x512xf32, #tpu.memory_space<vmem>>, %arg1: memref<1x512xf32, #tpu.memory_space<vmem>>, %arg2: memref<1x512xf32, #tpu.memory_space<vmem>>, %arg3: memref<65x8x448xf32, #tpu.memory_space<vmem>>, %arg4: memref<8x112xf32, #tpu.memory_space<vmem>>, %arg5: memref<8x112xf32, #tpu.memory_space<vmem>>, %arg6: memref<40x8x108xf32, #tpu.memory_space<vmem>>, %arg7: memref<8x1xf32, #tpu.memory_space<vmem>>, %arg8: memref<8x27xf32, #tpu.memory_space<vmem>>, %arg9: memref<8x27xf32, #tpu.memory_space<vmem>>, %arg10: memref<2x8x27xf32, #tpu.memory_space<vmem>>) attributes {dimension_semantics = [], scalar_prefetch = 0 : i64, scratch_operands = 0 : i64, tpu.core_type = #tpu.core_type<tc>} {
    %c0 = arith.constant 0 : index
    %c0_0 = arith.constant 0 : index
    %0 = vector.load %arg0[%c0, %c0_0] : memref<2x512xf32, #tpu.memory_space<vmem>>, vector<2x512xf32>
    %c0_1 = arith.constant 0 : index
    %c0_2 = arith.constant 0 : index
    %1 = vector.load %arg1[%c0_1, %c0_2] : memref<1x512xf32, #tpu.memory_space<vmem>>, vector<1x512xf32>
    %c0_3 = arith.constant 0 : index
    %c0_4 = arith.constant 0 : index
    %2 = vector.load %arg2[%c0_3, %c0_4] : memref<1x512xf32, #tpu.memory_space<vmem>>, vector<1x512xf32>
    %cst = arith.constant dense<0.000000e+00> : vector<2xf32>
    %3 = vector.multi_reduction <add>, %0, %cst [1] : vector<2x512xf32> to vector<2xf32>
    %4 = vector.shape_cast %3 : vector<2xf32> to vector<2x1xf32>
    %cst_5 = arith.constant 0.001953125 : f32
    %5 = vector.broadcast %cst_5 : f32 to vector<2x1xf32>
    %6 = arith.mulf %4, %5 : vector<2x1xf32>
    %7 = vector.broadcast %6 : vector<2x1xf32> to vector<2x512xf32>
    %8 = arith.subf %0, %7 : vector<2x512xf32>
    %9 = arith.mulf %8, %8 : vector<2x512xf32>
    %cst_6 = arith.constant dense<0.000000e+00> : vector<2xf32>
    %10 = vector.multi_reduction <add>, %9, %cst_6 [1] : vector<2x512xf32> to vector<2xf32>
    %11 = vector.shape_cast %10 : vector<2xf32> to vector<2x1xf32>
    %cst_7 = arith.constant 0.00195694715 : f32
    %12 = vector.broadcast %cst_7 : f32 to vector<2x1xf32>
    %13 = arith.mulf %11, %12 : vector<2x1xf32>
    %14 = math.sqrt %13 : vector<2x1xf32>
    %cst_8 = arith.constant 9.99999997E-7 : f32
    %15 = vector.broadcast %cst_8 : f32 to vector<2x1xf32>
    %16 = arith.addf %14, %15 : vector<2x1xf32>
    %17 = tpu.reciprocal %16 {approx = true} : vector<2x1xf32> -> vector<2x1xf32>
    %18 = arith.mulf %16, %17 : vector<2x1xf32>
    %cst_9 = arith.constant 2.000000e+00 : f32
    %19 = vector.broadcast %cst_9 : f32 to vector<2x1xf32>
    %20 = arith.subf %19, %18 : vector<2x1xf32>
    %21 = arith.mulf %17, %20 : vector<2x1xf32>
    %22 = vector.broadcast %21 : vector<2x1xf32> to vector<2x512xf32>
    %23 = arith.mulf %8, %22 : vector<2x512xf32>
    %24 = vector.broadcast %1 : vector<1x512xf32> to vector<2x512xf32>
    %25 = arith.mulf %24, %23 : vector<2x512xf32>
    %26 = vector.broadcast %2 : vector<1x512xf32> to vector<2x512xf32>
    %27 = arith.addf %25, %26 : vector<2x512xf32>
    %28 = vector.shape_cast %27 : vector<2x512xf32> to vector<2x1x512xf32>
    %29 = vector.shape_cast %28 : vector<2x1x512xf32> to vector<2x1x512xf32>
    %30 = vector.broadcast %29 : vector<2x1x512xf32> to vector<2x8x512xf32>
    %31 = vector.extract_strided_slice %30 {offsets = [0, 0, 0], sizes = [2, 8, 448], strides = [1, 1, 1]} : vector<2x8x512xf32> to vector<2x8x448xf32>
    %c0_10 = arith.constant 0 : index
    %c0_11 = arith.constant 0 : index
    %c0_12 = arith.constant 0 : index
    %32 = vector.load %arg3[%c0_10, %c0_11, %c0_12] : memref<65x8x448xf32, #tpu.memory_space<vmem>>, vector<1x8x448xf32>
    %33 = vector.shape_cast %32 : vector<1x8x448xf32> to vector<8x448xf32>
    %34 = vector.shape_cast %33 : vector<8x448xf32> to vector<1x8x448xf32>
    %35 = vector.broadcast %34 : vector<1x8x448xf32> to vector<2x8x448xf32>
    %36 = arith.mulf %31, %35 : vector<2x8x448xf32>
    %37 = vector.extract_strided_slice %30 {offsets = [0, 0, 1], sizes = [2, 8, 448], strides = [1, 1, 1]} : vector<2x8x512xf32> to vector<2x8x448xf32>
    %c1 = arith.constant 1 : index
    %c0_13 = arith.constant 0 : index
    %c0_14 = arith.constant 0 : index
    %38 = vector.load %arg3[%c1, %c0_13, %c0_14] : memref<65x8x448xf32, #tpu.memory_space<vmem>>, vector<1x8x448xf32>
    %39 = vector.shape_cast %38 : vector<1x8x448xf32> to vector<8x448xf32>
    %40 = vector.shape_cast %39 : vector<8x448xf32> to vector<1x8x448xf32>
    %41 = vector.broadcast %40 : vector<1x8x448xf32> to vector<2x8x448xf32>
    %42 = arith.mulf %37, %41 : vector<2x8x448xf32>
    %43 = vector.extract_strided_slice %30 {offsets = [0, 0, 2], sizes = [2, 8, 448], strides = [1, 1, 1]} : vector<2x8x512xf32> to vector<2x8x448xf32>
    %c2 = arith.constant 2 : index
    %c0_15 = arith.constant 0 : index
    %c0_16 = arith.constant 0 : index
    %44 = vector.load %arg3[%c2, %c0_15, %c0_16] : memref<65x8x448xf32, #tpu.memory_space<vmem>>, vector<1x8x448xf32>
    %45 = vector.shape_cast %44 : vector<1x8x448xf32> to vector<8x448xf32>
    %46 = vector.shape_cast %45 : vector<8x448xf32> to vector<1x8x448xf32>
    %47 = vector.broadcast %46 : vector<1x8x448xf32> to vector<2x8x448xf32>
    %48 = arith.mulf %43, %47 : vector<2x8x448xf32>
    %49 = arith.addf %36, %48 : vector<2x8x448xf32>
    %50 = vector.extract_strided_slice %30 {offsets = [0, 0, 3], sizes = [2, 8, 448], strides = [1, 1, 1]} : vector<2x8x512xf32> to vector<2x8x448xf32>
    %c3 = arith.constant 3 : index
    %c0_17 = arith.constant 0 : index
    %c0_18 = arith.constant 0 : index
    %51 = vector.load %arg3[%c3, %c0_17, %c0_18] : memref<65x8x448xf32, #tpu.memory_space<vmem>>, vector<1x8x448xf32>
    %52 = vector.shape_cast %51 : vector<1x8x448xf32> to vector<8x448xf32>
    %53 = vector.shape_cast %52 : vector<8x448xf32> to vector<1x8x448xf32>
    %54 = vector.broadcast %53 : vector<1x8x448xf32> to vector<2x8x448xf32>
    %55 = arith.mulf %50, %54 : vector<2x8x448xf32>
    %56 = arith.addf %42, %55 : vector<2x8x448xf32>
    %57 = vector.extract_strided_slice %30 {offsets = [0, 0, 4], sizes = [2, 8, 448], strides = [1, 1, 1]} : vector<2x8x512xf32> to vector<2x8x448xf32>
    %c4 = arith.constant 4 : index
    %c0_19 = arith.constant 0 : index
    %c0_20 = arith.constant 0 : index
    %58 = vector.load %arg3[%c4, %c0_19, %c0_20] : memref<65x8x448xf32, #tpu.memory_space<vmem>>, vector<1x8x448xf32>
    %59 = vector.shape_cast %58 : vector<1x8x448xf32> to vector<8x448xf32>
    %60 = vector.shape_cast %59 : vector<8x448xf32> to vector<1x8x448xf32>
    %61 = vector.broadcast %60 : vector<1x8x448xf32> to vector<2x8x448xf32>
    %62 = arith.mulf %57, %61 : vector<2x8x448xf32>
    %63 = arith.addf %49, %62 : vector<2x8x448xf32>
    %64 = vector.extract_strided_slice %30 {offsets = [0, 0, 5], sizes = [2, 8, 448], strides = [1, 1, 1]} : vector<2x8x512xf32> to vector<2x8x448xf32>
    %c5 = arith.constant 5 : index
    %c0_21 = arith.constant 0 : index
    %c0_22 = arith.constant 0 : index
    %65 = vector.load %arg3[%c5, %c0_21, %c0_22] : memref<65x8x448xf32, #tpu.memory_space<vmem>>, vector<1x8x448xf32>
    %66 = vector.shape_cast %65 : vector<1x8x448xf32> to vector<8x448xf32>
    %67 = vector.shape_cast %66 : vector<8x448xf32> to vector<1x8x448xf32>
    %68 = vector.broadcast %67 : vector<1x8x448xf32> to vector<2x8x448xf32>
    %69 = arith.mulf %64, %68 : vector<2x8x448xf32>
    %70 = arith.addf %56, %69 : vector<2x8x448xf32>
    %71 = vector.extract_strided_slice %30 {offsets = [0, 0, 6], sizes = [2, 8, 448], strides = [1, 1, 1]} : vector<2x8x512xf32> to vector<2x8x448xf32>
    %c6 = arith.constant 6 : index
    %c0_23 = arith.constant 0 : index
    %c0_24 = arith.constant 0 : index
    %72 = vector.load %arg3[%c6, %c0_23, %c0_24] : memref<65x8x448xf32, #tpu.memory_space<vmem>>, vector<1x8x448xf32>
    %73 = vector.shape_cast %72 : vector<1x8x448xf32> to vector<8x448xf32>
    %74 = vector.shape_cast %73 : vector<8x448xf32> to vector<1x8x448xf32>
    %75 = vector.broadcast %74 : vector<1x8x448xf32> to vector<2x8x448xf32>
    %76 = arith.mulf %71, %75 : vector<2x8x448xf32>
    %77 = arith.addf %63, %76 : vector<2x8x448xf32>
    %78 = vector.extract_strided_slice %30 {offsets = [0, 0, 7], sizes = [2, 8, 448], strides = [1, 1, 1]} : vector<2x8x512xf32> to vector<2x8x448xf32>
    %c7 = arith.constant 7 : index
    %c0_25 = arith.constant 0 : index
    %c0_26 = arith.constant 0 : index
    %79 = vector.load %arg3[%c7, %c0_25, %c0_26] : memref<65x8x448xf32, #tpu.memory_space<vmem>>, vector<1x8x448xf32>
    %80 = vector.shape_cast %79 : vector<1x8x448xf32> to vector<8x448xf32>
    %81 = vector.shape_cast %80 : vector<8x448xf32> to vector<1x8x448xf32>
    %82 = vector.broadcast %81 : vector<1x8x448xf32> to vector<2x8x448xf32>
    %83 = arith.mulf %78, %82 : vector<2x8x448xf32>
    %84 = arith.addf %70, %83 : vector<2x8x448xf32>
    %85 = vector.extract_strided_slice %30 {offsets = [0, 0, 8], sizes = [2, 8, 448], strides = [1, 1, 1]} : vector<2x8x512xf32> to vector<2x8x448xf32>
    %c8 = arith.constant 8 : index
    %c0_27 = arith.constant 0 : index
    %c0_28 = arith.constant 0 : index
    %86 = vector.load %arg3[%c8, %c0_27, %c0_28] : memref<65x8x448xf32, #tpu.memory_space<vmem>>, vector<1x8x448xf32>
    %87 = vector.shape_cast %86 : vector<1x8x448xf32> to vector<8x448xf32>
    %88 = vector.shape_cast %87 : vector<8x448xf32> to vector<1x8x448xf32>
    %89 = vector.broadcast %88 : vector<1x8x448xf32> to vector<2x8x448xf32>
    %90 = arith.mulf %85, %89 : vector<2x8x448xf32>
    %91 = arith.addf %77, %90 : vector<2x8x448xf32>
    %92 = vector.extract_strided_slice %30 {offsets = [0, 0, 9], sizes = [2, 8, 448], strides = [1, 1, 1]} : vector<2x8x512xf32> to vector<2x8x448xf32>
    %c9 = arith.constant 9 : index
    %c0_29 = arith.constant 0 : index
    %c0_30 = arith.constant 0 : index
    %93 = vector.load %arg3[%c9, %c0_29, %c0_30] : memref<65x8x448xf32, #tpu.memory_space<vmem>>, vector<1x8x448xf32>
    %94 = vector.shape_cast %93 : vector<1x8x448xf32> to vector<8x448xf32>
    %95 = vector.shape_cast %94 : vector<8x448xf32> to vector<1x8x448xf32>
    %96 = vector.broadcast %95 : vector<1x8x448xf32> to vector<2x8x448xf32>
    %97 = arith.mulf %92, %96 : vector<2x8x448xf32>
    %98 = arith.addf %84, %97 : vector<2x8x448xf32>
    %99 = vector.extract_strided_slice %30 {offsets = [0, 0, 10], sizes = [2, 8, 448], strides = [1, 1, 1]} : vector<2x8x512xf32> to vector<2x8x448xf32>
    %c10 = arith.constant 10 : index
    %c0_31 = arith.constant 0 : index
    %c0_32 = arith.constant 0 : index
    %100 = vector.load %arg3[%c10, %c0_31, %c0_32] : memref<65x8x448xf32, #tpu.memory_space<vmem>>, vector<1x8x448xf32>
    %101 = vector.shape_cast %100 : vector<1x8x448xf32> to vector<8x448xf32>
    %102 = vector.shape_cast %101 : vector<8x448xf32> to vector<1x8x448xf32>
    %103 = vector.broadcast %102 : vector<1x8x448xf32> to vector<2x8x448xf32>
    %104 = arith.mulf %99, %103 : vector<2x8x448xf32>
    %105 = arith.addf %91, %104 : vector<2x8x448xf32>
    %106 = vector.extract_strided_slice %30 {offsets = [0, 0, 11], sizes = [2, 8, 448], strides = [1, 1, 1]} : vector<2x8x512xf32> to vector<2x8x448xf32>
    %c11 = arith.constant 11 : index
    %c0_33 = arith.constant 0 : index
    %c0_34 = arith.constant 0 : index
    %107 = vector.load %arg3[%c11, %c0_33, %c0_34] : memref<65x8x448xf32, #tpu.memory_space<vmem>>, vector<1x8x448xf32>
    %108 = vector.shape_cast %107 : vector<1x8x448xf32> to vector<8x448xf32>
    %109 = vector.shape_cast %108 : vector<8x448xf32> to vector<1x8x448xf32>
    %110 = vector.broadcast %109 : vector<1x8x448xf32> to vector<2x8x448xf32>
    %111 = arith.mulf %106, %110 : vector<2x8x448xf32>
    %112 = arith.addf %98, %111 : vector<2x8x448xf32>
    %113 = vector.extract_strided_slice %30 {offsets = [0, 0, 12], sizes = [2, 8, 448], strides = [1, 1, 1]} : vector<2x8x512xf32> to vector<2x8x448xf32>
    %c12 = arith.constant 12 : index
    %c0_35 = arith.constant 0 : index
    %c0_36 = arith.constant 0 : index
    %114 = vector.load %arg3[%c12, %c0_35, %c0_36] : memref<65x8x448xf32, #tpu.memory_space<vmem>>, vector<1x8x448xf32>
    %115 = vector.shape_cast %114 : vector<1x8x448xf32> to vector<8x448xf32>
    %116 = vector.shape_cast %115 : vector<8x448xf32> to vector<1x8x448xf32>
    %117 = vector.broadcast %116 : vector<1x8x448xf32> to vector<2x8x448xf32>
    %118 = arith.mulf %113, %117 : vector<2x8x448xf32>
    %119 = arith.addf %105, %118 : vector<2x8x448xf32>
    %120 = vector.extract_strided_slice %30 {offsets = [0, 0, 13], sizes = [2, 8, 448], strides = [1, 1, 1]} : vector<2x8x512xf32> to vector<2x8x448xf32>
    %c13 = arith.constant 13 : index
    %c0_37 = arith.constant 0 : index
    %c0_38 = arith.constant 0 : index
    %121 = vector.load %arg3[%c13, %c0_37, %c0_38] : memref<65x8x448xf32, #tpu.memory_space<vmem>>, vector<1x8x448xf32>
    %122 = vector.shape_cast %121 : vector<1x8x448xf32> to vector<8x448xf32>
    %123 = vector.shape_cast %122 : vector<8x448xf32> to vector<1x8x448xf32>
    %124 = vector.broadcast %123 : vector<1x8x448xf32> to vector<2x8x448xf32>
    %125 = arith.mulf %120, %124 : vector<2x8x448xf32>
    %126 = arith.addf %112, %125 : vector<2x8x448xf32>
    %127 = vector.extract_strided_slice %30 {offsets = [0, 0, 14], sizes = [2, 8, 448], strides = [1, 1, 1]} : vector<2x8x512xf32> to vector<2x8x448xf32>
    %c14 = arith.constant 14 : index
    %c0_39 = arith.constant 0 : index
    %c0_40 = arith.constant 0 : index
    %128 = vector.load %arg3[%c14, %c0_39, %c0_40] : memref<65x8x448xf32, #tpu.memory_space<vmem>>, vector<1x8x448xf32>
    %129 = vector.shape_cast %128 : vector<1x8x448xf32> to vector<8x448xf32>
    %130 = vector.shape_cast %129 : vector<8x448xf32> to vector<1x8x448xf32>
    %131 = vector.broadcast %130 : vector<1x8x448xf32> to vector<2x8x448xf32>
    %132 = arith.mulf %127, %131 : vector<2x8x448xf32>
    %133 = arith.addf %119, %132 : vector<2x8x448xf32>
    %134 = vector.extract_strided_slice %30 {offsets = [0, 0, 15], sizes = [2, 8, 448], strides = [1, 1, 1]} : vector<2x8x512xf32> to vector<2x8x448xf32>
    %c15 = arith.constant 15 : index
    %c0_41 = arith.constant 0 : index
    %c0_42 = arith.constant 0 : index
    %135 = vector.load %arg3[%c15, %c0_41, %c0_42] : memref<65x8x448xf32, #tpu.memory_space<vmem>>, vector<1x8x448xf32>
    %136 = vector.shape_cast %135 : vector<1x8x448xf32> to vector<8x448xf32>
    %137 = vector.shape_cast %136 : vector<8x448xf32> to vector<1x8x448xf32>
    %138 = vector.broadcast %137 : vector<1x8x448xf32> to vector<2x8x448xf32>
    %139 = arith.mulf %134, %138 : vector<2x8x448xf32>
    %140 = arith.addf %126, %139 : vector<2x8x448xf32>
    %141 = vector.extract_strided_slice %30 {offsets = [0, 0, 16], sizes = [2, 8, 448], strides = [1, 1, 1]} : vector<2x8x512xf32> to vector<2x8x448xf32>
    %c16 = arith.constant 16 : index
    %c0_43 = arith.constant 0 : index
    %c0_44 = arith.constant 0 : index
    %142 = vector.load %arg3[%c16, %c0_43, %c0_44] : memref<65x8x448xf32, #tpu.memory_space<vmem>>, vector<1x8x448xf32>
    %143 = vector.shape_cast %142 : vector<1x8x448xf32> to vector<8x448xf32>
    %144 = vector.shape_cast %143 : vector<8x448xf32> to vector<1x8x448xf32>
    %145 = vector.broadcast %144 : vector<1x8x448xf32> to vector<2x8x448xf32>
    %146 = arith.mulf %141, %145 : vector<2x8x448xf32>
    %147 = arith.addf %133, %146 : vector<2x8x448xf32>
    %148 = vector.extract_strided_slice %30 {offsets = [0, 0, 17], sizes = [2, 8, 448], strides = [1, 1, 1]} : vector<2x8x512xf32> to vector<2x8x448xf32>
    %c17 = arith.constant 17 : index
    %c0_45 = arith.constant 0 : index
    %c0_46 = arith.constant 0 : index
    %149 = vector.load %arg3[%c17, %c0_45, %c0_46] : memref<65x8x448xf32, #tpu.memory_space<vmem>>, vector<1x8x448xf32>
    %150 = vector.shape_cast %149 : vector<1x8x448xf32> to vector<8x448xf32>
    %151 = vector.shape_cast %150 : vector<8x448xf32> to vector<1x8x448xf32>
    %152 = vector.broadcast %151 : vector<1x8x448xf32> to vector<2x8x448xf32>
    %153 = arith.mulf %148, %152 : vector<2x8x448xf32>
    %154 = arith.addf %140, %153 : vector<2x8x448xf32>
    %155 = vector.extract_strided_slice %30 {offsets = [0, 0, 18], sizes = [2, 8, 448], strides = [1, 1, 1]} : vector<2x8x512xf32> to vector<2x8x448xf32>
    %c18 = arith.constant 18 : index
    %c0_47 = arith.constant 0 : index
    %c0_48 = arith.constant 0 : index
    %156 = vector.load %arg3[%c18, %c0_47, %c0_48] : memref<65x8x448xf32, #tpu.memory_space<vmem>>, vector<1x8x448xf32>
    %157 = vector.shape_cast %156 : vector<1x8x448xf32> to vector<8x448xf32>
    %158 = vector.shape_cast %157 : vector<8x448xf32> to vector<1x8x448xf32>
    %159 = vector.broadcast %158 : vector<1x8x448xf32> to vector<2x8x448xf32>
    %160 = arith.mulf %155, %159 : vector<2x8x448xf32>
    %161 = arith.addf %147, %160 : vector<2x8x448xf32>
    %162 = vector.extract_strided_slice %30 {offsets = [0, 0, 19], sizes = [2, 8, 448], strides = [1, 1, 1]} : vector<2x8x512xf32> to vector<2x8x448xf32>
    %c19 = arith.constant 19 : index
    %c0_49 = arith.constant 0 : index
    %c0_50 = arith.constant 0 : index
    %163 = vector.load %arg3[%c19, %c0_49, %c0_50] : memref<65x8x448xf32, #tpu.memory_space<vmem>>, vector<1x8x448xf32>
    %164 = vector.shape_cast %163 : vector<1x8x448xf32> to vector<8x448xf32>
    %165 = vector.shape_cast %164 : vector<8x448xf32> to vector<1x8x448xf32>
    %166 = vector.broadcast %165 : vector<1x8x448xf32> to vector<2x8x448xf32>
    %167 = arith.mulf %162, %166 : vector<2x8x448xf32>
    %168 = arith.addf %154, %167 : vector<2x8x448xf32>
    %169 = vector.extract_strided_slice %30 {offsets = [0, 0, 20], sizes = [2, 8, 448], strides = [1, 1, 1]} : vector<2x8x512xf32> to vector<2x8x448xf32>
    %c20 = arith.constant 20 : index
    %c0_51 = arith.constant 0 : index
    %c0_52 = arith.constant 0 : index
    %170 = vector.load %arg3[%c20, %c0_51, %c0_52] : memref<65x8x448xf32, #tpu.memory_space<vmem>>, vector<1x8x448xf32>
    %171 = vector.shape_cast %170 : vector<1x8x448xf32> to vector<8x448xf32>
    %172 = vector.shape_cast %171 : vector<8x448xf32> to vector<1x8x448xf32>
    %173 = vector.broadcast %172 : vector<1x8x448xf32> to vector<2x8x448xf32>
    %174 = arith.mulf %169, %173 : vector<2x8x448xf32>
    %175 = arith.addf %161, %174 : vector<2x8x448xf32>
    %176 = vector.extract_strided_slice %30 {offsets = [0, 0, 21], sizes = [2, 8, 448], strides = [1, 1, 1]} : vector<2x8x512xf32> to vector<2x8x448xf32>
    %c21 = arith.constant 21 : index
    %c0_53 = arith.constant 0 : index
    %c0_54 = arith.constant 0 : index
    %177 = vector.load %arg3[%c21, %c0_53, %c0_54] : memref<65x8x448xf32, #tpu.memory_space<vmem>>, vector<1x8x448xf32>
    %178 = vector.shape_cast %177 : vector<1x8x448xf32> to vector<8x448xf32>
    %179 = vector.shape_cast %178 : vector<8x448xf32> to vector<1x8x448xf32>
    %180 = vector.broadcast %179 : vector<1x8x448xf32> to vector<2x8x448xf32>
    %181 = arith.mulf %176, %180 : vector<2x8x448xf32>
    %182 = arith.addf %168, %181 : vector<2x8x448xf32>
    %183 = vector.extract_strided_slice %30 {offsets = [0, 0, 22], sizes = [2, 8, 448], strides = [1, 1, 1]} : vector<2x8x512xf32> to vector<2x8x448xf32>
    %c22 = arith.constant 22 : index
    %c0_55 = arith.constant 0 : index
    %c0_56 = arith.constant 0 : index
    %184 = vector.load %arg3[%c22, %c0_55, %c0_56] : memref<65x8x448xf32, #tpu.memory_space<vmem>>, vector<1x8x448xf32>
    %185 = vector.shape_cast %184 : vector<1x8x448xf32> to vector<8x448xf32>
    %186 = vector.shape_cast %185 : vector<8x448xf32> to vector<1x8x448xf32>
    %187 = vector.broadcast %186 : vector<1x8x448xf32> to vector<2x8x448xf32>
    %188 = arith.mulf %183, %187 : vector<2x8x448xf32>
    %189 = arith.addf %175, %188 : vector<2x8x448xf32>
    %190 = vector.extract_strided_slice %30 {offsets = [0, 0, 23], sizes = [2, 8, 448], strides = [1, 1, 1]} : vector<2x8x512xf32> to vector<2x8x448xf32>
    %c23 = arith.constant 23 : index
    %c0_57 = arith.constant 0 : index
    %c0_58 = arith.constant 0 : index
    %191 = vector.load %arg3[%c23, %c0_57, %c0_58] : memref<65x8x448xf32, #tpu.memory_space<vmem>>, vector<1x8x448xf32>
    %192 = vector.shape_cast %191 : vector<1x8x448xf32> to vector<8x448xf32>
    %193 = vector.shape_cast %192 : vector<8x448xf32> to vector<1x8x448xf32>
    %194 = vector.broadcast %193 : vector<1x8x448xf32> to vector<2x8x448xf32>
    %195 = arith.mulf %190, %194 : vector<2x8x448xf32>
    %196 = arith.addf %182, %195 : vector<2x8x448xf32>
    %197 = vector.extract_strided_slice %30 {offsets = [0, 0, 24], sizes = [2, 8, 448], strides = [1, 1, 1]} : vector<2x8x512xf32> to vector<2x8x448xf32>
    %c24 = arith.constant 24 : index
    %c0_59 = arith.constant 0 : index
    %c0_60 = arith.constant 0 : index
    %198 = vector.load %arg3[%c24, %c0_59, %c0_60] : memref<65x8x448xf32, #tpu.memory_space<vmem>>, vector<1x8x448xf32>
    %199 = vector.shape_cast %198 : vector<1x8x448xf32> to vector<8x448xf32>
    %200 = vector.shape_cast %199 : vector<8x448xf32> to vector<1x8x448xf32>
    %201 = vector.broadcast %200 : vector<1x8x448xf32> to vector<2x8x448xf32>
    %202 = arith.mulf %197, %201 : vector<2x8x448xf32>
    %203 = arith.addf %189, %202 : vector<2x8x448xf32>
    %204 = vector.extract_strided_slice %30 {offsets = [0, 0, 25], sizes = [2, 8, 448], strides = [1, 1, 1]} : vector<2x8x512xf32> to vector<2x8x448xf32>
    %c25 = arith.constant 25 : index
    %c0_61 = arith.constant 0 : index
    %c0_62 = arith.constant 0 : index
    %205 = vector.load %arg3[%c25, %c0_61, %c0_62] : memref<65x8x448xf32, #tpu.memory_space<vmem>>, vector<1x8x448xf32>
    %206 = vector.shape_cast %205 : vector<1x8x448xf32> to vector<8x448xf32>
    %207 = vector.shape_cast %206 : vector<8x448xf32> to vector<1x8x448xf32>
    %208 = vector.broadcast %207 : vector<1x8x448xf32> to vector<2x8x448xf32>
    %209 = arith.mulf %204, %208 : vector<2x8x448xf32>
    %210 = arith.addf %196, %209 : vector<2x8x448xf32>
    %211 = vector.extract_strided_slice %30 {offsets = [0, 0, 26], sizes = [2, 8, 448], strides = [1, 1, 1]} : vector<2x8x512xf32> to vector<2x8x448xf32>
    %c26 = arith.constant 26 : index
    %c0_63 = arith.constant 0 : index
    %c0_64 = arith.constant 0 : index
    %212 = vector.load %arg3[%c26, %c0_63, %c0_64] : memref<65x8x448xf32, #tpu.memory_space<vmem>>, vector<1x8x448xf32>
    %213 = vector.shape_cast %212 : vector<1x8x448xf32> to vector<8x448xf32>
    %214 = vector.shape_cast %213 : vector<8x448xf32> to vector<1x8x448xf32>
    %215 = vector.broadcast %214 : vector<1x8x448xf32> to vector<2x8x448xf32>
    %216 = arith.mulf %211, %215 : vector<2x8x448xf32>
    %217 = arith.addf %203, %216 : vector<2x8x448xf32>
    %218 = vector.extract_strided_slice %30 {offsets = [0, 0, 27], sizes = [2, 8, 448], strides = [1, 1, 1]} : vector<2x8x512xf32> to vector<2x8x448xf32>
    %c27 = arith.constant 27 : index
    %c0_65 = arith.constant 0 : index
    %c0_66 = arith.constant 0 : index
    %219 = vector.load %arg3[%c27, %c0_65, %c0_66] : memref<65x8x448xf32, #tpu.memory_space<vmem>>, vector<1x8x448xf32>
    %220 = vector.shape_cast %219 : vector<1x8x448xf32> to vector<8x448xf32>
    %221 = vector.shape_cast %220 : vector<8x448xf32> to vector<1x8x448xf32>
    %222 = vector.broadcast %221 : vector<1x8x448xf32> to vector<2x8x448xf32>
    %223 = arith.mulf %218, %222 : vector<2x8x448xf32>
    %224 = arith.addf %210, %223 : vector<2x8x448xf32>
    %225 = vector.extract_strided_slice %30 {offsets = [0, 0, 28], sizes = [2, 8, 448], strides = [1, 1, 1]} : vector<2x8x512xf32> to vector<2x8x448xf32>
    %c28 = arith.constant 28 : index
    %c0_67 = arith.constant 0 : index
    %c0_68 = arith.constant 0 : index
    %226 = vector.load %arg3[%c28, %c0_67, %c0_68] : memref<65x8x448xf32, #tpu.memory_space<vmem>>, vector<1x8x448xf32>
    %227 = vector.shape_cast %226 : vector<1x8x448xf32> to vector<8x448xf32>
    %228 = vector.shape_cast %227 : vector<8x448xf32> to vector<1x8x448xf32>
    %229 = vector.broadcast %228 : vector<1x8x448xf32> to vector<2x8x448xf32>
    %230 = arith.mulf %225, %229 : vector<2x8x448xf32>
    %231 = arith.addf %217, %230 : vector<2x8x448xf32>
    %232 = vector.extract_strided_slice %30 {offsets = [0, 0, 29], sizes = [2, 8, 448], strides = [1, 1, 1]} : vector<2x8x512xf32> to vector<2x8x448xf32>
    %c29 = arith.constant 29 : index
    %c0_69 = arith.constant 0 : index
    %c0_70 = arith.constant 0 : index
    %233 = vector.load %arg3[%c29, %c0_69, %c0_70] : memref<65x8x448xf32, #tpu.memory_space<vmem>>, vector<1x8x448xf32>
    %234 = vector.shape_cast %233 : vector<1x8x448xf32> to vector<8x448xf32>
    %235 = vector.shape_cast %234 : vector<8x448xf32> to vector<1x8x448xf32>
    %236 = vector.broadcast %235 : vector<1x8x448xf32> to vector<2x8x448xf32>
    %237 = arith.mulf %232, %236 : vector<2x8x448xf32>
    %238 = arith.addf %224, %237 : vector<2x8x448xf32>
    %239 = vector.extract_strided_slice %30 {offsets = [0, 0, 30], sizes = [2, 8, 448], strides = [1, 1, 1]} : vector<2x8x512xf32> to vector<2x8x448xf32>
    %c30 = arith.constant 30 : index
    %c0_71 = arith.constant 0 : index
    %c0_72 = arith.constant 0 : index
    %240 = vector.load %arg3[%c30, %c0_71, %c0_72] : memref<65x8x448xf32, #tpu.memory_space<vmem>>, vector<1x8x448xf32>
    %241 = vector.shape_cast %240 : vector<1x8x448xf32> to vector<8x448xf32>
    %242 = vector.shape_cast %241 : vector<8x448xf32> to vector<1x8x448xf32>
    %243 = vector.broadcast %242 : vector<1x8x448xf32> to vector<2x8x448xf32>
    %244 = arith.mulf %239, %243 : vector<2x8x448xf32>
    %245 = arith.addf %231, %244 : vector<2x8x448xf32>
    %246 = vector.extract_strided_slice %30 {offsets = [0, 0, 31], sizes = [2, 8, 448], strides = [1, 1, 1]} : vector<2x8x512xf32> to vector<2x8x448xf32>
    %c31 = arith.constant 31 : index
    %c0_73 = arith.constant 0 : index
    %c0_74 = arith.constant 0 : index
    %247 = vector.load %arg3[%c31, %c0_73, %c0_74] : memref<65x8x448xf32, #tpu.memory_space<vmem>>, vector<1x8x448xf32>
    %248 = vector.shape_cast %247 : vector<1x8x448xf32> to vector<8x448xf32>
    %249 = vector.shape_cast %248 : vector<8x448xf32> to vector<1x8x448xf32>
    %250 = vector.broadcast %249 : vector<1x8x448xf32> to vector<2x8x448xf32>
    %251 = arith.mulf %246, %250 : vector<2x8x448xf32>
    %252 = arith.addf %238, %251 : vector<2x8x448xf32>
    %253 = vector.extract_strided_slice %30 {offsets = [0, 0, 32], sizes = [2, 8, 448], strides = [1, 1, 1]} : vector<2x8x512xf32> to vector<2x8x448xf32>
    %c32 = arith.constant 32 : index
    %c0_75 = arith.constant 0 : index
    %c0_76 = arith.constant 0 : index
    %254 = vector.load %arg3[%c32, %c0_75, %c0_76] : memref<65x8x448xf32, #tpu.memory_space<vmem>>, vector<1x8x448xf32>
    %255 = vector.shape_cast %254 : vector<1x8x448xf32> to vector<8x448xf32>
    %256 = vector.shape_cast %255 : vector<8x448xf32> to vector<1x8x448xf32>
    %257 = vector.broadcast %256 : vector<1x8x448xf32> to vector<2x8x448xf32>
    %258 = arith.mulf %253, %257 : vector<2x8x448xf32>
    %259 = arith.addf %245, %258 : vector<2x8x448xf32>
    %260 = vector.extract_strided_slice %30 {offsets = [0, 0, 33], sizes = [2, 8, 448], strides = [1, 1, 1]} : vector<2x8x512xf32> to vector<2x8x448xf32>
    %c33 = arith.constant 33 : index
    %c0_77 = arith.constant 0 : index
    %c0_78 = arith.constant 0 : index
    %261 = vector.load %arg3[%c33, %c0_77, %c0_78] : memref<65x8x448xf32, #tpu.memory_space<vmem>>, vector<1x8x448xf32>
    %262 = vector.shape_cast %261 : vector<1x8x448xf32> to vector<8x448xf32>
    %263 = vector.shape_cast %262 : vector<8x448xf32> to vector<1x8x448xf32>
    %264 = vector.broadcast %263 : vector<1x8x448xf32> to vector<2x8x448xf32>
    %265 = arith.mulf %260, %264 : vector<2x8x448xf32>
    %266 = arith.addf %252, %265 : vector<2x8x448xf32>
    %267 = vector.extract_strided_slice %30 {offsets = [0, 0, 34], sizes = [2, 8, 448], strides = [1, 1, 1]} : vector<2x8x512xf32> to vector<2x8x448xf32>
    %c34 = arith.constant 34 : index
    %c0_79 = arith.constant 0 : index
    %c0_80 = arith.constant 0 : index
    %268 = vector.load %arg3[%c34, %c0_79, %c0_80] : memref<65x8x448xf32, #tpu.memory_space<vmem>>, vector<1x8x448xf32>
    %269 = vector.shape_cast %268 : vector<1x8x448xf32> to vector<8x448xf32>
    %270 = vector.shape_cast %269 : vector<8x448xf32> to vector<1x8x448xf32>
    %271 = vector.broadcast %270 : vector<1x8x448xf32> to vector<2x8x448xf32>
    %272 = arith.mulf %267, %271 : vector<2x8x448xf32>
    %273 = arith.addf %259, %272 : vector<2x8x448xf32>
    %274 = vector.extract_strided_slice %30 {offsets = [0, 0, 35], sizes = [2, 8, 448], strides = [1, 1, 1]} : vector<2x8x512xf32> to vector<2x8x448xf32>
    %c35 = arith.constant 35 : index
    %c0_81 = arith.constant 0 : index
    %c0_82 = arith.constant 0 : index
    %275 = vector.load %arg3[%c35, %c0_81, %c0_82] : memref<65x8x448xf32, #tpu.memory_space<vmem>>, vector<1x8x448xf32>
    %276 = vector.shape_cast %275 : vector<1x8x448xf32> to vector<8x448xf32>
    %277 = vector.shape_cast %276 : vector<8x448xf32> to vector<1x8x448xf32>
    %278 = vector.broadcast %277 : vector<1x8x448xf32> to vector<2x8x448xf32>
    %279 = arith.mulf %274, %278 : vector<2x8x448xf32>
    %280 = arith.addf %266, %279 : vector<2x8x448xf32>
    %281 = vector.extract_strided_slice %30 {offsets = [0, 0, 36], sizes = [2, 8, 448], strides = [1, 1, 1]} : vector<2x8x512xf32> to vector<2x8x448xf32>
    %c36 = arith.constant 36 : index
    %c0_83 = arith.constant 0 : index
    %c0_84 = arith.constant 0 : index
    %282 = vector.load %arg3[%c36, %c0_83, %c0_84] : memref<65x8x448xf32, #tpu.memory_space<vmem>>, vector<1x8x448xf32>
    %283 = vector.shape_cast %282 : vector<1x8x448xf32> to vector<8x448xf32>
    %284 = vector.shape_cast %283 : vector<8x448xf32> to vector<1x8x448xf32>
    %285 = vector.broadcast %284 : vector<1x8x448xf32> to vector<2x8x448xf32>
    %286 = arith.mulf %281, %285 : vector<2x8x448xf32>
    %287 = arith.addf %273, %286 : vector<2x8x448xf32>
    %288 = vector.extract_strided_slice %30 {offsets = [0, 0, 37], sizes = [2, 8, 448], strides = [1, 1, 1]} : vector<2x8x512xf32> to vector<2x8x448xf32>
    %c37 = arith.constant 37 : index
    %c0_85 = arith.constant 0 : index
    %c0_86 = arith.constant 0 : index
    %289 = vector.load %arg3[%c37, %c0_85, %c0_86] : memref<65x8x448xf32, #tpu.memory_space<vmem>>, vector<1x8x448xf32>
    %290 = vector.shape_cast %289 : vector<1x8x448xf32> to vector<8x448xf32>
    %291 = vector.shape_cast %290 : vector<8x448xf32> to vector<1x8x448xf32>
    %292 = vector.broadcast %291 : vector<1x8x448xf32> to vector<2x8x448xf32>
    %293 = arith.mulf %288, %292 : vector<2x8x448xf32>
    %294 = arith.addf %280, %293 : vector<2x8x448xf32>
    %295 = vector.extract_strided_slice %30 {offsets = [0, 0, 38], sizes = [2, 8, 448], strides = [1, 1, 1]} : vector<2x8x512xf32> to vector<2x8x448xf32>
    %c38 = arith.constant 38 : index
    %c0_87 = arith.constant 0 : index
    %c0_88 = arith.constant 0 : index
    %296 = vector.load %arg3[%c38, %c0_87, %c0_88] : memref<65x8x448xf32, #tpu.memory_space<vmem>>, vector<1x8x448xf32>
    %297 = vector.shape_cast %296 : vector<1x8x448xf32> to vector<8x448xf32>
    %298 = vector.shape_cast %297 : vector<8x448xf32> to vector<1x8x448xf32>
    %299 = vector.broadcast %298 : vector<1x8x448xf32> to vector<2x8x448xf32>
    %300 = arith.mulf %295, %299 : vector<2x8x448xf32>
    %301 = arith.addf %287, %300 : vector<2x8x448xf32>
    %302 = vector.extract_strided_slice %30 {offsets = [0, 0, 39], sizes = [2, 8, 448], strides = [1, 1, 1]} : vector<2x8x512xf32> to vector<2x8x448xf32>
    %c39 = arith.constant 39 : index
    %c0_89 = arith.constant 0 : index
    %c0_90 = arith.constant 0 : index
    %303 = vector.load %arg3[%c39, %c0_89, %c0_90] : memref<65x8x448xf32, #tpu.memory_space<vmem>>, vector<1x8x448xf32>
    %304 = vector.shape_cast %303 : vector<1x8x448xf32> to vector<8x448xf32>
    %305 = vector.shape_cast %304 : vector<8x448xf32> to vector<1x8x448xf32>
    %306 = vector.broadcast %305 : vector<1x8x448xf32> to vector<2x8x448xf32>
    %307 = arith.mulf %302, %306 : vector<2x8x448xf32>
    %308 = arith.addf %294, %307 : vector<2x8x448xf32>
    %309 = vector.extract_strided_slice %30 {offsets = [0, 0, 40], sizes = [2, 8, 448], strides = [1, 1, 1]} : vector<2x8x512xf32> to vector<2x8x448xf32>
    %c40 = arith.constant 40 : index
    %c0_91 = arith.constant 0 : index
    %c0_92 = arith.constant 0 : index
    %310 = vector.load %arg3[%c40, %c0_91, %c0_92] : memref<65x8x448xf32, #tpu.memory_space<vmem>>, vector<1x8x448xf32>
    %311 = vector.shape_cast %310 : vector<1x8x448xf32> to vector<8x448xf32>
    %312 = vector.shape_cast %311 : vector<8x448xf32> to vector<1x8x448xf32>
    %313 = vector.broadcast %312 : vector<1x8x448xf32> to vector<2x8x448xf32>
    %314 = arith.mulf %309, %313 : vector<2x8x448xf32>
    %315 = arith.addf %301, %314 : vector<2x8x448xf32>
    %316 = vector.extract_strided_slice %30 {offsets = [0, 0, 41], sizes = [2, 8, 448], strides = [1, 1, 1]} : vector<2x8x512xf32> to vector<2x8x448xf32>
    %c41 = arith.constant 41 : index
    %c0_93 = arith.constant 0 : index
    %c0_94 = arith.constant 0 : index
    %317 = vector.load %arg3[%c41, %c0_93, %c0_94] : memref<65x8x448xf32, #tpu.memory_space<vmem>>, vector<1x8x448xf32>
    %318 = vector.shape_cast %317 : vector<1x8x448xf32> to vector<8x448xf32>
    %319 = vector.shape_cast %318 : vector<8x448xf32> to vector<1x8x448xf32>
    %320 = vector.broadcast %319 : vector<1x8x448xf32> to vector<2x8x448xf32>
    %321 = arith.mulf %316, %320 : vector<2x8x448xf32>
    %322 = arith.addf %308, %321 : vector<2x8x448xf32>
    %323 = vector.extract_strided_slice %30 {offsets = [0, 0, 42], sizes = [2, 8, 448], strides = [1, 1, 1]} : vector<2x8x512xf32> to vector<2x8x448xf32>
    %c42 = arith.constant 42 : index
    %c0_95 = arith.constant 0 : index
    %c0_96 = arith.constant 0 : index
    %324 = vector.load %arg3[%c42, %c0_95, %c0_96] : memref<65x8x448xf32, #tpu.memory_space<vmem>>, vector<1x8x448xf32>
    %325 = vector.shape_cast %324 : vector<1x8x448xf32> to vector<8x448xf32>
    %326 = vector.shape_cast %325 : vector<8x448xf32> to vector<1x8x448xf32>
    %327 = vector.broadcast %326 : vector<1x8x448xf32> to vector<2x8x448xf32>
    %328 = arith.mulf %323, %327 : vector<2x8x448xf32>
    %329 = arith.addf %315, %328 : vector<2x8x448xf32>
    %330 = vector.extract_strided_slice %30 {offsets = [0, 0, 43], sizes = [2, 8, 448], strides = [1, 1, 1]} : vector<2x8x512xf32> to vector<2x8x448xf32>
    %c43 = arith.constant 43 : index
    %c0_97 = arith.constant 0 : index
    %c0_98 = arith.constant 0 : index
    %331 = vector.load %arg3[%c43, %c0_97, %c0_98] : memref<65x8x448xf32, #tpu.memory_space<vmem>>, vector<1x8x448xf32>
    %332 = vector.shape_cast %331 : vector<1x8x448xf32> to vector<8x448xf32>
    %333 = vector.shape_cast %332 : vector<8x448xf32> to vector<1x8x448xf32>
    %334 = vector.broadcast %333 : vector<1x8x448xf32> to vector<2x8x448xf32>
    %335 = arith.mulf %330, %334 : vector<2x8x448xf32>
    %336 = arith.addf %322, %335 : vector<2x8x448xf32>
    %337 = vector.extract_strided_slice %30 {offsets = [0, 0, 44], sizes = [2, 8, 448], strides = [1, 1, 1]} : vector<2x8x512xf32> to vector<2x8x448xf32>
    %c44 = arith.constant 44 : index
    %c0_99 = arith.constant 0 : index
    %c0_100 = arith.constant 0 : index
    %338 = vector.load %arg3[%c44, %c0_99, %c0_100] : memref<65x8x448xf32, #tpu.memory_space<vmem>>, vector<1x8x448xf32>
    %339 = vector.shape_cast %338 : vector<1x8x448xf32> to vector<8x448xf32>
    %340 = vector.shape_cast %339 : vector<8x448xf32> to vector<1x8x448xf32>
    %341 = vector.broadcast %340 : vector<1x8x448xf32> to vector<2x8x448xf32>
    %342 = arith.mulf %337, %341 : vector<2x8x448xf32>
    %343 = arith.addf %329, %342 : vector<2x8x448xf32>
    %344 = vector.extract_strided_slice %30 {offsets = [0, 0, 45], sizes = [2, 8, 448], strides = [1, 1, 1]} : vector<2x8x512xf32> to vector<2x8x448xf32>
    %c45 = arith.constant 45 : index
    %c0_101 = arith.constant 0 : index
    %c0_102 = arith.constant 0 : index
    %345 = vector.load %arg3[%c45, %c0_101, %c0_102] : memref<65x8x448xf32, #tpu.memory_space<vmem>>, vector<1x8x448xf32>
    %346 = vector.shape_cast %345 : vector<1x8x448xf32> to vector<8x448xf32>
    %347 = vector.shape_cast %346 : vector<8x448xf32> to vector<1x8x448xf32>
    %348 = vector.broadcast %347 : vector<1x8x448xf32> to vector<2x8x448xf32>
    %349 = arith.mulf %344, %348 : vector<2x8x448xf32>
    %350 = arith.addf %336, %349 : vector<2x8x448xf32>
    %351 = vector.extract_strided_slice %30 {offsets = [0, 0, 46], sizes = [2, 8, 448], strides = [1, 1, 1]} : vector<2x8x512xf32> to vector<2x8x448xf32>
    %c46 = arith.constant 46 : index
    %c0_103 = arith.constant 0 : index
    %c0_104 = arith.constant 0 : index
    %352 = vector.load %arg3[%c46, %c0_103, %c0_104] : memref<65x8x448xf32, #tpu.memory_space<vmem>>, vector<1x8x448xf32>
    %353 = vector.shape_cast %352 : vector<1x8x448xf32> to vector<8x448xf32>
    %354 = vector.shape_cast %353 : vector<8x448xf32> to vector<1x8x448xf32>
    %355 = vector.broadcast %354 : vector<1x8x448xf32> to vector<2x8x448xf32>
    %356 = arith.mulf %351, %355 : vector<2x8x448xf32>
    %357 = arith.addf %343, %356 : vector<2x8x448xf32>
    %358 = vector.extract_strided_slice %30 {offsets = [0, 0, 47], sizes = [2, 8, 448], strides = [1, 1, 1]} : vector<2x8x512xf32> to vector<2x8x448xf32>
    %c47 = arith.constant 47 : index
    %c0_105 = arith.constant 0 : index
    %c0_106 = arith.constant 0 : index
    %359 = vector.load %arg3[%c47, %c0_105, %c0_106] : memref<65x8x448xf32, #tpu.memory_space<vmem>>, vector<1x8x448xf32>
    %360 = vector.shape_cast %359 : vector<1x8x448xf32> to vector<8x448xf32>
    %361 = vector.shape_cast %360 : vector<8x448xf32> to vector<1x8x448xf32>
    %362 = vector.broadcast %361 : vector<1x8x448xf32> to vector<2x8x448xf32>
    %363 = arith.mulf %358, %362 : vector<2x8x448xf32>
    %364 = arith.addf %350, %363 : vector<2x8x448xf32>
    %365 = vector.extract_strided_slice %30 {offsets = [0, 0, 48], sizes = [2, 8, 448], strides = [1, 1, 1]} : vector<2x8x512xf32> to vector<2x8x448xf32>
    %c48 = arith.constant 48 : index
    %c0_107 = arith.constant 0 : index
    %c0_108 = arith.constant 0 : index
    %366 = vector.load %arg3[%c48, %c0_107, %c0_108] : memref<65x8x448xf32, #tpu.memory_space<vmem>>, vector<1x8x448xf32>
    %367 = vector.shape_cast %366 : vector<1x8x448xf32> to vector<8x448xf32>
    %368 = vector.shape_cast %367 : vector<8x448xf32> to vector<1x8x448xf32>
    %369 = vector.broadcast %368 : vector<1x8x448xf32> to vector<2x8x448xf32>
    %370 = arith.mulf %365, %369 : vector<2x8x448xf32>
    %371 = arith.addf %357, %370 : vector<2x8x448xf32>
    %372 = vector.extract_strided_slice %30 {offsets = [0, 0, 49], sizes = [2, 8, 448], strides = [1, 1, 1]} : vector<2x8x512xf32> to vector<2x8x448xf32>
    %c49 = arith.constant 49 : index
    %c0_109 = arith.constant 0 : index
    %c0_110 = arith.constant 0 : index
    %373 = vector.load %arg3[%c49, %c0_109, %c0_110] : memref<65x8x448xf32, #tpu.memory_space<vmem>>, vector<1x8x448xf32>
    %374 = vector.shape_cast %373 : vector<1x8x448xf32> to vector<8x448xf32>
    %375 = vector.shape_cast %374 : vector<8x448xf32> to vector<1x8x448xf32>
    %376 = vector.broadcast %375 : vector<1x8x448xf32> to vector<2x8x448xf32>
    %377 = arith.mulf %372, %376 : vector<2x8x448xf32>
    %378 = arith.addf %364, %377 : vector<2x8x448xf32>
    %379 = vector.extract_strided_slice %30 {offsets = [0, 0, 50], sizes = [2, 8, 448], strides = [1, 1, 1]} : vector<2x8x512xf32> to vector<2x8x448xf32>
    %c50 = arith.constant 50 : index
    %c0_111 = arith.constant 0 : index
    %c0_112 = arith.constant 0 : index
    %380 = vector.load %arg3[%c50, %c0_111, %c0_112] : memref<65x8x448xf32, #tpu.memory_space<vmem>>, vector<1x8x448xf32>
    %381 = vector.shape_cast %380 : vector<1x8x448xf32> to vector<8x448xf32>
    %382 = vector.shape_cast %381 : vector<8x448xf32> to vector<1x8x448xf32>
    %383 = vector.broadcast %382 : vector<1x8x448xf32> to vector<2x8x448xf32>
    %384 = arith.mulf %379, %383 : vector<2x8x448xf32>
    %385 = arith.addf %371, %384 : vector<2x8x448xf32>
    %386 = vector.extract_strided_slice %30 {offsets = [0, 0, 51], sizes = [2, 8, 448], strides = [1, 1, 1]} : vector<2x8x512xf32> to vector<2x8x448xf32>
    %c51 = arith.constant 51 : index
    %c0_113 = arith.constant 0 : index
    %c0_114 = arith.constant 0 : index
    %387 = vector.load %arg3[%c51, %c0_113, %c0_114] : memref<65x8x448xf32, #tpu.memory_space<vmem>>, vector<1x8x448xf32>
    %388 = vector.shape_cast %387 : vector<1x8x448xf32> to vector<8x448xf32>
    %389 = vector.shape_cast %388 : vector<8x448xf32> to vector<1x8x448xf32>
    %390 = vector.broadcast %389 : vector<1x8x448xf32> to vector<2x8x448xf32>
    %391 = arith.mulf %386, %390 : vector<2x8x448xf32>
    %392 = arith.addf %378, %391 : vector<2x8x448xf32>
    %393 = vector.extract_strided_slice %30 {offsets = [0, 0, 52], sizes = [2, 8, 448], strides = [1, 1, 1]} : vector<2x8x512xf32> to vector<2x8x448xf32>
    %c52 = arith.constant 52 : index
    %c0_115 = arith.constant 0 : index
    %c0_116 = arith.constant 0 : index
    %394 = vector.load %arg3[%c52, %c0_115, %c0_116] : memref<65x8x448xf32, #tpu.memory_space<vmem>>, vector<1x8x448xf32>
    %395 = vector.shape_cast %394 : vector<1x8x448xf32> to vector<8x448xf32>
    %396 = vector.shape_cast %395 : vector<8x448xf32> to vector<1x8x448xf32>
    %397 = vector.broadcast %396 : vector<1x8x448xf32> to vector<2x8x448xf32>
    %398 = arith.mulf %393, %397 : vector<2x8x448xf32>
    %399 = arith.addf %385, %398 : vector<2x8x448xf32>
    %400 = vector.extract_strided_slice %30 {offsets = [0, 0, 53], sizes = [2, 8, 448], strides = [1, 1, 1]} : vector<2x8x512xf32> to vector<2x8x448xf32>
    %c53 = arith.constant 53 : index
    %c0_117 = arith.constant 0 : index
    %c0_118 = arith.constant 0 : index
    %401 = vector.load %arg3[%c53, %c0_117, %c0_118] : memref<65x8x448xf32, #tpu.memory_space<vmem>>, vector<1x8x448xf32>
    %402 = vector.shape_cast %401 : vector<1x8x448xf32> to vector<8x448xf32>
    %403 = vector.shape_cast %402 : vector<8x448xf32> to vector<1x8x448xf32>
    %404 = vector.broadcast %403 : vector<1x8x448xf32> to vector<2x8x448xf32>
    %405 = arith.mulf %400, %404 : vector<2x8x448xf32>
    %406 = arith.addf %392, %405 : vector<2x8x448xf32>
    %407 = vector.extract_strided_slice %30 {offsets = [0, 0, 54], sizes = [2, 8, 448], strides = [1, 1, 1]} : vector<2x8x512xf32> to vector<2x8x448xf32>
    %c54 = arith.constant 54 : index
    %c0_119 = arith.constant 0 : index
    %c0_120 = arith.constant 0 : index
    %408 = vector.load %arg3[%c54, %c0_119, %c0_120] : memref<65x8x448xf32, #tpu.memory_space<vmem>>, vector<1x8x448xf32>
    %409 = vector.shape_cast %408 : vector<1x8x448xf32> to vector<8x448xf32>
    %410 = vector.shape_cast %409 : vector<8x448xf32> to vector<1x8x448xf32>
    %411 = vector.broadcast %410 : vector<1x8x448xf32> to vector<2x8x448xf32>
    %412 = arith.mulf %407, %411 : vector<2x8x448xf32>
    %413 = arith.addf %399, %412 : vector<2x8x448xf32>
    %414 = vector.extract_strided_slice %30 {offsets = [0, 0, 55], sizes = [2, 8, 448], strides = [1, 1, 1]} : vector<2x8x512xf32> to vector<2x8x448xf32>
    %c55 = arith.constant 55 : index
    %c0_121 = arith.constant 0 : index
    %c0_122 = arith.constant 0 : index
    %415 = vector.load %arg3[%c55, %c0_121, %c0_122] : memref<65x8x448xf32, #tpu.memory_space<vmem>>, vector<1x8x448xf32>
    %416 = vector.shape_cast %415 : vector<1x8x448xf32> to vector<8x448xf32>
    %417 = vector.shape_cast %416 : vector<8x448xf32> to vector<1x8x448xf32>
    %418 = vector.broadcast %417 : vector<1x8x448xf32> to vector<2x8x448xf32>
    %419 = arith.mulf %414, %418 : vector<2x8x448xf32>
    %420 = arith.addf %406, %419 : vector<2x8x448xf32>
    %421 = vector.extract_strided_slice %30 {offsets = [0, 0, 56], sizes = [2, 8, 448], strides = [1, 1, 1]} : vector<2x8x512xf32> to vector<2x8x448xf32>
    %c56 = arith.constant 56 : index
    %c0_123 = arith.constant 0 : index
    %c0_124 = arith.constant 0 : index
    %422 = vector.load %arg3[%c56, %c0_123, %c0_124] : memref<65x8x448xf32, #tpu.memory_space<vmem>>, vector<1x8x448xf32>
    %423 = vector.shape_cast %422 : vector<1x8x448xf32> to vector<8x448xf32>
    %424 = vector.shape_cast %423 : vector<8x448xf32> to vector<1x8x448xf32>
    %425 = vector.broadcast %424 : vector<1x8x448xf32> to vector<2x8x448xf32>
    %426 = arith.mulf %421, %425 : vector<2x8x448xf32>
    %427 = arith.addf %413, %426 : vector<2x8x448xf32>
    %428 = vector.extract_strided_slice %30 {offsets = [0, 0, 57], sizes = [2, 8, 448], strides = [1, 1, 1]} : vector<2x8x512xf32> to vector<2x8x448xf32>
    %c57 = arith.constant 57 : index
    %c0_125 = arith.constant 0 : index
    %c0_126 = arith.constant 0 : index
    %429 = vector.load %arg3[%c57, %c0_125, %c0_126] : memref<65x8x448xf32, #tpu.memory_space<vmem>>, vector<1x8x448xf32>
    %430 = vector.shape_cast %429 : vector<1x8x448xf32> to vector<8x448xf32>
    %431 = vector.shape_cast %430 : vector<8x448xf32> to vector<1x8x448xf32>
    %432 = vector.broadcast %431 : vector<1x8x448xf32> to vector<2x8x448xf32>
    %433 = arith.mulf %428, %432 : vector<2x8x448xf32>
    %434 = arith.addf %420, %433 : vector<2x8x448xf32>
    %435 = vector.extract_strided_slice %30 {offsets = [0, 0, 58], sizes = [2, 8, 448], strides = [1, 1, 1]} : vector<2x8x512xf32> to vector<2x8x448xf32>
    %c58 = arith.constant 58 : index
    %c0_127 = arith.constant 0 : index
    %c0_128 = arith.constant 0 : index
    %436 = vector.load %arg3[%c58, %c0_127, %c0_128] : memref<65x8x448xf32, #tpu.memory_space<vmem>>, vector<1x8x448xf32>
    %437 = vector.shape_cast %436 : vector<1x8x448xf32> to vector<8x448xf32>
    %438 = vector.shape_cast %437 : vector<8x448xf32> to vector<1x8x448xf32>
    %439 = vector.broadcast %438 : vector<1x8x448xf32> to vector<2x8x448xf32>
    %440 = arith.mulf %435, %439 : vector<2x8x448xf32>
    %441 = arith.addf %427, %440 : vector<2x8x448xf32>
    %442 = vector.extract_strided_slice %30 {offsets = [0, 0, 59], sizes = [2, 8, 448], strides = [1, 1, 1]} : vector<2x8x512xf32> to vector<2x8x448xf32>
    %c59 = arith.constant 59 : index
    %c0_129 = arith.constant 0 : index
    %c0_130 = arith.constant 0 : index
    %443 = vector.load %arg3[%c59, %c0_129, %c0_130] : memref<65x8x448xf32, #tpu.memory_space<vmem>>, vector<1x8x448xf32>
    %444 = vector.shape_cast %443 : vector<1x8x448xf32> to vector<8x448xf32>
    %445 = vector.shape_cast %444 : vector<8x448xf32> to vector<1x8x448xf32>
    %446 = vector.broadcast %445 : vector<1x8x448xf32> to vector<2x8x448xf32>
    %447 = arith.mulf %442, %446 : vector<2x8x448xf32>
    %448 = arith.addf %434, %447 : vector<2x8x448xf32>
    %449 = vector.extract_strided_slice %30 {offsets = [0, 0, 60], sizes = [2, 8, 448], strides = [1, 1, 1]} : vector<2x8x512xf32> to vector<2x8x448xf32>
    %c60 = arith.constant 60 : index
    %c0_131 = arith.constant 0 : index
    %c0_132 = arith.constant 0 : index
    %450 = vector.load %arg3[%c60, %c0_131, %c0_132] : memref<65x8x448xf32, #tpu.memory_space<vmem>>, vector<1x8x448xf32>
    %451 = vector.shape_cast %450 : vector<1x8x448xf32> to vector<8x448xf32>
    %452 = vector.shape_cast %451 : vector<8x448xf32> to vector<1x8x448xf32>
    %453 = vector.broadcast %452 : vector<1x8x448xf32> to vector<2x8x448xf32>
    %454 = arith.mulf %449, %453 : vector<2x8x448xf32>
    %455 = arith.addf %441, %454 : vector<2x8x448xf32>
    %456 = vector.extract_strided_slice %30 {offsets = [0, 0, 61], sizes = [2, 8, 448], strides = [1, 1, 1]} : vector<2x8x512xf32> to vector<2x8x448xf32>
    %c61 = arith.constant 61 : index
    %c0_133 = arith.constant 0 : index
    %c0_134 = arith.constant 0 : index
    %457 = vector.load %arg3[%c61, %c0_133, %c0_134] : memref<65x8x448xf32, #tpu.memory_space<vmem>>, vector<1x8x448xf32>
    %458 = vector.shape_cast %457 : vector<1x8x448xf32> to vector<8x448xf32>
    %459 = vector.shape_cast %458 : vector<8x448xf32> to vector<1x8x448xf32>
    %460 = vector.broadcast %459 : vector<1x8x448xf32> to vector<2x8x448xf32>
    %461 = arith.mulf %456, %460 : vector<2x8x448xf32>
    %462 = arith.addf %448, %461 : vector<2x8x448xf32>
    %463 = vector.extract_strided_slice %30 {offsets = [0, 0, 62], sizes = [2, 8, 448], strides = [1, 1, 1]} : vector<2x8x512xf32> to vector<2x8x448xf32>
    %c62 = arith.constant 62 : index
    %c0_135 = arith.constant 0 : index
    %c0_136 = arith.constant 0 : index
    %464 = vector.load %arg3[%c62, %c0_135, %c0_136] : memref<65x8x448xf32, #tpu.memory_space<vmem>>, vector<1x8x448xf32>
    %465 = vector.shape_cast %464 : vector<1x8x448xf32> to vector<8x448xf32>
    %466 = vector.shape_cast %465 : vector<8x448xf32> to vector<1x8x448xf32>
    %467 = vector.broadcast %466 : vector<1x8x448xf32> to vector<2x8x448xf32>
    %468 = arith.mulf %463, %467 : vector<2x8x448xf32>
    %469 = arith.addf %455, %468 : vector<2x8x448xf32>
    %470 = vector.extract_strided_slice %30 {offsets = [0, 0, 63], sizes = [2, 8, 448], strides = [1, 1, 1]} : vector<2x8x512xf32> to vector<2x8x448xf32>
    %c63 = arith.constant 63 : index
    %c0_137 = arith.constant 0 : index
    %c0_138 = arith.constant 0 : index
    %471 = vector.load %arg3[%c63, %c0_137, %c0_138] : memref<65x8x448xf32, #tpu.memory_space<vmem>>, vector<1x8x448xf32>
    %472 = vector.shape_cast %471 : vector<1x8x448xf32> to vector<8x448xf32>
    %473 = vector.shape_cast %472 : vector<8x448xf32> to vector<1x8x448xf32>
    %474 = vector.broadcast %473 : vector<1x8x448xf32> to vector<2x8x448xf32>
    %475 = arith.mulf %470, %474 : vector<2x8x448xf32>
    %476 = arith.addf %462, %475 : vector<2x8x448xf32>
    %477 = vector.extract_strided_slice %30 {offsets = [0, 0, 64], sizes = [2, 8, 448], strides = [1, 1, 1]} : vector<2x8x512xf32> to vector<2x8x448xf32>
    %c64 = arith.constant 64 : index
    %c0_139 = arith.constant 0 : index
    %c0_140 = arith.constant 0 : index
    %478 = vector.load %arg3[%c64, %c0_139, %c0_140] : memref<65x8x448xf32, #tpu.memory_space<vmem>>, vector<1x8x448xf32>
    %479 = vector.shape_cast %478 : vector<1x8x448xf32> to vector<8x448xf32>
    %480 = vector.shape_cast %479 : vector<8x448xf32> to vector<1x8x448xf32>
    %481 = vector.broadcast %480 : vector<1x8x448xf32> to vector<2x8x448xf32>
    %482 = arith.mulf %477, %481 : vector<2x8x448xf32>
    %483 = arith.addf %469, %482 : vector<2x8x448xf32>
    %484 = arith.addf %483, %476 : vector<2x8x448xf32>
    %485 = math.absf %484 : vector<2x8x448xf32>
    %486 = vector.shape_cast %485 : vector<2x8x448xf32> to vector<16x448xf32>
    %487 = arith.truncf %486 : vector<16x448xf32> to vector<16x448xbf16>
    %488 = arith.extf %487 : vector<16x448xbf16> to vector<16x448xf32>
    %489 = arith.subf %486, %488 : vector<16x448xf32>
    %490 = arith.truncf %489 : vector<16x448xf32> to vector<16x448xbf16>
    %491 = tpu.iota {dimensions = array<i32: 0>} : vector<448x112xi32>
    %492 = tpu.iota {dimensions = array<i32: 1>} : vector<448x112xi32>
    %c4_i32 = arith.constant 4 : i32
    %493 = vector.broadcast %c4_i32 : i32 to vector<448x112xi32>
    %494 = arith.muli %493, %492 : vector<448x112xi32>
    %495 = arith.subi %491, %494 : vector<448x112xi32>
    %c0_i32 = arith.constant 0 : i32
    %496 = vector.broadcast %c0_i32 : i32 to vector<448x112xi32>
    %497 = arith.cmpi eq, %495, %496 : vector<448x112xi32>
    %cst_141 = arith.constant 1.000000e+00 : f32
    %cst_142 = arith.constant 0.000000e+00 : f32
    %498 = vector.broadcast %cst_141 : f32 to vector<448x112xf32>
    %499 = vector.broadcast %cst_142 : f32 to vector<448x112xf32>
    %500 = arith.select %497, %498, %499 : vector<448x112xi1>, vector<448x112xf32>
    %501 = arith.truncf %500 : vector<448x112xf32> to vector<448x112xbf16>
    %cst_143 = arith.constant dense<0.000000e+00> : vector<16x112xf32>
    %502 = tpu.matmul %487, %501, %cst_143 {dimension_numbers = #tpu.dot_dimension_numbers<[1], [0], [0], [1], [0, 0, 1, 1], [], []>} : vector<16x448xbf16>, vector<448x112xbf16>, vector<16x112xf32> -> vector<16x112xf32>
    %cst_144 = arith.constant dense<0.000000e+00> : vector<16x112xf32>
    %503 = tpu.matmul %490, %501, %cst_144 {dimension_numbers = #tpu.dot_dimension_numbers<[1], [0], [0], [1], [0, 0, 1, 1], [], []>} : vector<16x448xbf16>, vector<448x112xbf16>, vector<16x112xf32> -> vector<16x112xf32>
    %504 = arith.addf %502, %503 : vector<16x112xf32>
    %c1_i32 = arith.constant 1 : i32
    %505 = vector.broadcast %c1_i32 : i32 to vector<448x112xi32>
    %506 = arith.cmpi eq, %495, %505 : vector<448x112xi32>
    %cst_145 = arith.constant 1.000000e+00 : f32
    %cst_146 = arith.constant 0.000000e+00 : f32
    %507 = vector.broadcast %cst_145 : f32 to vector<448x112xf32>
    %508 = vector.broadcast %cst_146 : f32 to vector<448x112xf32>
    %509 = arith.select %506, %507, %508 : vector<448x112xi1>, vector<448x112xf32>
    %510 = arith.truncf %509 : vector<448x112xf32> to vector<448x112xbf16>
    %cst_147 = arith.constant dense<0.000000e+00> : vector<16x112xf32>
    %511 = tpu.matmul %487, %510, %cst_147 {dimension_numbers = #tpu.dot_dimension_numbers<[1], [0], [0], [1], [0, 0, 1, 1], [], []>} : vector<16x448xbf16>, vector<448x112xbf16>, vector<16x112xf32> -> vector<16x112xf32>
    %cst_148 = arith.constant dense<0.000000e+00> : vector<16x112xf32>
    %512 = tpu.matmul %490, %510, %cst_148 {dimension_numbers = #tpu.dot_dimension_numbers<[1], [0], [0], [1], [0, 0, 1, 1], [], []>} : vector<16x448xbf16>, vector<448x112xbf16>, vector<16x112xf32> -> vector<16x112xf32>
    %513 = arith.addf %511, %512 : vector<16x112xf32>
    %514 = arith.maximumf %504, %513 : vector<16x112xf32>
    %c2_i32 = arith.constant 2 : i32
    %515 = vector.broadcast %c2_i32 : i32 to vector<448x112xi32>
    %516 = arith.cmpi eq, %495, %515 : vector<448x112xi32>
    %cst_149 = arith.constant 1.000000e+00 : f32
    %cst_150 = arith.constant 0.000000e+00 : f32
    %517 = vector.broadcast %cst_149 : f32 to vector<448x112xf32>
    %518 = vector.broadcast %cst_150 : f32 to vector<448x112xf32>
    %519 = arith.select %516, %517, %518 : vector<448x112xi1>, vector<448x112xf32>
    %520 = arith.truncf %519 : vector<448x112xf32> to vector<448x112xbf16>
    %cst_151 = arith.constant dense<0.000000e+00> : vector<16x112xf32>
    %521 = tpu.matmul %487, %520, %cst_151 {dimension_numbers = #tpu.dot_dimension_numbers<[1], [0], [0], [1], [0, 0, 1, 1], [], []>} : vector<16x448xbf16>, vector<448x112xbf16>, vector<16x112xf32> -> vector<16x112xf32>
    %cst_152 = arith.constant dense<0.000000e+00> : vector<16x112xf32>
    %522 = tpu.matmul %490, %520, %cst_152 {dimension_numbers = #tpu.dot_dimension_numbers<[1], [0], [0], [1], [0, 0, 1, 1], [], []>} : vector<16x448xbf16>, vector<448x112xbf16>, vector<16x112xf32> -> vector<16x112xf32>
    %523 = arith.addf %521, %522 : vector<16x112xf32>
    %524 = arith.maximumf %514, %523 : vector<16x112xf32>
    %c3_i32 = arith.constant 3 : i32
    %525 = vector.broadcast %c3_i32 : i32 to vector<448x112xi32>
    %526 = arith.cmpi eq, %495, %525 : vector<448x112xi32>
    %cst_153 = arith.constant 1.000000e+00 : f32
    %cst_154 = arith.constant 0.000000e+00 : f32
    %527 = vector.broadcast %cst_153 : f32 to vector<448x112xf32>
    %528 = vector.broadcast %cst_154 : f32 to vector<448x112xf32>
    %529 = arith.select %526, %527, %528 : vector<448x112xi1>, vector<448x112xf32>
    %530 = arith.truncf %529 : vector<448x112xf32> to vector<448x112xbf16>
    %cst_155 = arith.constant dense<0.000000e+00> : vector<16x112xf32>
    %531 = tpu.matmul %487, %530, %cst_155 {dimension_numbers = #tpu.dot_dimension_numbers<[1], [0], [0], [1], [0, 0, 1, 1], [], []>} : vector<16x448xbf16>, vector<448x112xbf16>, vector<16x112xf32> -> vector<16x112xf32>
    %cst_156 = arith.constant dense<0.000000e+00> : vector<16x112xf32>
    %532 = tpu.matmul %490, %530, %cst_156 {dimension_numbers = #tpu.dot_dimension_numbers<[1], [0], [0], [1], [0, 0, 1, 1], [], []>} : vector<16x448xbf16>, vector<448x112xbf16>, vector<16x112xf32> -> vector<16x112xf32>
    %533 = arith.addf %531, %532 : vector<16x112xf32>
    %534 = arith.maximumf %524, %533 : vector<16x112xf32>
    %535 = vector.shape_cast %534 : vector<16x112xf32> to vector<2x8x112xf32>
    %c0_157 = arith.constant 0 : index
    %c0_158 = arith.constant 0 : index
    %536 = vector.load %arg4[%c0_157, %c0_158] : memref<8x112xf32, #tpu.memory_space<vmem>>, vector<8x112xf32>
    %c0_159 = arith.constant 0 : index
    %c0_160 = arith.constant 0 : index
    %537 = vector.load %arg5[%c0_159, %c0_160] : memref<8x112xf32, #tpu.memory_space<vmem>>, vector<8x112xf32>
    %cst_161 = arith.constant dense<0.000000e+00> : vector<2x8xf32>
    %538 = vector.multi_reduction <add>, %535, %cst_161 [2] : vector<2x8x112xf32> to vector<2x8xf32>
    %539 = vector.shape_cast %538 : vector<2x8xf32> to vector<2x8x1xf32>
    %cst_162 = arith.constant 0.00892857183 : f32
    %540 = vector.broadcast %cst_162 : f32 to vector<2x8x1xf32>
    %541 = arith.mulf %539, %540 : vector<2x8x1xf32>
    %542 = vector.broadcast %541 : vector<2x8x1xf32> to vector<2x8x112xf32>
    %543 = arith.subf %535, %542 : vector<2x8x112xf32>
    %544 = arith.mulf %543, %543 : vector<2x8x112xf32>
    %cst_163 = arith.constant dense<0.000000e+00> : vector<2x8xf32>
    %545 = vector.multi_reduction <add>, %544, %cst_163 [2] : vector<2x8x112xf32> to vector<2x8xf32>
    %546 = vector.shape_cast %545 : vector<2x8xf32> to vector<2x8x1xf32>
    %cst_164 = arith.constant 0.00900900922 : f32
    %547 = vector.broadcast %cst_164 : f32 to vector<2x8x1xf32>
    %548 = arith.mulf %546, %547 : vector<2x8x1xf32>
    %549 = math.sqrt %548 : vector<2x8x1xf32>
    %cst_165 = arith.constant 9.99999997E-7 : f32
    %550 = vector.broadcast %cst_165 : f32 to vector<2x8x1xf32>
    %551 = arith.addf %549, %550 : vector<2x8x1xf32>
    %552 = tpu.reciprocal %551 {approx = true} : vector<2x8x1xf32> -> vector<2x8x1xf32>
    %553 = arith.mulf %551, %552 : vector<2x8x1xf32>
    %cst_166 = arith.constant 2.000000e+00 : f32
    %554 = vector.broadcast %cst_166 : f32 to vector<2x8x1xf32>
    %555 = arith.subf %554, %553 : vector<2x8x1xf32>
    %556 = arith.mulf %552, %555 : vector<2x8x1xf32>
    %557 = vector.broadcast %556 : vector<2x8x1xf32> to vector<2x8x112xf32>
    %558 = arith.mulf %543, %557 : vector<2x8x112xf32>
    %559 = vector.shape_cast %536 : vector<8x112xf32> to vector<1x8x112xf32>
    %560 = vector.broadcast %559 : vector<1x8x112xf32> to vector<2x8x112xf32>
    %561 = arith.mulf %560, %558 : vector<2x8x112xf32>
    %562 = vector.shape_cast %537 : vector<8x112xf32> to vector<1x8x112xf32>
    %563 = vector.broadcast %562 : vector<1x8x112xf32> to vector<2x8x112xf32>
    %564 = arith.addf %561, %563 : vector<2x8x112xf32>
    %cst_167 = arith.constant 0.000000e+00 : f32
    %565 = vector.broadcast %cst_167 : f32 to vector<2x8x112xf32>
    %566 = arith.maximumf %564, %565 : vector<2x8x112xf32>
    %567 = vector.extract_strided_slice %566 {offsets = [0, 0, 0], sizes = [2, 1, 112], strides = [1, 1, 1]} : vector<2x8x112xf32> to vector<2x1x112xf32>
    %568 = vector.shape_cast %567 : vector<2x1x112xf32> to vector<2x1x112xf32>
    %569 = vector.broadcast %568 : vector<2x1x112xf32> to vector<2x8x112xf32>
    %570 = vector.extract_strided_slice %566 {offsets = [0, 1, 0], sizes = [2, 1, 112], strides = [1, 1, 1]} : vector<2x8x112xf32> to vector<2x1x112xf32>
    %571 = vector.shape_cast %570 : vector<2x1x112xf32> to vector<2x1x112xf32>
    %572 = vector.broadcast %571 : vector<2x1x112xf32> to vector<2x8x112xf32>
    %573 = vector.extract_strided_slice %566 {offsets = [0, 2, 0], sizes = [2, 1, 112], strides = [1, 1, 1]} : vector<2x8x112xf32> to vector<2x1x112xf32>
    %574 = vector.shape_cast %573 : vector<2x1x112xf32> to vector<2x1x112xf32>
    %575 = vector.broadcast %574 : vector<2x1x112xf32> to vector<2x8x112xf32>
    %576 = vector.extract_strided_slice %566 {offsets = [0, 3, 0], sizes = [2, 1, 112], strides = [1, 1, 1]} : vector<2x8x112xf32> to vector<2x1x112xf32>
    %577 = vector.shape_cast %576 : vector<2x1x112xf32> to vector<2x1x112xf32>
    %578 = vector.broadcast %577 : vector<2x1x112xf32> to vector<2x8x112xf32>
    %579 = vector.extract_strided_slice %566 {offsets = [0, 4, 0], sizes = [2, 1, 112], strides = [1, 1, 1]} : vector<2x8x112xf32> to vector<2x1x112xf32>
    %580 = vector.shape_cast %579 : vector<2x1x112xf32> to vector<2x1x112xf32>
    %581 = vector.broadcast %580 : vector<2x1x112xf32> to vector<2x8x112xf32>
    %582 = vector.extract_strided_slice %566 {offsets = [0, 5, 0], sizes = [2, 1, 112], strides = [1, 1, 1]} : vector<2x8x112xf32> to vector<2x1x112xf32>
    %583 = vector.shape_cast %582 : vector<2x1x112xf32> to vector<2x1x112xf32>
    %584 = vector.broadcast %583 : vector<2x1x112xf32> to vector<2x8x112xf32>
    %585 = vector.extract_strided_slice %566 {offsets = [0, 6, 0], sizes = [2, 1, 112], strides = [1, 1, 1]} : vector<2x8x112xf32> to vector<2x1x112xf32>
    %586 = vector.shape_cast %585 : vector<2x1x112xf32> to vector<2x1x112xf32>
    %587 = vector.broadcast %586 : vector<2x1x112xf32> to vector<2x8x112xf32>
    %588 = vector.extract_strided_slice %566 {offsets = [0, 7, 0], sizes = [2, 1, 112], strides = [1, 1, 1]} : vector<2x8x112xf32> to vector<2x1x112xf32>
    %589 = vector.shape_cast %588 : vector<2x1x112xf32> to vector<2x1x112xf32>
    %590 = vector.broadcast %589 : vector<2x1x112xf32> to vector<2x8x112xf32>
    %591 = vector.extract_strided_slice %569 {offsets = [0, 0, 0], sizes = [2, 8, 108], strides = [1, 1, 1]} : vector<2x8x112xf32> to vector<2x8x108xf32>
    %c0_168 = arith.constant 0 : index
    %c0_169 = arith.constant 0 : index
    %c0_170 = arith.constant 0 : index
    %592 = vector.load %arg6[%c0_168, %c0_169, %c0_170] : memref<40x8x108xf32, #tpu.memory_space<vmem>>, vector<1x8x108xf32>
    %593 = vector.shape_cast %592 : vector<1x8x108xf32> to vector<8x108xf32>
    %594 = vector.shape_cast %593 : vector<8x108xf32> to vector<1x8x108xf32>
    %595 = vector.broadcast %594 : vector<1x8x108xf32> to vector<2x8x108xf32>
    %596 = arith.mulf %591, %595 : vector<2x8x108xf32>
    %597 = vector.extract_strided_slice %569 {offsets = [0, 0, 1], sizes = [2, 8, 108], strides = [1, 1, 1]} : vector<2x8x112xf32> to vector<2x8x108xf32>
    %c1_171 = arith.constant 1 : index
    %c0_172 = arith.constant 0 : index
    %c0_173 = arith.constant 0 : index
    %598 = vector.load %arg6[%c1_171, %c0_172, %c0_173] : memref<40x8x108xf32, #tpu.memory_space<vmem>>, vector<1x8x108xf32>
    %599 = vector.shape_cast %598 : vector<1x8x108xf32> to vector<8x108xf32>
    %600 = vector.shape_cast %599 : vector<8x108xf32> to vector<1x8x108xf32>
    %601 = vector.broadcast %600 : vector<1x8x108xf32> to vector<2x8x108xf32>
    %602 = arith.mulf %597, %601 : vector<2x8x108xf32>
    %603 = vector.extract_strided_slice %569 {offsets = [0, 0, 2], sizes = [2, 8, 108], strides = [1, 1, 1]} : vector<2x8x112xf32> to vector<2x8x108xf32>
    %c2_174 = arith.constant 2 : index
    %c0_175 = arith.constant 0 : index
    %c0_176 = arith.constant 0 : index
    %604 = vector.load %arg6[%c2_174, %c0_175, %c0_176] : memref<40x8x108xf32, #tpu.memory_space<vmem>>, vector<1x8x108xf32>
    %605 = vector.shape_cast %604 : vector<1x8x108xf32> to vector<8x108xf32>
    %606 = vector.shape_cast %605 : vector<8x108xf32> to vector<1x8x108xf32>
    %607 = vector.broadcast %606 : vector<1x8x108xf32> to vector<2x8x108xf32>
    %608 = arith.mulf %603, %607 : vector<2x8x108xf32>
    %609 = vector.extract_strided_slice %569 {offsets = [0, 0, 3], sizes = [2, 8, 108], strides = [1, 1, 1]} : vector<2x8x112xf32> to vector<2x8x108xf32>
    %c3_177 = arith.constant 3 : index
    %c0_178 = arith.constant 0 : index
    %c0_179 = arith.constant 0 : index
    %610 = vector.load %arg6[%c3_177, %c0_178, %c0_179] : memref<40x8x108xf32, #tpu.memory_space<vmem>>, vector<1x8x108xf32>
    %611 = vector.shape_cast %610 : vector<1x8x108xf32> to vector<8x108xf32>
    %612 = vector.shape_cast %611 : vector<8x108xf32> to vector<1x8x108xf32>
    %613 = vector.broadcast %612 : vector<1x8x108xf32> to vector<2x8x108xf32>
    %614 = arith.mulf %609, %613 : vector<2x8x108xf32>
    %615 = vector.extract_strided_slice %569 {offsets = [0, 0, 4], sizes = [2, 8, 108], strides = [1, 1, 1]} : vector<2x8x112xf32> to vector<2x8x108xf32>
    %c4_180 = arith.constant 4 : index
    %c0_181 = arith.constant 0 : index
    %c0_182 = arith.constant 0 : index
    %616 = vector.load %arg6[%c4_180, %c0_181, %c0_182] : memref<40x8x108xf32, #tpu.memory_space<vmem>>, vector<1x8x108xf32>
    %617 = vector.shape_cast %616 : vector<1x8x108xf32> to vector<8x108xf32>
    %618 = vector.shape_cast %617 : vector<8x108xf32> to vector<1x8x108xf32>
    %619 = vector.broadcast %618 : vector<1x8x108xf32> to vector<2x8x108xf32>
    %620 = arith.mulf %615, %619 : vector<2x8x108xf32>
    %621 = arith.addf %596, %620 : vector<2x8x108xf32>
    %622 = vector.extract_strided_slice %572 {offsets = [0, 0, 0], sizes = [2, 8, 108], strides = [1, 1, 1]} : vector<2x8x112xf32> to vector<2x8x108xf32>
    %c5_183 = arith.constant 5 : index
    %c0_184 = arith.constant 0 : index
    %c0_185 = arith.constant 0 : index
    %623 = vector.load %arg6[%c5_183, %c0_184, %c0_185] : memref<40x8x108xf32, #tpu.memory_space<vmem>>, vector<1x8x108xf32>
    %624 = vector.shape_cast %623 : vector<1x8x108xf32> to vector<8x108xf32>
    %625 = vector.shape_cast %624 : vector<8x108xf32> to vector<1x8x108xf32>
    %626 = vector.broadcast %625 : vector<1x8x108xf32> to vector<2x8x108xf32>
    %627 = arith.mulf %622, %626 : vector<2x8x108xf32>
    %628 = arith.addf %602, %627 : vector<2x8x108xf32>
    %629 = vector.extract_strided_slice %572 {offsets = [0, 0, 1], sizes = [2, 8, 108], strides = [1, 1, 1]} : vector<2x8x112xf32> to vector<2x8x108xf32>
    %c6_186 = arith.constant 6 : index
    %c0_187 = arith.constant 0 : index
    %c0_188 = arith.constant 0 : index
    %630 = vector.load %arg6[%c6_186, %c0_187, %c0_188] : memref<40x8x108xf32, #tpu.memory_space<vmem>>, vector<1x8x108xf32>
    %631 = vector.shape_cast %630 : vector<1x8x108xf32> to vector<8x108xf32>
    %632 = vector.shape_cast %631 : vector<8x108xf32> to vector<1x8x108xf32>
    %633 = vector.broadcast %632 : vector<1x8x108xf32> to vector<2x8x108xf32>
    %634 = arith.mulf %629, %633 : vector<2x8x108xf32>
    %635 = arith.addf %608, %634 : vector<2x8x108xf32>
    %636 = vector.extract_strided_slice %572 {offsets = [0, 0, 2], sizes = [2, 8, 108], strides = [1, 1, 1]} : vector<2x8x112xf32> to vector<2x8x108xf32>
    %c7_189 = arith.constant 7 : index
    %c0_190 = arith.constant 0 : index
    %c0_191 = arith.constant 0 : index
    %637 = vector.load %arg6[%c7_189, %c0_190, %c0_191] : memref<40x8x108xf32, #tpu.memory_space<vmem>>, vector<1x8x108xf32>
    %638 = vector.shape_cast %637 : vector<1x8x108xf32> to vector<8x108xf32>
    %639 = vector.shape_cast %638 : vector<8x108xf32> to vector<1x8x108xf32>
    %640 = vector.broadcast %639 : vector<1x8x108xf32> to vector<2x8x108xf32>
    %641 = arith.mulf %636, %640 : vector<2x8x108xf32>
    %642 = arith.addf %614, %641 : vector<2x8x108xf32>
    %643 = vector.extract_strided_slice %572 {offsets = [0, 0, 3], sizes = [2, 8, 108], strides = [1, 1, 1]} : vector<2x8x112xf32> to vector<2x8x108xf32>
    %c8_192 = arith.constant 8 : index
    %c0_193 = arith.constant 0 : index
    %c0_194 = arith.constant 0 : index
    %644 = vector.load %arg6[%c8_192, %c0_193, %c0_194] : memref<40x8x108xf32, #tpu.memory_space<vmem>>, vector<1x8x108xf32>
    %645 = vector.shape_cast %644 : vector<1x8x108xf32> to vector<8x108xf32>
    %646 = vector.shape_cast %645 : vector<8x108xf32> to vector<1x8x108xf32>
    %647 = vector.broadcast %646 : vector<1x8x108xf32> to vector<2x8x108xf32>
    %648 = arith.mulf %643, %647 : vector<2x8x108xf32>
    %649 = arith.addf %621, %648 : vector<2x8x108xf32>
    %650 = vector.extract_strided_slice %572 {offsets = [0, 0, 4], sizes = [2, 8, 108], strides = [1, 1, 1]} : vector<2x8x112xf32> to vector<2x8x108xf32>
    %c9_195 = arith.constant 9 : index
    %c0_196 = arith.constant 0 : index
    %c0_197 = arith.constant 0 : index
    %651 = vector.load %arg6[%c9_195, %c0_196, %c0_197] : memref<40x8x108xf32, #tpu.memory_space<vmem>>, vector<1x8x108xf32>
    %652 = vector.shape_cast %651 : vector<1x8x108xf32> to vector<8x108xf32>
    %653 = vector.shape_cast %652 : vector<8x108xf32> to vector<1x8x108xf32>
    %654 = vector.broadcast %653 : vector<1x8x108xf32> to vector<2x8x108xf32>
    %655 = arith.mulf %650, %654 : vector<2x8x108xf32>
    %656 = arith.addf %628, %655 : vector<2x8x108xf32>
    %657 = vector.extract_strided_slice %575 {offsets = [0, 0, 0], sizes = [2, 8, 108], strides = [1, 1, 1]} : vector<2x8x112xf32> to vector<2x8x108xf32>
    %c10_198 = arith.constant 10 : index
    %c0_199 = arith.constant 0 : index
    %c0_200 = arith.constant 0 : index
    %658 = vector.load %arg6[%c10_198, %c0_199, %c0_200] : memref<40x8x108xf32, #tpu.memory_space<vmem>>, vector<1x8x108xf32>
    %659 = vector.shape_cast %658 : vector<1x8x108xf32> to vector<8x108xf32>
    %660 = vector.shape_cast %659 : vector<8x108xf32> to vector<1x8x108xf32>
    %661 = vector.broadcast %660 : vector<1x8x108xf32> to vector<2x8x108xf32>
    %662 = arith.mulf %657, %661 : vector<2x8x108xf32>
    %663 = arith.addf %635, %662 : vector<2x8x108xf32>
    %664 = vector.extract_strided_slice %575 {offsets = [0, 0, 1], sizes = [2, 8, 108], strides = [1, 1, 1]} : vector<2x8x112xf32> to vector<2x8x108xf32>
    %c11_201 = arith.constant 11 : index
    %c0_202 = arith.constant 0 : index
    %c0_203 = arith.constant 0 : index
    %665 = vector.load %arg6[%c11_201, %c0_202, %c0_203] : memref<40x8x108xf32, #tpu.memory_space<vmem>>, vector<1x8x108xf32>
    %666 = vector.shape_cast %665 : vector<1x8x108xf32> to vector<8x108xf32>
    %667 = vector.shape_cast %666 : vector<8x108xf32> to vector<1x8x108xf32>
    %668 = vector.broadcast %667 : vector<1x8x108xf32> to vector<2x8x108xf32>
    %669 = arith.mulf %664, %668 : vector<2x8x108xf32>
    %670 = arith.addf %642, %669 : vector<2x8x108xf32>
    %671 = vector.extract_strided_slice %575 {offsets = [0, 0, 2], sizes = [2, 8, 108], strides = [1, 1, 1]} : vector<2x8x112xf32> to vector<2x8x108xf32>
    %c12_204 = arith.constant 12 : index
    %c0_205 = arith.constant 0 : index
    %c0_206 = arith.constant 0 : index
    %672 = vector.load %arg6[%c12_204, %c0_205, %c0_206] : memref<40x8x108xf32, #tpu.memory_space<vmem>>, vector<1x8x108xf32>
    %673 = vector.shape_cast %672 : vector<1x8x108xf32> to vector<8x108xf32>
    %674 = vector.shape_cast %673 : vector<8x108xf32> to vector<1x8x108xf32>
    %675 = vector.broadcast %674 : vector<1x8x108xf32> to vector<2x8x108xf32>
    %676 = arith.mulf %671, %675 : vector<2x8x108xf32>
    %677 = arith.addf %649, %676 : vector<2x8x108xf32>
    %678 = vector.extract_strided_slice %575 {offsets = [0, 0, 3], sizes = [2, 8, 108], strides = [1, 1, 1]} : vector<2x8x112xf32> to vector<2x8x108xf32>
    %c13_207 = arith.constant 13 : index
    %c0_208 = arith.constant 0 : index
    %c0_209 = arith.constant 0 : index
    %679 = vector.load %arg6[%c13_207, %c0_208, %c0_209] : memref<40x8x108xf32, #tpu.memory_space<vmem>>, vector<1x8x108xf32>
    %680 = vector.shape_cast %679 : vector<1x8x108xf32> to vector<8x108xf32>
    %681 = vector.shape_cast %680 : vector<8x108xf32> to vector<1x8x108xf32>
    %682 = vector.broadcast %681 : vector<1x8x108xf32> to vector<2x8x108xf32>
    %683 = arith.mulf %678, %682 : vector<2x8x108xf32>
    %684 = arith.addf %656, %683 : vector<2x8x108xf32>
    %685 = vector.extract_strided_slice %575 {offsets = [0, 0, 4], sizes = [2, 8, 108], strides = [1, 1, 1]} : vector<2x8x112xf32> to vector<2x8x108xf32>
    %c14_210 = arith.constant 14 : index
    %c0_211 = arith.constant 0 : index
    %c0_212 = arith.constant 0 : index
    %686 = vector.load %arg6[%c14_210, %c0_211, %c0_212] : memref<40x8x108xf32, #tpu.memory_space<vmem>>, vector<1x8x108xf32>
    %687 = vector.shape_cast %686 : vector<1x8x108xf32> to vector<8x108xf32>
    %688 = vector.shape_cast %687 : vector<8x108xf32> to vector<1x8x108xf32>
    %689 = vector.broadcast %688 : vector<1x8x108xf32> to vector<2x8x108xf32>
    %690 = arith.mulf %685, %689 : vector<2x8x108xf32>
    %691 = arith.addf %663, %690 : vector<2x8x108xf32>
    %692 = vector.extract_strided_slice %578 {offsets = [0, 0, 0], sizes = [2, 8, 108], strides = [1, 1, 1]} : vector<2x8x112xf32> to vector<2x8x108xf32>
    %c15_213 = arith.constant 15 : index
    %c0_214 = arith.constant 0 : index
    %c0_215 = arith.constant 0 : index
    %693 = vector.load %arg6[%c15_213, %c0_214, %c0_215] : memref<40x8x108xf32, #tpu.memory_space<vmem>>, vector<1x8x108xf32>
    %694 = vector.shape_cast %693 : vector<1x8x108xf32> to vector<8x108xf32>
    %695 = vector.shape_cast %694 : vector<8x108xf32> to vector<1x8x108xf32>
    %696 = vector.broadcast %695 : vector<1x8x108xf32> to vector<2x8x108xf32>
    %697 = arith.mulf %692, %696 : vector<2x8x108xf32>
    %698 = arith.addf %670, %697 : vector<2x8x108xf32>
    %699 = vector.extract_strided_slice %578 {offsets = [0, 0, 1], sizes = [2, 8, 108], strides = [1, 1, 1]} : vector<2x8x112xf32> to vector<2x8x108xf32>
    %c16_216 = arith.constant 16 : index
    %c0_217 = arith.constant 0 : index
    %c0_218 = arith.constant 0 : index
    %700 = vector.load %arg6[%c16_216, %c0_217, %c0_218] : memref<40x8x108xf32, #tpu.memory_space<vmem>>, vector<1x8x108xf32>
    %701 = vector.shape_cast %700 : vector<1x8x108xf32> to vector<8x108xf32>
    %702 = vector.shape_cast %701 : vector<8x108xf32> to vector<1x8x108xf32>
    %703 = vector.broadcast %702 : vector<1x8x108xf32> to vector<2x8x108xf32>
    %704 = arith.mulf %699, %703 : vector<2x8x108xf32>
    %705 = arith.addf %677, %704 : vector<2x8x108xf32>
    %706 = vector.extract_strided_slice %578 {offsets = [0, 0, 2], sizes = [2, 8, 108], strides = [1, 1, 1]} : vector<2x8x112xf32> to vector<2x8x108xf32>
    %c17_219 = arith.constant 17 : index
    %c0_220 = arith.constant 0 : index
    %c0_221 = arith.constant 0 : index
    %707 = vector.load %arg6[%c17_219, %c0_220, %c0_221] : memref<40x8x108xf32, #tpu.memory_space<vmem>>, vector<1x8x108xf32>
    %708 = vector.shape_cast %707 : vector<1x8x108xf32> to vector<8x108xf32>
    %709 = vector.shape_cast %708 : vector<8x108xf32> to vector<1x8x108xf32>
    %710 = vector.broadcast %709 : vector<1x8x108xf32> to vector<2x8x108xf32>
    %711 = arith.mulf %706, %710 : vector<2x8x108xf32>
    %712 = arith.addf %684, %711 : vector<2x8x108xf32>
    %713 = vector.extract_strided_slice %578 {offsets = [0, 0, 3], sizes = [2, 8, 108], strides = [1, 1, 1]} : vector<2x8x112xf32> to vector<2x8x108xf32>
    %c18_222 = arith.constant 18 : index
    %c0_223 = arith.constant 0 : index
    %c0_224 = arith.constant 0 : index
    %714 = vector.load %arg6[%c18_222, %c0_223, %c0_224] : memref<40x8x108xf32, #tpu.memory_space<vmem>>, vector<1x8x108xf32>
    %715 = vector.shape_cast %714 : vector<1x8x108xf32> to vector<8x108xf32>
    %716 = vector.shape_cast %715 : vector<8x108xf32> to vector<1x8x108xf32>
    %717 = vector.broadcast %716 : vector<1x8x108xf32> to vector<2x8x108xf32>
    %718 = arith.mulf %713, %717 : vector<2x8x108xf32>
    %719 = arith.addf %691, %718 : vector<2x8x108xf32>
    %720 = vector.extract_strided_slice %578 {offsets = [0, 0, 4], sizes = [2, 8, 108], strides = [1, 1, 1]} : vector<2x8x112xf32> to vector<2x8x108xf32>
    %c19_225 = arith.constant 19 : index
    %c0_226 = arith.constant 0 : index
    %c0_227 = arith.constant 0 : index
    %721 = vector.load %arg6[%c19_225, %c0_226, %c0_227] : memref<40x8x108xf32, #tpu.memory_space<vmem>>, vector<1x8x108xf32>
    %722 = vector.shape_cast %721 : vector<1x8x108xf32> to vector<8x108xf32>
    %723 = vector.shape_cast %722 : vector<8x108xf32> to vector<1x8x108xf32>
    %724 = vector.broadcast %723 : vector<1x8x108xf32> to vector<2x8x108xf32>
    %725 = arith.mulf %720, %724 : vector<2x8x108xf32>
    %726 = arith.addf %698, %725 : vector<2x8x108xf32>
    %727 = vector.extract_strided_slice %581 {offsets = [0, 0, 0], sizes = [2, 8, 108], strides = [1, 1, 1]} : vector<2x8x112xf32> to vector<2x8x108xf32>
    %c20_228 = arith.constant 20 : index
    %c0_229 = arith.constant 0 : index
    %c0_230 = arith.constant 0 : index
    %728 = vector.load %arg6[%c20_228, %c0_229, %c0_230] : memref<40x8x108xf32, #tpu.memory_space<vmem>>, vector<1x8x108xf32>
    %729 = vector.shape_cast %728 : vector<1x8x108xf32> to vector<8x108xf32>
    %730 = vector.shape_cast %729 : vector<8x108xf32> to vector<1x8x108xf32>
    %731 = vector.broadcast %730 : vector<1x8x108xf32> to vector<2x8x108xf32>
    %732 = arith.mulf %727, %731 : vector<2x8x108xf32>
    %733 = arith.addf %705, %732 : vector<2x8x108xf32>
    %734 = vector.extract_strided_slice %581 {offsets = [0, 0, 1], sizes = [2, 8, 108], strides = [1, 1, 1]} : vector<2x8x112xf32> to vector<2x8x108xf32>
    %c21_231 = arith.constant 21 : index
    %c0_232 = arith.constant 0 : index
    %c0_233 = arith.constant 0 : index
    %735 = vector.load %arg6[%c21_231, %c0_232, %c0_233] : memref<40x8x108xf32, #tpu.memory_space<vmem>>, vector<1x8x108xf32>
    %736 = vector.shape_cast %735 : vector<1x8x108xf32> to vector<8x108xf32>
    %737 = vector.shape_cast %736 : vector<8x108xf32> to vector<1x8x108xf32>
    %738 = vector.broadcast %737 : vector<1x8x108xf32> to vector<2x8x108xf32>
    %739 = arith.mulf %734, %738 : vector<2x8x108xf32>
    %740 = arith.addf %712, %739 : vector<2x8x108xf32>
    %741 = vector.extract_strided_slice %581 {offsets = [0, 0, 2], sizes = [2, 8, 108], strides = [1, 1, 1]} : vector<2x8x112xf32> to vector<2x8x108xf32>
    %c22_234 = arith.constant 22 : index
    %c0_235 = arith.constant 0 : index
    %c0_236 = arith.constant 0 : index
    %742 = vector.load %arg6[%c22_234, %c0_235, %c0_236] : memref<40x8x108xf32, #tpu.memory_space<vmem>>, vector<1x8x108xf32>
    %743 = vector.shape_cast %742 : vector<1x8x108xf32> to vector<8x108xf32>
    %744 = vector.shape_cast %743 : vector<8x108xf32> to vector<1x8x108xf32>
    %745 = vector.broadcast %744 : vector<1x8x108xf32> to vector<2x8x108xf32>
    %746 = arith.mulf %741, %745 : vector<2x8x108xf32>
    %747 = arith.addf %719, %746 : vector<2x8x108xf32>
    %748 = vector.extract_strided_slice %581 {offsets = [0, 0, 3], sizes = [2, 8, 108], strides = [1, 1, 1]} : vector<2x8x112xf32> to vector<2x8x108xf32>
    %c23_237 = arith.constant 23 : index
    %c0_238 = arith.constant 0 : index
    %c0_239 = arith.constant 0 : index
    %749 = vector.load %arg6[%c23_237, %c0_238, %c0_239] : memref<40x8x108xf32, #tpu.memory_space<vmem>>, vector<1x8x108xf32>
    %750 = vector.shape_cast %749 : vector<1x8x108xf32> to vector<8x108xf32>
    %751 = vector.shape_cast %750 : vector<8x108xf32> to vector<1x8x108xf32>
    %752 = vector.broadcast %751 : vector<1x8x108xf32> to vector<2x8x108xf32>
    %753 = arith.mulf %748, %752 : vector<2x8x108xf32>
    %754 = arith.addf %726, %753 : vector<2x8x108xf32>
    %755 = vector.extract_strided_slice %581 {offsets = [0, 0, 4], sizes = [2, 8, 108], strides = [1, 1, 1]} : vector<2x8x112xf32> to vector<2x8x108xf32>
    %c24_240 = arith.constant 24 : index
    %c0_241 = arith.constant 0 : index
    %c0_242 = arith.constant 0 : index
    %756 = vector.load %arg6[%c24_240, %c0_241, %c0_242] : memref<40x8x108xf32, #tpu.memory_space<vmem>>, vector<1x8x108xf32>
    %757 = vector.shape_cast %756 : vector<1x8x108xf32> to vector<8x108xf32>
    %758 = vector.shape_cast %757 : vector<8x108xf32> to vector<1x8x108xf32>
    %759 = vector.broadcast %758 : vector<1x8x108xf32> to vector<2x8x108xf32>
    %760 = arith.mulf %755, %759 : vector<2x8x108xf32>
    %761 = arith.addf %733, %760 : vector<2x8x108xf32>
    %762 = vector.extract_strided_slice %584 {offsets = [0, 0, 0], sizes = [2, 8, 108], strides = [1, 1, 1]} : vector<2x8x112xf32> to vector<2x8x108xf32>
    %c25_243 = arith.constant 25 : index
    %c0_244 = arith.constant 0 : index
    %c0_245 = arith.constant 0 : index
    %763 = vector.load %arg6[%c25_243, %c0_244, %c0_245] : memref<40x8x108xf32, #tpu.memory_space<vmem>>, vector<1x8x108xf32>
    %764 = vector.shape_cast %763 : vector<1x8x108xf32> to vector<8x108xf32>
    %765 = vector.shape_cast %764 : vector<8x108xf32> to vector<1x8x108xf32>
    %766 = vector.broadcast %765 : vector<1x8x108xf32> to vector<2x8x108xf32>
    %767 = arith.mulf %762, %766 : vector<2x8x108xf32>
    %768 = arith.addf %740, %767 : vector<2x8x108xf32>
    %769 = vector.extract_strided_slice %584 {offsets = [0, 0, 1], sizes = [2, 8, 108], strides = [1, 1, 1]} : vector<2x8x112xf32> to vector<2x8x108xf32>
    %c26_246 = arith.constant 26 : index
    %c0_247 = arith.constant 0 : index
    %c0_248 = arith.constant 0 : index
    %770 = vector.load %arg6[%c26_246, %c0_247, %c0_248] : memref<40x8x108xf32, #tpu.memory_space<vmem>>, vector<1x8x108xf32>
    %771 = vector.shape_cast %770 : vector<1x8x108xf32> to vector<8x108xf32>
    %772 = vector.shape_cast %771 : vector<8x108xf32> to vector<1x8x108xf32>
    %773 = vector.broadcast %772 : vector<1x8x108xf32> to vector<2x8x108xf32>
    %774 = arith.mulf %769, %773 : vector<2x8x108xf32>
    %775 = arith.addf %747, %774 : vector<2x8x108xf32>
    %776 = vector.extract_strided_slice %584 {offsets = [0, 0, 2], sizes = [2, 8, 108], strides = [1, 1, 1]} : vector<2x8x112xf32> to vector<2x8x108xf32>
    %c27_249 = arith.constant 27 : index
    %c0_250 = arith.constant 0 : index
    %c0_251 = arith.constant 0 : index
    %777 = vector.load %arg6[%c27_249, %c0_250, %c0_251] : memref<40x8x108xf32, #tpu.memory_space<vmem>>, vector<1x8x108xf32>
    %778 = vector.shape_cast %777 : vector<1x8x108xf32> to vector<8x108xf32>
    %779 = vector.shape_cast %778 : vector<8x108xf32> to vector<1x8x108xf32>
    %780 = vector.broadcast %779 : vector<1x8x108xf32> to vector<2x8x108xf32>
    %781 = arith.mulf %776, %780 : vector<2x8x108xf32>
    %782 = arith.addf %754, %781 : vector<2x8x108xf32>
    %783 = vector.extract_strided_slice %584 {offsets = [0, 0, 3], sizes = [2, 8, 108], strides = [1, 1, 1]} : vector<2x8x112xf32> to vector<2x8x108xf32>
    %c28_252 = arith.constant 28 : index
    %c0_253 = arith.constant 0 : index
    %c0_254 = arith.constant 0 : index
    %784 = vector.load %arg6[%c28_252, %c0_253, %c0_254] : memref<40x8x108xf32, #tpu.memory_space<vmem>>, vector<1x8x108xf32>
    %785 = vector.shape_cast %784 : vector<1x8x108xf32> to vector<8x108xf32>
    %786 = vector.shape_cast %785 : vector<8x108xf32> to vector<1x8x108xf32>
    %787 = vector.broadcast %786 : vector<1x8x108xf32> to vector<2x8x108xf32>
    %788 = arith.mulf %783, %787 : vector<2x8x108xf32>
    %789 = arith.addf %761, %788 : vector<2x8x108xf32>
    %790 = vector.extract_strided_slice %584 {offsets = [0, 0, 4], sizes = [2, 8, 108], strides = [1, 1, 1]} : vector<2x8x112xf32> to vector<2x8x108xf32>
    %c29_255 = arith.constant 29 : index
    %c0_256 = arith.constant 0 : index
    %c0_257 = arith.constant 0 : index
    %791 = vector.load %arg6[%c29_255, %c0_256, %c0_257] : memref<40x8x108xf32, #tpu.memory_space<vmem>>, vector<1x8x108xf32>
    %792 = vector.shape_cast %791 : vector<1x8x108xf32> to vector<8x108xf32>
    %793 = vector.shape_cast %792 : vector<8x108xf32> to vector<1x8x108xf32>
    %794 = vector.broadcast %793 : vector<1x8x108xf32> to vector<2x8x108xf32>
    %795 = arith.mulf %790, %794 : vector<2x8x108xf32>
    %796 = arith.addf %768, %795 : vector<2x8x108xf32>
    %797 = vector.extract_strided_slice %587 {offsets = [0, 0, 0], sizes = [2, 8, 108], strides = [1, 1, 1]} : vector<2x8x112xf32> to vector<2x8x108xf32>
    %c30_258 = arith.constant 30 : index
    %c0_259 = arith.constant 0 : index
    %c0_260 = arith.constant 0 : index
    %798 = vector.load %arg6[%c30_258, %c0_259, %c0_260] : memref<40x8x108xf32, #tpu.memory_space<vmem>>, vector<1x8x108xf32>
    %799 = vector.shape_cast %798 : vector<1x8x108xf32> to vector<8x108xf32>
    %800 = vector.shape_cast %799 : vector<8x108xf32> to vector<1x8x108xf32>
    %801 = vector.broadcast %800 : vector<1x8x108xf32> to vector<2x8x108xf32>
    %802 = arith.mulf %797, %801 : vector<2x8x108xf32>
    %803 = arith.addf %775, %802 : vector<2x8x108xf32>
    %804 = vector.extract_strided_slice %587 {offsets = [0, 0, 1], sizes = [2, 8, 108], strides = [1, 1, 1]} : vector<2x8x112xf32> to vector<2x8x108xf32>
    %c31_261 = arith.constant 31 : index
    %c0_262 = arith.constant 0 : index
    %c0_263 = arith.constant 0 : index
    %805 = vector.load %arg6[%c31_261, %c0_262, %c0_263] : memref<40x8x108xf32, #tpu.memory_space<vmem>>, vector<1x8x108xf32>
    %806 = vector.shape_cast %805 : vector<1x8x108xf32> to vector<8x108xf32>
    %807 = vector.shape_cast %806 : vector<8x108xf32> to vector<1x8x108xf32>
    %808 = vector.broadcast %807 : vector<1x8x108xf32> to vector<2x8x108xf32>
    %809 = arith.mulf %804, %808 : vector<2x8x108xf32>
    %810 = arith.addf %782, %809 : vector<2x8x108xf32>
    %811 = vector.extract_strided_slice %587 {offsets = [0, 0, 2], sizes = [2, 8, 108], strides = [1, 1, 1]} : vector<2x8x112xf32> to vector<2x8x108xf32>
    %c32_264 = arith.constant 32 : index
    %c0_265 = arith.constant 0 : index
    %c0_266 = arith.constant 0 : index
    %812 = vector.load %arg6[%c32_264, %c0_265, %c0_266] : memref<40x8x108xf32, #tpu.memory_space<vmem>>, vector<1x8x108xf32>
    %813 = vector.shape_cast %812 : vector<1x8x108xf32> to vector<8x108xf32>
    %814 = vector.shape_cast %813 : vector<8x108xf32> to vector<1x8x108xf32>
    %815 = vector.broadcast %814 : vector<1x8x108xf32> to vector<2x8x108xf32>
    %816 = arith.mulf %811, %815 : vector<2x8x108xf32>
    %817 = arith.addf %789, %816 : vector<2x8x108xf32>
    %818 = vector.extract_strided_slice %587 {offsets = [0, 0, 3], sizes = [2, 8, 108], strides = [1, 1, 1]} : vector<2x8x112xf32> to vector<2x8x108xf32>
    %c33_267 = arith.constant 33 : index
    %c0_268 = arith.constant 0 : index
    %c0_269 = arith.constant 0 : index
    %819 = vector.load %arg6[%c33_267, %c0_268, %c0_269] : memref<40x8x108xf32, #tpu.memory_space<vmem>>, vector<1x8x108xf32>
    %820 = vector.shape_cast %819 : vector<1x8x108xf32> to vector<8x108xf32>
    %821 = vector.shape_cast %820 : vector<8x108xf32> to vector<1x8x108xf32>
    %822 = vector.broadcast %821 : vector<1x8x108xf32> to vector<2x8x108xf32>
    %823 = arith.mulf %818, %822 : vector<2x8x108xf32>
    %824 = arith.addf %796, %823 : vector<2x8x108xf32>
    %825 = vector.extract_strided_slice %587 {offsets = [0, 0, 4], sizes = [2, 8, 108], strides = [1, 1, 1]} : vector<2x8x112xf32> to vector<2x8x108xf32>
    %c34_270 = arith.constant 34 : index
    %c0_271 = arith.constant 0 : index
    %c0_272 = arith.constant 0 : index
    %826 = vector.load %arg6[%c34_270, %c0_271, %c0_272] : memref<40x8x108xf32, #tpu.memory_space<vmem>>, vector<1x8x108xf32>
    %827 = vector.shape_cast %826 : vector<1x8x108xf32> to vector<8x108xf32>
    %828 = vector.shape_cast %827 : vector<8x108xf32> to vector<1x8x108xf32>
    %829 = vector.broadcast %828 : vector<1x8x108xf32> to vector<2x8x108xf32>
    %830 = arith.mulf %825, %829 : vector<2x8x108xf32>
    %831 = arith.addf %803, %830 : vector<2x8x108xf32>
    %832 = vector.extract_strided_slice %590 {offsets = [0, 0, 0], sizes = [2, 8, 108], strides = [1, 1, 1]} : vector<2x8x112xf32> to vector<2x8x108xf32>
    %c35_273 = arith.constant 35 : index
    %c0_274 = arith.constant 0 : index
    %c0_275 = arith.constant 0 : index
    %833 = vector.load %arg6[%c35_273, %c0_274, %c0_275] : memref<40x8x108xf32, #tpu.memory_space<vmem>>, vector<1x8x108xf32>
    %834 = vector.shape_cast %833 : vector<1x8x108xf32> to vector<8x108xf32>
    %835 = vector.shape_cast %834 : vector<8x108xf32> to vector<1x8x108xf32>
    %836 = vector.broadcast %835 : vector<1x8x108xf32> to vector<2x8x108xf32>
    %837 = arith.mulf %832, %836 : vector<2x8x108xf32>
    %838 = arith.addf %810, %837 : vector<2x8x108xf32>
    %839 = vector.extract_strided_slice %590 {offsets = [0, 0, 1], sizes = [2, 8, 108], strides = [1, 1, 1]} : vector<2x8x112xf32> to vector<2x8x108xf32>
    %c36_276 = arith.constant 36 : index
    %c0_277 = arith.constant 0 : index
    %c0_278 = arith.constant 0 : index
    %840 = vector.load %arg6[%c36_276, %c0_277, %c0_278] : memref<40x8x108xf32, #tpu.memory_space<vmem>>, vector<1x8x108xf32>
    %841 = vector.shape_cast %840 : vector<1x8x108xf32> to vector<8x108xf32>
    %842 = vector.shape_cast %841 : vector<8x108xf32> to vector<1x8x108xf32>
    %843 = vector.broadcast %842 : vector<1x8x108xf32> to vector<2x8x108xf32>
    %844 = arith.mulf %839, %843 : vector<2x8x108xf32>
    %845 = arith.addf %817, %844 : vector<2x8x108xf32>
    %846 = vector.extract_strided_slice %590 {offsets = [0, 0, 2], sizes = [2, 8, 108], strides = [1, 1, 1]} : vector<2x8x112xf32> to vector<2x8x108xf32>
    %c37_279 = arith.constant 37 : index
    %c0_280 = arith.constant 0 : index
    %c0_281 = arith.constant 0 : index
    %847 = vector.load %arg6[%c37_279, %c0_280, %c0_281] : memref<40x8x108xf32, #tpu.memory_space<vmem>>, vector<1x8x108xf32>
    %848 = vector.shape_cast %847 : vector<1x8x108xf32> to vector<8x108xf32>
    %849 = vector.shape_cast %848 : vector<8x108xf32> to vector<1x8x108xf32>
    %850 = vector.broadcast %849 : vector<1x8x108xf32> to vector<2x8x108xf32>
    %851 = arith.mulf %846, %850 : vector<2x8x108xf32>
    %852 = arith.addf %824, %851 : vector<2x8x108xf32>
    %853 = vector.extract_strided_slice %590 {offsets = [0, 0, 3], sizes = [2, 8, 108], strides = [1, 1, 1]} : vector<2x8x112xf32> to vector<2x8x108xf32>
    %c38_282 = arith.constant 38 : index
    %c0_283 = arith.constant 0 : index
    %c0_284 = arith.constant 0 : index
    %854 = vector.load %arg6[%c38_282, %c0_283, %c0_284] : memref<40x8x108xf32, #tpu.memory_space<vmem>>, vector<1x8x108xf32>
    %855 = vector.shape_cast %854 : vector<1x8x108xf32> to vector<8x108xf32>
    %856 = vector.shape_cast %855 : vector<8x108xf32> to vector<1x8x108xf32>
    %857 = vector.broadcast %856 : vector<1x8x108xf32> to vector<2x8x108xf32>
    %858 = arith.mulf %853, %857 : vector<2x8x108xf32>
    %859 = arith.addf %831, %858 : vector<2x8x108xf32>
    %860 = vector.extract_strided_slice %590 {offsets = [0, 0, 4], sizes = [2, 8, 108], strides = [1, 1, 1]} : vector<2x8x112xf32> to vector<2x8x108xf32>
    %c39_285 = arith.constant 39 : index
    %c0_286 = arith.constant 0 : index
    %c0_287 = arith.constant 0 : index
    %861 = vector.load %arg6[%c39_285, %c0_286, %c0_287] : memref<40x8x108xf32, #tpu.memory_space<vmem>>, vector<1x8x108xf32>
    %862 = vector.shape_cast %861 : vector<1x8x108xf32> to vector<8x108xf32>
    %863 = vector.shape_cast %862 : vector<8x108xf32> to vector<1x8x108xf32>
    %864 = vector.broadcast %863 : vector<1x8x108xf32> to vector<2x8x108xf32>
    %865 = arith.mulf %860, %864 : vector<2x8x108xf32>
    %866 = arith.addf %838, %865 : vector<2x8x108xf32>
    %867 = arith.addf %845, %852 : vector<2x8x108xf32>
    %868 = arith.addf %859, %866 : vector<2x8x108xf32>
    %869 = arith.addf %867, %868 : vector<2x8x108xf32>
    %c0_288 = arith.constant 0 : index
    %c0_289 = arith.constant 0 : index
    %870 = vector.load %arg7[%c0_288, %c0_289] : memref<8x1xf32, #tpu.memory_space<vmem>>, vector<8x1xf32>
    %871 = vector.shape_cast %870 : vector<8x1xf32> to vector<1x8x1xf32>
    %872 = vector.broadcast %871 : vector<1x8x1xf32> to vector<2x8x108xf32>
    %873 = arith.addf %869, %872 : vector<2x8x108xf32>
    %874 = vector.shape_cast %873 : vector<2x8x108xf32> to vector<16x108xf32>
    %875 = arith.truncf %874 : vector<16x108xf32> to vector<16x108xbf16>
    %876 = arith.extf %875 : vector<16x108xbf16> to vector<16x108xf32>
    %877 = arith.subf %874, %876 : vector<16x108xf32>
    %878 = arith.truncf %877 : vector<16x108xf32> to vector<16x108xbf16>
    %879 = tpu.iota {dimensions = array<i32: 0>} : vector<108x27xi32>
    %880 = tpu.iota {dimensions = array<i32: 1>} : vector<108x27xi32>
    %c4_i32_290 = arith.constant 4 : i32
    %881 = vector.broadcast %c4_i32_290 : i32 to vector<108x27xi32>
    %882 = arith.muli %881, %880 : vector<108x27xi32>
    %883 = arith.subi %879, %882 : vector<108x27xi32>
    %c0_i32_291 = arith.constant 0 : i32
    %884 = vector.broadcast %c0_i32_291 : i32 to vector<108x27xi32>
    %885 = arith.cmpi eq, %883, %884 : vector<108x27xi32>
    %cst_292 = arith.constant 1.000000e+00 : f32
    %cst_293 = arith.constant 0.000000e+00 : f32
    %886 = vector.broadcast %cst_292 : f32 to vector<108x27xf32>
    %887 = vector.broadcast %cst_293 : f32 to vector<108x27xf32>
    %888 = arith.select %885, %886, %887 : vector<108x27xi1>, vector<108x27xf32>
    %889 = arith.truncf %888 : vector<108x27xf32> to vector<108x27xbf16>
    %cst_294 = arith.constant dense<0.000000e+00> : vector<16x27xf32>
    %890 = tpu.matmul %875, %889, %cst_294 {dimension_numbers = #tpu.dot_dimension_numbers<[1], [0], [0], [1], [0, 0, 1, 1], [], []>} : vector<16x108xbf16>, vector<108x27xbf16>, vector<16x27xf32> -> vector<16x27xf32>
    %cst_295 = arith.constant dense<0.000000e+00> : vector<16x27xf32>
    %891 = tpu.matmul %878, %889, %cst_295 {dimension_numbers = #tpu.dot_dimension_numbers<[1], [0], [0], [1], [0, 0, 1, 1], [], []>} : vector<16x108xbf16>, vector<108x27xbf16>, vector<16x27xf32> -> vector<16x27xf32>
    %892 = arith.addf %890, %891 : vector<16x27xf32>
    %c1_i32_296 = arith.constant 1 : i32
    %893 = vector.broadcast %c1_i32_296 : i32 to vector<108x27xi32>
    %894 = arith.cmpi eq, %883, %893 : vector<108x27xi32>
    %cst_297 = arith.constant 1.000000e+00 : f32
    %cst_298 = arith.constant 0.000000e+00 : f32
    %895 = vector.broadcast %cst_297 : f32 to vector<108x27xf32>
    %896 = vector.broadcast %cst_298 : f32 to vector<108x27xf32>
    %897 = arith.select %894, %895, %896 : vector<108x27xi1>, vector<108x27xf32>
    %898 = arith.truncf %897 : vector<108x27xf32> to vector<108x27xbf16>
    %cst_299 = arith.constant dense<0.000000e+00> : vector<16x27xf32>
    %899 = tpu.matmul %875, %898, %cst_299 {dimension_numbers = #tpu.dot_dimension_numbers<[1], [0], [0], [1], [0, 0, 1, 1], [], []>} : vector<16x108xbf16>, vector<108x27xbf16>, vector<16x27xf32> -> vector<16x27xf32>
    %cst_300 = arith.constant dense<0.000000e+00> : vector<16x27xf32>
    %900 = tpu.matmul %878, %898, %cst_300 {dimension_numbers = #tpu.dot_dimension_numbers<[1], [0], [0], [1], [0, 0, 1, 1], [], []>} : vector<16x108xbf16>, vector<108x27xbf16>, vector<16x27xf32> -> vector<16x27xf32>
    %901 = arith.addf %899, %900 : vector<16x27xf32>
    %902 = arith.maximumf %892, %901 : vector<16x27xf32>
    %c2_i32_301 = arith.constant 2 : i32
    %903 = vector.broadcast %c2_i32_301 : i32 to vector<108x27xi32>
    %904 = arith.cmpi eq, %883, %903 : vector<108x27xi32>
    %cst_302 = arith.constant 1.000000e+00 : f32
    %cst_303 = arith.constant 0.000000e+00 : f32
    %905 = vector.broadcast %cst_302 : f32 to vector<108x27xf32>
    %906 = vector.broadcast %cst_303 : f32 to vector<108x27xf32>
    %907 = arith.select %904, %905, %906 : vector<108x27xi1>, vector<108x27xf32>
    %908 = arith.truncf %907 : vector<108x27xf32> to vector<108x27xbf16>
    %cst_304 = arith.constant dense<0.000000e+00> : vector<16x27xf32>
    %909 = tpu.matmul %875, %908, %cst_304 {dimension_numbers = #tpu.dot_dimension_numbers<[1], [0], [0], [1], [0, 0, 1, 1], [], []>} : vector<16x108xbf16>, vector<108x27xbf16>, vector<16x27xf32> -> vector<16x27xf32>
    %cst_305 = arith.constant dense<0.000000e+00> : vector<16x27xf32>
    %910 = tpu.matmul %878, %908, %cst_305 {dimension_numbers = #tpu.dot_dimension_numbers<[1], [0], [0], [1], [0, 0, 1, 1], [], []>} : vector<16x108xbf16>, vector<108x27xbf16>, vector<16x27xf32> -> vector<16x27xf32>
    %911 = arith.addf %909, %910 : vector<16x27xf32>
    %912 = arith.maximumf %902, %911 : vector<16x27xf32>
    %c3_i32_306 = arith.constant 3 : i32
    %913 = vector.broadcast %c3_i32_306 : i32 to vector<108x27xi32>
    %914 = arith.cmpi eq, %883, %913 : vector<108x27xi32>
    %cst_307 = arith.constant 1.000000e+00 : f32
    %cst_308 = arith.constant 0.000000e+00 : f32
    %915 = vector.broadcast %cst_307 : f32 to vector<108x27xf32>
    %916 = vector.broadcast %cst_308 : f32 to vector<108x27xf32>
    %917 = arith.select %914, %915, %916 : vector<108x27xi1>, vector<108x27xf32>
    %918 = arith.truncf %917 : vector<108x27xf32> to vector<108x27xbf16>
    %cst_309 = arith.constant dense<0.000000e+00> : vector<16x27xf32>
    %919 = tpu.matmul %875, %918, %cst_309 {dimension_numbers = #tpu.dot_dimension_numbers<[1], [0], [0], [1], [0, 0, 1, 1], [], []>} : vector<16x108xbf16>, vector<108x27xbf16>, vector<16x27xf32> -> vector<16x27xf32>
    %cst_310 = arith.constant dense<0.000000e+00> : vector<16x27xf32>
    %920 = tpu.matmul %878, %918, %cst_310 {dimension_numbers = #tpu.dot_dimension_numbers<[1], [0], [0], [1], [0, 0, 1, 1], [], []>} : vector<16x108xbf16>, vector<108x27xbf16>, vector<16x27xf32> -> vector<16x27xf32>
    %921 = arith.addf %919, %920 : vector<16x27xf32>
    %922 = arith.maximumf %912, %921 : vector<16x27xf32>
    %923 = vector.shape_cast %922 : vector<16x27xf32> to vector<2x8x27xf32>
    %c0_311 = arith.constant 0 : index
    %c0_312 = arith.constant 0 : index
    %924 = vector.load %arg8[%c0_311, %c0_312] : memref<8x27xf32, #tpu.memory_space<vmem>>, vector<8x27xf32>
    %c0_313 = arith.constant 0 : index
    %c0_314 = arith.constant 0 : index
    %925 = vector.load %arg9[%c0_313, %c0_314] : memref<8x27xf32, #tpu.memory_space<vmem>>, vector<8x27xf32>
    %cst_315 = arith.constant dense<0.000000e+00> : vector<2x8xf32>
    %926 = vector.multi_reduction <add>, %923, %cst_315 [2] : vector<2x8x27xf32> to vector<2x8xf32>
    %927 = vector.shape_cast %926 : vector<2x8xf32> to vector<2x8x1xf32>
    %cst_316 = arith.constant 0.0370370373 : f32
    %928 = vector.broadcast %cst_316 : f32 to vector<2x8x1xf32>
    %929 = arith.mulf %927, %928 : vector<2x8x1xf32>
    %930 = vector.broadcast %929 : vector<2x8x1xf32> to vector<2x8x27xf32>
    %931 = arith.subf %923, %930 : vector<2x8x27xf32>
    %932 = arith.mulf %931, %931 : vector<2x8x27xf32>
    %cst_317 = arith.constant dense<0.000000e+00> : vector<2x8xf32>
    %933 = vector.multi_reduction <add>, %932, %cst_317 [2] : vector<2x8x27xf32> to vector<2x8xf32>
    %934 = vector.shape_cast %933 : vector<2x8xf32> to vector<2x8x1xf32>
    %cst_318 = arith.constant 0.0384615399 : f32
    %935 = vector.broadcast %cst_318 : f32 to vector<2x8x1xf32>
    %936 = arith.mulf %934, %935 : vector<2x8x1xf32>
    %937 = math.sqrt %936 : vector<2x8x1xf32>
    %cst_319 = arith.constant 9.99999997E-7 : f32
    %938 = vector.broadcast %cst_319 : f32 to vector<2x8x1xf32>
    %939 = arith.addf %937, %938 : vector<2x8x1xf32>
    %940 = tpu.reciprocal %939 {approx = true} : vector<2x8x1xf32> -> vector<2x8x1xf32>
    %941 = arith.mulf %939, %940 : vector<2x8x1xf32>
    %cst_320 = arith.constant 2.000000e+00 : f32
    %942 = vector.broadcast %cst_320 : f32 to vector<2x8x1xf32>
    %943 = arith.subf %942, %941 : vector<2x8x1xf32>
    %944 = arith.mulf %940, %943 : vector<2x8x1xf32>
    %945 = vector.broadcast %944 : vector<2x8x1xf32> to vector<2x8x27xf32>
    %946 = arith.mulf %931, %945 : vector<2x8x27xf32>
    %947 = vector.shape_cast %924 : vector<8x27xf32> to vector<1x8x27xf32>
    %948 = vector.broadcast %947 : vector<1x8x27xf32> to vector<2x8x27xf32>
    %949 = arith.mulf %948, %946 : vector<2x8x27xf32>
    %950 = vector.shape_cast %925 : vector<8x27xf32> to vector<1x8x27xf32>
    %951 = vector.broadcast %950 : vector<1x8x27xf32> to vector<2x8x27xf32>
    %952 = arith.addf %949, %951 : vector<2x8x27xf32>
    %cst_321 = arith.constant 0.000000e+00 : f32
    %953 = vector.broadcast %cst_321 : f32 to vector<2x8x27xf32>
    %954 = arith.maximumf %952, %953 : vector<2x8x27xf32>
    %c0_322 = arith.constant 0 : index
    %c0_323 = arith.constant 0 : index
    %c0_324 = arith.constant 0 : index
    %955 = vector.load %arg10[%c0_322, %c0_323, %c0_324] : memref<2x8x27xf32, #tpu.memory_space<vmem>>, vector<2x8x27xf32>
    tpu.vector_store %arg10[%c0_322, %c0_323, %c0_324], %954 {strides = array<i32>} : memref<2x8x27xf32, #tpu.memory_space<vmem>>, vector<2x8x27xf32>,
    return
  }
}

</mosaic_0001>

<llo_original>
// kernel: tpu_custom_call.1
$region0: #{tpu_custom_call.1}
  #allocation0 [shape = 'u32[]', space=smem, size = 0x4, offset = 0x4, fixed_abs, tag = 'smem constant byte address 0x4 - core index']
  #allocation1 [shape = 'u32[144,128]{1,0:T(1,128)}', space=vmem, size = 0x12000, scoped, tag = 'internal scratch']
  %s0 = inlined_call_operand.hbm [shape: f32[2,512], index: 0, kind: input, shape index: {}]
  %s1 = inlined_call_operand.hbm [shape: f32[1,512], index: 1, kind: input, shape index: {}]
  %s2 = inlined_call_operand.hbm [shape: f32[1,512], index: 2, kind: input, shape index: {}]
  %s3 = inlined_call_operand.hbm [shape: f32[65,8,448], index: 3, kind: input, shape index: {}]
  %s4 = inlined_call_operand.hbm [shape: f32[8,112], index: 4, kind: input, shape index: {}]
  %s5 = inlined_call_operand.hbm [shape: f32[8,112], index: 5, kind: input, shape index: {}]
  %s6 = inlined_call_operand.hbm [shape: f32[40,8,108], index: 6, kind: input, shape index: {}]
  %s7 = inlined_call_operand.vmem [shape: f32[8,1], index: 7, kind: input, shape index: {}]
  %s8 = inlined_call_operand.hbm [shape: f32[8,27], index: 8, kind: input, shape index: {}]
  %s9 = inlined_call_operand.hbm [shape: f32[8,27], index: 9, kind: input, shape index: {}]
  %s10 = inlined_call_operand.hbm [shape: f32[2,8,27], index: 10, kind: output, shape index: {}]
  %s11 = sld [smem:[#allocation0]]
  $region86: #{tpu_custom_call.1} parent=0
    _
  %s13 = ssub.s32 1, %s11
  %s14 = scalar_select 0, %s13, %s11
  $region1: #{tpu_custom_call.1} parent=0
    #allocation2 [shape = 'u8[4096]{0}', space=vmem, size = 0x1000, scoped, tag = 'input window, operand 0, single buffered']
    #allocation3 [shape = 's32[1]{0}', space=sflag, size = 0x4, scoped, tag = 'scoped memory for tpu_custom_call.1']
    #allocation4 [shape = 's32[1]{0}', space=sflag, size = 0x4, scoped, tag = 'scoped memory for tpu_custom_call.1']
    #allocation5 [shape = 'u8[2048]{0}', space=vmem, size = 0x800, scoped, tag = 'input window, operand 1, single buffered']
    #allocation6 [shape = 's32[1]{0}', space=sflag, size = 0x4, scoped, tag = 'scoped memory for tpu_custom_call.1']
    #allocation7 [shape = 'u8[2048]{0}', space=vmem, size = 0x800, scoped, tag = 'input window, operand 2, single buffered']
    #allocation8 [shape = 'u8[1064960]{0}', space=vmem, size = 0x104000, scoped, tag = 'input window, operand 3, single buffered']
    #allocation9 [shape = 's32[1]{0}', space=sflag, size = 0x4, scoped, tag = 'scoped memory for tpu_custom_call.1']
    #allocation10 [shape = 'u8[4096]{0}', space=vmem, size = 0x1000, scoped, tag = 'input window, operand 4, single buffered']
    #allocation11 [shape = 'u8[4096]{0}', space=vmem, size = 0x1000, scoped, tag = 'input window, operand 5, single buffered']
    #allocation12 [shape = 's32[1]{0}', space=sflag, size = 0x4, scoped, tag = 'scoped memory for tpu_custom_call.1']
    #allocation13 [shape = 'u8[163840]{0}', space=vmem, size = 0x28000, scoped, tag = 'input window, operand 6, single buffered']
    #allocation14 [shape = 'u8[4096]{0}', space=vmem, size = 0x1000, scoped, tag = 'input window, operand 8, single buffered']
    #allocation15 [shape = 's32[1]{0}', space=sflag, size = 0x4, scoped, tag = 'scoped memory for tpu_custom_call.1']
    #allocation16 [shape = 'u8[4096]{0}', space=vmem, size = 0x1000, scoped, tag = 'input window, operand 9, single buffered']
    #allocation17 [shape = 'u8[8192]{0}', space=vmem, size = 0x2000, scoped, tag = 'output window, operand 0, single buffered']
    %15 = vsyncpa [#allocation3], 0
    %16 = vsyncpa [#allocation6], 0
    %17 = vsyncpa [#allocation9], 0
    %18 = vsyncpa [#allocation12], 0
    %19 = vsyncpa [#allocation15], 0
    %20 = vsyncpa [#allocation4], 0
    // Predicated region
    $region2: #{tpu_custom_call.1} parent=1 // pred_check
      _
    $region3: #{tpu_custom_call.1} parent=1 // pred_check_branch
      %22 = sbr.rel (0) target = $region5
    $region4: #{tpu_custom_call.1} parent=1 // pred_region
      %s24 = ssub.s32 128, 128
      %25 = vsyncadd [#allocation3], %s24
      %s27 = sshll.u32 [#allocation2], 4
      %s28 = int_to_ptr.vmem [resolvable:$true] %s27
      %30 = dma.hbm_to_vmem [thread:$0]  %s0, 128, %s28, [#allocation3]
    $region5: #{tpu_custom_call.1} parent=1 // pred_fallthru
      _
    // Predicated region
    $region6: #{tpu_custom_call.1} parent=1 // pred_check
      _
    $region7: #{tpu_custom_call.1} parent=1 // pred_check_branch
      %32 = sbr.rel (0) target = $region9
    $region8: #{tpu_custom_call.1} parent=1 // pred_region
      %s34 = ssub.s32 64, 64
      %35 = vsyncadd [#allocation6], %s34
      %s37 = sshll.u32 [#allocation5], 4
      %s38 = int_to_ptr.vmem [resolvable:$true] %s37
      %40 = dma.hbm_to_vmem [thread:$0]  %s1, 64, %s38, [#allocation6]
    $region9: #{tpu_custom_call.1} parent=1 // pred_fallthru
      _
    // Predicated region
    $region10: #{tpu_custom_call.1} parent=1 // pred_check
      _
    $region11: #{tpu_custom_call.1} parent=1 // pred_check_branch
      %42 = sbr.rel (0) target = $region13
    $region12: #{tpu_custom_call.1} parent=1 // pred_region
      %s44 = ssub.s32 64, 64
      %45 = vsyncadd [#allocation6], %s44
      %s47 = sshll.u32 [#allocation7], 4
      %s48 = int_to_ptr.vmem [resolvable:$true] %s47
      %50 = dma.hbm_to_vmem [thread:$0]  %s2, 64, %s48, [#allocation6]
    $region13: #{tpu_custom_call.1} parent=1 // pred_fallthru
      _
    // Predicated region
    $region14: #{tpu_custom_call.1} parent=1 // pred_check
      _
    $region15: #{tpu_custom_call.1} parent=1 // pred_check_branch
      %52 = sbr.rel (0) target = $region17
    $region16: #{tpu_custom_call.1} parent=1 // pred_region
      %s54 = ssub.s32 33280, 33280
      %55 = vsyncadd [#allocation9], %s54
      %s56 = sshll.u32 [#allocation8], 4
      %s57 = int_to_ptr.vmem [resolvable:$true] %s56
      %62 = dma.hbm_to_vmem [thread:$0]  %s3, 33280, %s57, [#allocation9], 512, 512, 32
    $region17: #{tpu_custom_call.1} parent=1 // pred_fallthru
      _
    // Predicated region
    $region18: #{tpu_custom_call.1} parent=1 // pred_check
      _
    $region19: #{tpu_custom_call.1} parent=1 // pred_check_branch
      %64 = sbr.rel (0) target = $region21
    $region20: #{tpu_custom_call.1} parent=1 // pred_region
      %s66 = ssub.s32 128, 128
      %67 = vsyncadd [#allocation9], %s66
      %s69 = sshll.u32 [#allocation10], 4
      %s70 = int_to_ptr.vmem [resolvable:$true] %s69
      %72 = dma.hbm_to_vmem [thread:$0]  %s4, 128, %s70, [#allocation9]
    $region21: #{tpu_custom_call.1} parent=1 // pred_fallthru
      _
    // Predicated region
    $region22: #{tpu_custom_call.1} parent=1 // pred_check
      _
    $region23: #{tpu_custom_call.1} parent=1 // pred_check_branch
      %74 = sbr.rel (0) target = $region25
    $region24: #{tpu_custom_call.1} parent=1 // pred_region
      %s76 = ssub.s32 128, 128
      %77 = vsyncadd [#allocation12], %s76
      %s79 = sshll.u32 [#allocation11], 4
      %s80 = int_to_ptr.vmem [resolvable:$true] %s79
      %82 = dma.hbm_to_vmem [thread:$0]  %s5, 128, %s80, [#allocation12]
    $region25: #{tpu_custom_call.1} parent=1 // pred_fallthru
      _
    // Predicated region
    $region26: #{tpu_custom_call.1} parent=1 // pred_check
      _
    $region27: #{tpu_custom_call.1} parent=1 // pred_check_branch
      %84 = sbr.rel (0) target = $region29
    $region28: #{tpu_custom_call.1} parent=1 // pred_region
      %s86 = ssub.s32 5120, 5120
      %87 = vsyncadd [#allocation12], %s86
      %s88 = sshll.u32 [#allocation13], 4
      %s89 = int_to_ptr.vmem [resolvable:$true] %s88
      %94 = dma.hbm_to_vmem [thread:$0]  %s6, 5120, %s89, [#allocation12], 128, 128, 8
    $region29: #{tpu_custom_call.1} parent=1 // pred_fallthru
      _
    // Predicated region
    $region30: #{tpu_custom_call.1} parent=1 // pred_check
      _
    $region31: #{tpu_custom_call.1} parent=1 // pred_check_branch
      %96 = sbr.rel (0) target = $region33
    $region32: #{tpu_custom_call.1} parent=1 // pred_region
      _
    $region33: #{tpu_custom_call.1} parent=1 // pred_fallthru
      _
    // Predicated region
    $region34: #{tpu_custom_call.1} parent=1 // pred_check
      _
    $region35: #{tpu_custom_call.1} parent=1 // pred_check_branch
      %98 = sbr.rel (0) target = $region37
    $region36: #{tpu_custom_call.1} parent=1 // pred_region
      %s100 = ssub.s32 128, 128
      %101 = vsyncadd [#allocation15], %s100
      %s103 = sshll.u32 [#allocation14], 4
      %s104 = int_to_ptr.vmem [resolvable:$true] %s103
      %106 = dma.hbm_to_vmem [thread:$0]  %s8, 128, %s104, [#allocation15]
    $region37: #{tpu_custom_call.1} parent=1 // pred_fallthru
      _
    // Predicated region
    $region38: #{tpu_custom_call.1} parent=1 // pred_check
      _
    $region39: #{tpu_custom_call.1} parent=1 // pred_check_branch
      %108 = sbr.rel (0) target = $region41
    $region40: #{tpu_custom_call.1} parent=1 // pred_region
      %s110 = ssub.s32 128, 128
      %111 = vsyncadd [#allocation15], %s110
      %s113 = sshll.u32 [#allocation16], 4
      %s114 = int_to_ptr.vmem [resolvable:$true] %s113
      %116 = dma.hbm_to_vmem [thread:$0]  %s9, 128, %s114, [#allocation15]
    $region41: #{tpu_custom_call.1} parent=1 // pred_fallthru
      _
    // Predicated region
    $region42: #{tpu_custom_call.1} parent=1 // pred_check
      _
    $region43: #{tpu_custom_call.1} parent=1 // pred_check_branch
      %118 = sbr.rel (0) target = $region45
    $region44: #{tpu_custom_call.1} parent=1 // pred_region
      %119 = dma.done [#allocation3], 128
    $region45: #{tpu_custom_call.1} parent=1 // pred_fallthru
      _
    // Predicated region
    $region46: #{tpu_custom_call.1} parent=1 // pred_check
      _
    $region47: #{tpu_custom_call.1} parent=1 // pred_check_branch
      %121 = sbr.rel (0) target = $region49
    $region48: #{tpu_custom_call.1} parent=1 // pred_region
      %122 = dma.done [#allocation6], 64
    $region49: #{tpu_custom_call.1} parent=1 // pred_fallthru
      _
    // Predicated region
    $region50: #{tpu_custom_call.1} parent=1 // pred_check
      _
    $region51: #{tpu_custom_call.1} parent=1 // pred_check_branch
      %124 = sbr.rel (0) target = $region53
    $region52: #{tpu_custom_call.1} parent=1 // pred_region
      %125 = dma.done [#allocation6], 64
    $region53: #{tpu_custom_call.1} parent=1 // pred_fallthru
      _
    // Predicated region
    $region54: #{tpu_custom_call.1} parent=1 // pred_check
      _
    $region55: #{tpu_custom_call.1} parent=1 // pred_check_branch
      %127 = sbr.rel (0) target = $region57
    $region56: #{tpu_custom_call.1} parent=1 // pred_region
      %128 = dma.done [#allocation9], 33280
    $region57: #{tpu_custom_call.1} parent=1 // pred_fallthru
      _
    // Predicated region
    $region58: #{tpu_custom_call.1} parent=1 // pred_check
      _
    $region59: #{tpu_custom_call.1} parent=1 // pred_check_branch
      %130 = sbr.rel (0) target = $region61
    $region60: #{tpu_custom_call.1} parent=1 // pred_region
      %131 = dma.done [#allocation9], 128
    $region61: #{tpu_custom_call.1} parent=1 // pred_fallthru
      _
    // Predicated region
    $region62: #{tpu_custom_call.1} parent=1 // pred_check
      _
    $region63: #{tpu_custom_call.1} parent=1 // pred_check_branch
      %133 = sbr.rel (0) target = $region65
    $region64: #{tpu_custom_call.1} parent=1 // pred_region
      %134 = dma.done [#allocation12], 128
    $region65: #{tpu_custom_call.1} parent=1 // pred_fallthru
      _
    // Predicated region
    $region66: #{tpu_custom_call.1} parent=1 // pred_check
      _
    $region67: #{tpu_custom_call.1} parent=1 // pred_check_branch
      %136 = sbr.rel (0) target = $region69
    $region68: #{tpu_custom_call.1} parent=1 // pred_region
      %137 = dma.done [#allocation12], 5120
    $region69: #{tpu_custom_call.1} parent=1 // pred_fallthru
      _
    // Predicated region
    $region70: #{tpu_custom_call.1} parent=1 // pred_check
      _
    $region71: #{tpu_custom_call.1} parent=1 // pred_check_branch
      %139 = sbr.rel (0) target = $region73
    $region72: #{tpu_custom_call.1} parent=1 // pred_region
      %140 = dma.done [#allocation15], 128
    $region73: #{tpu_custom_call.1} parent=1 // pred_fallthru
      _
    // Predicated region
    $region74: #{tpu_custom_call.1} parent=1 // pred_check
      _
    $region75: #{tpu_custom_call.1} parent=1 // pred_check_branch
      %142 = sbr.rel (0) target = $region77
    $region76: #{tpu_custom_call.1} parent=1 // pred_region
      %143 = dma.done [#allocation15], 128
    $region77: #{tpu_custom_call.1} parent=1 // pred_fallthru
      _
    %v145 = vld [vmem:[#allocation2] sm:$0xff]
    %v146 = vld [vmem:[#allocation5] sm:$0xf]
    %v147 = vld [vmem:[#allocation7] sm:$0xf]
    %v149 = vcombine.high %v145, %v145
    %v151 = vunpack.c.l.s4 1983009808
    %v152 = vunpack.c.0.s8 %v151
    %v153 = vlaneseq
    %v154 = vshrl.u32 %v153, 7
    %v155 = vsub.s32 %v152, %v154
    %v156 = vrot.slane %v145, %v155
    %v158 = vunpack.c.l.s4 1983009808
    %v159 = vunpack.c.0.s8 %v158
    %v160 = vlaneseq
    %v161 = vshrl.u32 %v160, 7
    %v162 = vsub.s32 %v159, %v161
    %v163 = vrot.slane %v149, %v162
    %v164 = vcombine.high %v156, %v156
    %v165 = vcombine.high %v163, %v163
    %vm170 = vcmask 1041408
    %v171 = vsel %vm170, %v156, 0.0
    %v172 = vsel %vm170, %v164, 0.0
    %v173 = vadd.f32 %v171, %v172
    %v174 = vsel %vm170, %v163, 0.0
    %v175 = vadd.f32 %v173, %v174
    %v176 = vsel %vm170, %v165, 0.0
    %v177 = vadd.f32 %v175, %v176
    %178 = vadd.xlane.f32.xlu0 %v177
    %v179 = vpop.xlane.xlu0 %178
    %v180 = vmul.f32 %v179, 0.001953125
    %v183 = vunpack.c.l.s4 269488144
    %v184 = vunpack.c.0.s8 %v183
    %v185 = vlaneseq
    %v186 = vshrl.u32 %v185, 7
    %v187 = vsub.s32 %v184, %v186
    %v188 = vrot.slane %v180, %v187
    %v190 = vsub.f32 %v145, %v188
    %v191 = vmul.f32 %v190, %v190
    %v193 = vcombine.high %v191, %v191
    %v195 = vunpack.c.l.s4 1983009808
    %v196 = vunpack.c.0.s8 %v195
    %v197 = vlaneseq
    %v198 = vshrl.u32 %v197, 7
    %v199 = vsub.s32 %v196, %v198
    %v200 = vrot.slane %v191, %v199
    %v202 = vunpack.c.l.s4 1983009808
    %v203 = vunpack.c.0.s8 %v202
    %v204 = vlaneseq
    %v205 = vshrl.u32 %v204, 7
    %v206 = vsub.s32 %v203, %v205
    %v207 = vrot.slane %v193, %v206
    %v208 = vcombine.high %v200, %v200
    %v209 = vcombine.high %v207, %v207
    %v214 = vsel %vm170, %v200, 0.0
    %v215 = vsel %vm170, %v208, 0.0
    %v216 = vadd.f32 %v214, %v215
    %v217 = vsel %vm170, %v207, 0.0
    %v218 = vadd.f32 %v216, %v217
    %v219 = vsel %vm170, %v209, 0.0
    %v220 = vadd.f32 %v218, %v219
    %221 = vadd.xlane.f32.xlu0 %v220
    %v222 = vpop.xlane.xlu0 %221
    %v223 = vmul.f32 %v222, 0.0019569471
    %v224 = vrsqrt.pop %v223
    %v225 = vmul.f32 %v223, %v224
    %vm226 = vcmp.eq.f32.partialorder %v223, inf
    %v227 = vsel %vm226, %v223, %v225
    %vm228 = vcmp.eq.f32.partialorder %v223, 0.0
    %v229 = vand.u32 %v223, 2147483648
    %v230 = vsel %vm228, %v229, %v227
    %v231 = vadd.f32 %v230, 1e-06
    %v232 = vrcp.pop %v231
    %v233 = vmul.f32 %v231, %v232
    %v234 = vsub.f32 2.0, %v233
    %v235 = vmul.f32 %v232, %v234
    %v238 = vunpack.c.l.s4 269488144
    %v239 = vunpack.c.0.s8 %v238
    %v240 = vlaneseq
    %v241 = vshrl.u32 %v240, 7
    %v242 = vsub.s32 %v239, %v241
    %v243 = vrot.slane %v235, %v242
    %v245 = vmul.f32 %v190, %v243
    %v247 = vlaneseq
    %v248 = vshrl.u32 %v247, 7
    %v249 = vsub.s32 0, %v248
    %v250 = vrot.slane %v146, %v249
    %v251 = vlaneseq
    %v252 = vshrl.u32 %v251, 7
    %v253 = vsub.s32 1, %v252
    %v254 = vrot.slane %v146, %v253
    %v255 = vlaneseq
    %v256 = vshrl.u32 %v255, 7
    %v257 = vsub.s32 2, %v256
    %v258 = vrot.slane %v146, %v257
    %v259 = vlaneseq
    %v260 = vshrl.u32 %v259, 7
    %v261 = vsub.s32 3, %v260
    %v262 = vrot.slane %v146, %v261
    %v268 = vcombine.high %v245, %v245
    %v270 = vunpack.c.l.s4 1983009808
    %v271 = vunpack.c.0.s8 %v270
    %v272 = vlaneseq
    %v273 = vshrl.u32 %v272, 7
    %v274 = vsub.s32 %v271, %v273
    %v275 = vrot.slane %v245, %v274
    %v277 = vunpack.c.l.s4 1983009808
    %v278 = vunpack.c.0.s8 %v277
    %v279 = vlaneseq
    %v280 = vshrl.u32 %v279, 7
    %v281 = vsub.s32 %v278, %v280
    %v282 = vrot.slane %v268, %v281
    %v283 = vcombine.high %v275, %v275
    %v284 = vcombine.high %v282, %v282
    %v289 = vmul.f32 %v250, %v275
    %v290 = vmul.f32 %v254, %v283
    %v291 = vmul.f32 %v258, %v282
    %v292 = vmul.f32 %v262, %v284
    %v294 = vlaneseq
    %v295 = vshrl.u32 %v294, 7
    %v296 = vsub.s32 0, %v295
    %v297 = vrot.slane %v147, %v296
    %v298 = vlaneseq
    %v299 = vshrl.u32 %v298, 7
    %v300 = vsub.s32 1, %v299
    %v301 = vrot.slane %v147, %v300
    %v302 = vlaneseq
    %v303 = vshrl.u32 %v302, 7
    %v304 = vsub.s32 2, %v303
    %v305 = vrot.slane %v147, %v304
    %v306 = vlaneseq
    %v307 = vshrl.u32 %v306, 7
    %v308 = vsub.s32 3, %v307
    %v309 = vrot.slane %v147, %v308
    %v314 = vadd.f32 %v289, %v297
    %v315 = vadd.f32 %v290, %v301
    %v316 = vadd.f32 %v291, %v305
    %v317 = vadd.f32 %v292, %v309
    %v322 = vcombine.low %v314, %v315
    %v323 = vcombine.low %v316, %v317
    %v325 = vunpack.c.l.s4 1966171168
    %v326 = vunpack.c.0.s8 %v325
    %v327 = vlaneseq
    %v328 = vshrl.u32 %v327, 7
    %v329 = vsub.s32 %v326, %v328
    %v330 = vrot.slane %v322, %v329
    %v332 = vunpack.c.l.s4 1966171168
    %v333 = vunpack.c.0.s8 %v332
    %v334 = vlaneseq
    %v335 = vshrl.u32 %v334, 7
    %v336 = vsub.s32 %v333, %v335
    %v337 = vrot.slane %v323, %v336
    %v338 = vcombine.low %v330, %v337
    %v339 = vcombine.high %v330, %v337
    %v341 = vunpack.c.l.s4 1966171168
    %v342 = vunpack.c.0.s8 %v341
    %v343 = vlaneseq
    %v344 = vshrl.u32 %v343, 7
    %v345 = vsub.s32 %v342, %v344
    %v346 = vrot.slane %v338, %v345
    %v348 = vunpack.c.l.s4 1966171168
    %v349 = vunpack.c.0.s8 %v348
    %v350 = vlaneseq
    %v351 = vshrl.u32 %v350, 7
    %v352 = vsub.s32 %v349, %v351
    %v353 = vrot.slane %v339, %v352
    %v354 = vlaneseq
    %v355 = vshrl.u32 %v354, 7
    %v356 = vsub.s32 0, %v355
    %v357 = vrot.slane %v346, %v356
    %v358 = vlaneseq
    %v359 = vshrl.u32 %v358, 7
    %v360 = vsub.s32 1, %v359
    %v361 = vrot.slane %v346, %v360
    %v362 = vlaneseq
    %v363 = vshrl.u32 %v362, 7
    %v364 = vsub.s32 2, %v363
    %v365 = vrot.slane %v346, %v364
    %v366 = vlaneseq
    %v367 = vshrl.u32 %v366, 7
    %v368 = vsub.s32 3, %v367
    %v369 = vrot.slane %v346, %v368
    %v370 = vlaneseq
    %v371 = vshrl.u32 %v370, 7
    %v372 = vsub.s32 0, %v371
    %v373 = vrot.slane %v353, %v372
    %v374 = vlaneseq
    %v375 = vshrl.u32 %v374, 7
    %v376 = vsub.s32 1, %v375
    %v377 = vrot.slane %v353, %v376
    %v378 = vlaneseq
    %v379 = vshrl.u32 %v378, 7
    %v380 = vsub.s32 2, %v379
    %v381 = vrot.slane %v353, %v380
    %v382 = vlaneseq
    %v383 = vshrl.u32 %v382, 7
    %v384 = vsub.s32 3, %v383
    %v385 = vrot.slane %v353, %v384
    %v394 = vld [vmem:[#allocation8] sm:$0xff]
    %v395 = vld [vmem:[#allocation8 + $0x8] sm:$0xff]
    %v396 = vld [vmem:[#allocation8 + $0x10] sm:$0xff]
    %v397 = vld [vmem:[#allocation8 + $0x18] sm:$0xff]
    %v398 = vmul.f32 %v357, %v394
    %v399 = vmul.f32 %v361, %v395
    %v400 = vmul.f32 %v365, %v396
    %v401 = vmul.f32 %v369, %v397
    %v402 = vmul.f32 %v373, %v394
    %v403 = vmul.f32 %v377, %v395
    %v404 = vmul.f32 %v381, %v396
    %v405 = vmul.f32 %v385, %v397
    %s406 = scalar_lea.vmem [#allocation8], 32
    %v407 = vld [vmem:[%s406] sm:$0xff]
    %v408 = vld [vmem:[%s406 + $0x8] sm:$0xff]
    %v409 = vld [vmem:[%s406 + $0x10] sm:$0xff]
    %v410 = vld [vmem:[%s406 + $0x18] sm:$0xff]
    %415 = vrot.lane.b32.xlu0 %v407, 1
    %v416 = vpop.permute.xlu0 %415
    %417 = vrot.lane.b32.xlu0 %v408, 1
    %v418 = vpop.permute.xlu0 %417
    %419 = vrot.lane.b32.xlu0 %v409, 1
    %v420 = vpop.permute.xlu0 %419
    %421 = vrot.lane.b32.xlu0 %v410, 1
    %v422 = vpop.permute.xlu0 %421
    %vm423 = vcmask 7168
    %v424 = vsel %vm423, %v416, %v418
    %v425 = vsel %vm423, %v418, %v420
    %v426 = vsel %vm423, %v420, %v422
    %v431 = vmul.f32 %v357, %v416
    %v432 = vmul.f32 %v361, %v424
    %v433 = vmul.f32 %v365, %v425
    %v434 = vmul.f32 %v369, %v426
    %v435 = vmul.f32 %v373, %v416
    %v436 = vmul.f32 %v377, %v424
    %v437 = vmul.f32 %v381, %v425
    %v438 = vmul.f32 %v385, %v426
    %s439 = scalar_lea.vmem [#allocation8], 64
    %v440 = vld [vmem:[%s439] sm:$0xff]
    %v441 = vld [vmem:[%s439 + $0x8] sm:$0xff]
    %v442 = vld [vmem:[%s439 + $0x10] sm:$0xff]
    %v443 = vld [vmem:[%s439 + $0x18] sm:$0xff]
    %448 = vrot.lane.b32.xlu0 %v440, 2
    %v449 = vpop.permute.xlu0 %448
    %450 = vrot.lane.b32.xlu0 %v441, 2
    %v451 = vpop.permute.xlu0 %450
    %452 = vrot.lane.b32.xlu0 %v442, 2
    %v453 = vpop.permute.xlu0 %452
    %454 = vrot.lane.b32.xlu0 %v443, 2
    %v455 = vpop.permute.xlu0 %454
    %vm456 = vcmask 15360
    %v457 = vsel %vm456, %v449, %v451
    %v458 = vsel %vm456, %v451, %v453
    %v459 = vsel %vm456, %v453, %v455
    %v464 = vmul.f32 %v357, %v449
    %v465 = vmul.f32 %v361, %v457
    %v466 = vmul.f32 %v365, %v458
    %v467 = vmul.f32 %v369, %v459
    %v468 = vmul.f32 %v373, %v449
    %v469 = vmul.f32 %v377, %v457
    %v470 = vmul.f32 %v381, %v458
    %v471 = vmul.f32 %v385, %v459
    %480 = vrot.lane.b32.xlu0 %v464, 126
    %v481 = vpop.permute.xlu0 %480
    %482 = vrot.lane.b32.xlu0 %v465, 126
    %v483 = vpop.permute.xlu0 %482
    %484 = vrot.lane.b32.xlu0 %v466, 126
    %v485 = vpop.permute.xlu0 %484
    %486 = vrot.lane.b32.xlu0 %v467, 126
    %v487 = vpop.permute.xlu0 %486
    %488 = vrot.lane.b32.xlu0 %v468, 126
    %v489 = vpop.permute.xlu0 %488
    %490 = vrot.lane.b32.xlu0 %v469, 126
    %v491 = vpop.permute.xlu0 %490
    %492 = vrot.lane.b32.xlu0 %v470, 126
    %v493 = vpop.permute.xlu0 %492
    %494 = vrot.lane.b32.xlu0 %v471, 126
    %v495 = vpop.permute.xlu0 %494
    %vm496 = vcmask 1031168
    %v497 = vsel %vm496, %v481, %v483
    %v498 = vsel %vm496, %v483, %v485
    %v499 = vsel %vm496, %v485, %v487
    %v500 = vsel %vm496, %v489, %v491
    %v501 = vsel %vm496, %v491, %v493
    %v502 = vsel %vm496, %v493, %v495
    %v511 = vadd.f32 %v398, %v497
    %v512 = vadd.f32 %v399, %v498
    %v513 = vadd.f32 %v400, %v499
    %v514 = vadd.f32 %v401, %v487
    %v515 = vadd.f32 %v402, %v500
    %v516 = vadd.f32 %v403, %v501
    %v517 = vadd.f32 %v404, %v502
    %v518 = vadd.f32 %v405, %v495
    %s519 = scalar_lea.vmem [#allocation8], 96
    %v520 = vld [vmem:[%s519] sm:$0xff]
    %v521 = vld [vmem:[%s519 + $0x8] sm:$0xff]
    %v522 = vld [vmem:[%s519 + $0x10] sm:$0xff]
    %v523 = vld [vmem:[%s519 + $0x18] sm:$0xff]
    %528 = vrot.lane.b32.xlu0 %v520, 3
    %v529 = vpop.permute.xlu0 %528
    %530 = vrot.lane.b32.xlu0 %v521, 3
    %v531 = vpop.permute.xlu0 %530
    %532 = vrot.lane.b32.xlu0 %v522, 3
    %v533 = vpop.permute.xlu0 %532
    %534 = vrot.lane.b32.xlu0 %v523, 3
    %v535 = vpop.permute.xlu0 %534
    %vm536 = vcmask 23552
    %v537 = vsel %vm536, %v529, %v531
    %v538 = vsel %vm536, %v531, %v533
    %v539 = vsel %vm536, %v533, %v535
    %v544 = vmul.f32 %v357, %v529
    %v545 = vmul.f32 %v361, %v537
    %v546 = vmul.f32 %v365, %v538
    %v547 = vmul.f32 %v369, %v539
    %v548 = vmul.f32 %v373, %v529
    %v549 = vmul.f32 %v377, %v537
    %v550 = vmul.f32 %v381, %v538
    %v551 = vmul.f32 %v385, %v539
    %560 = vrot.lane.b32.xlu0 %v544, 126
    %v561 = vpop.permute.xlu0 %560
    %562 = vrot.lane.b32.xlu0 %v545, 126
    %v563 = vpop.permute.xlu0 %562
    %564 = vrot.lane.b32.xlu0 %v546, 126
    %v565 = vpop.permute.xlu0 %564
    %566 = vrot.lane.b32.xlu0 %v547, 126
    %v567 = vpop.permute.xlu0 %566
    %568 = vrot.lane.b32.xlu0 %v548, 126
    %v569 = vpop.permute.xlu0 %568
    %570 = vrot.lane.b32.xlu0 %v549, 126
    %v571 = vpop.permute.xlu0 %570
    %572 = vrot.lane.b32.xlu0 %v550, 126
    %v573 = vpop.permute.xlu0 %572
    %574 = vrot.lane.b32.xlu0 %v551, 126
    %v575 = vpop.permute.xlu0 %574
    %v576 = vsel %vm496, %v561, %v563
    %v577 = vsel %vm496, %v563, %v565
    %v578 = vsel %vm496, %v565, %v567
    %v579 = vsel %vm496, %v569, %v571
    %v580 = vsel %vm496, %v571, %v573
    %v581 = vsel %vm496, %v573, %v575
    %v590 = vadd.f32 %v431, %v576
    %v591 = vadd.f32 %v432, %v577
    %v592 = vadd.f32 %v433, %v578
    %v593 = vadd.f32 %v434, %v567
    %v594 = vadd.f32 %v435, %v579
    %v595 = vadd.f32 %v436, %v580
    %v596 = vadd.f32 %v437, %v581
    %v597 = vadd.f32 %v438, %v575
    %s598 = scalar_lea.vmem [#allocation8], 128
    %v599 = vld [vmem:[%s598] sm:$0xff]
    %v600 = vld [vmem:[%s598 + $0x8] sm:$0xff]
    %v601 = vld [vmem:[%s598 + $0x10] sm:$0xff]
    %v602 = vld [vmem:[%s598 + $0x18] sm:$0xff]
    %607 = vrot.lane.b32.xlu0 %v599, 4
    %v608 = vpop.permute.xlu0 %607
    %609 = vrot.lane.b32.xlu0 %v600, 4
    %v610 = vpop.permute.xlu0 %609
    %611 = vrot.lane.b32.xlu0 %v601, 4
    %v612 = vpop.permute.xlu0 %611
    %613 = vrot.lane.b32.xlu0 %v602, 4
    %v614 = vpop.permute.xlu0 %613
    %vm615 = vcmask 31744
    %v616 = vsel %vm615, %v608, %v610
    %v617 = vsel %vm615, %v610, %v612
    %v618 = vsel %vm615, %v612, %v614
    %v623 = vmul.f32 %v357, %v608
    %v624 = vmul.f32 %v361, %v616
    %v625 = vmul.f32 %v365, %v617
    %v626 = vmul.f32 %v369, %v618
    %v627 = vmul.f32 %v373, %v608
    %v628 = vmul.f32 %v377, %v616
    %v629 = vmul.f32 %v381, %v617
    %v630 = vmul.f32 %v385, %v618
    %639 = vrot.lane.b32.xlu0 %v623, 124
    %v640 = vpop.permute.xlu0 %639
    %641 = vrot.lane.b32.xlu0 %v624, 124
    %v642 = vpop.permute.xlu0 %641
    %643 = vrot.lane.b32.xlu0 %v625, 124
    %v644 = vpop.permute.xlu0 %643
    %645 = vrot.lane.b32.xlu0 %v626, 124
    %v646 = vpop.permute.xlu0 %645
    %647 = vrot.lane.b32.xlu0 %v627, 124
    %v648 = vpop.permute.xlu0 %647
    %649 = vrot.lane.b32.xlu0 %v628, 124
    %v650 = vpop.permute.xlu0 %649
    %651 = vrot.lane.b32.xlu0 %v629, 124
    %v652 = vpop.permute.xlu0 %651
    %653 = vrot.lane.b32.xlu0 %v630, 124
    %v654 = vpop.permute.xlu0 %653
    %vm655 = vcmask 1014784
    %v656 = vsel %vm655, %v640, %v642
    %v657 = vsel %vm655, %v642, %v644
    %v658 = vsel %vm655, %v644, %v646
    %v659 = vsel %vm655, %v648, %v650
    %v660 = vsel %vm655, %v650, %v652
    %v661 = vsel %vm655, %v652, %v654
    %v670 = vadd.f32 %v511, %v656
    %v671 = vadd.f32 %v512, %v657
    %v672 = vadd.f32 %v513, %v658
    %v673 = vadd.f32 %v514, %v646
    %v674 = vadd.f32 %v515, %v659
    %v675 = vadd.f32 %v516, %v660
    %v676 = vadd.f32 %v517, %v661
    %v677 = vadd.f32 %v518, %v654
    %s678 = scalar_lea.vmem [#allocation8], 160
    %v679 = vld [vmem:[%s678] sm:$0xff]
    %v680 = vld [vmem:[%s678 + $0x8] sm:$0xff]
    %v681 = vld [vmem:[%s678 + $0x10] sm:$0xff]
    %v682 = vld [vmem:[%s678 + $0x18] sm:$0xff]
    %687 = vrot.lane.b32.xlu0 %v679, 5
    %v688 = vpop.permute.xlu0 %687
    %689 = vrot.lane.b32.xlu0 %v680, 5
    %v690 = vpop.permute.xlu0 %689
    %691 = vrot.lane.b32.xlu0 %v681, 5
    %v692 = vpop.permute.xlu0 %691
    %693 = vrot.lane.b32.xlu0 %v682, 5
    %v694 = vpop.permute.xlu0 %693
    %vm695 = vcmask 39936
    %v696 = vsel %vm695, %v688, %v690
    %v697 = vsel %vm695, %v690, %v692
    %v698 = vsel %vm695, %v692, %v694
    %v703 = vmul.f32 %v357, %v688
    %v704 = vmul.f32 %v361, %v696
    %v705 = vmul.f32 %v365, %v697
    %v706 = vmul.f32 %v369, %v698
    %v707 = vmul.f32 %v373, %v688
    %v708 = vmul.f32 %v377, %v696
    %v709 = vmul.f32 %v381, %v697
    %v710 = vmul.f32 %v385, %v698
    %719 = vrot.lane.b32.xlu0 %v703, 124
    %v720 = vpop.permute.xlu0 %719
    %721 = vrot.lane.b32.xlu0 %v704, 124
    %v722 = vpop.permute.xlu0 %721
    %723 = vrot.lane.b32.xlu0 %v705, 124
    %v724 = vpop.permute.xlu0 %723
    %725 = vrot.lane.b32.xlu0 %v706, 124
    %v726 = vpop.permute.xlu0 %725
    %727 = vrot.lane.b32.xlu0 %v707, 124
    %v728 = vpop.permute.xlu0 %727
    %729 = vrot.lane.b32.xlu0 %v708, 124
    %v730 = vpop.permute.xlu0 %729
    %731 = vrot.lane.b32.xlu0 %v709, 124
    %v732 = vpop.permute.xlu0 %731
    %733 = vrot.lane.b32.xlu0 %v710, 124
    %v734 = vpop.permute.xlu0 %733
    %v735 = vsel %vm655, %v720, %v722
    %v736 = vsel %vm655, %v722, %v724
    %v737 = vsel %vm655, %v724, %v726
    %v738 = vsel %vm655, %v728, %v730
    %v739 = vsel %vm655, %v730, %v732
    %v740 = vsel %vm655, %v732, %v734
    %v749 = vadd.f32 %v590, %v735
    %v750 = vadd.f32 %v591, %v736
    %v751 = vadd.f32 %v592, %v737
    %v752 = vadd.f32 %v593, %v726
    %v753 = vadd.f32 %v594, %v738
    %v754 = vadd.f32 %v595, %v739
    %v755 = vadd.f32 %v596, %v740
    %v756 = vadd.f32 %v597, %v734
    %s757 = scalar_lea.vmem [#allocation8], 192
    %v758 = vld [vmem:[%s757] sm:$0xff]
    %v759 = vld [vmem:[%s757 + $0x8] sm:$0xff]
    %v760 = vld [vmem:[%s757 + $0x10] sm:$0xff]
    %v761 = vld [vmem:[%s757 + $0x18] sm:$0xff]
    %766 = vrot.lane.b32.xlu0 %v758, 6
    %v767 = vpop.permute.xlu0 %766
    %768 = vrot.lane.b32.xlu0 %v759, 6
    %v769 = vpop.permute.xlu0 %768
    %770 = vrot.lane.b32.xlu0 %v760, 6
    %v771 = vpop.permute.xlu0 %770
    %772 = vrot.lane.b32.xlu0 %v761, 6
    %v773 = vpop.permute.xlu0 %772
    %vm774 = vcmask 48128
    %v775 = vsel %vm774, %v767, %v769
    %v776 = vsel %vm774, %v769, %v771
    %v777 = vsel %vm774, %v771, %v773
    %v782 = vmul.f32 %v357, %v767
    %v783 = vmul.f32 %v361, %v775
    %v784 = vmul.f32 %v365, %v776
    %v785 = vmul.f32 %v369, %v777
    %v786 = vmul.f32 %v373, %v767
    %v787 = vmul.f32 %v377, %v775
    %v788 = vmul.f32 %v381, %v776
    %v789 = vmul.f32 %v385, %v777
    %798 = vrot.lane.b32.xlu0 %v782, 122
    %v799 = vpop.permute.xlu0 %798
    %800 = vrot.lane.b32.xlu0 %v783, 122
    %v801 = vpop.permute.xlu0 %800
    %802 = vrot.lane.b32.xlu0 %v784, 122
    %v803 = vpop.permute.xlu0 %802
    %804 = vrot.lane.b32.xlu0 %v785, 122
    %v805 = vpop.permute.xlu0 %804
    %806 = vrot.lane.b32.xlu0 %v786, 122
    %v807 = vpop.permute.xlu0 %806
    %808 = vrot.lane.b32.xlu0 %v787, 122
    %v809 = vpop.permute.xlu0 %808
    %810 = vrot.lane.b32.xlu0 %v788, 122
    %v811 = vpop.permute.xlu0 %810
    %812 = vrot.lane.b32.xlu0 %v789, 122
    %v813 = vpop.permute.xlu0 %812
    %vm814 = vcmask 998400
    %v815 = vsel %vm814, %v799, %v801
    %v816 = vsel %vm814, %v801, %v803
    %v817 = vsel %vm814, %v803, %v805
    %v818 = vsel %vm814, %v807, %v809
    %v819 = vsel %vm814, %v809, %v811
    %v820 = vsel %vm814, %v811, %v813
    %v829 = vadd.f32 %v670, %v815
    %v830 = vadd.f32 %v671, %v816
    %v831 = vadd.f32 %v672, %v817
    %v832 = vadd.f32 %v673, %v805
    %v833 = vadd.f32 %v674, %v818
    %v834 = vadd.f32 %v675, %v819
    %v835 = vadd.f32 %v676, %v820
    %v836 = vadd.f32 %v677, %v813
    %s837 = scalar_lea.vmem [#allocation8], 224
    %v838 = vld [vmem:[%s837] sm:$0xff]
    %v839 = vld [vmem:[%s837 + $0x8] sm:$0xff]
    %v840 = vld [vmem:[%s837 + $0x10] sm:$0xff]
    %v841 = vld [vmem:[%s837 + $0x18] sm:$0xff]
    %846 = vrot.lane.b32.xlu0 %v838, 7
    %v847 = vpop.permute.xlu0 %846
    %848 = vrot.lane.b32.xlu0 %v839, 7
    %v849 = vpop.permute.xlu0 %848
    %850 = vrot.lane.b32.xlu0 %v840, 7
    %v851 = vpop.permute.xlu0 %850
    %852 = vrot.lane.b32.xlu0 %v841, 7
    %v853 = vpop.permute.xlu0 %852
    %vm854 = vcmask 56320
    %v855 = vsel %vm854, %v847, %v849
    %v856 = vsel %vm854, %v849, %v851
    %v857 = vsel %vm854, %v851, %v853
    %v862 = vmul.f32 %v357, %v847
    %v863 = vmul.f32 %v361, %v855
    %v864 = vmul.f32 %v365, %v856
    %v865 = vmul.f32 %v369, %v857
    %v866 = vmul.f32 %v373, %v847
    %v867 = vmul.f32 %v377, %v855
    %v868 = vmul.f32 %v381, %v856
    %v869 = vmul.f32 %v385, %v857
    %878 = vrot.lane.b32.xlu0 %v862, 122
    %v879 = vpop.permute.xlu0 %878
    %880 = vrot.lane.b32.xlu0 %v863, 122
    %v881 = vpop.permute.xlu0 %880
    %882 = vrot.lane.b32.xlu0 %v864, 122
    %v883 = vpop.permute.xlu0 %882
    %884 = vrot.lane.b32.xlu0 %v865, 122
    %v885 = vpop.permute.xlu0 %884
    %886 = vrot.lane.b32.xlu0 %v866, 122
    %v887 = vpop.permute.xlu0 %886
    %888 = vrot.lane.b32.xlu0 %v867, 122
    %v889 = vpop.permute.xlu0 %888
    %890 = vrot.lane.b32.xlu0 %v868, 122
    %v891 = vpop.permute.xlu0 %890
    %892 = vrot.lane.b32.xlu0 %v869, 122
    %v893 = vpop.permute.xlu0 %892
    %v894 = vsel %vm814, %v879, %v881
    %v895 = vsel %vm814, %v881, %v883
    %v896 = vsel %vm814, %v883, %v885
    %v897 = vsel %vm814, %v887, %v889
    %v898 = vsel %vm814, %v889, %v891
    %v899 = vsel %vm814, %v891, %v893
    %v908 = vadd.f32 %v749, %v894
    %v909 = vadd.f32 %v750, %v895
    %v910 = vadd.f32 %v751, %v896
    %v911 = vadd.f32 %v752, %v885
    %v912 = vadd.f32 %v753, %v897
    %v913 = vadd.f32 %v754, %v898
    %v914 = vadd.f32 %v755, %v899
    %v915 = vadd.f32 %v756, %v893
    %s916 = scalar_lea.vmem [#allocation8], 256
    %v917 = vld [vmem:[%s916] sm:$0xff]
    %v918 = vld [vmem:[%s916 + $0x8] sm:$0xff]
    %v919 = vld [vmem:[%s916 + $0x10] sm:$0xff]
    %v920 = vld [vmem:[%s916 + $0x18] sm:$0xff]
    %925 = vrot.lane.b32.xlu0 %v917, 8
    %v926 = vpop.permute.xlu0 %925
    %927 = vrot.lane.b32.xlu0 %v918, 8
    %v928 = vpop.permute.xlu0 %927
    %929 = vrot.lane.b32.xlu0 %v919, 8
    %v930 = vpop.permute.xlu0 %929
    %931 = vrot.lane.b32.xlu0 %v920, 8
    %v932 = vpop.permute.xlu0 %931
    %vm933 = vcmask 64512
    %v934 = vsel %vm933, %v926, %v928
    %v935 = vsel %vm933, %v928, %v930
    %v936 = vsel %vm933, %v930, %v932
    %v941 = vmul.f32 %v357, %v926
    %v942 = vmul.f32 %v361, %v934
    %v943 = vmul.f32 %v365, %v935
    %v944 = vmul.f32 %v369, %v936
    %v945 = vmul.f32 %v373, %v926
    %v946 = vmul.f32 %v377, %v934
    %v947 = vmul.f32 %v381, %v935
    %v948 = vmul.f32 %v385, %v936
    %957 = vrot.lane.b32.xlu0 %v941, 120
    %v958 = vpop.permute.xlu0 %957
    %959 = vrot.lane.b32.xlu0 %v942, 120
    %v960 = vpop.permute.xlu0 %959
    %961 = vrot.lane.b32.xlu0 %v943, 120
    %v962 = vpop.permute.xlu0 %961
    %963 = vrot.lane.b32.xlu0 %v944, 120
    %v964 = vpop.permute.xlu0 %963
    %965 = vrot.lane.b32.xlu0 %v945, 120
    %v966 = vpop.permute.xlu0 %965
    %967 = vrot.lane.b32.xlu0 %v946, 120
    %v968 = vpop.permute.xlu0 %967
    %969 = vrot.lane.b32.xlu0 %v947, 120
    %v970 = vpop.permute.xlu0 %969
    %971 = vrot.lane.b32.xlu0 %v948, 120
    %v972 = vpop.permute.xlu0 %971
    %vm973 = vcmask 982016
    %v974 = vsel %vm973, %v958, %v960
    %v975 = vsel %vm973, %v960, %v962
    %v976 = vsel %vm973, %v962, %v964
    %v977 = vsel %vm973, %v966, %v968
    %v978 = vsel %vm973, %v968, %v970
    %v979 = vsel %vm973, %v970, %v972
    %v988 = vadd.f32 %v829, %v974
    %v989 = vadd.f32 %v830, %v975
    %v990 = vadd.f32 %v831, %v976
    %v991 = vadd.f32 %v832, %v964
    %v992 = vadd.f32 %v833, %v977
    %v993 = vadd.f32 %v834, %v978
    %v994 = vadd.f32 %v835, %v979
    %v995 = vadd.f32 %v836, %v972
    %s996 = scalar_lea.vmem [#allocation8], 288
    %v997 = vld [vmem:[%s996] sm:$0xff]
    %v998 = vld [vmem:[%s996 + $0x8] sm:$0xff]
    %v999 = vld [vmem:[%s996 + $0x10] sm:$0xff]
    %v1000 = vld [vmem:[%s996 + $0x18] sm:$0xff]
    %1005 = vrot.lane.b32.xlu0 %v997, 9
    %v1006 = vpop.permute.xlu0 %1005
    %1007 = vrot.lane.b32.xlu0 %v998, 9
    %v1008 = vpop.permute.xlu0 %1007
    %1009 = vrot.lane.b32.xlu0 %v999, 9
    %v1010 = vpop.permute.xlu0 %1009
    %1011 = vrot.lane.b32.xlu0 %v1000, 9
    %v1012 = vpop.permute.xlu0 %1011
    %vm1013 = vcmask 72704
    %v1014 = vsel %vm1013, %v1006, %v1008
    %v1015 = vsel %vm1013, %v1008, %v1010
    %v1016 = vsel %vm1013, %v1010, %v1012
    %v1021 = vmul.f32 %v357, %v1006
    %v1022 = vmul.f32 %v361, %v1014
    %v1023 = vmul.f32 %v365, %v1015
    %v1024 = vmul.f32 %v369, %v1016
    %v1025 = vmul.f32 %v373, %v1006
    %v1026 = vmul.f32 %v377, %v1014
    %v1027 = vmul.f32 %v381, %v1015
    %v1028 = vmul.f32 %v385, %v1016
    %1037 = vrot.lane.b32.xlu0 %v1021, 120
    %v1038 = vpop.permute.xlu0 %1037
    %1039 = vrot.lane.b32.xlu0 %v1022, 120
    %v1040 = vpop.permute.xlu0 %1039
    %1041 = vrot.lane.b32.xlu0 %v1023, 120
    %v1042 = vpop.permute.xlu0 %1041
    %1043 = vrot.lane.b32.xlu0 %v1024, 120
    %v1044 = vpop.permute.xlu0 %1043
    %1045 = vrot.lane.b32.xlu0 %v1025, 120
    %v1046 = vpop.permute.xlu0 %1045
    %1047 = vrot.lane.b32.xlu0 %v1026, 120
    %v1048 = vpop.permute.xlu0 %1047
    %1049 = vrot.lane.b32.xlu0 %v1027, 120
    %v1050 = vpop.permute.xlu0 %1049
    %1051 = vrot.lane.b32.xlu0 %v1028, 120
    %v1052 = vpop.permute.xlu0 %1051
    %v1053 = vsel %vm973, %v1038, %v1040
    %v1054 = vsel %vm973, %v1040, %v1042
    %v1055 = vsel %vm973, %v1042, %v1044
    %v1056 = vsel %vm973, %v1046, %v1048
    %v1057 = vsel %vm973, %v1048, %v1050
    %v1058 = vsel %vm973, %v1050, %v1052
    %v1067 = vadd.f32 %v908, %v1053
    %v1068 = vadd.f32 %v909, %v1054
    %v1069 = vadd.f32 %v910, %v1055
    %v1070 = vadd.f32 %v911, %v1044
    %v1071 = vadd.f32 %v912, %v1056
    %v1072 = vadd.f32 %v913, %v1057
    %v1073 = vadd.f32 %v914, %v1058
    %v1074 = vadd.f32 %v915, %v1052
    %s1075 = scalar_lea.vmem [#allocation8], 320
    %v1076 = vld [vmem:[%s1075] sm:$0xff]
    %v1077 = vld [vmem:[%s1075 + $0x8] sm:$0xff]
    %v1078 = vld [vmem:[%s1075 + $0x10] sm:$0xff]
    %v1079 = vld [vmem:[%s1075 + $0x18] sm:$0xff]
    %1084 = vrot.lane.b32.xlu0 %v1076, 10
    %v1085 = vpop.permute.xlu0 %1084
    %1086 = vrot.lane.b32.xlu0 %v1077, 10
    %v1087 = vpop.permute.xlu0 %1086
    %1088 = vrot.lane.b32.xlu0 %v1078, 10
    %v1089 = vpop.permute.xlu0 %1088
    %1090 = vrot.lane.b32.xlu0 %v1079, 10
    %v1091 = vpop.permute.xlu0 %1090
    %vm1092 = vcmask 80896
    %v1093 = vsel %vm1092, %v1085, %v1087
    %v1094 = vsel %vm1092, %v1087, %v1089
    %v1095 = vsel %vm1092, %v1089, %v1091
    %v1100 = vmul.f32 %v357, %v1085
    %v1101 = vmul.f32 %v361, %v1093
    %v1102 = vmul.f32 %v365, %v1094
    %v1103 = vmul.f32 %v369, %v1095
    %v1104 = vmul.f32 %v373, %v1085
    %v1105 = vmul.f32 %v377, %v1093
    %v1106 = vmul.f32 %v381, %v1094
    %v1107 = vmul.f32 %v385, %v1095
    %1116 = vrot.lane.b32.xlu0 %v1100, 118
    %v1117 = vpop.permute.xlu0 %1116
    %1118 = vrot.lane.b32.xlu0 %v1101, 118
    %v1119 = vpop.permute.xlu0 %1118
    %1120 = vrot.lane.b32.xlu0 %v1102, 118
    %v1121 = vpop.permute.xlu0 %1120
    %1122 = vrot.lane.b32.xlu0 %v1103, 118
    %v1123 = vpop.permute.xlu0 %1122
    %1124 = vrot.lane.b32.xlu0 %v1104, 118
    %v1125 = vpop.permute.xlu0 %1124
    %1126 = vrot.lane.b32.xlu0 %v1105, 118
    %v1127 = vpop.permute.xlu0 %1126
    %1128 = vrot.lane.b32.xlu0 %v1106, 118
    %v1129 = vpop.permute.xlu0 %1128
    %1130 = vrot.lane.b32.xlu0 %v1107, 118
    %v1131 = vpop.permute.xlu0 %1130
    %vm1132 = vcmask 965632
    %v1133 = vsel %vm1132, %v1117, %v1119
    %v1134 = vsel %vm1132, %v1119, %v1121
    %v1135 = vsel %vm1132, %v1121, %v1123
    %v1136 = vsel %vm1132, %v1125, %v1127
    %v1137 = vsel %vm1132, %v1127, %v1129
    %v1138 = vsel %vm1132, %v1129, %v1131
    %v1147 = vadd.f32 %v988, %v1133
    %v1148 = vadd.f32 %v989, %v1134
    %v1149 = vadd.f32 %v990, %v1135
    %v1150 = vadd.f32 %v991, %v1123
    %v1151 = vadd.f32 %v992, %v1136
    %v1152 = vadd.f32 %v993, %v1137
    %v1153 = vadd.f32 %v994, %v1138
    %v1154 = vadd.f32 %v995, %v1131
    %s1155 = scalar_lea.vmem [#allocation8], 352
    %v1156 = vld [vmem:[%s1155] sm:$0xff]
    %v1157 = vld [vmem:[%s1155 + $0x8] sm:$0xff]
    %v1158 = vld [vmem:[%s1155 + $0x10] sm:$0xff]
    %v1159 = vld [vmem:[%s1155 + $0x18] sm:$0xff]
    %1164 = vrot.lane.b32.xlu0 %v1156, 11
    %v1165 = vpop.permute.xlu0 %1164
    %1166 = vrot.lane.b32.xlu0 %v1157, 11
    %v1167 = vpop.permute.xlu0 %1166
    %1168 = vrot.lane.b32.xlu0 %v1158, 11
    %v1169 = vpop.permute.xlu0 %1168
    %1170 = vrot.lane.b32.xlu0 %v1159, 11
    %v1171 = vpop.permute.xlu0 %1170
    %vm1172 = vcmask 89088
    %v1173 = vsel %vm1172, %v1165, %v1167
    %v1174 = vsel %vm1172, %v1167, %v1169
    %v1175 = vsel %vm1172, %v1169, %v1171
    %v1180 = vmul.f32 %v357, %v1165
    %v1181 = vmul.f32 %v361, %v1173
    %v1182 = vmul.f32 %v365, %v1174
    %v1183 = vmul.f32 %v369, %v1175
    %v1184 = vmul.f32 %v373, %v1165
    %v1185 = vmul.f32 %v377, %v1173
    %v1186 = vmul.f32 %v381, %v1174
    %v1187 = vmul.f32 %v385, %v1175
    %1196 = vrot.lane.b32.xlu0 %v1180, 118
    %v1197 = vpop.permute.xlu0 %1196
    %1198 = vrot.lane.b32.xlu0 %v1181, 118
    %v1199 = vpop.permute.xlu0 %1198
    %1200 = vrot.lane.b32.xlu0 %v1182, 118
    %v1201 = vpop.permute.xlu0 %1200
    %1202 = vrot.lane.b32.xlu0 %v1183, 118
    %v1203 = vpop.permute.xlu0 %1202
    %1204 = vrot.lane.b32.xlu0 %v1184, 118
    %v1205 = vpop.permute.xlu0 %1204
    %1206 = vrot.lane.b32.xlu0 %v1185, 118
    %v1207 = vpop.permute.xlu0 %1206
    %1208 = vrot.lane.b32.xlu0 %v1186, 118
    %v1209 = vpop.permute.xlu0 %1208
    %1210 = vrot.lane.b32.xlu0 %v1187, 118
    %v1211 = vpop.permute.xlu0 %1210
    %v1212 = vsel %vm1132, %v1197, %v1199
    %v1213 = vsel %vm1132, %v1199, %v1201
    %v1214 = vsel %vm1132, %v1201, %v1203
    %v1215 = vsel %vm1132, %v1205, %v1207
    %v1216 = vsel %vm1132, %v1207, %v1209
    %v1217 = vsel %vm1132, %v1209, %v1211
    %v1226 = vadd.f32 %v1067, %v1212
    %v1227 = vadd.f32 %v1068, %v1213
    %v1228 = vadd.f32 %v1069, %v1214
    %v1229 = vadd.f32 %v1070, %v1203
    %v1230 = vadd.f32 %v1071, %v1215
    %v1231 = vadd.f32 %v1072, %v1216
    %v1232 = vadd.f32 %v1073, %v1217
    %v1233 = vadd.f32 %v1074, %v1211
    %s1234 = scalar_lea.vmem [#allocation8], 384
    %v1235 = vld [vmem:[%s1234] sm:$0xff]
    %v1236 = vld [vmem:[%s1234 + $0x8] sm:$0xff]
    %v1237 = vld [vmem:[%s1234 + $0x10] sm:$0xff]
    %v1238 = vld [vmem:[%s1234 + $0x18] sm:$0xff]
    %1243 = vrot.lane.b32.xlu0 %v1235, 12
    %v1244 = vpop.permute.xlu0 %1243
    %1245 = vrot.lane.b32.xlu0 %v1236, 12
    %v1246 = vpop.permute.xlu0 %1245
    %1247 = vrot.lane.b32.xlu0 %v1237, 12
    %v1248 = vpop.permute.xlu0 %1247
    %1249 = vrot.lane.b32.xlu0 %v1238, 12
    %v1250 = vpop.permute.xlu0 %1249
    %vm1251 = vcmask 97280
    %v1252 = vsel %vm1251, %v1244, %v1246
    %v1253 = vsel %vm1251, %v1246, %v1248
    %v1254 = vsel %vm1251, %v1248, %v1250
    %v1259 = vmul.f32 %v357, %v1244
    %v1260 = vmul.f32 %v361, %v1252
    %v1261 = vmul.f32 %v365, %v1253
    %v1262 = vmul.f32 %v369, %v1254
    %v1263 = vmul.f32 %v373, %v1244
    %v1264 = vmul.f32 %v377, %v1252
    %v1265 = vmul.f32 %v381, %v1253
    %v1266 = vmul.f32 %v385, %v1254
    %1275 = vrot.lane.b32.xlu0 %v1259, 116
    %v1276 = vpop.permute.xlu0 %1275
    %1277 = vrot.lane.b32.xlu0 %v1260, 116
    %v1278 = vpop.permute.xlu0 %1277
    %1279 = vrot.lane.b32.xlu0 %v1261, 116
    %v1280 = vpop.permute.xlu0 %1279
    %1281 = vrot.lane.b32.xlu0 %v1262, 116
    %v1282 = vpop.permute.xlu0 %1281
    %1283 = vrot.lane.b32.xlu0 %v1263, 116
    %v1284 = vpop.permute.xlu0 %1283
    %1285 = vrot.lane.b32.xlu0 %v1264, 116
    %v1286 = vpop.permute.xlu0 %1285
    %1287 = vrot.lane.b32.xlu0 %v1265, 116
    %v1288 = vpop.permute.xlu0 %1287
    %1289 = vrot.lane.b32.xlu0 %v1266, 116
    %v1290 = vpop.permute.xlu0 %1289
    %vm1291 = vcmask 949248
    %v1292 = vsel %vm1291, %v1276, %v1278
    %v1293 = vsel %vm1291, %v1278, %v1280
    %v1294 = vsel %vm1291, %v1280, %v1282
    %v1295 = vsel %vm1291, %v1284, %v1286
    %v1296 = vsel %vm1291, %v1286, %v1288
    %v1297 = vsel %vm1291, %v1288, %v1290
    %v1306 = vadd.f32 %v1147, %v1292
    %v1307 = vadd.f32 %v1148, %v1293
    %v1308 = vadd.f32 %v1149, %v1294
    %v1309 = vadd.f32 %v1150, %v1282
    %v1310 = vadd.f32 %v1151, %v1295
    %v1311 = vadd.f32 %v1152, %v1296
    %v1312 = vadd.f32 %v1153, %v1297
    %v1313 = vadd.f32 %v1154, %v1290
    %s1314 = scalar_lea.vmem [#allocation8], 416
    %v1315 = vld [vmem:[%s1314] sm:$0xff]
    %v1316 = vld [vmem:[%s1314 + $0x8] sm:$0xff]
    %v1317 = vld [vmem:[%s1314 + $0x10] sm:$0xff]
    %v1318 = vld [vmem:[%s1314 + $0x18] sm:$0xff]
    %1323 = vrot.lane.b32.xlu0 %v1315, 13
    %v1324 = vpop.permute.xlu0 %1323
    %1325 = vrot.lane.b32.xlu0 %v1316, 13
    %v1326 = vpop.permute.xlu0 %1325
    %1327 = vrot.lane.b32.xlu0 %v1317, 13
    %v1328 = vpop.permute.xlu0 %1327
    %1329 = vrot.lane.b32.xlu0 %v1318, 13
    %v1330 = vpop.permute.xlu0 %1329
    %vm1331 = vcmask 105472
    %v1332 = vsel %vm1331, %v1324, %v1326
    %v1333 = vsel %vm1331, %v1326, %v1328
    %v1334 = vsel %vm1331, %v1328, %v1330
    %v1339 = vmul.f32 %v357, %v1324
    %v1340 = vmul.f32 %v361, %v1332
    %v1341 = vmul.f32 %v365, %v1333
    %v1342 = vmul.f32 %v369, %v1334
    %v1343 = vmul.f32 %v373, %v1324
    %v1344 = vmul.f32 %v377, %v1332
    %v1345 = vmul.f32 %v381, %v1333
    %v1346 = vmul.f32 %v385, %v1334
    %1355 = vrot.lane.b32.xlu0 %v1339, 116
    %v1356 = vpop.permute.xlu0 %1355
    %1357 = vrot.lane.b32.xlu0 %v1340, 116
    %v1358 = vpop.permute.xlu0 %1357
    %1359 = vrot.lane.b32.xlu0 %v1341, 116
    %v1360 = vpop.permute.xlu0 %1359
    %1361 = vrot.lane.b32.xlu0 %v1342, 116
    %v1362 = vpop.permute.xlu0 %1361
    %1363 = vrot.lane.b32.xlu0 %v1343, 116
    %v1364 = vpop.permute.xlu0 %1363
    %1365 = vrot.lane.b32.xlu0 %v1344, 116
    %v1366 = vpop.permute.xlu0 %1365
    %1367 = vrot.lane.b32.xlu0 %v1345, 116
    %v1368 = vpop.permute.xlu0 %1367
    %1369 = vrot.lane.b32.xlu0 %v1346, 116
    %v1370 = vpop.permute.xlu0 %1369
    %v1371 = vsel %vm1291, %v1356, %v1358
    %v1372 = vsel %vm1291, %v1358, %v1360
    %v1373 = vsel %vm1291, %v1360, %v1362
    %v1374 = vsel %vm1291, %v1364, %v1366
    %v1375 = vsel %vm1291, %v1366, %v1368
    %v1376 = vsel %vm1291, %v1368, %v1370
    %v1385 = vadd.f32 %v1226, %v1371
    %v1386 = vadd.f32 %v1227, %v1372
    %v1387 = vadd.f32 %v1228, %v1373
    %v1388 = vadd.f32 %v1229, %v1362
    %v1389 = vadd.f32 %v1230, %v1374
    %v1390 = vadd.f32 %v1231, %v1375
    %v1391 = vadd.f32 %v1232, %v1376
    %v1392 = vadd.f32 %v1233, %v1370
    %s1393 = scalar_lea.vmem [#allocation8], 448
    %v1394 = vld [vmem:[%s1393] sm:$0xff]
    %v1395 = vld [vmem:[%s1393 + $0x8] sm:$0xff]
    %v1396 = vld [vmem:[%s1393 + $0x10] sm:$0xff]
    %v1397 = vld [vmem:[%s1393 + $0x18] sm:$0xff]
    %1402 = vrot.lane.b32.xlu0 %v1394, 14
    %v1403 = vpop.permute.xlu0 %1402
    %1404 = vrot.lane.b32.xlu0 %v1395, 14
    %v1405 = vpop.permute.xlu0 %1404
    %1406 = vrot.lane.b32.xlu0 %v1396, 14
    %v1407 = vpop.permute.xlu0 %1406
    %1408 = vrot.lane.b32.xlu0 %v1397, 14
    %v1409 = vpop.permute.xlu0 %1408
    %vm1410 = vcmask 113664
    %v1411 = vsel %vm1410, %v1403, %v1405
    %v1412 = vsel %vm1410, %v1405, %v1407
    %v1413 = vsel %vm1410, %v1407, %v1409
    %v1418 = vmul.f32 %v357, %v1403
    %v1419 = vmul.f32 %v361, %v1411
    %v1420 = vmul.f32 %v365, %v1412
    %v1421 = vmul.f32 %v369, %v1413
    %v1422 = vmul.f32 %v373, %v1403
    %v1423 = vmul.f32 %v377, %v1411
    %v1424 = vmul.f32 %v381, %v1412
    %v1425 = vmul.f32 %v385, %v1413
    %1434 = vrot.lane.b32.xlu0 %v1418, 114
    %v1435 = vpop.permute.xlu0 %1434
    %1436 = vrot.lane.b32.xlu0 %v1419, 114
    %v1437 = vpop.permute.xlu0 %1436
    %1438 = vrot.lane.b32.xlu0 %v1420, 114
    %v1439 = vpop.permute.xlu0 %1438
    %1440 = vrot.lane.b32.xlu0 %v1421, 114
    %v1441 = vpop.permute.xlu0 %1440
    %1442 = vrot.lane.b32.xlu0 %v1422, 114
    %v1443 = vpop.permute.xlu0 %1442
    %1444 = vrot.lane.b32.xlu0 %v1423, 114
    %v1445 = vpop.permute.xlu0 %1444
    %1446 = vrot.lane.b32.xlu0 %v1424, 114
    %v1447 = vpop.permute.xlu0 %1446
    %1448 = vrot.lane.b32.xlu0 %v1425, 114
    %v1449 = vpop.permute.xlu0 %1448
    %vm1450 = vcmask 932864
    %v1451 = vsel %vm1450, %v1435, %v1437
    %v1452 = vsel %vm1450, %v1437, %v1439
    %v1453 = vsel %vm1450, %v1439, %v1441
    %v1454 = vsel %vm1450, %v1443, %v1445
    %v1455 = vsel %vm1450, %v1445, %v1447
    %v1456 = vsel %vm1450, %v1447, %v1449
    %v1465 = vadd.f32 %v1306, %v1451
    %v1466 = vadd.f32 %v1307, %v1452
    %v1467 = vadd.f32 %v1308, %v1453
    %v1468 = vadd.f32 %v1309, %v1441
    %v1469 = vadd.f32 %v1310, %v1454
    %v1470 = vadd.f32 %v1311, %v1455
    %v1471 = vadd.f32 %v1312, %v1456
    %v1472 = vadd.f32 %v1313, %v1449
    %s1473 = scalar_lea.vmem [#allocation8], 480
    %v1474 = vld [vmem:[%s1473] sm:$0xff]
    %v1475 = vld [vmem:[%s1473 + $0x8] sm:$0xff]
    %v1476 = vld [vmem:[%s1473 + $0x10] sm:$0xff]
    %v1477 = vld [vmem:[%s1473 + $0x18] sm:$0xff]
    %1482 = vrot.lane.b32.xlu0 %v1474, 15
    %v1483 = vpop.permute.xlu0 %1482
    %1484 = vrot.lane.b32.xlu0 %v1475, 15
    %v1485 = vpop.permute.xlu0 %1484
    %1486 = vrot.lane.b32.xlu0 %v1476, 15
    %v1487 = vpop.permute.xlu0 %1486
    %1488 = vrot.lane.b32.xlu0 %v1477, 15
    %v1489 = vpop.permute.xlu0 %1488
    %vm1490 = vcmask 121856
    %v1491 = vsel %vm1490, %v1483, %v1485
    %v1492 = vsel %vm1490, %v1485, %v1487
    %v1493 = vsel %vm1490, %v1487, %v1489
    %v1498 = vmul.f32 %v357, %v1483
    %v1499 = vmul.f32 %v361, %v1491
    %v1500 = vmul.f32 %v365, %v1492
    %v1501 = vmul.f32 %v369, %v1493
    %v1502 = vmul.f32 %v373, %v1483
    %v1503 = vmul.f32 %v377, %v1491
    %v1504 = vmul.f32 %v381, %v1492
    %v1505 = vmul.f32 %v385, %v1493
    %1514 = vrot.lane.b32.xlu0 %v1498, 114
    %v1515 = vpop.permute.xlu0 %1514
    %1516 = vrot.lane.b32.xlu0 %v1499, 114
    %v1517 = vpop.permute.xlu0 %1516
    %1518 = vrot.lane.b32.xlu0 %v1500, 114
    %v1519 = vpop.permute.xlu0 %1518
    %1520 = vrot.lane.b32.xlu0 %v1501, 114
    %v1521 = vpop.permute.xlu0 %1520
    %1522 = vrot.lane.b32.xlu0 %v1502, 114
    %v1523 = vpop.permute.xlu0 %1522
    %1524 = vrot.lane.b32.xlu0 %v1503, 114
    %v1525 = vpop.permute.xlu0 %1524
    %1526 = vrot.lane.b32.xlu0 %v1504, 114
    %v1527 = vpop.permute.xlu0 %1526
    %1528 = vrot.lane.b32.xlu0 %v1505, 114
    %v1529 = vpop.permute.xlu0 %1528
    %v1530 = vsel %vm1450, %v1515, %v1517
    %v1531 = vsel %vm1450, %v1517, %v1519
    %v1532 = vsel %vm1450, %v1519, %v1521
    %v1533 = vsel %vm1450, %v1523, %v1525
    %v1534 = vsel %vm1450, %v1525, %v1527
    %v1535 = vsel %vm1450, %v1527, %v1529
    %v1544 = vadd.f32 %v1385, %v1530
    %v1545 = vadd.f32 %v1386, %v1531
    %v1546 = vadd.f32 %v1387, %v1532
    %v1547 = vadd.f32 %v1388, %v1521
    %v1548 = vadd.f32 %v1389, %v1533
    %v1549 = vadd.f32 %v1390, %v1534
    %v1550 = vadd.f32 %v1391, %v1535
    %v1551 = vadd.f32 %v1392, %v1529
    %s1552 = scalar_lea.vmem [#allocation8], 512
    %v1553 = vld [vmem:[%s1552] sm:$0xff]
    %v1554 = vld [vmem:[%s1552 + $0x8] sm:$0xff]
    %v1555 = vld [vmem:[%s1552 + $0x10] sm:$0xff]
    %v1556 = vld [vmem:[%s1552 + $0x18] sm:$0xff]
    %1561 = vrot.lane.b32.xlu0 %v1553, 16
    %v1562 = vpop.permute.xlu0 %1561
    %1563 = vrot.lane.b32.xlu0 %v1554, 16
    %v1564 = vpop.permute.xlu0 %1563
    %1565 = vrot.lane.b32.xlu0 %v1555, 16
    %v1566 = vpop.permute.xlu0 %1565
    %1567 = vrot.lane.b32.xlu0 %v1556, 16
    %v1568 = vpop.permute.xlu0 %1567
    %vm1569 = vcmask 130048
    %v1570 = vsel %vm1569, %v1562, %v1564
    %v1571 = vsel %vm1569, %v1564, %v1566
    %v1572 = vsel %vm1569, %v1566, %v1568
    %v1577 = vmul.f32 %v357, %v1562
    %v1578 = vmul.f32 %v361, %v1570
    %v1579 = vmul.f32 %v365, %v1571
    %v1580 = vmul.f32 %v369, %v1572
    %v1581 = vmul.f32 %v373, %v1562
    %v1582 = vmul.f32 %v377, %v1570
    %v1583 = vmul.f32 %v381, %v1571
    %v1584 = vmul.f32 %v385, %v1572
    %1593 = vrot.lane.b32.xlu0 %v1577, 112
    %v1594 = vpop.permute.xlu0 %1593
    %1595 = vrot.lane.b32.xlu0 %v1578, 112
    %v1596 = vpop.permute.xlu0 %1595
    %1597 = vrot.lane.b32.xlu0 %v1579, 112
    %v1598 = vpop.permute.xlu0 %1597
    %1599 = vrot.lane.b32.xlu0 %v1580, 112
    %v1600 = vpop.permute.xlu0 %1599
    %1601 = vrot.lane.b32.xlu0 %v1581, 112
    %v1602 = vpop.permute.xlu0 %1601
    %1603 = vrot.lane.b32.xlu0 %v1582, 112
    %v1604 = vpop.permute.xlu0 %1603
    %1605 = vrot.lane.b32.xlu0 %v1583, 112
    %v1606 = vpop.permute.xlu0 %1605
    %1607 = vrot.lane.b32.xlu0 %v1584, 112
    %v1608 = vpop.permute.xlu0 %1607
    %vm1609 = vcmask 916480
    %v1610 = vsel %vm1609, %v1594, %v1596
    %v1611 = vsel %vm1609, %v1596, %v1598
    %v1612 = vsel %vm1609, %v1598, %v1600
    %v1613 = vsel %vm1609, %v1602, %v1604
    %v1614 = vsel %vm1609, %v1604, %v1606
    %v1615 = vsel %vm1609, %v1606, %v1608
    %v1624 = vadd.f32 %v1465, %v1610
    %v1625 = vadd.f32 %v1466, %v1611
    %v1626 = vadd.f32 %v1467, %v1612
    %v1627 = vadd.f32 %v1468, %v1600
    %v1628 = vadd.f32 %v1469, %v1613
    %v1629 = vadd.f32 %v1470, %v1614
    %v1630 = vadd.f32 %v1471, %v1615
    %v1631 = vadd.f32 %v1472, %v1608
    %s1632 = scalar_lea.vmem [#allocation8], 544
    %v1633 = vld [vmem:[%s1632] sm:$0xff]
    %v1634 = vld [vmem:[%s1632 + $0x8] sm:$0xff]
    %v1635 = vld [vmem:[%s1632 + $0x10] sm:$0xff]
    %v1636 = vld [vmem:[%s1632 + $0x18] sm:$0xff]
    %1641 = vrot.lane.b32.xlu0 %v1633, 17
    %v1642 = vpop.permute.xlu0 %1641
    %1643 = vrot.lane.b32.xlu0 %v1634, 17
    %v1644 = vpop.permute.xlu0 %1643
    %1645 = vrot.lane.b32.xlu0 %v1635, 17
    %v1646 = vpop.permute.xlu0 %1645
    %1647 = vrot.lane.b32.xlu0 %v1636, 17
    %v1648 = vpop.permute.xlu0 %1647
    %vm1649 = vcmask 138240
    %v1650 = vsel %vm1649, %v1642, %v1644
    %v1651 = vsel %vm1649, %v1644, %v1646
    %v1652 = vsel %vm1649, %v1646, %v1648
    %v1657 = vmul.f32 %v357, %v1642
    %v1658 = vmul.f32 %v361, %v1650
    %v1659 = vmul.f32 %v365, %v1651
    %v1660 = vmul.f32 %v369, %v1652
    %v1661 = vmul.f32 %v373, %v1642
    %v1662 = vmul.f32 %v377, %v1650
    %v1663 = vmul.f32 %v381, %v1651
    %v1664 = vmul.f32 %v385, %v1652
    %1673 = vrot.lane.b32.xlu0 %v1657, 112
    %v1674 = vpop.permute.xlu0 %1673
    %1675 = vrot.lane.b32.xlu0 %v1658, 112
    %v1676 = vpop.permute.xlu0 %1675
    %1677 = vrot.lane.b32.xlu0 %v1659, 112
    %v1678 = vpop.permute.xlu0 %1677
    %1679 = vrot.lane.b32.xlu0 %v1660, 112
    %v1680 = vpop.permute.xlu0 %1679
    %1681 = vrot.lane.b32.xlu0 %v1661, 112
    %v1682 = vpop.permute.xlu0 %1681
    %1683 = vrot.lane.b32.xlu0 %v1662, 112
    %v1684 = vpop.permute.xlu0 %1683
    %1685 = vrot.lane.b32.xlu0 %v1663, 112
    %v1686 = vpop.permute.xlu0 %1685
    %1687 = vrot.lane.b32.xlu0 %v1664, 112
    %v1688 = vpop.permute.xlu0 %1687
    %v1689 = vsel %vm1609, %v1674, %v1676
    %v1690 = vsel %vm1609, %v1676, %v1678
    %v1691 = vsel %vm1609, %v1678, %v1680
    %v1692 = vsel %vm1609, %v1682, %v1684
    %v1693 = vsel %vm1609, %v1684, %v1686
    %v1694 = vsel %vm1609, %v1686, %v1688
    %v1703 = vadd.f32 %v1544, %v1689
    %v1704 = vadd.f32 %v1545, %v1690
    %v1705 = vadd.f32 %v1546, %v1691
    %v1706 = vadd.f32 %v1547, %v1680
    %v1707 = vadd.f32 %v1548, %v1692
    %v1708 = vadd.f32 %v1549, %v1693
    %v1709 = vadd.f32 %v1550, %v1694
    %v1710 = vadd.f32 %v1551, %v1688
    %s1711 = scalar_lea.vmem [#allocation8], 576
    %v1712 = vld [vmem:[%s1711] sm:$0xff]
    %v1713 = vld [vmem:[%s1711 + $0x8] sm:$0xff]
    %v1714 = vld [vmem:[%s1711 + $0x10] sm:$0xff]
    %v1715 = vld [vmem:[%s1711 + $0x18] sm:$0xff]
    %1720 = vrot.lane.b32.xlu0 %v1712, 18
    %v1721 = vpop.permute.xlu0 %1720
    %1722 = vrot.lane.b32.xlu0 %v1713, 18
    %v1723 = vpop.permute.xlu0 %1722
    %1724 = vrot.lane.b32.xlu0 %v1714, 18
    %v1725 = vpop.permute.xlu0 %1724
    %1726 = vrot.lane.b32.xlu0 %v1715, 18
    %v1727 = vpop.permute.xlu0 %1726
    %vm1728 = vcmask 146432
    %v1729 = vsel %vm1728, %v1721, %v1723
    %v1730 = vsel %vm1728, %v1723, %v1725
    %v1731 = vsel %vm1728, %v1725, %v1727
    %v1736 = vmul.f32 %v357, %v1721
    %v1737 = vmul.f32 %v361, %v1729
    %v1738 = vmul.f32 %v365, %v1730
    %v1739 = vmul.f32 %v369, %v1731
    %v1740 = vmul.f32 %v373, %v1721
    %v1741 = vmul.f32 %v377, %v1729
    %v1742 = vmul.f32 %v381, %v1730
    %v1743 = vmul.f32 %v385, %v1731
    %1752 = vrot.lane.b32.xlu0 %v1736, 110
    %v1753 = vpop.permute.xlu0 %1752
    %1754 = vrot.lane.b32.xlu0 %v1737, 110
    %v1755 = vpop.permute.xlu0 %1754
    %1756 = vrot.lane.b32.xlu0 %v1738, 110
    %v1757 = vpop.permute.xlu0 %1756
    %1758 = vrot.lane.b32.xlu0 %v1739, 110
    %v1759 = vpop.permute.xlu0 %1758
    %1760 = vrot.lane.b32.xlu0 %v1740, 110
    %v1761 = vpop.permute.xlu0 %1760
    %1762 = vrot.lane.b32.xlu0 %v1741, 110
    %v1763 = vpop.permute.xlu0 %1762
    %1764 = vrot.lane.b32.xlu0 %v1742, 110
    %v1765 = vpop.permute.xlu0 %1764
    %1766 = vrot.lane.b32.xlu0 %v1743, 110
    %v1767 = vpop.permute.xlu0 %1766
    %vm1768 = vcmask 900096
    %v1769 = vsel %vm1768, %v1753, %v1755
    %v1770 = vsel %vm1768, %v1755, %v1757
    %v1771 = vsel %vm1768, %v1757, %v1759
    %v1772 = vsel %vm1768, %v1761, %v1763
    %v1773 = vsel %vm1768, %v1763, %v1765
    %v1774 = vsel %vm1768, %v1765, %v1767
    %v1783 = vadd.f32 %v1624, %v1769
    %v1784 = vadd.f32 %v1625, %v1770
    %v1785 = vadd.f32 %v1626, %v1771
    %v1786 = vadd.f32 %v1627, %v1759
    %v1787 = vadd.f32 %v1628, %v1772
    %v1788 = vadd.f32 %v1629, %v1773
    %v1789 = vadd.f32 %v1630, %v1774
    %v1790 = vadd.f32 %v1631, %v1767
    %s1791 = scalar_lea.vmem [#allocation8], 608
    %v1792 = vld [vmem:[%s1791] sm:$0xff]
    %v1793 = vld [vmem:[%s1791 + $0x8] sm:$0xff]
    %v1794 = vld [vmem:[%s1791 + $0x10] sm:$0xff]
    %v1795 = vld [vmem:[%s1791 + $0x18] sm:$0xff]
    %1800 = vrot.lane.b32.xlu0 %v1792, 19
    %v1801 = vpop.permute.xlu0 %1800
    %1802 = vrot.lane.b32.xlu0 %v1793, 19
    %v1803 = vpop.permute.xlu0 %1802
    %1804 = vrot.lane.b32.xlu0 %v1794, 19
    %v1805 = vpop.permute.xlu0 %1804
    %1806 = vrot.lane.b32.xlu0 %v1795, 19
    %v1807 = vpop.permute.xlu0 %1806
    %vm1808 = vcmask 154624
    %v1809 = vsel %vm1808, %v1801, %v1803
    %v1810 = vsel %vm1808, %v1803, %v1805
    %v1811 = vsel %vm1808, %v1805, %v1807
    %v1816 = vmul.f32 %v357, %v1801
    %v1817 = vmul.f32 %v361, %v1809
    %v1818 = vmul.f32 %v365, %v1810
    %v1819 = vmul.f32 %v369, %v1811
    %v1820 = vmul.f32 %v373, %v1801
    %v1821 = vmul.f32 %v377, %v1809
    %v1822 = vmul.f32 %v381, %v1810
    %v1823 = vmul.f32 %v385, %v1811
    %1832 = vrot.lane.b32.xlu0 %v1816, 110
    %v1833 = vpop.permute.xlu0 %1832
    %1834 = vrot.lane.b32.xlu0 %v1817, 110
    %v1835 = vpop.permute.xlu0 %1834
    %1836 = vrot.lane.b32.xlu0 %v1818, 110
    %v1837 = vpop.permute.xlu0 %1836
    %1838 = vrot.lane.b32.xlu0 %v1819, 110
    %v1839 = vpop.permute.xlu0 %1838
    %1840 = vrot.lane.b32.xlu0 %v1820, 110
    %v1841 = vpop.permute.xlu0 %1840
    %1842 = vrot.lane.b32.xlu0 %v1821, 110
    %v1843 = vpop.permute.xlu0 %1842
    %1844 = vrot.lane.b32.xlu0 %v1822, 110
    %v1845 = vpop.permute.xlu0 %1844
    %1846 = vrot.lane.b32.xlu0 %v1823, 110
    %v1847 = vpop.permute.xlu0 %1846
    %v1848 = vsel %vm1768, %v1833, %v1835
    %v1849 = vsel %vm1768, %v1835, %v1837
    %v1850 = vsel %vm1768, %v1837, %v1839
    %v1851 = vsel %vm1768, %v1841, %v1843
    %v1852 = vsel %vm1768, %v1843, %v1845
    %v1853 = vsel %vm1768, %v1845, %v1847
    %v1862 = vadd.f32 %v1703, %v1848
    %v1863 = vadd.f32 %v1704, %v1849
    %v1864 = vadd.f32 %v1705, %v1850
    %v1865 = vadd.f32 %v1706, %v1839
    %v1866 = vadd.f32 %v1707, %v1851
    %v1867 = vadd.f32 %v1708, %v1852
    %v1868 = vadd.f32 %v1709, %v1853
    %v1869 = vadd.f32 %v1710, %v1847
    %s1870 = scalar_lea.vmem [#allocation8], 640
    %v1871 = vld [vmem:[%s1870] sm:$0xff]
    %v1872 = vld [vmem:[%s1870 + $0x8] sm:$0xff]
    %v1873 = vld [vmem:[%s1870 + $0x10] sm:$0xff]
    %v1874 = vld [vmem:[%s1870 + $0x18] sm:$0xff]
    %1879 = vrot.lane.b32.xlu0 %v1871, 20
    %v1880 = vpop.permute.xlu0 %1879
    %1881 = vrot.lane.b32.xlu0 %v1872, 20
    %v1882 = vpop.permute.xlu0 %1881
    %1883 = vrot.lane.b32.xlu0 %v1873, 20
    %v1884 = vpop.permute.xlu0 %1883
    %1885 = vrot.lane.b32.xlu0 %v1874, 20
    %v1886 = vpop.permute.xlu0 %1885
    %vm1887 = vcmask 162816
    %v1888 = vsel %vm1887, %v1880, %v1882
    %v1889 = vsel %vm1887, %v1882, %v1884
    %v1890 = vsel %vm1887, %v1884, %v1886
    %v1895 = vmul.f32 %v357, %v1880
    %v1896 = vmul.f32 %v361, %v1888
    %v1897 = vmul.f32 %v365, %v1889
    %v1898 = vmul.f32 %v369, %v1890
    %v1899 = vmul.f32 %v373, %v1880
    %v1900 = vmul.f32 %v377, %v1888
    %v1901 = vmul.f32 %v381, %v1889
    %v1902 = vmul.f32 %v385, %v1890
    %1911 = vrot.lane.b32.xlu0 %v1895, 108
    %v1912 = vpop.permute.xlu0 %1911
    %1913 = vrot.lane.b32.xlu0 %v1896, 108
    %v1914 = vpop.permute.xlu0 %1913
    %1915 = vrot.lane.b32.xlu0 %v1897, 108
    %v1916 = vpop.permute.xlu0 %1915
    %1917 = vrot.lane.b32.xlu0 %v1898, 108
    %v1918 = vpop.permute.xlu0 %1917
    %1919 = vrot.lane.b32.xlu0 %v1899, 108
    %v1920 = vpop.permute.xlu0 %1919
    %1921 = vrot.lane.b32.xlu0 %v1900, 108
    %v1922 = vpop.permute.xlu0 %1921
    %1923 = vrot.lane.b32.xlu0 %v1901, 108
    %v1924 = vpop.permute.xlu0 %1923
    %1925 = vrot.lane.b32.xlu0 %v1902, 108
    %v1926 = vpop.permute.xlu0 %1925
    %vm1927 = vcmask 883712
    %v1928 = vsel %vm1927, %v1912, %v1914
    %v1929 = vsel %vm1927, %v1914, %v1916
    %v1930 = vsel %vm1927, %v1916, %v1918
    %v1931 = vsel %vm1927, %v1920, %v1922
    %v1932 = vsel %vm1927, %v1922, %v1924
    %v1933 = vsel %vm1927, %v1924, %v1926
    %v1942 = vadd.f32 %v1783, %v1928
    %v1943 = vadd.f32 %v1784, %v1929
    %v1944 = vadd.f32 %v1785, %v1930
    %v1945 = vadd.f32 %v1786, %v1918
    %v1946 = vadd.f32 %v1787, %v1931
    %v1947 = vadd.f32 %v1788, %v1932
    %v1948 = vadd.f32 %v1789, %v1933
    %v1949 = vadd.f32 %v1790, %v1926
    %s1950 = scalar_lea.vmem [#allocation8], 672
    %v1951 = vld [vmem:[%s1950] sm:$0xff]
    %v1952 = vld [vmem:[%s1950 + $0x8] sm:$0xff]
    %v1953 = vld [vmem:[%s1950 + $0x10] sm:$0xff]
    %v1954 = vld [vmem:[%s1950 + $0x18] sm:$0xff]
    %1959 = vrot.lane.b32.xlu0 %v1951, 21
    %v1960 = vpop.permute.xlu0 %1959
    %1961 = vrot.lane.b32.xlu0 %v1952, 21
    %v1962 = vpop.permute.xlu0 %1961
    %1963 = vrot.lane.b32.xlu0 %v1953, 21
    %v1964 = vpop.permute.xlu0 %1963
    %1965 = vrot.lane.b32.xlu0 %v1954, 21
    %v1966 = vpop.permute.xlu0 %1965
    %vm1967 = vcmask 171008
    %v1968 = vsel %vm1967, %v1960, %v1962
    %v1969 = vsel %vm1967, %v1962, %v1964
    %v1970 = vsel %vm1967, %v1964, %v1966
    %v1975 = vmul.f32 %v357, %v1960
    %v1976 = vmul.f32 %v361, %v1968
    %v1977 = vmul.f32 %v365, %v1969
    %v1978 = vmul.f32 %v369, %v1970
    %v1979 = vmul.f32 %v373, %v1960
    %v1980 = vmul.f32 %v377, %v1968
    %v1981 = vmul.f32 %v381, %v1969
    %v1982 = vmul.f32 %v385, %v1970
    %1991 = vrot.lane.b32.xlu0 %v1975, 108
    %v1992 = vpop.permute.xlu0 %1991
    %1993 = vrot.lane.b32.xlu0 %v1976, 108
    %v1994 = vpop.permute.xlu0 %1993
    %1995 = vrot.lane.b32.xlu0 %v1977, 108
    %v1996 = vpop.permute.xlu0 %1995
    %1997 = vrot.lane.b32.xlu0 %v1978, 108
    %v1998 = vpop.permute.xlu0 %1997
    %1999 = vrot.lane.b32.xlu0 %v1979, 108
    %v2000 = vpop.permute.xlu0 %1999
    %2001 = vrot.lane.b32.xlu0 %v1980, 108
    %v2002 = vpop.permute.xlu0 %2001
    %2003 = vrot.lane.b32.xlu0 %v1981, 108
    %v2004 = vpop.permute.xlu0 %2003
    %2005 = vrot.lane.b32.xlu0 %v1982, 108
    %v2006 = vpop.permute.xlu0 %2005
    %v2007 = vsel %vm1927, %v1992, %v1994
    %v2008 = vsel %vm1927, %v1994, %v1996
    %v2009 = vsel %vm1927, %v1996, %v1998
    %v2010 = vsel %vm1927, %v2000, %v2002
    %v2011 = vsel %vm1927, %v2002, %v2004
    %v2012 = vsel %vm1927, %v2004, %v2006
    %v2021 = vadd.f32 %v1862, %v2007
    %v2022 = vadd.f32 %v1863, %v2008
    %v2023 = vadd.f32 %v1864, %v2009
    %v2024 = vadd.f32 %v1865, %v1998
    %v2025 = vadd.f32 %v1866, %v2010
    %v2026 = vadd.f32 %v1867, %v2011
    %v2027 = vadd.f32 %v1868, %v2012
    %v2028 = vadd.f32 %v1869, %v2006
    %s2029 = scalar_lea.vmem [#allocation8], 704
    %v2030 = vld [vmem:[%s2029] sm:$0xff]
    %v2031 = vld [vmem:[%s2029 + $0x8] sm:$0xff]
    %v2032 = vld [vmem:[%s2029 + $0x10] sm:$0xff]
    %v2033 = vld [vmem:[%s2029 + $0x18] sm:$0xff]
    %2038 = vrot.lane.b32.xlu0 %v2030, 22
    %v2039 = vpop.permute.xlu0 %2038
    %2040 = vrot.lane.b32.xlu0 %v2031, 22
    %v2041 = vpop.permute.xlu0 %2040
    %2042 = vrot.lane.b32.xlu0 %v2032, 22
    %v2043 = vpop.permute.xlu0 %2042
    %2044 = vrot.lane.b32.xlu0 %v2033, 22
    %v2045 = vpop.permute.xlu0 %2044
    %vm2046 = vcmask 179200
    %v2047 = vsel %vm2046, %v2039, %v2041
    %v2048 = vsel %vm2046, %v2041, %v2043
    %v2049 = vsel %vm2046, %v2043, %v2045
    %v2054 = vmul.f32 %v357, %v2039
    %v2055 = vmul.f32 %v361, %v2047
    %v2056 = vmul.f32 %v365, %v2048
    %v2057 = vmul.f32 %v369, %v2049
    %v2058 = vmul.f32 %v373, %v2039
    %v2059 = vmul.f32 %v377, %v2047
    %v2060 = vmul.f32 %v381, %v2048
    %v2061 = vmul.f32 %v385, %v2049
    %2070 = vrot.lane.b32.xlu0 %v2054, 106
    %v2071 = vpop.permute.xlu0 %2070
    %2072 = vrot.lane.b32.xlu0 %v2055, 106
    %v2073 = vpop.permute.xlu0 %2072
    %2074 = vrot.lane.b32.xlu0 %v2056, 106
    %v2075 = vpop.permute.xlu0 %2074
    %2076 = vrot.lane.b32.xlu0 %v2057, 106
    %v2077 = vpop.permute.xlu0 %2076
    %2078 = vrot.lane.b32.xlu0 %v2058, 106
    %v2079 = vpop.permute.xlu0 %2078
    %2080 = vrot.lane.b32.xlu0 %v2059, 106
    %v2081 = vpop.permute.xlu0 %2080
    %2082 = vrot.lane.b32.xlu0 %v2060, 106
    %v2083 = vpop.permute.xlu0 %2082
    %2084 = vrot.lane.b32.xlu0 %v2061, 106
    %v2085 = vpop.permute.xlu0 %2084
    %vm2086 = vcmask 867328
    %v2087 = vsel %vm2086, %v2071, %v2073
    %v2088 = vsel %vm2086, %v2073, %v2075
    %v2089 = vsel %vm2086, %v2075, %v2077
    %v2090 = vsel %vm2086, %v2079, %v2081
    %v2091 = vsel %vm2086, %v2081, %v2083
    %v2092 = vsel %vm2086, %v2083, %v2085
    %v2101 = vadd.f32 %v1942, %v2087
    %v2102 = vadd.f32 %v1943, %v2088
    %v2103 = vadd.f32 %v1944, %v2089
    %v2104 = vadd.f32 %v1945, %v2077
    %v2105 = vadd.f32 %v1946, %v2090
    %v2106 = vadd.f32 %v1947, %v2091
    %v2107 = vadd.f32 %v1948, %v2092
    %v2108 = vadd.f32 %v1949, %v2085
    %s2109 = scalar_lea.vmem [#allocation8], 736
    %v2110 = vld [vmem:[%s2109] sm:$0xff]
    %v2111 = vld [vmem:[%s2109 + $0x8] sm:$0xff]
    %v2112 = vld [vmem:[%s2109 + $0x10] sm:$0xff]
    %v2113 = vld [vmem:[%s2109 + $0x18] sm:$0xff]
    %2118 = vrot.lane.b32.xlu0 %v2110, 23
    %v2119 = vpop.permute.xlu0 %2118
    %2120 = vrot.lane.b32.xlu0 %v2111, 23
    %v2121 = vpop.permute.xlu0 %2120
    %2122 = vrot.lane.b32.xlu0 %v2112, 23
    %v2123 = vpop.permute.xlu0 %2122
    %2124 = vrot.lane.b32.xlu0 %v2113, 23
    %v2125 = vpop.permute.xlu0 %2124
    %vm2126 = vcmask 187392
    %v2127 = vsel %vm2126, %v2119, %v2121
    %v2128 = vsel %vm2126, %v2121, %v2123
    %v2129 = vsel %vm2126, %v2123, %v2125
    %v2134 = vmul.f32 %v357, %v2119
    %v2135 = vmul.f32 %v361, %v2127
    %v2136 = vmul.f32 %v365, %v2128
    %v2137 = vmul.f32 %v369, %v2129
    %v2138 = vmul.f32 %v373, %v2119
    %v2139 = vmul.f32 %v377, %v2127
    %v2140 = vmul.f32 %v381, %v2128
    %v2141 = vmul.f32 %v385, %v2129
    %2150 = vrot.lane.b32.xlu0 %v2134, 106
    %v2151 = vpop.permute.xlu0 %2150
    %2152 = vrot.lane.b32.xlu0 %v2135, 106
    %v2153 = vpop.permute.xlu0 %2152
    %2154 = vrot.lane.b32.xlu0 %v2136, 106
    %v2155 = vpop.permute.xlu0 %2154
    %2156 = vrot.lane.b32.xlu0 %v2137, 106
    %v2157 = vpop.permute.xlu0 %2156
    %2158 = vrot.lane.b32.xlu0 %v2138, 106
    %v2159 = vpop.permute.xlu0 %2158
    %2160 = vrot.lane.b32.xlu0 %v2139, 106
    %v2161 = vpop.permute.xlu0 %2160
    %2162 = vrot.lane.b32.xlu0 %v2140, 106
    %v2163 = vpop.permute.xlu0 %2162
    %2164 = vrot.lane.b32.xlu0 %v2141, 106
    %v2165 = vpop.permute.xlu0 %2164
    %v2166 = vsel %vm2086, %v2151, %v2153
    %v2167 = vsel %vm2086, %v2153, %v2155
    %v2168 = vsel %vm2086, %v2155, %v2157
    %v2169 = vsel %vm2086, %v2159, %v2161
    %v2170 = vsel %vm2086, %v2161, %v2163
    %v2171 = vsel %vm2086, %v2163, %v2165
    %v2180 = vadd.f32 %v2021, %v2166
    %v2181 = vadd.f32 %v2022, %v2167
    %v2182 = vadd.f32 %v2023, %v2168
    %v2183 = vadd.f32 %v2024, %v2157
    %v2184 = vadd.f32 %v2025, %v2169
    %v2185 = vadd.f32 %v2026, %v2170
    %v2186 = vadd.f32 %v2027, %v2171
    %v2187 = vadd.f32 %v2028, %v2165
    %s2188 = scalar_lea.vmem [#allocation8], 768
    %v2189 = vld [vmem:[%s2188] sm:$0xff]
    %v2190 = vld [vmem:[%s2188 + $0x8] sm:$0xff]
    %v2191 = vld [vmem:[%s2188 + $0x10] sm:$0xff]
    %v2192 = vld [vmem:[%s2188 + $0x18] sm:$0xff]
    %2197 = vrot.lane.b32.xlu0 %v2189, 24
    %v2198 = vpop.permute.xlu0 %2197
    %2199 = vrot.lane.b32.xlu0 %v2190, 24
    %v2200 = vpop.permute.xlu0 %2199
    %2201 = vrot.lane.b32.xlu0 %v2191, 24
    %v2202 = vpop.permute.xlu0 %2201
    %2203 = vrot.lane.b32.xlu0 %v2192, 24
    %v2204 = vpop.permute.xlu0 %2203
    %vm2205 = vcmask 195584
    %v2206 = vsel %vm2205, %v2198, %v2200
    %v2207 = vsel %vm2205, %v2200, %v2202
    %v2208 = vsel %vm2205, %v2202, %v2204
    %v2213 = vmul.f32 %v357, %v2198
    %v2214 = vmul.f32 %v361, %v2206
    %v2215 = vmul.f32 %v365, %v2207
    %v2216 = vmul.f32 %v369, %v2208
    %v2217 = vmul.f32 %v373, %v2198
    %v2218 = vmul.f32 %v377, %v2206
    %v2219 = vmul.f32 %v381, %v2207
    %v2220 = vmul.f32 %v385, %v2208
    %2229 = vrot.lane.b32.xlu0 %v2213, 104
    %v2230 = vpop.permute.xlu0 %2229
    %2231 = vrot.lane.b32.xlu0 %v2214, 104
    %v2232 = vpop.permute.xlu0 %2231
    %2233 = vrot.lane.b32.xlu0 %v2215, 104
    %v2234 = vpop.permute.xlu0 %2233
    %2235 = vrot.lane.b32.xlu0 %v2216, 104
    %v2236 = vpop.permute.xlu0 %2235
    %2237 = vrot.lane.b32.xlu0 %v2217, 104
    %v2238 = vpop.permute.xlu0 %2237
    %2239 = vrot.lane.b32.xlu0 %v2218, 104
    %v2240 = vpop.permute.xlu0 %2239
    %2241 = vrot.lane.b32.xlu0 %v2219, 104
    %v2242 = vpop.permute.xlu0 %2241
    %2243 = vrot.lane.b32.xlu0 %v2220, 104
    %v2244 = vpop.permute.xlu0 %2243
    %vm2245 = vcmask 850944
    %v2246 = vsel %vm2245, %v2230, %v2232
    %v2247 = vsel %vm2245, %v2232, %v2234
    %v2248 = vsel %vm2245, %v2234, %v2236
    %v2249 = vsel %vm2245, %v2238, %v2240
    %v2250 = vsel %vm2245, %v2240, %v2242
    %v2251 = vsel %vm2245, %v2242, %v2244
    %v2260 = vadd.f32 %v2101, %v2246
    %v2261 = vadd.f32 %v2102, %v2247
    %v2262 = vadd.f32 %v2103, %v2248
    %v2263 = vadd.f32 %v2104, %v2236
    %v2264 = vadd.f32 %v2105, %v2249
    %v2265 = vadd.f32 %v2106, %v2250
    %v2266 = vadd.f32 %v2107, %v2251
    %v2267 = vadd.f32 %v2108, %v2244
    %s2268 = scalar_lea.vmem [#allocation8], 800
    %v2269 = vld [vmem:[%s2268] sm:$0xff]
    %v2270 = vld [vmem:[%s2268 + $0x8] sm:$0xff]
    %v2271 = vld [vmem:[%s2268 + $0x10] sm:$0xff]
    %v2272 = vld [vmem:[%s2268 + $0x18] sm:$0xff]
    %2277 = vrot.lane.b32.xlu0 %v2269, 25
    %v2278 = vpop.permute.xlu0 %2277
    %2279 = vrot.lane.b32.xlu0 %v2270, 25
    %v2280 = vpop.permute.xlu0 %2279
    %2281 = vrot.lane.b32.xlu0 %v2271, 25
    %v2282 = vpop.permute.xlu0 %2281
    %2283 = vrot.lane.b32.xlu0 %v2272, 25
    %v2284 = vpop.permute.xlu0 %2283
    %vm2285 = vcmask 203776
    %v2286 = vsel %vm2285, %v2278, %v2280
    %v2287 = vsel %vm2285, %v2280, %v2282
    %v2288 = vsel %vm2285, %v2282, %v2284
    %v2293 = vmul.f32 %v357, %v2278
    %v2294 = vmul.f32 %v361, %v2286
    %v2295 = vmul.f32 %v365, %v2287
    %v2296 = vmul.f32 %v369, %v2288
    %v2297 = vmul.f32 %v373, %v2278
    %v2298 = vmul.f32 %v377, %v2286
    %v2299 = vmul.f32 %v381, %v2287
    %v2300 = vmul.f32 %v385, %v2288
    %2309 = vrot.lane.b32.xlu0 %v2293, 104
    %v2310 = vpop.permute.xlu0 %2309
    %2311 = vrot.lane.b32.xlu0 %v2294, 104
    %v2312 = vpop.permute.xlu0 %2311
    %2313 = vrot.lane.b32.xlu0 %v2295, 104
    %v2314 = vpop.permute.xlu0 %2313
    %2315 = vrot.lane.b32.xlu0 %v2296, 104
    %v2316 = vpop.permute.xlu0 %2315
    %2317 = vrot.lane.b32.xlu0 %v2297, 104
    %v2318 = vpop.permute.xlu0 %2317
    %2319 = vrot.lane.b32.xlu0 %v2298, 104
    %v2320 = vpop.permute.xlu0 %2319
    %2321 = vrot.lane.b32.xlu0 %v2299, 104
    %v2322 = vpop.permute.xlu0 %2321
    %2323 = vrot.lane.b32.xlu0 %v2300, 104
    %v2324 = vpop.permute.xlu0 %2323
    %v2325 = vsel %vm2245, %v2310, %v2312
    %v2326 = vsel %vm2245, %v2312, %v2314
    %v2327 = vsel %vm2245, %v2314, %v2316
    %v2328 = vsel %vm2245, %v2318, %v2320
    %v2329 = vsel %vm2245, %v2320, %v2322
    %v2330 = vsel %vm2245, %v2322, %v2324
    %v2339 = vadd.f32 %v2180, %v2325
    %v2340 = vadd.f32 %v2181, %v2326
    %v2341 = vadd.f32 %v2182, %v2327
    %v2342 = vadd.f32 %v2183, %v2316
    %v2343 = vadd.f32 %v2184, %v2328
    %v2344 = vadd.f32 %v2185, %v2329
    %v2345 = vadd.f32 %v2186, %v2330
    %v2346 = vadd.f32 %v2187, %v2324
    %s2347 = scalar_lea.vmem [#allocation8], 832
    %v2348 = vld [vmem:[%s2347] sm:$0xff]
    %v2349 = vld [vmem:[%s2347 + $0x8] sm:$0xff]
    %v2350 = vld [vmem:[%s2347 + $0x10] sm:$0xff]
    %v2351 = vld [vmem:[%s2347 + $0x18] sm:$0xff]
    %2356 = vrot.lane.b32.xlu0 %v2348, 26
    %v2357 = vpop.permute.xlu0 %2356
    %2358 = vrot.lane.b32.xlu0 %v2349, 26
    %v2359 = vpop.permute.xlu0 %2358
    %2360 = vrot.lane.b32.xlu0 %v2350, 26
    %v2361 = vpop.permute.xlu0 %2360
    %2362 = vrot.lane.b32.xlu0 %v2351, 26
    %v2363 = vpop.permute.xlu0 %2362
    %vm2364 = vcmask 211968
    %v2365 = vsel %vm2364, %v2357, %v2359
    %v2366 = vsel %vm2364, %v2359, %v2361
    %v2367 = vsel %vm2364, %v2361, %v2363
    %v2372 = vmul.f32 %v357, %v2357
    %v2373 = vmul.f32 %v361, %v2365
    %v2374 = vmul.f32 %v365, %v2366
    %v2375 = vmul.f32 %v369, %v2367
    %v2376 = vmul.f32 %v373, %v2357
    %v2377 = vmul.f32 %v377, %v2365
    %v2378 = vmul.f32 %v381, %v2366
    %v2379 = vmul.f32 %v385, %v2367
    %2388 = vrot.lane.b32.xlu0 %v2372, 102
    %v2389 = vpop.permute.xlu0 %2388
    %2390 = vrot.lane.b32.xlu0 %v2373, 102
    %v2391 = vpop.permute.xlu0 %2390
    %2392 = vrot.lane.b32.xlu0 %v2374, 102
    %v2393 = vpop.permute.xlu0 %2392
    %2394 = vrot.lane.b32.xlu0 %v2375, 102
    %v2395 = vpop.permute.xlu0 %2394
    %2396 = vrot.lane.b32.xlu0 %v2376, 102
    %v2397 = vpop.permute.xlu0 %2396
    %2398 = vrot.lane.b32.xlu0 %v2377, 102
    %v2399 = vpop.permute.xlu0 %2398
    %2400 = vrot.lane.b32.xlu0 %v2378, 102
    %v2401 = vpop.permute.xlu0 %2400
    %2402 = vrot.lane.b32.xlu0 %v2379, 102
    %v2403 = vpop.permute.xlu0 %2402
    %vm2404 = vcmask 834560
    %v2405 = vsel %vm2404, %v2389, %v2391
    %v2406 = vsel %vm2404, %v2391, %v2393
    %v2407 = vsel %vm2404, %v2393, %v2395
    %v2408 = vsel %vm2404, %v2397, %v2399
    %v2409 = vsel %vm2404, %v2399, %v2401
    %v2410 = vsel %vm2404, %v2401, %v2403
    %v2419 = vadd.f32 %v2260, %v2405
    %v2420 = vadd.f32 %v2261, %v2406
    %v2421 = vadd.f32 %v2262, %v2407
    %v2422 = vadd.f32 %v2263, %v2395
    %v2423 = vadd.f32 %v2264, %v2408
    %v2424 = vadd.f32 %v2265, %v2409
    %v2425 = vadd.f32 %v2266, %v2410
    %v2426 = vadd.f32 %v2267, %v2403
    %s2427 = scalar_lea.vmem [#allocation8], 864
    %v2428 = vld [vmem:[%s2427] sm:$0xff]
    %v2429 = vld [vmem:[%s2427 + $0x8] sm:$0xff]
    %v2430 = vld [vmem:[%s2427 + $0x10] sm:$0xff]
    %v2431 = vld [vmem:[%s2427 + $0x18] sm:$0xff]
    %2436 = vrot.lane.b32.xlu0 %v2428, 27
    %v2437 = vpop.permute.xlu0 %2436
    %2438 = vrot.lane.b32.xlu0 %v2429, 27
    %v2439 = vpop.permute.xlu0 %2438
    %2440 = vrot.lane.b32.xlu0 %v2430, 27
    %v2441 = vpop.permute.xlu0 %2440
    %2442 = vrot.lane.b32.xlu0 %v2431, 27
    %v2443 = vpop.permute.xlu0 %2442
    %vm2444 = vcmask 220160
    %v2445 = vsel %vm2444, %v2437, %v2439
    %v2446 = vsel %vm2444, %v2439, %v2441
    %v2447 = vsel %vm2444, %v2441, %v2443
    %v2452 = vmul.f32 %v357, %v2437
    %v2453 = vmul.f32 %v361, %v2445
    %v2454 = vmul.f32 %v365, %v2446
    %v2455 = vmul.f32 %v369, %v2447
    %v2456 = vmul.f32 %v373, %v2437
    %v2457 = vmul.f32 %v377, %v2445
    %v2458 = vmul.f32 %v381, %v2446
    %v2459 = vmul.f32 %v385, %v2447
    %2468 = vrot.lane.b32.xlu0 %v2452, 102
    %v2469 = vpop.permute.xlu0 %2468
    %2470 = vrot.lane.b32.xlu0 %v2453, 102
    %v2471 = vpop.permute.xlu0 %2470
    %2472 = vrot.lane.b32.xlu0 %v2454, 102
    %v2473 = vpop.permute.xlu0 %2472
    %2474 = vrot.lane.b32.xlu0 %v2455, 102
    %v2475 = vpop.permute.xlu0 %2474
    %2476 = vrot.lane.b32.xlu0 %v2456, 102
    %v2477 = vpop.permute.xlu0 %2476
    %2478 = vrot.lane.b32.xlu0 %v2457, 102
    %v2479 = vpop.permute.xlu0 %2478
    %2480 = vrot.lane.b32.xlu0 %v2458, 102
    %v2481 = vpop.permute.xlu0 %2480
    %2482 = vrot.lane.b32.xlu0 %v2459, 102
    %v2483 = vpop.permute.xlu0 %2482
    %v2484 = vsel %vm2404, %v2469, %v2471
    %v2485 = vsel %vm2404, %v2471, %v2473
    %v2486 = vsel %vm2404, %v2473, %v2475
    %v2487 = vsel %vm2404, %v2477, %v2479
    %v2488 = vsel %vm2404, %v2479, %v2481
    %v2489 = vsel %vm2404, %v2481, %v2483
    %v2498 = vadd.f32 %v2339, %v2484
    %v2499 = vadd.f32 %v2340, %v2485
    %v2500 = vadd.f32 %v2341, %v2486
    %v2501 = vadd.f32 %v2342, %v2475
    %v2502 = vadd.f32 %v2343, %v2487
    %v2503 = vadd.f32 %v2344, %v2488
    %v2504 = vadd.f32 %v2345, %v2489
    %v2505 = vadd.f32 %v2346, %v2483
    %s2506 = scalar_lea.vmem [#allocation8], 896
    %v2507 = vld [vmem:[%s2506] sm:$0xff]
    %v2508 = vld [vmem:[%s2506 + $0x8] sm:$0xff]
    %v2509 = vld [vmem:[%s2506 + $0x10] sm:$0xff]
    %v2510 = vld [vmem:[%s2506 + $0x18] sm:$0xff]
    %2515 = vrot.lane.b32.xlu0 %v2507, 28
    %v2516 = vpop.permute.xlu0 %2515
    %2517 = vrot.lane.b32.xlu0 %v2508, 28
    %v2518 = vpop.permute.xlu0 %2517
    %2519 = vrot.lane.b32.xlu0 %v2509, 28
    %v2520 = vpop.permute.xlu0 %2519
    %2521 = vrot.lane.b32.xlu0 %v2510, 28
    %v2522 = vpop.permute.xlu0 %2521
    %vm2523 = vcmask 228352
    %v2524 = vsel %vm2523, %v2516, %v2518
    %v2525 = vsel %vm2523, %v2518, %v2520
    %v2526 = vsel %vm2523, %v2520, %v2522
    %v2531 = vmul.f32 %v357, %v2516
    %v2532 = vmul.f32 %v361, %v2524
    %v2533 = vmul.f32 %v365, %v2525
    %v2534 = vmul.f32 %v369, %v2526
    %v2535 = vmul.f32 %v373, %v2516
    %v2536 = vmul.f32 %v377, %v2524
    %v2537 = vmul.f32 %v381, %v2525
    %v2538 = vmul.f32 %v385, %v2526
    %2547 = vrot.lane.b32.xlu0 %v2531, 100
    %v2548 = vpop.permute.xlu0 %2547
    %2549 = vrot.lane.b32.xlu0 %v2532, 100
    %v2550 = vpop.permute.xlu0 %2549
    %2551 = vrot.lane.b32.xlu0 %v2533, 100
    %v2552 = vpop.permute.xlu0 %2551
    %2553 = vrot.lane.b32.xlu0 %v2534, 100
    %v2554 = vpop.permute.xlu0 %2553
    %2555 = vrot.lane.b32.xlu0 %v2535, 100
    %v2556 = vpop.permute.xlu0 %2555
    %2557 = vrot.lane.b32.xlu0 %v2536, 100
    %v2558 = vpop.permute.xlu0 %2557
    %2559 = vrot.lane.b32.xlu0 %v2537, 100
    %v2560 = vpop.permute.xlu0 %2559
    %2561 = vrot.lane.b32.xlu0 %v2538, 100
    %v2562 = vpop.permute.xlu0 %2561
    %vm2563 = vcmask 818176
    %v2564 = vsel %vm2563, %v2548, %v2550
    %v2565 = vsel %vm2563, %v2550, %v2552
    %v2566 = vsel %vm2563, %v2552, %v2554
    %v2567 = vsel %vm2563, %v2556, %v2558
    %v2568 = vsel %vm2563, %v2558, %v2560
    %v2569 = vsel %vm2563, %v2560, %v2562
    %v2578 = vadd.f32 %v2419, %v2564
    %v2579 = vadd.f32 %v2420, %v2565
    %v2580 = vadd.f32 %v2421, %v2566
    %v2581 = vadd.f32 %v2422, %v2554
    %v2582 = vadd.f32 %v2423, %v2567
    %v2583 = vadd.f32 %v2424, %v2568
    %v2584 = vadd.f32 %v2425, %v2569
    %v2585 = vadd.f32 %v2426, %v2562
    %s2586 = scalar_lea.vmem [#allocation8], 928
    %v2587 = vld [vmem:[%s2586] sm:$0xff]
    %v2588 = vld [vmem:[%s2586 + $0x8] sm:$0xff]
    %v2589 = vld [vmem:[%s2586 + $0x10] sm:$0xff]
    %v2590 = vld [vmem:[%s2586 + $0x18] sm:$0xff]
    %2595 = vrot.lane.b32.xlu0 %v2587, 29
    %v2596 = vpop.permute.xlu0 %2595
    %2597 = vrot.lane.b32.xlu0 %v2588, 29
    %v2598 = vpop.permute.xlu0 %2597
    %2599 = vrot.lane.b32.xlu0 %v2589, 29
    %v2600 = vpop.permute.xlu0 %2599
    %2601 = vrot.lane.b32.xlu0 %v2590, 29
    %v2602 = vpop.permute.xlu0 %2601
    %vm2603 = vcmask 236544
    %v2604 = vsel %vm2603, %v2596, %v2598
    %v2605 = vsel %vm2603, %v2598, %v2600
    %v2606 = vsel %vm2603, %v2600, %v2602
    %v2611 = vmul.f32 %v357, %v2596
    %v2612 = vmul.f32 %v361, %v2604
    %v2613 = vmul.f32 %v365, %v2605
    %v2614 = vmul.f32 %v369, %v2606
    %v2615 = vmul.f32 %v373, %v2596
    %v2616 = vmul.f32 %v377, %v2604
    %v2617 = vmul.f32 %v381, %v2605
    %v2618 = vmul.f32 %v385, %v2606
    %2627 = vrot.lane.b32.xlu0 %v2611, 100
    %v2628 = vpop.permute.xlu0 %2627
    %2629 = vrot.lane.b32.xlu0 %v2612, 100
    %v2630 = vpop.permute.xlu0 %2629
    %2631 = vrot.lane.b32.xlu0 %v2613, 100
    %v2632 = vpop.permute.xlu0 %2631
    %2633 = vrot.lane.b32.xlu0 %v2614, 100
    %v2634 = vpop.permute.xlu0 %2633
    %2635 = vrot.lane.b32.xlu0 %v2615, 100
    %v2636 = vpop.permute.xlu0 %2635
    %2637 = vrot.lane.b32.xlu0 %v2616, 100
    %v2638 = vpop.permute.xlu0 %2637
    %2639 = vrot.lane.b32.xlu0 %v2617, 100
    %v2640 = vpop.permute.xlu0 %2639
    %2641 = vrot.lane.b32.xlu0 %v2618, 100
    %v2642 = vpop.permute.xlu0 %2641
    %v2643 = vsel %vm2563, %v2628, %v2630
    %v2644 = vsel %vm2563, %v2630, %v2632
    %v2645 = vsel %vm2563, %v2632, %v2634
    %v2646 = vsel %vm2563, %v2636, %v2638
    %v2647 = vsel %vm2563, %v2638, %v2640
    %v2648 = vsel %vm2563, %v2640, %v2642
    %v2657 = vadd.f32 %v2498, %v2643
    %v2658 = vadd.f32 %v2499, %v2644
    %v2659 = vadd.f32 %v2500, %v2645
    %v2660 = vadd.f32 %v2501, %v2634
    %v2661 = vadd.f32 %v2502, %v2646
    %v2662 = vadd.f32 %v2503, %v2647
    %v2663 = vadd.f32 %v2504, %v2648
    %v2664 = vadd.f32 %v2505, %v2642
    %s2665 = scalar_lea.vmem [#allocation8], 960
    %v2666 = vld [vmem:[%s2665] sm:$0xff]
    %v2667 = vld [vmem:[%s2665 + $0x8] sm:$0xff]
    %v2668 = vld [vmem:[%s2665 + $0x10] sm:$0xff]
    %v2669 = vld [vmem:[%s2665 + $0x18] sm:$0xff]
    %2674 = vrot.lane.b32.xlu0 %v2666, 30
    %v2675 = vpop.permute.xlu0 %2674
    %2676 = vrot.lane.b32.xlu0 %v2667, 30
    %v2677 = vpop.permute.xlu0 %2676
    %2678 = vrot.lane.b32.xlu0 %v2668, 30
    %v2679 = vpop.permute.xlu0 %2678
    %2680 = vrot.lane.b32.xlu0 %v2669, 30
    %v2681 = vpop.permute.xlu0 %2680
    %vm2682 = vcmask 244736
    %v2683 = vsel %vm2682, %v2675, %v2677
    %v2684 = vsel %vm2682, %v2677, %v2679
    %v2685 = vsel %vm2682, %v2679, %v2681
    %v2690 = vmul.f32 %v357, %v2675
    %v2691 = vmul.f32 %v361, %v2683
    %v2692 = vmul.f32 %v365, %v2684
    %v2693 = vmul.f32 %v369, %v2685
    %v2694 = vmul.f32 %v373, %v2675
    %v2695 = vmul.f32 %v377, %v2683
    %v2696 = vmul.f32 %v381, %v2684
    %v2697 = vmul.f32 %v385, %v2685
    %2706 = vrot.lane.b32.xlu0 %v2690, 98
    %v2707 = vpop.permute.xlu0 %2706
    %2708 = vrot.lane.b32.xlu0 %v2691, 98
    %v2709 = vpop.permute.xlu0 %2708
    %2710 = vrot.lane.b32.xlu0 %v2692, 98
    %v2711 = vpop.permute.xlu0 %2710
    %2712 = vrot.lane.b32.xlu0 %v2693, 98
    %v2713 = vpop.permute.xlu0 %2712
    %2714 = vrot.lane.b32.xlu0 %v2694, 98
    %v2715 = vpop.permute.xlu0 %2714
    %2716 = vrot.lane.b32.xlu0 %v2695, 98
    %v2717 = vpop.permute.xlu0 %2716
    %2718 = vrot.lane.b32.xlu0 %v2696, 98
    %v2719 = vpop.permute.xlu0 %2718
    %2720 = vrot.lane.b32.xlu0 %v2697, 98
    %v2721 = vpop.permute.xlu0 %2720
    %vm2722 = vcmask 801792
    %v2723 = vsel %vm2722, %v2707, %v2709
    %v2724 = vsel %vm2722, %v2709, %v2711
    %v2725 = vsel %vm2722, %v2711, %v2713
    %v2726 = vsel %vm2722, %v2715, %v2717
    %v2727 = vsel %vm2722, %v2717, %v2719
    %v2728 = vsel %vm2722, %v2719, %v2721
    %v2737 = vadd.f32 %v2578, %v2723
    %v2738 = vadd.f32 %v2579, %v2724
    %v2739 = vadd.f32 %v2580, %v2725
    %v2740 = vadd.f32 %v2581, %v2713
    %v2741 = vadd.f32 %v2582, %v2726
    %v2742 = vadd.f32 %v2583, %v2727
    %v2743 = vadd.f32 %v2584, %v2728
    %v2744 = vadd.f32 %v2585, %v2721
    %s2745 = scalar_lea.vmem [#allocation8], 992
    %v2746 = vld [vmem:[%s2745] sm:$0xff]
    %v2747 = vld [vmem:[%s2745 + $0x8] sm:$0xff]
    %v2748 = vld [vmem:[%s2745 + $0x10] sm:$0xff]
    %v2749 = vld [vmem:[%s2745 + $0x18] sm:$0xff]
    %2754 = vrot.lane.b32.xlu0 %v2746, 31
    %v2755 = vpop.permute.xlu0 %2754
    %2756 = vrot.lane.b32.xlu0 %v2747, 31
    %v2757 = vpop.permute.xlu0 %2756
    %2758 = vrot.lane.b32.xlu0 %v2748, 31
    %v2759 = vpop.permute.xlu0 %2758
    %2760 = vrot.lane.b32.xlu0 %v2749, 31
    %v2761 = vpop.permute.xlu0 %2760
    %vm2762 = vcmask 252928
    %v2763 = vsel %vm2762, %v2755, %v2757
    %v2764 = vsel %vm2762, %v2757, %v2759
    %v2765 = vsel %vm2762, %v2759, %v2761
    %v2770 = vmul.f32 %v357, %v2755
    %v2771 = vmul.f32 %v361, %v2763
    %v2772 = vmul.f32 %v365, %v2764
    %v2773 = vmul.f32 %v369, %v2765
    %v2774 = vmul.f32 %v373, %v2755
    %v2775 = vmul.f32 %v377, %v2763
    %v2776 = vmul.f32 %v381, %v2764
    %v2777 = vmul.f32 %v385, %v2765
    %2786 = vrot.lane.b32.xlu0 %v2770, 98
    %v2787 = vpop.permute.xlu0 %2786
    %2788 = vrot.lane.b32.xlu0 %v2771, 98
    %v2789 = vpop.permute.xlu0 %2788
    %2790 = vrot.lane.b32.xlu0 %v2772, 98
    %v2791 = vpop.permute.xlu0 %2790
    %2792 = vrot.lane.b32.xlu0 %v2773, 98
    %v2793 = vpop.permute.xlu0 %2792
    %2794 = vrot.lane.b32.xlu0 %v2774, 98
    %v2795 = vpop.permute.xlu0 %2794
    %2796 = vrot.lane.b32.xlu0 %v2775, 98
    %v2797 = vpop.permute.xlu0 %2796
    %2798 = vrot.lane.b32.xlu0 %v2776, 98
    %v2799 = vpop.permute.xlu0 %2798
    %2800 = vrot.lane.b32.xlu0 %v2777, 98
    %v2801 = vpop.permute.xlu0 %2800
    %v2802 = vsel %vm2722, %v2787, %v2789
    %v2803 = vsel %vm2722, %v2789, %v2791
    %v2804 = vsel %vm2722, %v2791, %v2793
    %v2805 = vsel %vm2722, %v2795, %v2797
    %v2806 = vsel %vm2722, %v2797, %v2799
    %v2807 = vsel %vm2722, %v2799, %v2801
    %v2816 = vadd.f32 %v2657, %v2802
    %v2817 = vadd.f32 %v2658, %v2803
    %v2818 = vadd.f32 %v2659, %v2804
    %v2819 = vadd.f32 %v2660, %v2793
    %v2820 = vadd.f32 %v2661, %v2805
    %v2821 = vadd.f32 %v2662, %v2806
    %v2822 = vadd.f32 %v2663, %v2807
    %v2823 = vadd.f32 %v2664, %v2801
    %s2824 = scalar_lea.vmem [#allocation8], 1024
    %v2825 = vld [vmem:[%s2824] sm:$0xff]
    %v2826 = vld [vmem:[%s2824 + $0x8] sm:$0xff]
    %v2827 = vld [vmem:[%s2824 + $0x10] sm:$0xff]
    %v2828 = vld [vmem:[%s2824 + $0x18] sm:$0xff]
    %2833 = vrot.lane.b32.xlu0 %v2825, 32
    %v2834 = vpop.permute.xlu0 %2833
    %2835 = vrot.lane.b32.xlu0 %v2826, 32
    %v2836 = vpop.permute.xlu0 %2835
    %2837 = vrot.lane.b32.xlu0 %v2827, 32
    %v2838 = vpop.permute.xlu0 %2837
    %2839 = vrot.lane.b32.xlu0 %v2828, 32
    %v2840 = vpop.permute.xlu0 %2839
    %vm2841 = vcmask 261120
    %v2842 = vsel %vm2841, %v2834, %v2836
    %v2843 = vsel %vm2841, %v2836, %v2838
    %v2844 = vsel %vm2841, %v2838, %v2840
    %v2849 = vmul.f32 %v357, %v2834
    %v2850 = vmul.f32 %v361, %v2842
    %v2851 = vmul.f32 %v365, %v2843
    %v2852 = vmul.f32 %v369, %v2844
    %v2853 = vmul.f32 %v373, %v2834
    %v2854 = vmul.f32 %v377, %v2842
    %v2855 = vmul.f32 %v381, %v2843
    %v2856 = vmul.f32 %v385, %v2844
    %2865 = vrot.lane.b32.xlu0 %v2849, 96
    %v2866 = vpop.permute.xlu0 %2865
    %2867 = vrot.lane.b32.xlu0 %v2850, 96
    %v2868 = vpop.permute.xlu0 %2867
    %2869 = vrot.lane.b32.xlu0 %v2851, 96
    %v2870 = vpop.permute.xlu0 %2869
    %2871 = vrot.lane.b32.xlu0 %v2852, 96
    %v2872 = vpop.permute.xlu0 %2871
    %2873 = vrot.lane.b32.xlu0 %v2853, 96
    %v2874 = vpop.permute.xlu0 %2873
    %2875 = vrot.lane.b32.xlu0 %v2854, 96
    %v2876 = vpop.permute.xlu0 %2875
    %2877 = vrot.lane.b32.xlu0 %v2855, 96
    %v2878 = vpop.permute.xlu0 %2877
    %2879 = vrot.lane.b32.xlu0 %v2856, 96
    %v2880 = vpop.permute.xlu0 %2879
    %vm2881 = vcmask 785408
    %v2882 = vsel %vm2881, %v2866, %v2868
    %v2883 = vsel %vm2881, %v2868, %v2870
    %v2884 = vsel %vm2881, %v2870, %v2872
    %v2885 = vsel %vm2881, %v2874, %v2876
    %v2886 = vsel %vm2881, %v2876, %v2878
    %v2887 = vsel %vm2881, %v2878, %v2880
    %v2896 = vadd.f32 %v2737, %v2882
    %v2897 = vadd.f32 %v2738, %v2883
    %v2898 = vadd.f32 %v2739, %v2884
    %v2899 = vadd.f32 %v2740, %v2872
    %v2900 = vadd.f32 %v2741, %v2885
    %v2901 = vadd.f32 %v2742, %v2886
    %v2902 = vadd.f32 %v2743, %v2887
    %v2903 = vadd.f32 %v2744, %v2880
    %s2904 = scalar_lea.vmem [#allocation8], 1056
    %v2905 = vld [vmem:[%s2904] sm:$0xff]
    %v2906 = vld [vmem:[%s2904 + $0x8] sm:$0xff]
    %v2907 = vld [vmem:[%s2904 + $0x10] sm:$0xff]
    %v2908 = vld [vmem:[%s2904 + $0x18] sm:$0xff]
    %2913 = vrot.lane.b32.xlu0 %v2905, 33
    %v2914 = vpop.permute.xlu0 %2913
    %2915 = vrot.lane.b32.xlu0 %v2906, 33
    %v2916 = vpop.permute.xlu0 %2915
    %2917 = vrot.lane.b32.xlu0 %v2907, 33
    %v2918 = vpop.permute.xlu0 %2917
    %2919 = vrot.lane.b32.xlu0 %v2908, 33
    %v2920 = vpop.permute.xlu0 %2919
    %vm2921 = vcmask 269312
    %v2922 = vsel %vm2921, %v2914, %v2916
    %v2923 = vsel %vm2921, %v2916, %v2918
    %v2924 = vsel %vm2921, %v2918, %v2920
    %v2929 = vmul.f32 %v357, %v2914
    %v2930 = vmul.f32 %v361, %v2922
    %v2931 = vmul.f32 %v365, %v2923
    %v2932 = vmul.f32 %v369, %v2924
    %v2933 = vmul.f32 %v373, %v2914
    %v2934 = vmul.f32 %v377, %v2922
    %v2935 = vmul.f32 %v381, %v2923
    %v2936 = vmul.f32 %v385, %v2924
    %2945 = vrot.lane.b32.xlu0 %v2929, 96
    %v2946 = vpop.permute.xlu0 %2945
    %2947 = vrot.lane.b32.xlu0 %v2930, 96
    %v2948 = vpop.permute.xlu0 %2947
    %2949 = vrot.lane.b32.xlu0 %v2931, 96
    %v2950 = vpop.permute.xlu0 %2949
    %2951 = vrot.lane.b32.xlu0 %v2932, 96
    %v2952 = vpop.permute.xlu0 %2951
    %2953 = vrot.lane.b32.xlu0 %v2933, 96
    %v2954 = vpop.permute.xlu0 %2953
    %2955 = vrot.lane.b32.xlu0 %v2934, 96
    %v2956 = vpop.permute.xlu0 %2955
    %2957 = vrot.lane.b32.xlu0 %v2935, 96
    %v2958 = vpop.permute.xlu0 %2957
    %2959 = vrot.lane.b32.xlu0 %v2936, 96
    %v2960 = vpop.permute.xlu0 %2959
    %v2961 = vsel %vm2881, %v2946, %v2948
    %v2962 = vsel %vm2881, %v2948, %v2950
    %v2963 = vsel %vm2881, %v2950, %v2952
    %v2964 = vsel %vm2881, %v2954, %v2956
    %v2965 = vsel %vm2881, %v2956, %v2958
    %v2966 = vsel %vm2881, %v2958, %v2960
    %v2975 = vadd.f32 %v2816, %v2961
    %v2976 = vadd.f32 %v2817, %v2962
    %v2977 = vadd.f32 %v2818, %v2963
    %v2978 = vadd.f32 %v2819, %v2952
    %v2979 = vadd.f32 %v2820, %v2964
    %v2980 = vadd.f32 %v2821, %v2965
    %v2981 = vadd.f32 %v2822, %v2966
    %v2982 = vadd.f32 %v2823, %v2960
    %s2983 = scalar_lea.vmem [#allocation8], 1088
    %v2984 = vld [vmem:[%s2983] sm:$0xff]
    %v2985 = vld [vmem:[%s2983 + $0x8] sm:$0xff]
    %v2986 = vld [vmem:[%s2983 + $0x10] sm:$0xff]
    %v2987 = vld [vmem:[%s2983 + $0x18] sm:$0xff]
    %2992 = vrot.lane.b32.xlu0 %v2984, 34
    %v2993 = vpop.permute.xlu0 %2992
    %2994 = vrot.lane.b32.xlu0 %v2985, 34
    %v2995 = vpop.permute.xlu0 %2994
    %2996 = vrot.lane.b32.xlu0 %v2986, 34
    %v2997 = vpop.permute.xlu0 %2996
    %2998 = vrot.lane.b32.xlu0 %v2987, 34
    %v2999 = vpop.permute.xlu0 %2998
    %vm3000 = vcmask 277504
    %v3001 = vsel %vm3000, %v2993, %v2995
    %v3002 = vsel %vm3000, %v2995, %v2997
    %v3003 = vsel %vm3000, %v2997, %v2999
    %v3008 = vmul.f32 %v357, %v2993
    %v3009 = vmul.f32 %v361, %v3001
    %v3010 = vmul.f32 %v365, %v3002
    %v3011 = vmul.f32 %v369, %v3003
    %v3012 = vmul.f32 %v373, %v2993
    %v3013 = vmul.f32 %v377, %v3001
    %v3014 = vmul.f32 %v381, %v3002
    %v3015 = vmul.f32 %v385, %v3003
    %3024 = vrot.lane.b32.xlu0 %v3008, 94
    %v3025 = vpop.permute.xlu0 %3024
    %3026 = vrot.lane.b32.xlu0 %v3009, 94
    %v3027 = vpop.permute.xlu0 %3026
    %3028 = vrot.lane.b32.xlu0 %v3010, 94
    %v3029 = vpop.permute.xlu0 %3028
    %3030 = vrot.lane.b32.xlu0 %v3011, 94
    %v3031 = vpop.permute.xlu0 %3030
    %3032 = vrot.lane.b32.xlu0 %v3012, 94
    %v3033 = vpop.permute.xlu0 %3032
    %3034 = vrot.lane.b32.xlu0 %v3013, 94
    %v3035 = vpop.permute.xlu0 %3034
    %3036 = vrot.lane.b32.xlu0 %v3014, 94
    %v3037 = vpop.permute.xlu0 %3036
    %3038 = vrot.lane.b32.xlu0 %v3015, 94
    %v3039 = vpop.permute.xlu0 %3038
    %vm3040 = vcmask 769024
    %v3041 = vsel %vm3040, %v3025, %v3027
    %v3042 = vsel %vm3040, %v3027, %v3029
    %v3043 = vsel %vm3040, %v3029, %v3031
    %v3044 = vsel %vm3040, %v3033, %v3035
    %v3045 = vsel %vm3040, %v3035, %v3037
    %v3046 = vsel %vm3040, %v3037, %v3039
    %v3055 = vadd.f32 %v2896, %v3041
    %v3056 = vadd.f32 %v2897, %v3042
    %v3057 = vadd.f32 %v2898, %v3043
    %v3058 = vadd.f32 %v2899, %v3031
    %v3059 = vadd.f32 %v2900, %v3044
    %v3060 = vadd.f32 %v2901, %v3045
    %v3061 = vadd.f32 %v2902, %v3046
    %v3062 = vadd.f32 %v2903, %v3039
    %s3063 = scalar_lea.vmem [#allocation8], 1120
    %v3064 = vld [vmem:[%s3063] sm:$0xff]
    %v3065 = vld [vmem:[%s3063 + $0x8] sm:$0xff]
    %v3066 = vld [vmem:[%s3063 + $0x10] sm:$0xff]
    %v3067 = vld [vmem:[%s3063 + $0x18] sm:$0xff]
    %3072 = vrot.lane.b32.xlu0 %v3064, 35
    %v3073 = vpop.permute.xlu0 %3072
    %3074 = vrot.lane.b32.xlu0 %v3065, 35
    %v3075 = vpop.permute.xlu0 %3074
    %3076 = vrot.lane.b32.xlu0 %v3066, 35
    %v3077 = vpop.permute.xlu0 %3076
    %3078 = vrot.lane.b32.xlu0 %v3067, 35
    %v3079 = vpop.permute.xlu0 %3078
    %vm3080 = vcmask 285696
    %v3081 = vsel %vm3080, %v3073, %v3075
    %v3082 = vsel %vm3080, %v3075, %v3077
    %v3083 = vsel %vm3080, %v3077, %v3079
    %v3088 = vmul.f32 %v357, %v3073
    %v3089 = vmul.f32 %v361, %v3081
    %v3090 = vmul.f32 %v365, %v3082
    %v3091 = vmul.f32 %v369, %v3083
    %v3092 = vmul.f32 %v373, %v3073
    %v3093 = vmul.f32 %v377, %v3081
    %v3094 = vmul.f32 %v381, %v3082
    %v3095 = vmul.f32 %v385, %v3083
    %3104 = vrot.lane.b32.xlu0 %v3088, 94
    %v3105 = vpop.permute.xlu0 %3104
    %3106 = vrot.lane.b32.xlu0 %v3089, 94
    %v3107 = vpop.permute.xlu0 %3106
    %3108 = vrot.lane.b32.xlu0 %v3090, 94
    %v3109 = vpop.permute.xlu0 %3108
    %3110 = vrot.lane.b32.xlu0 %v3091, 94
    %v3111 = vpop.permute.xlu0 %3110
    %3112 = vrot.lane.b32.xlu0 %v3092, 94
    %v3113 = vpop.permute.xlu0 %3112
    %3114 = vrot.lane.b32.xlu0 %v3093, 94
    %v3115 = vpop.permute.xlu0 %3114
    %3116 = vrot.lane.b32.xlu0 %v3094, 94
    %v3117 = vpop.permute.xlu0 %3116
    %3118 = vrot.lane.b32.xlu0 %v3095, 94
    %v3119 = vpop.permute.xlu0 %3118
    %v3120 = vsel %vm3040, %v3105, %v3107
    %v3121 = vsel %vm3040, %v3107, %v3109
    %v3122 = vsel %vm3040, %v3109, %v3111
    %v3123 = vsel %vm3040, %v3113, %v3115
    %v3124 = vsel %vm3040, %v3115, %v3117
    %v3125 = vsel %vm3040, %v3117, %v3119
    %v3134 = vadd.f32 %v2975, %v3120
    %v3135 = vadd.f32 %v2976, %v3121
    %v3136 = vadd.f32 %v2977, %v3122
    %v3137 = vadd.f32 %v2978, %v3111
    %v3138 = vadd.f32 %v2979, %v3123
    %v3139 = vadd.f32 %v2980, %v3124
    %v3140 = vadd.f32 %v2981, %v3125
    %v3141 = vadd.f32 %v2982, %v3119
    %s3142 = scalar_lea.vmem [#allocation8], 1152
    %v3143 = vld [vmem:[%s3142] sm:$0xff]
    %v3144 = vld [vmem:[%s3142 + $0x8] sm:$0xff]
    %v3145 = vld [vmem:[%s3142 + $0x10] sm:$0xff]
    %v3146 = vld [vmem:[%s3142 + $0x18] sm:$0xff]
    %3151 = vrot.lane.b32.xlu0 %v3143, 36
    %v3152 = vpop.permute.xlu0 %3151
    %3153 = vrot.lane.b32.xlu0 %v3144, 36
    %v3154 = vpop.permute.xlu0 %3153
    %3155 = vrot.lane.b32.xlu0 %v3145, 36
    %v3156 = vpop.permute.xlu0 %3155
    %3157 = vrot.lane.b32.xlu0 %v3146, 36
    %v3158 = vpop.permute.xlu0 %3157
    %vm3159 = vcmask 293888
    %v3160 = vsel %vm3159, %v3152, %v3154
    %v3161 = vsel %vm3159, %v3154, %v3156
    %v3162 = vsel %vm3159, %v3156, %v3158
    %v3167 = vmul.f32 %v357, %v3152
    %v3168 = vmul.f32 %v361, %v3160
    %v3169 = vmul.f32 %v365, %v3161
    %v3170 = vmul.f32 %v369, %v3162
    %v3171 = vmul.f32 %v373, %v3152
    %v3172 = vmul.f32 %v377, %v3160
    %v3173 = vmul.f32 %v381, %v3161
    %v3174 = vmul.f32 %v385, %v3162
    %3183 = vrot.lane.b32.xlu0 %v3167, 92
    %v3184 = vpop.permute.xlu0 %3183
    %3185 = vrot.lane.b32.xlu0 %v3168, 92
    %v3186 = vpop.permute.xlu0 %3185
    %3187 = vrot.lane.b32.xlu0 %v3169, 92
    %v3188 = vpop.permute.xlu0 %3187
    %3189 = vrot.lane.b32.xlu0 %v3170, 92
    %v3190 = vpop.permute.xlu0 %3189
    %3191 = vrot.lane.b32.xlu0 %v3171, 92
    %v3192 = vpop.permute.xlu0 %3191
    %3193 = vrot.lane.b32.xlu0 %v3172, 92
    %v3194 = vpop.permute.xlu0 %3193
    %3195 = vrot.lane.b32.xlu0 %v3173, 92
    %v3196 = vpop.permute.xlu0 %3195
    %3197 = vrot.lane.b32.xlu0 %v3174, 92
    %v3198 = vpop.permute.xlu0 %3197
    %vm3199 = vcmask 752640
    %v3200 = vsel %vm3199, %v3184, %v3186
    %v3201 = vsel %vm3199, %v3186, %v3188
    %v3202 = vsel %vm3199, %v3188, %v3190
    %v3203 = vsel %vm3199, %v3192, %v3194
    %v3204 = vsel %vm3199, %v3194, %v3196
    %v3205 = vsel %vm3199, %v3196, %v3198
    %v3214 = vadd.f32 %v3055, %v3200
    %v3215 = vadd.f32 %v3056, %v3201
    %v3216 = vadd.f32 %v3057, %v3202
    %v3217 = vadd.f32 %v3058, %v3190
    %v3218 = vadd.f32 %v3059, %v3203
    %v3219 = vadd.f32 %v3060, %v3204
    %v3220 = vadd.f32 %v3061, %v3205
    %v3221 = vadd.f32 %v3062, %v3198
    %s3222 = scalar_lea.vmem [#allocation8], 1184
    %v3223 = vld [vmem:[%s3222] sm:$0xff]
    %v3224 = vld [vmem:[%s3222 + $0x8] sm:$0xff]
    %v3225 = vld [vmem:[%s3222 + $0x10] sm:$0xff]
    %v3226 = vld [vmem:[%s3222 + $0x18] sm:$0xff]
    %3231 = vrot.lane.b32.xlu0 %v3223, 37
    %v3232 = vpop.permute.xlu0 %3231
    %3233 = vrot.lane.b32.xlu0 %v3224, 37
    %v3234 = vpop.permute.xlu0 %3233
    %3235 = vrot.lane.b32.xlu0 %v3225, 37
    %v3236 = vpop.permute.xlu0 %3235
    %3237 = vrot.lane.b32.xlu0 %v3226, 37
    %v3238 = vpop.permute.xlu0 %3237
    %vm3239 = vcmask 302080
    %v3240 = vsel %vm3239, %v3232, %v3234
    %v3241 = vsel %vm3239, %v3234, %v3236
    %v3242 = vsel %vm3239, %v3236, %v3238
    %v3247 = vmul.f32 %v357, %v3232
    %v3248 = vmul.f32 %v361, %v3240
    %v3249 = vmul.f32 %v365, %v3241
    %v3250 = vmul.f32 %v369, %v3242
    %v3251 = vmul.f32 %v373, %v3232
    %v3252 = vmul.f32 %v377, %v3240
    %v3253 = vmul.f32 %v381, %v3241
    %v3254 = vmul.f32 %v385, %v3242
    %3263 = vrot.lane.b32.xlu0 %v3247, 92
    %v3264 = vpop.permute.xlu0 %3263
    %3265 = vrot.lane.b32.xlu0 %v3248, 92
    %v3266 = vpop.permute.xlu0 %3265
    %3267 = vrot.lane.b32.xlu0 %v3249, 92
    %v3268 = vpop.permute.xlu0 %3267
    %3269 = vrot.lane.b32.xlu0 %v3250, 92
    %v3270 = vpop.permute.xlu0 %3269
    %3271 = vrot.lane.b32.xlu0 %v3251, 92
    %v3272 = vpop.permute.xlu0 %3271
    %3273 = vrot.lane.b32.xlu0 %v3252, 92
    %v3274 = vpop.permute.xlu0 %3273
    %3275 = vrot.lane.b32.xlu0 %v3253, 92
    %v3276 = vpop.permute.xlu0 %3275
    %3277 = vrot.lane.b32.xlu0 %v3254, 92
    %v3278 = vpop.permute.xlu0 %3277
    %v3279 = vsel %vm3199, %v3264, %v3266
    %v3280 = vsel %vm3199, %v3266, %v3268
    %v3281 = vsel %vm3199, %v3268, %v3270
    %v3282 = vsel %vm3199, %v3272, %v3274
    %v3283 = vsel %vm3199, %v3274, %v3276
    %v3284 = vsel %vm3199, %v3276, %v3278
    %v3293 = vadd.f32 %v3134, %v3279
    %v3294 = vadd.f32 %v3135, %v3280
    %v3295 = vadd.f32 %v3136, %v3281
    %v3296 = vadd.f32 %v3137, %v3270
    %v3297 = vadd.f32 %v3138, %v3282
    %v3298 = vadd.f32 %v3139, %v3283
    %v3299 = vadd.f32 %v3140, %v3284
    %v3300 = vadd.f32 %v3141, %v3278
    %s3301 = scalar_lea.vmem [#allocation8], 1216
    %v3302 = vld [vmem:[%s3301] sm:$0xff]
    %v3303 = vld [vmem:[%s3301 + $0x8] sm:$0xff]
    %v3304 = vld [vmem:[%s3301 + $0x10] sm:$0xff]
    %v3305 = vld [vmem:[%s3301 + $0x18] sm:$0xff]
    %3310 = vrot.lane.b32.xlu0 %v3302, 38
    %v3311 = vpop.permute.xlu0 %3310
    %3312 = vrot.lane.b32.xlu0 %v3303, 38
    %v3313 = vpop.permute.xlu0 %3312
    %3314 = vrot.lane.b32.xlu0 %v3304, 38
    %v3315 = vpop.permute.xlu0 %3314
    %3316 = vrot.lane.b32.xlu0 %v3305, 38
    %v3317 = vpop.permute.xlu0 %3316
    %vm3318 = vcmask 310272
    %v3319 = vsel %vm3318, %v3311, %v3313
    %v3320 = vsel %vm3318, %v3313, %v3315
    %v3321 = vsel %vm3318, %v3315, %v3317
    %v3326 = vmul.f32 %v357, %v3311
    %v3327 = vmul.f32 %v361, %v3319
    %v3328 = vmul.f32 %v365, %v3320
    %v3329 = vmul.f32 %v369, %v3321
    %v3330 = vmul.f32 %v373, %v3311
    %v3331 = vmul.f32 %v377, %v3319
    %v3332 = vmul.f32 %v381, %v3320
    %v3333 = vmul.f32 %v385, %v3321
    %3342 = vrot.lane.b32.xlu0 %v3326, 90
    %v3343 = vpop.permute.xlu0 %3342
    %3344 = vrot.lane.b32.xlu0 %v3327, 90
    %v3345 = vpop.permute.xlu0 %3344
    %3346 = vrot.lane.b32.xlu0 %v3328, 90
    %v3347 = vpop.permute.xlu0 %3346
    %3348 = vrot.lane.b32.xlu0 %v3329, 90
    %v3349 = vpop.permute.xlu0 %3348
    %3350 = vrot.lane.b32.xlu0 %v3330, 90
    %v3351 = vpop.permute.xlu0 %3350
    %3352 = vrot.lane.b32.xlu0 %v3331, 90
    %v3353 = vpop.permute.xlu0 %3352
    %3354 = vrot.lane.b32.xlu0 %v3332, 90
    %v3355 = vpop.permute.xlu0 %3354
    %3356 = vrot.lane.b32.xlu0 %v3333, 90
    %v3357 = vpop.permute.xlu0 %3356
    %vm3358 = vcmask 736256
    %v3359 = vsel %vm3358, %v3343, %v3345
    %v3360 = vsel %vm3358, %v3345, %v3347
    %v3361 = vsel %vm3358, %v3347, %v3349
    %v3362 = vsel %vm3358, %v3351, %v3353
    %v3363 = vsel %vm3358, %v3353, %v3355
    %v3364 = vsel %vm3358, %v3355, %v3357
    %v3373 = vadd.f32 %v3214, %v3359
    %v3374 = vadd.f32 %v3215, %v3360
    %v3375 = vadd.f32 %v3216, %v3361
    %v3376 = vadd.f32 %v3217, %v3349
    %v3377 = vadd.f32 %v3218, %v3362
    %v3378 = vadd.f32 %v3219, %v3363
    %v3379 = vadd.f32 %v3220, %v3364
    %v3380 = vadd.f32 %v3221, %v3357
    %s3381 = scalar_lea.vmem [#allocation8], 1248
    %v3382 = vld [vmem:[%s3381] sm:$0xff]
    %v3383 = vld [vmem:[%s3381 + $0x8] sm:$0xff]
    %v3384 = vld [vmem:[%s3381 + $0x10] sm:$0xff]
    %v3385 = vld [vmem:[%s3381 + $0x18] sm:$0xff]
    %3390 = vrot.lane.b32.xlu0 %v3382, 39
    %v3391 = vpop.permute.xlu0 %3390
    %3392 = vrot.lane.b32.xlu0 %v3383, 39
    %v3393 = vpop.permute.xlu0 %3392
    %3394 = vrot.lane.b32.xlu0 %v3384, 39
    %v3395 = vpop.permute.xlu0 %3394
    %3396 = vrot.lane.b32.xlu0 %v3385, 39
    %v3397 = vpop.permute.xlu0 %3396
    %vm3398 = vcmask 318464
    %v3399 = vsel %vm3398, %v3391, %v3393
    %v3400 = vsel %vm3398, %v3393, %v3395
    %v3401 = vsel %vm3398, %v3395, %v3397
    %v3406 = vmul.f32 %v357, %v3391
    %v3407 = vmul.f32 %v361, %v3399
    %v3408 = vmul.f32 %v365, %v3400
    %v3409 = vmul.f32 %v369, %v3401
    %v3410 = vmul.f32 %v373, %v3391
    %v3411 = vmul.f32 %v377, %v3399
    %v3412 = vmul.f32 %v381, %v3400
    %v3413 = vmul.f32 %v385, %v3401
    %3422 = vrot.lane.b32.xlu0 %v3406, 90
    %v3423 = vpop.permute.xlu0 %3422
    %3424 = vrot.lane.b32.xlu0 %v3407, 90
    %v3425 = vpop.permute.xlu0 %3424
    %3426 = vrot.lane.b32.xlu0 %v3408, 90
    %v3427 = vpop.permute.xlu0 %3426
    %3428 = vrot.lane.b32.xlu0 %v3409, 90
    %v3429 = vpop.permute.xlu0 %3428
    %3430 = vrot.lane.b32.xlu0 %v3410, 90
    %v3431 = vpop.permute.xlu0 %3430
    %3432 = vrot.lane.b32.xlu0 %v3411, 90
    %v3433 = vpop.permute.xlu0 %3432
    %3434 = vrot.lane.b32.xlu0 %v3412, 90
    %v3435 = vpop.permute.xlu0 %3434
    %3436 = vrot.lane.b32.xlu0 %v3413, 90
    %v3437 = vpop.permute.xlu0 %3436
    %v3438 = vsel %vm3358, %v3423, %v3425
    %v3439 = vsel %vm3358, %v3425, %v3427
    %v3440 = vsel %vm3358, %v3427, %v3429
    %v3441 = vsel %vm3358, %v3431, %v3433
    %v3442 = vsel %vm3358, %v3433, %v3435
    %v3443 = vsel %vm3358, %v3435, %v3437
    %v3452 = vadd.f32 %v3293, %v3438
    %v3453 = vadd.f32 %v3294, %v3439
    %v3454 = vadd.f32 %v3295, %v3440
    %v3455 = vadd.f32 %v3296, %v3429
    %v3456 = vadd.f32 %v3297, %v3441
    %v3457 = vadd.f32 %v3298, %v3442
    %v3458 = vadd.f32 %v3299, %v3443
    %v3459 = vadd.f32 %v3300, %v3437
    %s3460 = scalar_lea.vmem [#allocation8], 1280
    %v3461 = vld [vmem:[%s3460] sm:$0xff]
    %v3462 = vld [vmem:[%s3460 + $0x8] sm:$0xff]
    %v3463 = vld [vmem:[%s3460 + $0x10] sm:$0xff]
    %v3464 = vld [vmem:[%s3460 + $0x18] sm:$0xff]
    %3469 = vrot.lane.b32.xlu0 %v3461, 40
    %v3470 = vpop.permute.xlu0 %3469
    %3471 = vrot.lane.b32.xlu0 %v3462, 40
    %v3472 = vpop.permute.xlu0 %3471
    %3473 = vrot.lane.b32.xlu0 %v3463, 40
    %v3474 = vpop.permute.xlu0 %3473
    %3475 = vrot.lane.b32.xlu0 %v3464, 40
    %v3476 = vpop.permute.xlu0 %3475
    %vm3477 = vcmask 326656
    %v3478 = vsel %vm3477, %v3470, %v3472
    %v3479 = vsel %vm3477, %v3472, %v3474
    %v3480 = vsel %vm3477, %v3474, %v3476
    %v3485 = vmul.f32 %v357, %v3470
    %v3486 = vmul.f32 %v361, %v3478
    %v3487 = vmul.f32 %v365, %v3479
    %v3488 = vmul.f32 %v369, %v3480
    %v3489 = vmul.f32 %v373, %v3470
    %v3490 = vmul.f32 %v377, %v3478
    %v3491 = vmul.f32 %v381, %v3479
    %v3492 = vmul.f32 %v385, %v3480
    %3501 = vrot.lane.b32.xlu0 %v3485, 88
    %v3502 = vpop.permute.xlu0 %3501
    %3503 = vrot.lane.b32.xlu0 %v3486, 88
    %v3504 = vpop.permute.xlu0 %3503
    %3505 = vrot.lane.b32.xlu0 %v3487, 88
    %v3506 = vpop.permute.xlu0 %3505
    %3507 = vrot.lane.b32.xlu0 %v3488, 88
    %v3508 = vpop.permute.xlu0 %3507
    %3509 = vrot.lane.b32.xlu0 %v3489, 88
    %v3510 = vpop.permute.xlu0 %3509
    %3511 = vrot.lane.b32.xlu0 %v3490, 88
    %v3512 = vpop.permute.xlu0 %3511
    %3513 = vrot.lane.b32.xlu0 %v3491, 88
    %v3514 = vpop.permute.xlu0 %3513
    %3515 = vrot.lane.b32.xlu0 %v3492, 88
    %v3516 = vpop.permute.xlu0 %3515
    %vm3517 = vcmask 719872
    %v3518 = vsel %vm3517, %v3502, %v3504
    %v3519 = vsel %vm3517, %v3504, %v3506
    %v3520 = vsel %vm3517, %v3506, %v3508
    %v3521 = vsel %vm3517, %v3510, %v3512
    %v3522 = vsel %vm3517, %v3512, %v3514
    %v3523 = vsel %vm3517, %v3514, %v3516
    %v3532 = vadd.f32 %v3373, %v3518
    %v3533 = vadd.f32 %v3374, %v3519
    %v3534 = vadd.f32 %v3375, %v3520
    %v3535 = vadd.f32 %v3376, %v3508
    %v3536 = vadd.f32 %v3377, %v3521
    %v3537 = vadd.f32 %v3378, %v3522
    %v3538 = vadd.f32 %v3379, %v3523
    %v3539 = vadd.f32 %v3380, %v3516
    %s3540 = scalar_lea.vmem [#allocation8], 1312
    %v3541 = vld [vmem:[%s3540] sm:$0xff]
    %v3542 = vld [vmem:[%s3540 + $0x8] sm:$0xff]
    %v3543 = vld [vmem:[%s3540 + $0x10] sm:$0xff]
    %v3544 = vld [vmem:[%s3540 + $0x18] sm:$0xff]
    %3549 = vrot.lane.b32.xlu0 %v3541, 41
    %v3550 = vpop.permute.xlu0 %3549
    %3551 = vrot.lane.b32.xlu0 %v3542, 41
    %v3552 = vpop.permute.xlu0 %3551
    %3553 = vrot.lane.b32.xlu0 %v3543, 41
    %v3554 = vpop.permute.xlu0 %3553
    %3555 = vrot.lane.b32.xlu0 %v3544, 41
    %v3556 = vpop.permute.xlu0 %3555
    %vm3557 = vcmask 334848
    %v3558 = vsel %vm3557, %v3550, %v3552
    %v3559 = vsel %vm3557, %v3552, %v3554
    %v3560 = vsel %vm3557, %v3554, %v3556
    %v3565 = vmul.f32 %v357, %v3550
    %v3566 = vmul.f32 %v361, %v3558
    %v3567 = vmul.f32 %v365, %v3559
    %v3568 = vmul.f32 %v369, %v3560
    %v3569 = vmul.f32 %v373, %v3550
    %v3570 = vmul.f32 %v377, %v3558
    %v3571 = vmul.f32 %v381, %v3559
    %v3572 = vmul.f32 %v385, %v3560
    %3581 = vrot.lane.b32.xlu0 %v3565, 88
    %v3582 = vpop.permute.xlu0 %3581
    %3583 = vrot.lane.b32.xlu0 %v3566, 88
    %v3584 = vpop.permute.xlu0 %3583
    %3585 = vrot.lane.b32.xlu0 %v3567, 88
    %v3586 = vpop.permute.xlu0 %3585
    %3587 = vrot.lane.b32.xlu0 %v3568, 88
    %v3588 = vpop.permute.xlu0 %3587
    %3589 = vrot.lane.b32.xlu0 %v3569, 88
    %v3590 = vpop.permute.xlu0 %3589
    %3591 = vrot.lane.b32.xlu0 %v3570, 88
    %v3592 = vpop.permute.xlu0 %3591
    %3593 = vrot.lane.b32.xlu0 %v3571, 88
    %v3594 = vpop.permute.xlu0 %3593
    %3595 = vrot.lane.b32.xlu0 %v3572, 88
    %v3596 = vpop.permute.xlu0 %3595
    %v3597 = vsel %vm3517, %v3582, %v3584
    %v3598 = vsel %vm3517, %v3584, %v3586
    %v3599 = vsel %vm3517, %v3586, %v3588
    %v3600 = vsel %vm3517, %v3590, %v3592
    %v3601 = vsel %vm3517, %v3592, %v3594
    %v3602 = vsel %vm3517, %v3594, %v3596
    %v3611 = vadd.f32 %v3452, %v3597
    %v3612 = vadd.f32 %v3453, %v3598
    %v3613 = vadd.f32 %v3454, %v3599
    %v3614 = vadd.f32 %v3455, %v3588
    %v3615 = vadd.f32 %v3456, %v3600
    %v3616 = vadd.f32 %v3457, %v3601
    %v3617 = vadd.f32 %v3458, %v3602
    %v3618 = vadd.f32 %v3459, %v3596
    %s3619 = scalar_lea.vmem [#allocation8], 1344
    %v3620 = vld [vmem:[%s3619] sm:$0xff]
    %v3621 = vld [vmem:[%s3619 + $0x8] sm:$0xff]
    %v3622 = vld [vmem:[%s3619 + $0x10] sm:$0xff]
    %v3623 = vld [vmem:[%s3619 + $0x18] sm:$0xff]
    %3628 = vrot.lane.b32.xlu0 %v3620, 42
    %v3629 = vpop.permute.xlu0 %3628
    %3630 = vrot.lane.b32.xlu0 %v3621, 42
    %v3631 = vpop.permute.xlu0 %3630
    %3632 = vrot.lane.b32.xlu0 %v3622, 42
    %v3633 = vpop.permute.xlu0 %3632
    %3634 = vrot.lane.b32.xlu0 %v3623, 42
    %v3635 = vpop.permute.xlu0 %3634
    %vm3636 = vcmask 343040
    %v3637 = vsel %vm3636, %v3629, %v3631
    %v3638 = vsel %vm3636, %v3631, %v3633
    %v3639 = vsel %vm3636, %v3633, %v3635
    %v3644 = vmul.f32 %v357, %v3629
    %v3645 = vmul.f32 %v361, %v3637
    %v3646 = vmul.f32 %v365, %v3638
    %v3647 = vmul.f32 %v369, %v3639
    %v3648 = vmul.f32 %v373, %v3629
    %v3649 = vmul.f32 %v377, %v3637
    %v3650 = vmul.f32 %v381, %v3638
    %v3651 = vmul.f32 %v385, %v3639
    %3660 = vrot.lane.b32.xlu0 %v3644, 86
    %v3661 = vpop.permute.xlu0 %3660
    %3662 = vrot.lane.b32.xlu0 %v3645, 86
    %v3663 = vpop.permute.xlu0 %3662
    %3664 = vrot.lane.b32.xlu0 %v3646, 86
    %v3665 = vpop.permute.xlu0 %3664
    %3666 = vrot.lane.b32.xlu0 %v3647, 86
    %v3667 = vpop.permute.xlu0 %3666
    %3668 = vrot.lane.b32.xlu0 %v3648, 86
    %v3669 = vpop.permute.xlu0 %3668
    %3670 = vrot.lane.b32.xlu0 %v3649, 86
    %v3671 = vpop.permute.xlu0 %3670
    %3672 = vrot.lane.b32.xlu0 %v3650, 86
    %v3673 = vpop.permute.xlu0 %3672
    %3674 = vrot.lane.b32.xlu0 %v3651, 86
    %v3675 = vpop.permute.xlu0 %3674
    %vm3676 = vcmask 703488
    %v3677 = vsel %vm3676, %v3661, %v3663
    %v3678 = vsel %vm3676, %v3663, %v3665
    %v3679 = vsel %vm3676, %v3665, %v3667
    %v3680 = vsel %vm3676, %v3669, %v3671
    %v3681 = vsel %vm3676, %v3671, %v3673
    %v3682 = vsel %vm3676, %v3673, %v3675
    %v3691 = vadd.f32 %v3532, %v3677
    %v3692 = vadd.f32 %v3533, %v3678
    %v3693 = vadd.f32 %v3534, %v3679
    %v3694 = vadd.f32 %v3535, %v3667
    %v3695 = vadd.f32 %v3536, %v3680
    %v3696 = vadd.f32 %v3537, %v3681
    %v3697 = vadd.f32 %v3538, %v3682
    %v3698 = vadd.f32 %v3539, %v3675
    %s3699 = scalar_lea.vmem [#allocation8], 1376
    %v3700 = vld [vmem:[%s3699] sm:$0xff]
    %v3701 = vld [vmem:[%s3699 + $0x8] sm:$0xff]
    %v3702 = vld [vmem:[%s3699 + $0x10] sm:$0xff]
    %v3703 = vld [vmem:[%s3699 + $0x18] sm:$0xff]
    %3708 = vrot.lane.b32.xlu0 %v3700, 43
    %v3709 = vpop.permute.xlu0 %3708
    %3710 = vrot.lane.b32.xlu0 %v3701, 43
    %v3711 = vpop.permute.xlu0 %3710
    %3712 = vrot.lane.b32.xlu0 %v3702, 43
    %v3713 = vpop.permute.xlu0 %3712
    %3714 = vrot.lane.b32.xlu0 %v3703, 43
    %v3715 = vpop.permute.xlu0 %3714
    %vm3716 = vcmask 351232
    %v3717 = vsel %vm3716, %v3709, %v3711
    %v3718 = vsel %vm3716, %v3711, %v3713
    %v3719 = vsel %vm3716, %v3713, %v3715
    %v3724 = vmul.f32 %v357, %v3709
    %v3725 = vmul.f32 %v361, %v3717
    %v3726 = vmul.f32 %v365, %v3718
    %v3727 = vmul.f32 %v369, %v3719
    %v3728 = vmul.f32 %v373, %v3709
    %v3729 = vmul.f32 %v377, %v3717
    %v3730 = vmul.f32 %v381, %v3718
    %v3731 = vmul.f32 %v385, %v3719
    %3740 = vrot.lane.b32.xlu0 %v3724, 86
    %v3741 = vpop.permute.xlu0 %3740
    %3742 = vrot.lane.b32.xlu0 %v3725, 86
    %v3743 = vpop.permute.xlu0 %3742
    %3744 = vrot.lane.b32.xlu0 %v3726, 86
    %v3745 = vpop.permute.xlu0 %3744
    %3746 = vrot.lane.b32.xlu0 %v3727, 86
    %v3747 = vpop.permute.xlu0 %3746
    %3748 = vrot.lane.b32.xlu0 %v3728, 86
    %v3749 = vpop.permute.xlu0 %3748
    %3750 = vrot.lane.b32.xlu0 %v3729, 86
    %v3751 = vpop.permute.xlu0 %3750
    %3752 = vrot.lane.b32.xlu0 %v3730, 86
    %v3753 = vpop.permute.xlu0 %3752
    %3754 = vrot.lane.b32.xlu0 %v3731, 86
    %v3755 = vpop.permute.xlu0 %3754
    %v3756 = vsel %vm3676, %v3741, %v3743
    %v3757 = vsel %vm3676, %v3743, %v3745
    %v3758 = vsel %vm3676, %v3745, %v3747
    %v3759 = vsel %vm3676, %v3749, %v3751
    %v3760 = vsel %vm3676, %v3751, %v3753
    %v3761 = vsel %vm3676, %v3753, %v3755
    %v3770 = vadd.f32 %v3611, %v3756
    %v3771 = vadd.f32 %v3612, %v3757
    %v3772 = vadd.f32 %v3613, %v3758
    %v3773 = vadd.f32 %v3614, %v3747
    %v3774 = vadd.f32 %v3615, %v3759
    %v3775 = vadd.f32 %v3616, %v3760
    %v3776 = vadd.f32 %v3617, %v3761
    %v3777 = vadd.f32 %v3618, %v3755
    %s3778 = scalar_lea.vmem [#allocation8], 1408
    %v3779 = vld [vmem:[%s3778] sm:$0xff]
    %v3780 = vld [vmem:[%s3778 + $0x8] sm:$0xff]
    %v3781 = vld [vmem:[%s3778 + $0x10] sm:$0xff]
    %v3782 = vld [vmem:[%s3778 + $0x18] sm:$0xff]
    %3787 = vrot.lane.b32.xlu0 %v3779, 44
    %v3788 = vpop.permute.xlu0 %3787
    %3789 = vrot.lane.b32.xlu0 %v3780, 44
    %v3790 = vpop.permute.xlu0 %3789
    %3791 = vrot.lane.b32.xlu0 %v3781, 44
    %v3792 = vpop.permute.xlu0 %3791
    %3793 = vrot.lane.b32.xlu0 %v3782, 44
    %v3794 = vpop.permute.xlu0 %3793
    %vm3795 = vcmask 359424
    %v3796 = vsel %vm3795, %v3788, %v3790
    %v3797 = vsel %vm3795, %v3790, %v3792
    %v3798 = vsel %vm3795, %v3792, %v3794
    %v3803 = vmul.f32 %v357, %v3788
    %v3804 = vmul.f32 %v361, %v3796
    %v3805 = vmul.f32 %v365, %v3797
    %v3806 = vmul.f32 %v369, %v3798
    %v3807 = vmul.f32 %v373, %v3788
    %v3808 = vmul.f32 %v377, %v3796
    %v3809 = vmul.f32 %v381, %v3797
    %v3810 = vmul.f32 %v385, %v3798
    %3819 = vrot.lane.b32.xlu0 %v3803, 84
    %v3820 = vpop.permute.xlu0 %3819
    %3821 = vrot.lane.b32.xlu0 %v3804, 84
    %v3822 = vpop.permute.xlu0 %3821
    %3823 = vrot.lane.b32.xlu0 %v3805, 84
    %v3824 = vpop.permute.xlu0 %3823
    %3825 = vrot.lane.b32.xlu0 %v3806, 84
    %v3826 = vpop.permute.xlu0 %3825
    %3827 = vrot.lane.b32.xlu0 %v3807, 84
    %v3828 = vpop.permute.xlu0 %3827
    %3829 = vrot.lane.b32.xlu0 %v3808, 84
    %v3830 = vpop.permute.xlu0 %3829
    %3831 = vrot.lane.b32.xlu0 %v3809, 84
    %v3832 = vpop.permute.xlu0 %3831
    %3833 = vrot.lane.b32.xlu0 %v3810, 84
    %v3834 = vpop.permute.xlu0 %3833
    %vm3835 = vcmask 687104
    %v3836 = vsel %vm3835, %v3820, %v3822
    %v3837 = vsel %vm3835, %v3822, %v3824
    %v3838 = vsel %vm3835, %v3824, %v3826
    %v3839 = vsel %vm3835, %v3828, %v3830
    %v3840 = vsel %vm3835, %v3830, %v3832
    %v3841 = vsel %vm3835, %v3832, %v3834
    %v3850 = vadd.f32 %v3691, %v3836
    %v3851 = vadd.f32 %v3692, %v3837
    %v3852 = vadd.f32 %v3693, %v3838
    %v3853 = vadd.f32 %v3694, %v3826
    %v3854 = vadd.f32 %v3695, %v3839
    %v3855 = vadd.f32 %v3696, %v3840
    %v3856 = vadd.f32 %v3697, %v3841
    %v3857 = vadd.f32 %v3698, %v3834
    %s3858 = scalar_lea.vmem [#allocation8], 1440
    %v3859 = vld [vmem:[%s3858] sm:$0xff]
    %v3860 = vld [vmem:[%s3858 + $0x8] sm:$0xff]
    %v3861 = vld [vmem:[%s3858 + $0x10] sm:$0xff]
    %v3862 = vld [vmem:[%s3858 + $0x18] sm:$0xff]
    %3867 = vrot.lane.b32.xlu0 %v3859, 45
    %v3868 = vpop.permute.xlu0 %3867
    %3869 = vrot.lane.b32.xlu0 %v3860, 45
    %v3870 = vpop.permute.xlu0 %3869
    %3871 = vrot.lane.b32.xlu0 %v3861, 45
    %v3872 = vpop.permute.xlu0 %3871
    %3873 = vrot.lane.b32.xlu0 %v3862, 45
    %v3874 = vpop.permute.xlu0 %3873
    %vm3875 = vcmask 367616
    %v3876 = vsel %vm3875, %v3868, %v3870
    %v3877 = vsel %vm3875, %v3870, %v3872
    %v3878 = vsel %vm3875, %v3872, %v3874
    %v3883 = vmul.f32 %v357, %v3868
    %v3884 = vmul.f32 %v361, %v3876
    %v3885 = vmul.f32 %v365, %v3877
    %v3886 = vmul.f32 %v369, %v3878
    %v3887 = vmul.f32 %v373, %v3868
    %v3888 = vmul.f32 %v377, %v3876
    %v3889 = vmul.f32 %v381, %v3877
    %v3890 = vmul.f32 %v385, %v3878
    %3899 = vrot.lane.b32.xlu0 %v3883, 84
    %v3900 = vpop.permute.xlu0 %3899
    %3901 = vrot.lane.b32.xlu0 %v3884, 84
    %v3902 = vpop.permute.xlu0 %3901
    %3903 = vrot.lane.b32.xlu0 %v3885, 84
    %v3904 = vpop.permute.xlu0 %3903
    %3905 = vrot.lane.b32.xlu0 %v3886, 84
    %v3906 = vpop.permute.xlu0 %3905
    %3907 = vrot.lane.b32.xlu0 %v3887, 84
    %v3908 = vpop.permute.xlu0 %3907
    %3909 = vrot.lane.b32.xlu0 %v3888, 84
    %v3910 = vpop.permute.xlu0 %3909
    %3911 = vrot.lane.b32.xlu0 %v3889, 84
    %v3912 = vpop.permute.xlu0 %3911
    %3913 = vrot.lane.b32.xlu0 %v3890, 84
    %v3914 = vpop.permute.xlu0 %3913
    %v3915 = vsel %vm3835, %v3900, %v3902
    %v3916 = vsel %vm3835, %v3902, %v3904
    %v3917 = vsel %vm3835, %v3904, %v3906
    %v3918 = vsel %vm3835, %v3908, %v3910
    %v3919 = vsel %vm3835, %v3910, %v3912
    %v3920 = vsel %vm3835, %v3912, %v3914
    %v3929 = vadd.f32 %v3770, %v3915
    %v3930 = vadd.f32 %v3771, %v3916
    %v3931 = vadd.f32 %v3772, %v3917
    %v3932 = vadd.f32 %v3773, %v3906
    %v3933 = vadd.f32 %v3774, %v3918
    %v3934 = vadd.f32 %v3775, %v3919
    %v3935 = vadd.f32 %v3776, %v3920
    %v3936 = vadd.f32 %v3777, %v3914
    %s3937 = scalar_lea.vmem [#allocation8], 1472
    %v3938 = vld [vmem:[%s3937] sm:$0xff]
    %v3939 = vld [vmem:[%s3937 + $0x8] sm:$0xff]
    %v3940 = vld [vmem:[%s3937 + $0x10] sm:$0xff]
    %v3941 = vld [vmem:[%s3937 + $0x18] sm:$0xff]
    %3946 = vrot.lane.b32.xlu0 %v3938, 46
    %v3947 = vpop.permute.xlu0 %3946
    %3948 = vrot.lane.b32.xlu0 %v3939, 46
    %v3949 = vpop.permute.xlu0 %3948
    %3950 = vrot.lane.b32.xlu0 %v3940, 46
    %v3951 = vpop.permute.xlu0 %3950
    %3952 = vrot.lane.b32.xlu0 %v3941, 46
    %v3953 = vpop.permute.xlu0 %3952
    %vm3954 = vcmask 375808
    %v3955 = vsel %vm3954, %v3947, %v3949
    %v3956 = vsel %vm3954, %v3949, %v3951
    %v3957 = vsel %vm3954, %v3951, %v3953
    %v3962 = vmul.f32 %v357, %v3947
    %v3963 = vmul.f32 %v361, %v3955
    %v3964 = vmul.f32 %v365, %v3956
    %v3965 = vmul.f32 %v369, %v3957
    %v3966 = vmul.f32 %v373, %v3947
    %v3967 = vmul.f32 %v377, %v3955
    %v3968 = vmul.f32 %v381, %v3956
    %v3969 = vmul.f32 %v385, %v3957
    %3978 = vrot.lane.b32.xlu0 %v3962, 82
    %v3979 = vpop.permute.xlu0 %3978
    %3980 = vrot.lane.b32.xlu0 %v3963, 82
    %v3981 = vpop.permute.xlu0 %3980
    %3982 = vrot.lane.b32.xlu0 %v3964, 82
    %v3983 = vpop.permute.xlu0 %3982
    %3984 = vrot.lane.b32.xlu0 %v3965, 82
    %v3985 = vpop.permute.xlu0 %3984
    %3986 = vrot.lane.b32.xlu0 %v3966, 82
    %v3987 = vpop.permute.xlu0 %3986
    %3988 = vrot.lane.b32.xlu0 %v3967, 82
    %v3989 = vpop.permute.xlu0 %3988
    %3990 = vrot.lane.b32.xlu0 %v3968, 82
    %v3991 = vpop.permute.xlu0 %3990
    %3992 = vrot.lane.b32.xlu0 %v3969, 82
    %v3993 = vpop.permute.xlu0 %3992
    %vm3994 = vcmask 670720
    %v3995 = vsel %vm3994, %v3979, %v3981
    %v3996 = vsel %vm3994, %v3981, %v3983
    %v3997 = vsel %vm3994, %v3983, %v3985
    %v3998 = vsel %vm3994, %v3987, %v3989
    %v3999 = vsel %vm3994, %v3989, %v3991
    %v4000 = vsel %vm3994, %v3991, %v3993
    %v4009 = vadd.f32 %v3850, %v3995
    %v4010 = vadd.f32 %v3851, %v3996
    %v4011 = vadd.f32 %v3852, %v3997
    %v4012 = vadd.f32 %v3853, %v3985
    %v4013 = vadd.f32 %v3854, %v3998
    %v4014 = vadd.f32 %v3855, %v3999
    %v4015 = vadd.f32 %v3856, %v4000
    %v4016 = vadd.f32 %v3857, %v3993
    %s4017 = scalar_lea.vmem [#allocation8], 1504
    %v4018 = vld [vmem:[%s4017] sm:$0xff]
    %v4019 = vld [vmem:[%s4017 + $0x8] sm:$0xff]
    %v4020 = vld [vmem:[%s4017 + $0x10] sm:$0xff]
    %v4021 = vld [vmem:[%s4017 + $0x18] sm:$0xff]
    %4026 = vrot.lane.b32.xlu0 %v4018, 47
    %v4027 = vpop.permute.xlu0 %4026
    %4028 = vrot.lane.b32.xlu0 %v4019, 47
    %v4029 = vpop.permute.xlu0 %4028
    %4030 = vrot.lane.b32.xlu0 %v4020, 47
    %v4031 = vpop.permute.xlu0 %4030
    %4032 = vrot.lane.b32.xlu0 %v4021, 47
    %v4033 = vpop.permute.xlu0 %4032
    %vm4034 = vcmask 384000
    %v4035 = vsel %vm4034, %v4027, %v4029
    %v4036 = vsel %vm4034, %v4029, %v4031
    %v4037 = vsel %vm4034, %v4031, %v4033
    %v4042 = vmul.f32 %v357, %v4027
    %v4043 = vmul.f32 %v361, %v4035
    %v4044 = vmul.f32 %v365, %v4036
    %v4045 = vmul.f32 %v369, %v4037
    %v4046 = vmul.f32 %v373, %v4027
    %v4047 = vmul.f32 %v377, %v4035
    %v4048 = vmul.f32 %v381, %v4036
    %v4049 = vmul.f32 %v385, %v4037
    %4058 = vrot.lane.b32.xlu0 %v4042, 82
    %v4059 = vpop.permute.xlu0 %4058
    %4060 = vrot.lane.b32.xlu0 %v4043, 82
    %v4061 = vpop.permute.xlu0 %4060
    %4062 = vrot.lane.b32.xlu0 %v4044, 82
    %v4063 = vpop.permute.xlu0 %4062
    %4064 = vrot.lane.b32.xlu0 %v4045, 82
    %v4065 = vpop.permute.xlu0 %4064
    %4066 = vrot.lane.b32.xlu0 %v4046, 82
    %v4067 = vpop.permute.xlu0 %4066
    %4068 = vrot.lane.b32.xlu0 %v4047, 82
    %v4069 = vpop.permute.xlu0 %4068
    %4070 = vrot.lane.b32.xlu0 %v4048, 82
    %v4071 = vpop.permute.xlu0 %4070
    %4072 = vrot.lane.b32.xlu0 %v4049, 82
    %v4073 = vpop.permute.xlu0 %4072
    %v4074 = vsel %vm3994, %v4059, %v4061
    %v4075 = vsel %vm3994, %v4061, %v4063
    %v4076 = vsel %vm3994, %v4063, %v4065
    %v4077 = vsel %vm3994, %v4067, %v4069
    %v4078 = vsel %vm3994, %v4069, %v4071
    %v4079 = vsel %vm3994, %v4071, %v4073
    %v4088 = vadd.f32 %v3929, %v4074
    %v4089 = vadd.f32 %v3930, %v4075
    %v4090 = vadd.f32 %v3931, %v4076
    %v4091 = vadd.f32 %v3932, %v4065
    %v4092 = vadd.f32 %v3933, %v4077
    %v4093 = vadd.f32 %v3934, %v4078
    %v4094 = vadd.f32 %v3935, %v4079
    %v4095 = vadd.f32 %v3936, %v4073
    %s4096 = scalar_lea.vmem [#allocation8], 1536
    %v4097 = vld [vmem:[%s4096] sm:$0xff]
    %v4098 = vld [vmem:[%s4096 + $0x8] sm:$0xff]
    %v4099 = vld [vmem:[%s4096 + $0x10] sm:$0xff]
    %v4100 = vld [vmem:[%s4096 + $0x18] sm:$0xff]
    %4105 = vrot.lane.b32.xlu0 %v4097, 48
    %v4106 = vpop.permute.xlu0 %4105
    %4107 = vrot.lane.b32.xlu0 %v4098, 48
    %v4108 = vpop.permute.xlu0 %4107
    %4109 = vrot.lane.b32.xlu0 %v4099, 48
    %v4110 = vpop.permute.xlu0 %4109
    %4111 = vrot.lane.b32.xlu0 %v4100, 48
    %v4112 = vpop.permute.xlu0 %4111
    %vm4113 = vcmask 392192
    %v4114 = vsel %vm4113, %v4106, %v4108
    %v4115 = vsel %vm4113, %v4108, %v4110
    %v4116 = vsel %vm4113, %v4110, %v4112
    %v4121 = vmul.f32 %v357, %v4106
    %v4122 = vmul.f32 %v361, %v4114
    %v4123 = vmul.f32 %v365, %v4115
    %v4124 = vmul.f32 %v369, %v4116
    %v4125 = vmul.f32 %v373, %v4106
    %v4126 = vmul.f32 %v377, %v4114
    %v4127 = vmul.f32 %v381, %v4115
    %v4128 = vmul.f32 %v385, %v4116
    %4137 = vrot.lane.b32.xlu0 %v4121, 80
    %v4138 = vpop.permute.xlu0 %4137
    %4139 = vrot.lane.b32.xlu0 %v4122, 80
    %v4140 = vpop.permute.xlu0 %4139
    %4141 = vrot.lane.b32.xlu0 %v4123, 80
    %v4142 = vpop.permute.xlu0 %4141
    %4143 = vrot.lane.b32.xlu0 %v4124, 80
    %v4144 = vpop.permute.xlu0 %4143
    %4145 = vrot.lane.b32.xlu0 %v4125, 80
    %v4146 = vpop.permute.xlu0 %4145
    %4147 = vrot.lane.b32.xlu0 %v4126, 80
    %v4148 = vpop.permute.xlu0 %4147
    %4149 = vrot.lane.b32.xlu0 %v4127, 80
    %v4150 = vpop.permute.xlu0 %4149
    %4151 = vrot.lane.b32.xlu0 %v4128, 80
    %v4152 = vpop.permute.xlu0 %4151
    %vm4153 = vcmask 654336
    %v4154 = vsel %vm4153, %v4138, %v4140
    %v4155 = vsel %vm4153, %v4140, %v4142
    %v4156 = vsel %vm4153, %v4142, %v4144
    %v4157 = vsel %vm4153, %v4146, %v4148
    %v4158 = vsel %vm4153, %v4148, %v4150
    %v4159 = vsel %vm4153, %v4150, %v4152
    %v4168 = vadd.f32 %v4009, %v4154
    %v4169 = vadd.f32 %v4010, %v4155
    %v4170 = vadd.f32 %v4011, %v4156
    %v4171 = vadd.f32 %v4012, %v4144
    %v4172 = vadd.f32 %v4013, %v4157
    %v4173 = vadd.f32 %v4014, %v4158
    %v4174 = vadd.f32 %v4015, %v4159
    %v4175 = vadd.f32 %v4016, %v4152
    %s4176 = scalar_lea.vmem [#allocation8], 1568
    %v4177 = vld [vmem:[%s4176] sm:$0xff]
    %v4178 = vld [vmem:[%s4176 + $0x8] sm:$0xff]
    %v4179 = vld [vmem:[%s4176 + $0x10] sm:$0xff]
    %v4180 = vld [vmem:[%s4176 + $0x18] sm:$0xff]
    %4185 = vrot.lane.b32.xlu0 %v4177, 49
    %v4186 = vpop.permute.xlu0 %4185
    %4187 = vrot.lane.b32.xlu0 %v4178, 49
    %v4188 = vpop.permute.xlu0 %4187
    %4189 = vrot.lane.b32.xlu0 %v4179, 49
    %v4190 = vpop.permute.xlu0 %4189
    %4191 = vrot.lane.b32.xlu0 %v4180, 49
    %v4192 = vpop.permute.xlu0 %4191
    %vm4193 = vcmask 400384
    %v4194 = vsel %vm4193, %v4186, %v4188
    %v4195 = vsel %vm4193, %v4188, %v4190
    %v4196 = vsel %vm4193, %v4190, %v4192
    %v4201 = vmul.f32 %v357, %v4186
    %v4202 = vmul.f32 %v361, %v4194
    %v4203 = vmul.f32 %v365, %v4195
    %v4204 = vmul.f32 %v369, %v4196
    %v4205 = vmul.f32 %v373, %v4186
    %v4206 = vmul.f32 %v377, %v4194
    %v4207 = vmul.f32 %v381, %v4195
    %v4208 = vmul.f32 %v385, %v4196
    %4217 = vrot.lane.b32.xlu0 %v4201, 80
    %v4218 = vpop.permute.xlu0 %4217
    %4219 = vrot.lane.b32.xlu0 %v4202, 80
    %v4220 = vpop.permute.xlu0 %4219
    %4221 = vrot.lane.b32.xlu0 %v4203, 80
    %v4222 = vpop.permute.xlu0 %4221
    %4223 = vrot.lane.b32.xlu0 %v4204, 80
    %v4224 = vpop.permute.xlu0 %4223
    %4225 = vrot.lane.b32.xlu0 %v4205, 80
    %v4226 = vpop.permute.xlu0 %4225
    %4227 = vrot.lane.b32.xlu0 %v4206, 80
    %v4228 = vpop.permute.xlu0 %4227
    %4229 = vrot.lane.b32.xlu0 %v4207, 80
    %v4230 = vpop.permute.xlu0 %4229
    %4231 = vrot.lane.b32.xlu0 %v4208, 80
    %v4232 = vpop.permute.xlu0 %4231
    %v4233 = vsel %vm4153, %v4218, %v4220
    %v4234 = vsel %vm4153, %v4220, %v4222
    %v4235 = vsel %vm4153, %v4222, %v4224
    %v4236 = vsel %vm4153, %v4226, %v4228
    %v4237 = vsel %vm4153, %v4228, %v4230
    %v4238 = vsel %vm4153, %v4230, %v4232
    %v4247 = vadd.f32 %v4088, %v4233
    %v4248 = vadd.f32 %v4089, %v4234
    %v4249 = vadd.f32 %v4090, %v4235
    %v4250 = vadd.f32 %v4091, %v4224
    %v4251 = vadd.f32 %v4092, %v4236
    %v4252 = vadd.f32 %v4093, %v4237
    %v4253 = vadd.f32 %v4094, %v4238
    %v4254 = vadd.f32 %v4095, %v4232
    %s4255 = scalar_lea.vmem [#allocation8], 1600
    %v4256 = vld [vmem:[%s4255] sm:$0xff]
    %v4257 = vld [vmem:[%s4255 + $0x8] sm:$0xff]
    %v4258 = vld [vmem:[%s4255 + $0x10] sm:$0xff]
    %v4259 = vld [vmem:[%s4255 + $0x18] sm:$0xff]
    %4264 = vrot.lane.b32.xlu0 %v4256, 50
    %v4265 = vpop.permute.xlu0 %4264
    %4266 = vrot.lane.b32.xlu0 %v4257, 50
    %v4267 = vpop.permute.xlu0 %4266
    %4268 = vrot.lane.b32.xlu0 %v4258, 50
    %v4269 = vpop.permute.xlu0 %4268
    %4270 = vrot.lane.b32.xlu0 %v4259, 50
    %v4271 = vpop.permute.xlu0 %4270
    %vm4272 = vcmask 408576
    %v4273 = vsel %vm4272, %v4265, %v4267
    %v4274 = vsel %vm4272, %v4267, %v4269
    %v4275 = vsel %vm4272, %v4269, %v4271
    %v4280 = vmul.f32 %v357, %v4265
    %v4281 = vmul.f32 %v361, %v4273
    %v4282 = vmul.f32 %v365, %v4274
    %v4283 = vmul.f32 %v369, %v4275
    %v4284 = vmul.f32 %v373, %v4265
    %v4285 = vmul.f32 %v377, %v4273
    %v4286 = vmul.f32 %v381, %v4274
    %v4287 = vmul.f32 %v385, %v4275
    %4296 = vrot.lane.b32.xlu0 %v4280, 78
    %v4297 = vpop.permute.xlu0 %4296
    %4298 = vrot.lane.b32.xlu0 %v4281, 78
    %v4299 = vpop.permute.xlu0 %4298
    %4300 = vrot.lane.b32.xlu0 %v4282, 78
    %v4301 = vpop.permute.xlu0 %4300
    %4302 = vrot.lane.b32.xlu0 %v4283, 78
    %v4303 = vpop.permute.xlu0 %4302
    %4304 = vrot.lane.b32.xlu0 %v4284, 78
    %v4305 = vpop.permute.xlu0 %4304
    %4306 = vrot.lane.b32.xlu0 %v4285, 78
    %v4307 = vpop.permute.xlu0 %4306
    %4308 = vrot.lane.b32.xlu0 %v4286, 78
    %v4309 = vpop.permute.xlu0 %4308
    %4310 = vrot.lane.b32.xlu0 %v4287, 78
    %v4311 = vpop.permute.xlu0 %4310
    %vm4312 = vcmask 637952
    %v4313 = vsel %vm4312, %v4297, %v4299
    %v4314 = vsel %vm4312, %v4299, %v4301
    %v4315 = vsel %vm4312, %v4301, %v4303
    %v4316 = vsel %vm4312, %v4305, %v4307
    %v4317 = vsel %vm4312, %v4307, %v4309
    %v4318 = vsel %vm4312, %v4309, %v4311
    %v4327 = vadd.f32 %v4168, %v4313
    %v4328 = vadd.f32 %v4169, %v4314
    %v4329 = vadd.f32 %v4170, %v4315
    %v4330 = vadd.f32 %v4171, %v4303
    %v4331 = vadd.f32 %v4172, %v4316
    %v4332 = vadd.f32 %v4173, %v4317
    %v4333 = vadd.f32 %v4174, %v4318
    %v4334 = vadd.f32 %v4175, %v4311
    %s4335 = scalar_lea.vmem [#allocation8], 1632
    %v4336 = vld [vmem:[%s4335] sm:$0xff]
    %v4337 = vld [vmem:[%s4335 + $0x8] sm:$0xff]
    %v4338 = vld [vmem:[%s4335 + $0x10] sm:$0xff]
    %v4339 = vld [vmem:[%s4335 + $0x18] sm:$0xff]
    %4344 = vrot.lane.b32.xlu0 %v4336, 51
    %v4345 = vpop.permute.xlu0 %4344
    %4346 = vrot.lane.b32.xlu0 %v4337, 51
    %v4347 = vpop.permute.xlu0 %4346
    %4348 = vrot.lane.b32.xlu0 %v4338, 51
    %v4349 = vpop.permute.xlu0 %4348
    %4350 = vrot.lane.b32.xlu0 %v4339, 51
    %v4351 = vpop.permute.xlu0 %4350
    %vm4352 = vcmask 416768
    %v4353 = vsel %vm4352, %v4345, %v4347
    %v4354 = vsel %vm4352, %v4347, %v4349
    %v4355 = vsel %vm4352, %v4349, %v4351
    %v4360 = vmul.f32 %v357, %v4345
    %v4361 = vmul.f32 %v361, %v4353
    %v4362 = vmul.f32 %v365, %v4354
    %v4363 = vmul.f32 %v369, %v4355
    %v4364 = vmul.f32 %v373, %v4345
    %v4365 = vmul.f32 %v377, %v4353
    %v4366 = vmul.f32 %v381, %v4354
    %v4367 = vmul.f32 %v385, %v4355
    %4376 = vrot.lane.b32.xlu0 %v4360, 78
    %v4377 = vpop.permute.xlu0 %4376
    %4378 = vrot.lane.b32.xlu0 %v4361, 78
    %v4379 = vpop.permute.xlu0 %4378
    %4380 = vrot.lane.b32.xlu0 %v4362, 78
    %v4381 = vpop.permute.xlu0 %4380
    %4382 = vrot.lane.b32.xlu0 %v4363, 78
    %v4383 = vpop.permute.xlu0 %4382
    %4384 = vrot.lane.b32.xlu0 %v4364, 78
    %v4385 = vpop.permute.xlu0 %4384
    %4386 = vrot.lane.b32.xlu0 %v4365, 78
    %v4387 = vpop.permute.xlu0 %4386
    %4388 = vrot.lane.b32.xlu0 %v4366, 78
    %v4389 = vpop.permute.xlu0 %4388
    %4390 = vrot.lane.b32.xlu0 %v4367, 78
    %v4391 = vpop.permute.xlu0 %4390
    %v4392 = vsel %vm4312, %v4377, %v4379
    %v4393 = vsel %vm4312, %v4379, %v4381
    %v4394 = vsel %vm4312, %v4381, %v4383
    %v4395 = vsel %vm4312, %v4385, %v4387
    %v4396 = vsel %vm4312, %v4387, %v4389
    %v4397 = vsel %vm4312, %v4389, %v4391
    %v4406 = vadd.f32 %v4247, %v4392
    %v4407 = vadd.f32 %v4248, %v4393
    %v4408 = vadd.f32 %v4249, %v4394
    %v4409 = vadd.f32 %v4250, %v4383
    %v4410 = vadd.f32 %v4251, %v4395
    %v4411 = vadd.f32 %v4252, %v4396
    %v4412 = vadd.f32 %v4253, %v4397
    %v4413 = vadd.f32 %v4254, %v4391
    %s4414 = scalar_lea.vmem [#allocation8], 1664
    %v4415 = vld [vmem:[%s4414] sm:$0xff]
    %v4416 = vld [vmem:[%s4414 + $0x8] sm:$0xff]
    %v4417 = vld [vmem:[%s4414 + $0x10] sm:$0xff]
    %v4418 = vld [vmem:[%s4414 + $0x18] sm:$0xff]
    %4423 = vrot.lane.b32.xlu0 %v4415, 52
    %v4424 = vpop.permute.xlu0 %4423
    %4425 = vrot.lane.b32.xlu0 %v4416, 52
    %v4426 = vpop.permute.xlu0 %4425
    %4427 = vrot.lane.b32.xlu0 %v4417, 52
    %v4428 = vpop.permute.xlu0 %4427
    %4429 = vrot.lane.b32.xlu0 %v4418, 52
    %v4430 = vpop.permute.xlu0 %4429
    %vm4431 = vcmask 424960
    %v4432 = vsel %vm4431, %v4424, %v4426
    %v4433 = vsel %vm4431, %v4426, %v4428
    %v4434 = vsel %vm4431, %v4428, %v4430
    %v4439 = vmul.f32 %v357, %v4424
    %v4440 = vmul.f32 %v361, %v4432
    %v4441 = vmul.f32 %v365, %v4433
    %v4442 = vmul.f32 %v369, %v4434
    %v4443 = vmul.f32 %v373, %v4424
    %v4444 = vmul.f32 %v377, %v4432
    %v4445 = vmul.f32 %v381, %v4433
    %v4446 = vmul.f32 %v385, %v4434
    %4455 = vrot.lane.b32.xlu0 %v4439, 76
    %v4456 = vpop.permute.xlu0 %4455
    %4457 = vrot.lane.b32.xlu0 %v4440, 76
    %v4458 = vpop.permute.xlu0 %4457
    %4459 = vrot.lane.b32.xlu0 %v4441, 76
    %v4460 = vpop.permute.xlu0 %4459
    %4461 = vrot.lane.b32.xlu0 %v4442, 76
    %v4462 = vpop.permute.xlu0 %4461
    %4463 = vrot.lane.b32.xlu0 %v4443, 76
    %v4464 = vpop.permute.xlu0 %4463
    %4465 = vrot.lane.b32.xlu0 %v4444, 76
    %v4466 = vpop.permute.xlu0 %4465
    %4467 = vrot.lane.b32.xlu0 %v4445, 76
    %v4468 = vpop.permute.xlu0 %4467
    %4469 = vrot.lane.b32.xlu0 %v4446, 76
    %v4470 = vpop.permute.xlu0 %4469
    %vm4471 = vcmask 621568
    %v4472 = vsel %vm4471, %v4456, %v4458
    %v4473 = vsel %vm4471, %v4458, %v4460
    %v4474 = vsel %vm4471, %v4460, %v4462
    %v4475 = vsel %vm4471, %v4464, %v4466
    %v4476 = vsel %vm4471, %v4466, %v4468
    %v4477 = vsel %vm4471, %v4468, %v4470
    %v4486 = vadd.f32 %v4327, %v4472
    %v4487 = vadd.f32 %v4328, %v4473
    %v4488 = vadd.f32 %v4329, %v4474
    %v4489 = vadd.f32 %v4330, %v4462
    %v4490 = vadd.f32 %v4331, %v4475
    %v4491 = vadd.f32 %v4332, %v4476
    %v4492 = vadd.f32 %v4333, %v4477
    %v4493 = vadd.f32 %v4334, %v4470
    %s4494 = scalar_lea.vmem [#allocation8], 1696
    %v4495 = vld [vmem:[%s4494] sm:$0xff]
    %v4496 = vld [vmem:[%s4494 + $0x8] sm:$0xff]
    %v4497 = vld [vmem:[%s4494 + $0x10] sm:$0xff]
    %v4498 = vld [vmem:[%s4494 + $0x18] sm:$0xff]
    %4503 = vrot.lane.b32.xlu0 %v4495, 53
    %v4504 = vpop.permute.xlu0 %4503
    %4505 = vrot.lane.b32.xlu0 %v4496, 53
    %v4506 = vpop.permute.xlu0 %4505
    %4507 = vrot.lane.b32.xlu0 %v4497, 53
    %v4508 = vpop.permute.xlu0 %4507
    %4509 = vrot.lane.b32.xlu0 %v4498, 53
    %v4510 = vpop.permute.xlu0 %4509
    %vm4511 = vcmask 433152
    %v4512 = vsel %vm4511, %v4504, %v4506
    %v4513 = vsel %vm4511, %v4506, %v4508
    %v4514 = vsel %vm4511, %v4508, %v4510
    %v4519 = vmul.f32 %v357, %v4504
    %v4520 = vmul.f32 %v361, %v4512
    %v4521 = vmul.f32 %v365, %v4513
    %v4522 = vmul.f32 %v369, %v4514
    %v4523 = vmul.f32 %v373, %v4504
    %v4524 = vmul.f32 %v377, %v4512
    %v4525 = vmul.f32 %v381, %v4513
    %v4526 = vmul.f32 %v385, %v4514
    %4535 = vrot.lane.b32.xlu0 %v4519, 76
    %v4536 = vpop.permute.xlu0 %4535
    %4537 = vrot.lane.b32.xlu0 %v4520, 76
    %v4538 = vpop.permute.xlu0 %4537
    %4539 = vrot.lane.b32.xlu0 %v4521, 76
    %v4540 = vpop.permute.xlu0 %4539
    %4541 = vrot.lane.b32.xlu0 %v4522, 76
    %v4542 = vpop.permute.xlu0 %4541
    %4543 = vrot.lane.b32.xlu0 %v4523, 76
    %v4544 = vpop.permute.xlu0 %4543
    %4545 = vrot.lane.b32.xlu0 %v4524, 76
    %v4546 = vpop.permute.xlu0 %4545
    %4547 = vrot.lane.b32.xlu0 %v4525, 76
    %v4548 = vpop.permute.xlu0 %4547
    %4549 = vrot.lane.b32.xlu0 %v4526, 76
    %v4550 = vpop.permute.xlu0 %4549
    %v4551 = vsel %vm4471, %v4536, %v4538
    %v4552 = vsel %vm4471, %v4538, %v4540
    %v4553 = vsel %vm4471, %v4540, %v4542
    %v4554 = vsel %vm4471, %v4544, %v4546
    %v4555 = vsel %vm4471, %v4546, %v4548
    %v4556 = vsel %vm4471, %v4548, %v4550
    %v4565 = vadd.f32 %v4406, %v4551
    %v4566 = vadd.f32 %v4407, %v4552
    %v4567 = vadd.f32 %v4408, %v4553
    %v4568 = vadd.f32 %v4409, %v4542
    %v4569 = vadd.f32 %v4410, %v4554
    %v4570 = vadd.f32 %v4411, %v4555
    %v4571 = vadd.f32 %v4412, %v4556
    %v4572 = vadd.f32 %v4413, %v4550
    %s4573 = scalar_lea.vmem [#allocation8], 1728
    %v4574 = vld [vmem:[%s4573] sm:$0xff]
    %v4575 = vld [vmem:[%s4573 + $0x8] sm:$0xff]
    %v4576 = vld [vmem:[%s4573 + $0x10] sm:$0xff]
    %v4577 = vld [vmem:[%s4573 + $0x18] sm:$0xff]
    %4582 = vrot.lane.b32.xlu0 %v4574, 54
    %v4583 = vpop.permute.xlu0 %4582
    %4584 = vrot.lane.b32.xlu0 %v4575, 54
    %v4585 = vpop.permute.xlu0 %4584
    %4586 = vrot.lane.b32.xlu0 %v4576, 54
    %v4587 = vpop.permute.xlu0 %4586
    %4588 = vrot.lane.b32.xlu0 %v4577, 54
    %v4589 = vpop.permute.xlu0 %4588
    %vm4590 = vcmask 441344
    %v4591 = vsel %vm4590, %v4583, %v4585
    %v4592 = vsel %vm4590, %v4585, %v4587
    %v4593 = vsel %vm4590, %v4587, %v4589
    %v4598 = vmul.f32 %v357, %v4583
    %v4599 = vmul.f32 %v361, %v4591
    %v4600 = vmul.f32 %v365, %v4592
    %v4601 = vmul.f32 %v369, %v4593
    %v4602 = vmul.f32 %v373, %v4583
    %v4603 = vmul.f32 %v377, %v4591
    %v4604 = vmul.f32 %v381, %v4592
    %v4605 = vmul.f32 %v385, %v4593
    %4614 = vrot.lane.b32.xlu0 %v4598, 74
    %v4615 = vpop.permute.xlu0 %4614
    %4616 = vrot.lane.b32.xlu0 %v4599, 74
    %v4617 = vpop.permute.xlu0 %4616
    %4618 = vrot.lane.b32.xlu0 %v4600, 74
    %v4619 = vpop.permute.xlu0 %4618
    %4620 = vrot.lane.b32.xlu0 %v4601, 74
    %v4621 = vpop.permute.xlu0 %4620
    %4622 = vrot.lane.b32.xlu0 %v4602, 74
    %v4623 = vpop.permute.xlu0 %4622
    %4624 = vrot.lane.b32.xlu0 %v4603, 74
    %v4625 = vpop.permute.xlu0 %4624
    %4626 = vrot.lane.b32.xlu0 %v4604, 74
    %v4627 = vpop.permute.xlu0 %4626
    %4628 = vrot.lane.b32.xlu0 %v4605, 74
    %v4629 = vpop.permute.xlu0 %4628
    %vm4630 = vcmask 605184
    %v4631 = vsel %vm4630, %v4615, %v4617
    %v4632 = vsel %vm4630, %v4617, %v4619
    %v4633 = vsel %vm4630, %v4619, %v4621
    %v4634 = vsel %vm4630, %v4623, %v4625
    %v4635 = vsel %vm4630, %v4625, %v4627
    %v4636 = vsel %vm4630, %v4627, %v4629
    %v4645 = vadd.f32 %v4486, %v4631
    %v4646 = vadd.f32 %v4487, %v4632
    %v4647 = vadd.f32 %v4488, %v4633
    %v4648 = vadd.f32 %v4489, %v4621
    %v4649 = vadd.f32 %v4490, %v4634
    %v4650 = vadd.f32 %v4491, %v4635
    %v4651 = vadd.f32 %v4492, %v4636
    %v4652 = vadd.f32 %v4493, %v4629
    %s4653 = scalar_lea.vmem [#allocation8], 1760
    %v4654 = vld [vmem:[%s4653] sm:$0xff]
    %v4655 = vld [vmem:[%s4653 + $0x8] sm:$0xff]
    %v4656 = vld [vmem:[%s4653 + $0x10] sm:$0xff]
    %v4657 = vld [vmem:[%s4653 + $0x18] sm:$0xff]
    %4662 = vrot.lane.b32.xlu0 %v4654, 55
    %v4663 = vpop.permute.xlu0 %4662
    %4664 = vrot.lane.b32.xlu0 %v4655, 55
    %v4665 = vpop.permute.xlu0 %4664
    %4666 = vrot.lane.b32.xlu0 %v4656, 55
    %v4667 = vpop.permute.xlu0 %4666
    %4668 = vrot.lane.b32.xlu0 %v4657, 55
    %v4669 = vpop.permute.xlu0 %4668
    %vm4670 = vcmask 449536
    %v4671 = vsel %vm4670, %v4663, %v4665
    %v4672 = vsel %vm4670, %v4665, %v4667
    %v4673 = vsel %vm4670, %v4667, %v4669
    %v4678 = vmul.f32 %v357, %v4663
    %v4679 = vmul.f32 %v361, %v4671
    %v4680 = vmul.f32 %v365, %v4672
    %v4681 = vmul.f32 %v369, %v4673
    %v4682 = vmul.f32 %v373, %v4663
    %v4683 = vmul.f32 %v377, %v4671
    %v4684 = vmul.f32 %v381, %v4672
    %v4685 = vmul.f32 %v385, %v4673
    %4694 = vrot.lane.b32.xlu0 %v4678, 74
    %v4695 = vpop.permute.xlu0 %4694
    %4696 = vrot.lane.b32.xlu0 %v4679, 74
    %v4697 = vpop.permute.xlu0 %4696
    %4698 = vrot.lane.b32.xlu0 %v4680, 74
    %v4699 = vpop.permute.xlu0 %4698
    %4700 = vrot.lane.b32.xlu0 %v4681, 74
    %v4701 = vpop.permute.xlu0 %4700
    %4702 = vrot.lane.b32.xlu0 %v4682, 74
    %v4703 = vpop.permute.xlu0 %4702
    %4704 = vrot.lane.b32.xlu0 %v4683, 74
    %v4705 = vpop.permute.xlu0 %4704
    %4706 = vrot.lane.b32.xlu0 %v4684, 74
    %v4707 = vpop.permute.xlu0 %4706
    %4708 = vrot.lane.b32.xlu0 %v4685, 74
    %v4709 = vpop.permute.xlu0 %4708
    %v4710 = vsel %vm4630, %v4695, %v4697
    %v4711 = vsel %vm4630, %v4697, %v4699
    %v4712 = vsel %vm4630, %v4699, %v4701
    %v4713 = vsel %vm4630, %v4703, %v4705
    %v4714 = vsel %vm4630, %v4705, %v4707
    %v4715 = vsel %vm4630, %v4707, %v4709
    %v4724 = vadd.f32 %v4565, %v4710
    %v4725 = vadd.f32 %v4566, %v4711
    %v4726 = vadd.f32 %v4567, %v4712
    %v4727 = vadd.f32 %v4568, %v4701
    %v4728 = vadd.f32 %v4569, %v4713
    %v4729 = vadd.f32 %v4570, %v4714
    %v4730 = vadd.f32 %v4571, %v4715
    %v4731 = vadd.f32 %v4572, %v4709
    %s4732 = scalar_lea.vmem [#allocation8], 1792
    %v4733 = vld [vmem:[%s4732] sm:$0xff]
    %v4734 = vld [vmem:[%s4732 + $0x8] sm:$0xff]
    %v4735 = vld [vmem:[%s4732 + $0x10] sm:$0xff]
    %v4736 = vld [vmem:[%s4732 + $0x18] sm:$0xff]
    %4741 = vrot.lane.b32.xlu0 %v4733, 56
    %v4742 = vpop.permute.xlu0 %4741
    %4743 = vrot.lane.b32.xlu0 %v4734, 56
    %v4744 = vpop.permute.xlu0 %4743
    %4745 = vrot.lane.b32.xlu0 %v4735, 56
    %v4746 = vpop.permute.xlu0 %4745
    %4747 = vrot.lane.b32.xlu0 %v4736, 56
    %v4748 = vpop.permute.xlu0 %4747
    %vm4749 = vcmask 457728
    %v4750 = vsel %vm4749, %v4742, %v4744
    %v4751 = vsel %vm4749, %v4744, %v4746
    %v4752 = vsel %vm4749, %v4746, %v4748
    %v4757 = vmul.f32 %v357, %v4742
    %v4758 = vmul.f32 %v361, %v4750
    %v4759 = vmul.f32 %v365, %v4751
    %v4760 = vmul.f32 %v369, %v4752
    %v4761 = vmul.f32 %v373, %v4742
    %v4762 = vmul.f32 %v377, %v4750
    %v4763 = vmul.f32 %v381, %v4751
    %v4764 = vmul.f32 %v385, %v4752
    %4773 = vrot.lane.b32.xlu0 %v4757, 72
    %v4774 = vpop.permute.xlu0 %4773
    %4775 = vrot.lane.b32.xlu0 %v4758, 72
    %v4776 = vpop.permute.xlu0 %4775
    %4777 = vrot.lane.b32.xlu0 %v4759, 72
    %v4778 = vpop.permute.xlu0 %4777
    %4779 = vrot.lane.b32.xlu0 %v4760, 72
    %v4780 = vpop.permute.xlu0 %4779
    %4781 = vrot.lane.b32.xlu0 %v4761, 72
    %v4782 = vpop.permute.xlu0 %4781
    %4783 = vrot.lane.b32.xlu0 %v4762, 72
    %v4784 = vpop.permute.xlu0 %4783
    %4785 = vrot.lane.b32.xlu0 %v4763, 72
    %v4786 = vpop.permute.xlu0 %4785
    %4787 = vrot.lane.b32.xlu0 %v4764, 72
    %v4788 = vpop.permute.xlu0 %4787
    %vm4789 = vcmask 588800
    %v4790 = vsel %vm4789, %v4774, %v4776
    %v4791 = vsel %vm4789, %v4776, %v4778
    %v4792 = vsel %vm4789, %v4778, %v4780
    %v4793 = vsel %vm4789, %v4782, %v4784
    %v4794 = vsel %vm4789, %v4784, %v4786
    %v4795 = vsel %vm4789, %v4786, %v4788
    %v4804 = vadd.f32 %v4645, %v4790
    %v4805 = vadd.f32 %v4646, %v4791
    %v4806 = vadd.f32 %v4647, %v4792
    %v4807 = vadd.f32 %v4648, %v4780
    %v4808 = vadd.f32 %v4649, %v4793
    %v4809 = vadd.f32 %v4650, %v4794
    %v4810 = vadd.f32 %v4651, %v4795
    %v4811 = vadd.f32 %v4652, %v4788
    %s4812 = scalar_lea.vmem [#allocation8], 1824
    %v4813 = vld [vmem:[%s4812] sm:$0xff]
    %v4814 = vld [vmem:[%s4812 + $0x8] sm:$0xff]
    %v4815 = vld [vmem:[%s4812 + $0x10] sm:$0xff]
    %v4816 = vld [vmem:[%s4812 + $0x18] sm:$0xff]
    %4821 = vrot.lane.b32.xlu0 %v4813, 57
    %v4822 = vpop.permute.xlu0 %4821
    %4823 = vrot.lane.b32.xlu0 %v4814, 57
    %v4824 = vpop.permute.xlu0 %4823
    %4825 = vrot.lane.b32.xlu0 %v4815, 57
    %v4826 = vpop.permute.xlu0 %4825
    %4827 = vrot.lane.b32.xlu0 %v4816, 57
    %v4828 = vpop.permute.xlu0 %4827
    %vm4829 = vcmask 465920
    %v4830 = vsel %vm4829, %v4822, %v4824
    %v4831 = vsel %vm4829, %v4824, %v4826
    %v4832 = vsel %vm4829, %v4826, %v4828
    %v4837 = vmul.f32 %v357, %v4822
    %v4838 = vmul.f32 %v361, %v4830
    %v4839 = vmul.f32 %v365, %v4831
    %v4840 = vmul.f32 %v369, %v4832
    %v4841 = vmul.f32 %v373, %v4822
    %v4842 = vmul.f32 %v377, %v4830
    %v4843 = vmul.f32 %v381, %v4831
    %v4844 = vmul.f32 %v385, %v4832
    %4853 = vrot.lane.b32.xlu0 %v4837, 72
    %v4854 = vpop.permute.xlu0 %4853
    %4855 = vrot.lane.b32.xlu0 %v4838, 72
    %v4856 = vpop.permute.xlu0 %4855
    %4857 = vrot.lane.b32.xlu0 %v4839, 72
    %v4858 = vpop.permute.xlu0 %4857
    %4859 = vrot.lane.b32.xlu0 %v4840, 72
    %v4860 = vpop.permute.xlu0 %4859
    %4861 = vrot.lane.b32.xlu0 %v4841, 72
    %v4862 = vpop.permute.xlu0 %4861
    %4863 = vrot.lane.b32.xlu0 %v4842, 72
    %v4864 = vpop.permute.xlu0 %4863
    %4865 = vrot.lane.b32.xlu0 %v4843, 72
    %v4866 = vpop.permute.xlu0 %4865
    %4867 = vrot.lane.b32.xlu0 %v4844, 72
    %v4868 = vpop.permute.xlu0 %4867
    %v4869 = vsel %vm4789, %v4854, %v4856
    %v4870 = vsel %vm4789, %v4856, %v4858
    %v4871 = vsel %vm4789, %v4858, %v4860
    %v4872 = vsel %vm4789, %v4862, %v4864
    %v4873 = vsel %vm4789, %v4864, %v4866
    %v4874 = vsel %vm4789, %v4866, %v4868
    %v4883 = vadd.f32 %v4724, %v4869
    %v4884 = vadd.f32 %v4725, %v4870
    %v4885 = vadd.f32 %v4726, %v4871
    %v4886 = vadd.f32 %v4727, %v4860
    %v4887 = vadd.f32 %v4728, %v4872
    %v4888 = vadd.f32 %v4729, %v4873
    %v4889 = vadd.f32 %v4730, %v4874
    %v4890 = vadd.f32 %v4731, %v4868
    %s4891 = scalar_lea.vmem [#allocation8], 1856
    %v4892 = vld [vmem:[%s4891] sm:$0xff]
    %v4893 = vld [vmem:[%s4891 + $0x8] sm:$0xff]
    %v4894 = vld [vmem:[%s4891 + $0x10] sm:$0xff]
    %v4895 = vld [vmem:[%s4891 + $0x18] sm:$0xff]
    %4900 = vrot.lane.b32.xlu0 %v4892, 58
    %v4901 = vpop.permute.xlu0 %4900
    %4902 = vrot.lane.b32.xlu0 %v4893, 58
    %v4903 = vpop.permute.xlu0 %4902
    %4904 = vrot.lane.b32.xlu0 %v4894, 58
    %v4905 = vpop.permute.xlu0 %4904
    %4906 = vrot.lane.b32.xlu0 %v4895, 58
    %v4907 = vpop.permute.xlu0 %4906
    %vm4908 = vcmask 474112
    %v4909 = vsel %vm4908, %v4901, %v4903
    %v4910 = vsel %vm4908, %v4903, %v4905
    %v4911 = vsel %vm4908, %v4905, %v4907
    %v4916 = vmul.f32 %v357, %v4901
    %v4917 = vmul.f32 %v361, %v4909
    %v4918 = vmul.f32 %v365, %v4910
    %v4919 = vmul.f32 %v369, %v4911
    %v4920 = vmul.f32 %v373, %v4901
    %v4921 = vmul.f32 %v377, %v4909
    %v4922 = vmul.f32 %v381, %v4910
    %v4923 = vmul.f32 %v385, %v4911
    %4932 = vrot.lane.b32.xlu0 %v4916, 70
    %v4933 = vpop.permute.xlu0 %4932
    %4934 = vrot.lane.b32.xlu0 %v4917, 70
    %v4935 = vpop.permute.xlu0 %4934
    %4936 = vrot.lane.b32.xlu0 %v4918, 70
    %v4937 = vpop.permute.xlu0 %4936
    %4938 = vrot.lane.b32.xlu0 %v4919, 70
    %v4939 = vpop.permute.xlu0 %4938
    %4940 = vrot.lane.b32.xlu0 %v4920, 70
    %v4941 = vpop.permute.xlu0 %4940
    %4942 = vrot.lane.b32.xlu0 %v4921, 70
    %v4943 = vpop.permute.xlu0 %4942
    %4944 = vrot.lane.b32.xlu0 %v4922, 70
    %v4945 = vpop.permute.xlu0 %4944
    %4946 = vrot.lane.b32.xlu0 %v4923, 70
    %v4947 = vpop.permute.xlu0 %4946
    %vm4948 = vcmask 572416
    %v4949 = vsel %vm4948, %v4933, %v4935
    %v4950 = vsel %vm4948, %v4935, %v4937
    %v4951 = vsel %vm4948, %v4937, %v4939
    %v4952 = vsel %vm4948, %v4941, %v4943
    %v4953 = vsel %vm4948, %v4943, %v4945
    %v4954 = vsel %vm4948, %v4945, %v4947
    %v4963 = vadd.f32 %v4804, %v4949
    %v4964 = vadd.f32 %v4805, %v4950
    %v4965 = vadd.f32 %v4806, %v4951
    %v4966 = vadd.f32 %v4807, %v4939
    %v4967 = vadd.f32 %v4808, %v4952
    %v4968 = vadd.f32 %v4809, %v4953
    %v4969 = vadd.f32 %v4810, %v4954
    %v4970 = vadd.f32 %v4811, %v4947
    %s4971 = scalar_lea.vmem [#allocation8], 1888
    %v4972 = vld [vmem:[%s4971] sm:$0xff]
    %v4973 = vld [vmem:[%s4971 + $0x8] sm:$0xff]
    %v4974 = vld [vmem:[%s4971 + $0x10] sm:$0xff]
    %v4975 = vld [vmem:[%s4971 + $0x18] sm:$0xff]
    %4980 = vrot.lane.b32.xlu0 %v4972, 59
    %v4981 = vpop.permute.xlu0 %4980
    %4982 = vrot.lane.b32.xlu0 %v4973, 59
    %v4983 = vpop.permute.xlu0 %4982
    %4984 = vrot.lane.b32.xlu0 %v4974, 59
    %v4985 = vpop.permute.xlu0 %4984
    %4986 = vrot.lane.b32.xlu0 %v4975, 59
    %v4987 = vpop.permute.xlu0 %4986
    %vm4988 = vcmask 482304
    %v4989 = vsel %vm4988, %v4981, %v4983
    %v4990 = vsel %vm4988, %v4983, %v4985
    %v4991 = vsel %vm4988, %v4985, %v4987
    %v4996 = vmul.f32 %v357, %v4981
    %v4997 = vmul.f32 %v361, %v4989
    %v4998 = vmul.f32 %v365, %v4990
    %v4999 = vmul.f32 %v369, %v4991
    %v5000 = vmul.f32 %v373, %v4981
    %v5001 = vmul.f32 %v377, %v4989
    %v5002 = vmul.f32 %v381, %v4990
    %v5003 = vmul.f32 %v385, %v4991
    %5012 = vrot.lane.b32.xlu0 %v4996, 70
    %v5013 = vpop.permute.xlu0 %5012
    %5014 = vrot.lane.b32.xlu0 %v4997, 70
    %v5015 = vpop.permute.xlu0 %5014
    %5016 = vrot.lane.b32.xlu0 %v4998, 70
    %v5017 = vpop.permute.xlu0 %5016
    %5018 = vrot.lane.b32.xlu0 %v4999, 70
    %v5019 = vpop.permute.xlu0 %5018
    %5020 = vrot.lane.b32.xlu0 %v5000, 70
    %v5021 = vpop.permute.xlu0 %5020
    %5022 = vrot.lane.b32.xlu0 %v5001, 70
    %v5023 = vpop.permute.xlu0 %5022
    %5024 = vrot.lane.b32.xlu0 %v5002, 70
    %v5025 = vpop.permute.xlu0 %5024
    %5026 = vrot.lane.b32.xlu0 %v5003, 70
    %v5027 = vpop.permute.xlu0 %5026
    %v5028 = vsel %vm4948, %v5013, %v5015
    %v5029 = vsel %vm4948, %v5015, %v5017
    %v5030 = vsel %vm4948, %v5017, %v5019
    %v5031 = vsel %vm4948, %v5021, %v5023
    %v5032 = vsel %vm4948, %v5023, %v5025
    %v5033 = vsel %vm4948, %v5025, %v5027
    %v5042 = vadd.f32 %v4883, %v5028
    %v5043 = vadd.f32 %v4884, %v5029
    %v5044 = vadd.f32 %v4885, %v5030
    %v5045 = vadd.f32 %v4886, %v5019
    %v5046 = vadd.f32 %v4887, %v5031
    %v5047 = vadd.f32 %v4888, %v5032
    %v5048 = vadd.f32 %v4889, %v5033
    %v5049 = vadd.f32 %v4890, %v5027
    %s5050 = scalar_lea.vmem [#allocation8], 1920
    %v5051 = vld [vmem:[%s5050] sm:$0xff]
    %v5052 = vld [vmem:[%s5050 + $0x8] sm:$0xff]
    %v5053 = vld [vmem:[%s5050 + $0x10] sm:$0xff]
    %v5054 = vld [vmem:[%s5050 + $0x18] sm:$0xff]
    %5059 = vrot.lane.b32.xlu0 %v5051, 60
    %v5060 = vpop.permute.xlu0 %5059
    %5061 = vrot.lane.b32.xlu0 %v5052, 60
    %v5062 = vpop.permute.xlu0 %5061
    %5063 = vrot.lane.b32.xlu0 %v5053, 60
    %v5064 = vpop.permute.xlu0 %5063
    %5065 = vrot.lane.b32.xlu0 %v5054, 60
    %v5066 = vpop.permute.xlu0 %5065
    %vm5067 = vcmask 490496
    %v5068 = vsel %vm5067, %v5060, %v5062
    %v5069 = vsel %vm5067, %v5062, %v5064
    %v5070 = vsel %vm5067, %v5064, %v5066
    %v5075 = vmul.f32 %v357, %v5060
    %v5076 = vmul.f32 %v361, %v5068
    %v5077 = vmul.f32 %v365, %v5069
    %v5078 = vmul.f32 %v369, %v5070
    %v5079 = vmul.f32 %v373, %v5060
    %v5080 = vmul.f32 %v377, %v5068
    %v5081 = vmul.f32 %v381, %v5069
    %v5082 = vmul.f32 %v385, %v5070
    %5091 = vrot.lane.b32.xlu0 %v5075, 68
    %v5092 = vpop.permute.xlu0 %5091
    %5093 = vrot.lane.b32.xlu0 %v5076, 68
    %v5094 = vpop.permute.xlu0 %5093
    %5095 = vrot.lane.b32.xlu0 %v5077, 68
    %v5096 = vpop.permute.xlu0 %5095
    %5097 = vrot.lane.b32.xlu0 %v5078, 68
    %v5098 = vpop.permute.xlu0 %5097
    %5099 = vrot.lane.b32.xlu0 %v5079, 68
    %v5100 = vpop.permute.xlu0 %5099
    %5101 = vrot.lane.b32.xlu0 %v5080, 68
    %v5102 = vpop.permute.xlu0 %5101
    %5103 = vrot.lane.b32.xlu0 %v5081, 68
    %v5104 = vpop.permute.xlu0 %5103
    %5105 = vrot.lane.b32.xlu0 %v5082, 68
    %v5106 = vpop.permute.xlu0 %5105
    %vm5107 = vcmask 556032
    %v5108 = vsel %vm5107, %v5092, %v5094
    %v5109 = vsel %vm5107, %v5094, %v5096
    %v5110 = vsel %vm5107, %v5096, %v5098
    %v5111 = vsel %vm5107, %v5100, %v5102
    %v5112 = vsel %vm5107, %v5102, %v5104
    %v5113 = vsel %vm5107, %v5104, %v5106
    %v5122 = vadd.f32 %v4963, %v5108
    %v5123 = vadd.f32 %v4964, %v5109
    %v5124 = vadd.f32 %v4965, %v5110
    %v5125 = vadd.f32 %v4966, %v5098
    %v5126 = vadd.f32 %v4967, %v5111
    %v5127 = vadd.f32 %v4968, %v5112
    %v5128 = vadd.f32 %v4969, %v5113
    %v5129 = vadd.f32 %v4970, %v5106
    %s5130 = scalar_lea.vmem [#allocation8], 1952
    %v5131 = vld [vmem:[%s5130] sm:$0xff]
    %v5132 = vld [vmem:[%s5130 + $0x8] sm:$0xff]
    %v5133 = vld [vmem:[%s5130 + $0x10] sm:$0xff]
    %v5134 = vld [vmem:[%s5130 + $0x18] sm:$0xff]
    %5139 = vrot.lane.b32.xlu0 %v5131, 61
    %v5140 = vpop.permute.xlu0 %5139
    %5141 = vrot.lane.b32.xlu0 %v5132, 61
    %v5142 = vpop.permute.xlu0 %5141
    %5143 = vrot.lane.b32.xlu0 %v5133, 61
    %v5144 = vpop.permute.xlu0 %5143
    %5145 = vrot.lane.b32.xlu0 %v5134, 61
    %v5146 = vpop.permute.xlu0 %5145
    %vm5147 = vcmask 498688
    %v5148 = vsel %vm5147, %v5140, %v5142
    %v5149 = vsel %vm5147, %v5142, %v5144
    %v5150 = vsel %vm5147, %v5144, %v5146
    %v5155 = vmul.f32 %v357, %v5140
    %v5156 = vmul.f32 %v361, %v5148
    %v5157 = vmul.f32 %v365, %v5149
    %v5158 = vmul.f32 %v369, %v5150
    %v5159 = vmul.f32 %v373, %v5140
    %v5160 = vmul.f32 %v377, %v5148
    %v5161 = vmul.f32 %v381, %v5149
    %v5162 = vmul.f32 %v385, %v5150
    %5171 = vrot.lane.b32.xlu0 %v5155, 68
    %v5172 = vpop.permute.xlu0 %5171
    %5173 = vrot.lane.b32.xlu0 %v5156, 68
    %v5174 = vpop.permute.xlu0 %5173
    %5175 = vrot.lane.b32.xlu0 %v5157, 68
    %v5176 = vpop.permute.xlu0 %5175
    %5177 = vrot.lane.b32.xlu0 %v5158, 68
    %v5178 = vpop.permute.xlu0 %5177
    %5179 = vrot.lane.b32.xlu0 %v5159, 68
    %v5180 = vpop.permute.xlu0 %5179
    %5181 = vrot.lane.b32.xlu0 %v5160, 68
    %v5182 = vpop.permute.xlu0 %5181
    %5183 = vrot.lane.b32.xlu0 %v5161, 68
    %v5184 = vpop.permute.xlu0 %5183
    %5185 = vrot.lane.b32.xlu0 %v5162, 68
    %v5186 = vpop.permute.xlu0 %5185
    %v5187 = vsel %vm5107, %v5172, %v5174
    %v5188 = vsel %vm5107, %v5174, %v5176
    %v5189 = vsel %vm5107, %v5176, %v5178
    %v5190 = vsel %vm5107, %v5180, %v5182
    %v5191 = vsel %vm5107, %v5182, %v5184
    %v5192 = vsel %vm5107, %v5184, %v5186
    %v5201 = vadd.f32 %v5042, %v5187
    %v5202 = vadd.f32 %v5043, %v5188
    %v5203 = vadd.f32 %v5044, %v5189
    %v5204 = vadd.f32 %v5045, %v5178
    %v5205 = vadd.f32 %v5046, %v5190
    %v5206 = vadd.f32 %v5047, %v5191
    %v5207 = vadd.f32 %v5048, %v5192
    %v5208 = vadd.f32 %v5049, %v5186
    %s5209 = scalar_lea.vmem [#allocation8], 1984
    %v5210 = vld [vmem:[%s5209] sm:$0xff]
    %v5211 = vld [vmem:[%s5209 + $0x8] sm:$0xff]
    %v5212 = vld [vmem:[%s5209 + $0x10] sm:$0xff]
    %v5213 = vld [vmem:[%s5209 + $0x18] sm:$0xff]
    %5218 = vrot.lane.b32.xlu0 %v5210, 62
    %v5219 = vpop.permute.xlu0 %5218
    %5220 = vrot.lane.b32.xlu0 %v5211, 62
    %v5221 = vpop.permute.xlu0 %5220
    %5222 = vrot.lane.b32.xlu0 %v5212, 62
    %v5223 = vpop.permute.xlu0 %5222
    %5224 = vrot.lane.b32.xlu0 %v5213, 62
    %v5225 = vpop.permute.xlu0 %5224
    %vm5226 = vcmask 506880
    %v5227 = vsel %vm5226, %v5219, %v5221
    %v5228 = vsel %vm5226, %v5221, %v5223
    %v5229 = vsel %vm5226, %v5223, %v5225
    %v5234 = vmul.f32 %v357, %v5219
    %v5235 = vmul.f32 %v361, %v5227
    %v5236 = vmul.f32 %v365, %v5228
    %v5237 = vmul.f32 %v369, %v5229
    %v5238 = vmul.f32 %v373, %v5219
    %v5239 = vmul.f32 %v377, %v5227
    %v5240 = vmul.f32 %v381, %v5228
    %v5241 = vmul.f32 %v385, %v5229
    %5250 = vrot.lane.b32.xlu0 %v5234, 66
    %v5251 = vpop.permute.xlu0 %5250
    %5252 = vrot.lane.b32.xlu0 %v5235, 66
    %v5253 = vpop.permute.xlu0 %5252
    %5254 = vrot.lane.b32.xlu0 %v5236, 66
    %v5255 = vpop.permute.xlu0 %5254
    %5256 = vrot.lane.b32.xlu0 %v5237, 66
    %v5257 = vpop.permute.xlu0 %5256
    %5258 = vrot.lane.b32.xlu0 %v5238, 66
    %v5259 = vpop.permute.xlu0 %5258
    %5260 = vrot.lane.b32.xlu0 %v5239, 66
    %v5261 = vpop.permute.xlu0 %5260
    %5262 = vrot.lane.b32.xlu0 %v5240, 66
    %v5263 = vpop.permute.xlu0 %5262
    %5264 = vrot.lane.b32.xlu0 %v5241, 66
    %v5265 = vpop.permute.xlu0 %5264
    %vm5266 = vcmask 539648
    %v5267 = vsel %vm5266, %v5251, %v5253
    %v5268 = vsel %vm5266, %v5253, %v5255
    %v5269 = vsel %vm5266, %v5255, %v5257
    %v5270 = vsel %vm5266, %v5259, %v5261
    %v5271 = vsel %vm5266, %v5261, %v5263
    %v5272 = vsel %vm5266, %v5263, %v5265
    %v5281 = vadd.f32 %v5122, %v5267
    %v5282 = vadd.f32 %v5123, %v5268
    %v5283 = vadd.f32 %v5124, %v5269
    %v5284 = vadd.f32 %v5125, %v5257
    %v5285 = vadd.f32 %v5126, %v5270
    %v5286 = vadd.f32 %v5127, %v5271
    %v5287 = vadd.f32 %v5128, %v5272
    %v5288 = vadd.f32 %v5129, %v5265
    %s5289 = scalar_lea.vmem [#allocation8], 2016
    %v5290 = vld [vmem:[%s5289] sm:$0xff]
    %v5291 = vld [vmem:[%s5289 + $0x8] sm:$0xff]
    %v5292 = vld [vmem:[%s5289 + $0x10] sm:$0xff]
    %v5293 = vld [vmem:[%s5289 + $0x18] sm:$0xff]
    %5298 = vrot.lane.b32.xlu0 %v5290, 63
    %v5299 = vpop.permute.xlu0 %5298
    %5300 = vrot.lane.b32.xlu0 %v5291, 63
    %v5301 = vpop.permute.xlu0 %5300
    %5302 = vrot.lane.b32.xlu0 %v5292, 63
    %v5303 = vpop.permute.xlu0 %5302
    %5304 = vrot.lane.b32.xlu0 %v5293, 63
    %v5305 = vpop.permute.xlu0 %5304
    %vm5306 = vcmask 515072
    %v5307 = vsel %vm5306, %v5299, %v5301
    %v5308 = vsel %vm5306, %v5301, %v5303
    %v5309 = vsel %vm5306, %v5303, %v5305
    %v5314 = vmul.f32 %v357, %v5299
    %v5315 = vmul.f32 %v361, %v5307
    %v5316 = vmul.f32 %v365, %v5308
    %v5317 = vmul.f32 %v369, %v5309
    %v5318 = vmul.f32 %v373, %v5299
    %v5319 = vmul.f32 %v377, %v5307
    %v5320 = vmul.f32 %v381, %v5308
    %v5321 = vmul.f32 %v385, %v5309
    %5330 = vrot.lane.b32.xlu0 %v5314, 66
    %v5331 = vpop.permute.xlu0 %5330
    %5332 = vrot.lane.b32.xlu0 %v5315, 66
    %v5333 = vpop.permute.xlu0 %5332
    %5334 = vrot.lane.b32.xlu0 %v5316, 66
    %v5335 = vpop.permute.xlu0 %5334
    %5336 = vrot.lane.b32.xlu0 %v5317, 66
    %v5337 = vpop.permute.xlu0 %5336
    %5338 = vrot.lane.b32.xlu0 %v5318, 66
    %v5339 = vpop.permute.xlu0 %5338
    %5340 = vrot.lane.b32.xlu0 %v5319, 66
    %v5341 = vpop.permute.xlu0 %5340
    %5342 = vrot.lane.b32.xlu0 %v5320, 66
    %v5343 = vpop.permute.xlu0 %5342
    %5344 = vrot.lane.b32.xlu0 %v5321, 66
    %v5345 = vpop.permute.xlu0 %5344
    %v5346 = vsel %vm5266, %v5331, %v5333
    %v5347 = vsel %vm5266, %v5333, %v5335
    %v5348 = vsel %vm5266, %v5335, %v5337
    %v5349 = vsel %vm5266, %v5339, %v5341
    %v5350 = vsel %vm5266, %v5341, %v5343
    %v5351 = vsel %vm5266, %v5343, %v5345
    %v5360 = vadd.f32 %v5201, %v5346
    %v5361 = vadd.f32 %v5202, %v5347
    %v5362 = vadd.f32 %v5203, %v5348
    %v5363 = vadd.f32 %v5204, %v5337
    %v5364 = vadd.f32 %v5205, %v5349
    %v5365 = vadd.f32 %v5206, %v5350
    %v5366 = vadd.f32 %v5207, %v5351
    %v5367 = vadd.f32 %v5208, %v5345
    %s5368 = scalar_lea.vmem [#allocation8], 2048
    %v5369 = vld [vmem:[%s5368] sm:$0xff]
    %v5370 = vld [vmem:[%s5368 + $0x8] sm:$0xff]
    %v5371 = vld [vmem:[%s5368 + $0x10] sm:$0xff]
    %v5372 = vld [vmem:[%s5368 + $0x18] sm:$0xff]
    %5377 = vrot.lane.b32.xlu0 %v5369, 64
    %v5378 = vpop.permute.xlu0 %5377
    %5379 = vrot.lane.b32.xlu0 %v5370, 64
    %v5380 = vpop.permute.xlu0 %5379
    %5381 = vrot.lane.b32.xlu0 %v5371, 64
    %v5382 = vpop.permute.xlu0 %5381
    %5383 = vrot.lane.b32.xlu0 %v5372, 64
    %v5384 = vpop.permute.xlu0 %5383
    %vm5385 = vcmask 523264
    %v5386 = vsel %vm5385, %v5378, %v5380
    %v5387 = vsel %vm5385, %v5380, %v5382
    %v5388 = vsel %vm5385, %v5382, %v5384
    %v5393 = vmul.f32 %v357, %v5378
    %v5394 = vmul.f32 %v361, %v5386
    %v5395 = vmul.f32 %v365, %v5387
    %v5396 = vmul.f32 %v369, %v5388
    %v5397 = vmul.f32 %v373, %v5378
    %v5398 = vmul.f32 %v377, %v5386
    %v5399 = vmul.f32 %v381, %v5387
    %v5400 = vmul.f32 %v385, %v5388
    %5409 = vrot.lane.b32.xlu0 %v5393, 64
    %v5410 = vpop.permute.xlu0 %5409
    %5411 = vrot.lane.b32.xlu0 %v5394, 64
    %v5412 = vpop.permute.xlu0 %5411
    %5413 = vrot.lane.b32.xlu0 %v5395, 64
    %v5414 = vpop.permute.xlu0 %5413
    %5415 = vrot.lane.b32.xlu0 %v5396, 64
    %v5416 = vpop.permute.xlu0 %5415
    %5417 = vrot.lane.b32.xlu0 %v5397, 64
    %v5418 = vpop.permute.xlu0 %5417
    %5419 = vrot.lane.b32.xlu0 %v5398, 64
    %v5420 = vpop.permute.xlu0 %5419
    %5421 = vrot.lane.b32.xlu0 %v5399, 64
    %v5422 = vpop.permute.xlu0 %5421
    %5423 = vrot.lane.b32.xlu0 %v5400, 64
    %v5424 = vpop.permute.xlu0 %5423
    %v5425 = vsel %vm5385, %v5410, %v5412
    %v5426 = vsel %vm5385, %v5412, %v5414
    %v5427 = vsel %vm5385, %v5414, %v5416
    %v5428 = vsel %vm5385, %v5418, %v5420
    %v5429 = vsel %vm5385, %v5420, %v5422
    %v5430 = vsel %vm5385, %v5422, %v5424
    %v5439 = vadd.f32 %v5281, %v5425
    %v5440 = vadd.f32 %v5282, %v5426
    %v5441 = vadd.f32 %v5283, %v5427
    %v5442 = vadd.f32 %v5284, %v5416
    %v5443 = vadd.f32 %v5285, %v5428
    %v5444 = vadd.f32 %v5286, %v5429
    %v5445 = vadd.f32 %v5287, %v5430
    %v5446 = vadd.f32 %v5288, %v5424
    %5455 = vrot.lane.b32.xlu0 %v5360, 127
    %v5456 = vpop.permute.xlu0 %5455
    %5457 = vrot.lane.b32.xlu0 %v5361, 127
    %v5458 = vpop.permute.xlu0 %5457
    %5459 = vrot.lane.b32.xlu0 %v5362, 127
    %v5460 = vpop.permute.xlu0 %5459
    %5461 = vrot.lane.b32.xlu0 %v5363, 127
    %v5462 = vpop.permute.xlu0 %5461
    %5463 = vrot.lane.b32.xlu0 %v5364, 127
    %v5464 = vpop.permute.xlu0 %5463
    %5465 = vrot.lane.b32.xlu0 %v5365, 127
    %v5466 = vpop.permute.xlu0 %5465
    %5467 = vrot.lane.b32.xlu0 %v5366, 127
    %v5468 = vpop.permute.xlu0 %5467
    %5469 = vrot.lane.b32.xlu0 %v5367, 127
    %v5470 = vpop.permute.xlu0 %5469
    %vm5471 = vcmask 1039360
    %v5472 = vsel %vm5471, %v5456, %v5458
    %v5473 = vsel %vm5471, %v5458, %v5460
    %v5474 = vsel %vm5471, %v5460, %v5462
    %v5475 = vsel %vm5471, %v5464, %v5466
    %v5476 = vsel %vm5471, %v5466, %v5468
    %v5477 = vsel %vm5471, %v5468, %v5470
    %v5486 = vadd.f32 %v5439, %v5472
    %v5487 = vadd.f32 %v5440, %v5473
    %v5488 = vadd.f32 %v5441, %v5474
    %v5489 = vadd.f32 %v5442, %v5462
    %v5490 = vadd.f32 %v5443, %v5475
    %v5491 = vadd.f32 %v5444, %v5476
    %v5492 = vadd.f32 %v5445, %v5477
    %v5493 = vadd.f32 %v5446, %v5470
    %v5494 = vand.u32 2147483647, %v5486
    %v5495 = vand.u32 2147483647, %v5487
    %v5496 = vand.u32 2147483647, %v5488
    %v5497 = vand.u32 2147483647, %v5489
    %v5498 = vand.u32 2147483647, %v5490
    %v5499 = vand.u32 2147483647, %v5491
    %v5500 = vand.u32 2147483647, %v5492
    %v5501 = vand.u32 2147483647, %v5493
    %v5502 = vpack.c.bf16 %v5498, %v5494
    %v5503 = vpack.c.bf16 %v5499, %v5495
    %v5504 = vpack.c.bf16 %v5500, %v5496
    %v5505 = vpack.c.bf16 %v5501, %v5497
    %v5506 = vunpack.c.l.bf16 %v5502
    %v5507 = vunpack.c.l.bf16 %v5503
    %v5508 = vunpack.c.l.bf16 %v5504
    %v5509 = vunpack.c.l.bf16 %v5505
    %v5510 = vunpack.c.h.bf16 %v5502
    %v5511 = vunpack.c.h.bf16 %v5503
    %v5512 = vunpack.c.h.bf16 %v5504
    %v5513 = vunpack.c.h.bf16 %v5505
    %v5514 = vsub.f32 %v5494, %v5506
    %v5515 = vsub.f32 %v5495, %v5507
    %v5516 = vsub.f32 %v5496, %v5508
    %v5517 = vsub.f32 %v5497, %v5509
    %v5518 = vsub.f32 %v5498, %v5510
    %v5519 = vsub.f32 %v5499, %v5511
    %v5520 = vsub.f32 %v5500, %v5512
    %v5521 = vsub.f32 %v5501, %v5513
    %v5522 = vpack.c.bf16 %v5518, %v5514
    %v5523 = vpack.c.bf16 %v5519, %v5515
    %v5524 = vpack.c.bf16 %v5520, %v5516
    %v5525 = vpack.c.bf16 %v5521, %v5517
    %v5526 = vlaneseq
    %v5527 = vshrl.u32 %v5526, 7
    %v5528 = vadd.s32 %v5527, 8
    %v5529 = vadd.s32 %v5527, 16
    %v5530 = vadd.s32 %v5527, 24
    %v5531 = vadd.s32 %v5527, 32
    %v5532 = vadd.s32 %v5527, 40
    %v5533 = vadd.s32 %v5527, 48
    %v5534 = vadd.s32 %v5527, 56
    %v5535 = vadd.s32 %v5527, 64
    %v5536 = vadd.s32 %v5527, 72
    %v5537 = vadd.s32 %v5527, 80
    %v5538 = vadd.s32 %v5527, 88
    %v5539 = vadd.s32 %v5527, 96
    %v5540 = vadd.s32 %v5527, 104
    %v5541 = vadd.s32 %v5527, 112
    %v5542 = vadd.s32 %v5527, 120
    %v5543 = vadd.s32 %v5527, 128
    %v5544 = vadd.s32 %v5527, 136
    %v5545 = vadd.s32 %v5527, 144
    %v5546 = vadd.s32 %v5527, 152
    %v5547 = vadd.s32 %v5527, 160
    %v5548 = vadd.s32 %v5527, 168
    %v5549 = vadd.s32 %v5527, 176
    %v5550 = vadd.s32 %v5527, 184
    %v5551 = vadd.s32 %v5527, 192
    %v5552 = vadd.s32 %v5527, 200
    %v5553 = vadd.s32 %v5527, 208
    %v5554 = vadd.s32 %v5527, 216
    %v5555 = vadd.s32 %v5527, 224
    %v5556 = vadd.s32 %v5527, 232
    %v5557 = vadd.s32 %v5527, 240
    %v5558 = vadd.s32 %v5527, 248
    %v5559 = vadd.s32 %v5527, 256
    %v5560 = vadd.s32 %v5527, 264
    %v5561 = vadd.s32 %v5527, 272
    %v5562 = vadd.s32 %v5527, 280
    %v5563 = vadd.s32 %v5527, 288
    %v5564 = vadd.s32 %v5527, 296
    %v5565 = vadd.s32 %v5527, 304
    %v5566 = vadd.s32 %v5527, 312
    %v5567 = vadd.s32 %v5527, 320
    %v5568 = vadd.s32 %v5527, 328
    %v5569 = vadd.s32 %v5527, 336
    %v5570 = vadd.s32 %v5527, 344
    %v5571 = vadd.s32 %v5527, 352
    %v5572 = vadd.s32 %v5527, 360
    %v5573 = vadd.s32 %v5527, 368
    %v5574 = vadd.s32 %v5527, 376
    %v5575 = vadd.s32 %v5527, 384
    %v5576 = vadd.s32 %v5527, 392
    %v5577 = vadd.s32 %v5527, 400
    %v5578 = vadd.s32 %v5527, 408
    %v5579 = vadd.s32 %v5527, 416
    %v5580 = vadd.s32 %v5527, 424
    %v5581 = vadd.s32 %v5527, 432
    %v5582 = vadd.s32 %v5527, 440
    %v5583 = vlaneseq
    %v5584 = vand.u32 %v5583, 127
    %v5585 = vmul.u32 %v5584, 4
    %v5586 = vsub.s32 %v5527, %v5585
    %v5587 = vsub.s32 %v5528, %v5585
    %v5588 = vsub.s32 %v5529, %v5585
    %v5589 = vsub.s32 %v5530, %v5585
    %v5590 = vsub.s32 %v5531, %v5585
    %v5591 = vsub.s32 %v5532, %v5585
    %v5592 = vsub.s32 %v5533, %v5585
    %v5593 = vsub.s32 %v5534, %v5585
    %v5594 = vsub.s32 %v5535, %v5585
    %v5595 = vsub.s32 %v5536, %v5585
    %v5596 = vsub.s32 %v5537, %v5585
    %v5597 = vsub.s32 %v5538, %v5585
    %v5598 = vsub.s32 %v5539, %v5585
    %v5599 = vsub.s32 %v5540, %v5585
    %v5600 = vsub.s32 %v5541, %v5585
    %v5601 = vsub.s32 %v5542, %v5585
    %v5602 = vsub.s32 %v5543, %v5585
    %v5603 = vsub.s32 %v5544, %v5585
    %v5604 = vsub.s32 %v5545, %v5585
    %v5605 = vsub.s32 %v5546, %v5585
    %v5606 = vsub.s32 %v5547, %v5585
    %v5607 = vsub.s32 %v5548, %v5585
    %v5608 = vsub.s32 %v5549, %v5585
    %v5609 = vsub.s32 %v5550, %v5585
    %v5610 = vsub.s32 %v5551, %v5585
    %v5611 = vsub.s32 %v5552, %v5585
    %v5612 = vsub.s32 %v5553, %v5585
    %v5613 = vsub.s32 %v5554, %v5585
    %v5614 = vsub.s32 %v5555, %v5585
    %v5615 = vsub.s32 %v5556, %v5585
    %v5616 = vsub.s32 %v5557, %v5585
    %v5617 = vsub.s32 %v5558, %v5585
    %v5618 = vsub.s32 %v5559, %v5585
    %v5619 = vsub.s32 %v5560, %v5585
    %v5620 = vsub.s32 %v5561, %v5585
    %v5621 = vsub.s32 %v5562, %v5585
    %v5622 = vsub.s32 %v5563, %v5585
    %v5623 = vsub.s32 %v5564, %v5585
    %v5624 = vsub.s32 %v5565, %v5585
    %v5625 = vsub.s32 %v5566, %v5585
    %v5626 = vsub.s32 %v5567, %v5585
    %v5627 = vsub.s32 %v5568, %v5585
    %v5628 = vsub.s32 %v5569, %v5585
    %v5629 = vsub.s32 %v5570, %v5585
    %v5630 = vsub.s32 %v5571, %v5585
    %v5631 = vsub.s32 %v5572, %v5585
    %v5632 = vsub.s32 %v5573, %v5585
    %v5633 = vsub.s32 %v5574, %v5585
    %v5634 = vsub.s32 %v5575, %v5585
    %v5635 = vsub.s32 %v5576, %v5585
    %v5636 = vsub.s32 %v5577, %v5585
    %v5637 = vsub.s32 %v5578, %v5585
    %v5638 = vsub.s32 %v5579, %v5585
    %v5639 = vsub.s32 %v5580, %v5585
    %v5640 = vsub.s32 %v5581, %v5585
    %v5641 = vsub.s32 %v5582, %v5585
    %vm5642 = vcmp.eq.s32.totalorder %v5586, 0
    %vm5643 = vcmp.eq.s32.totalorder %v5587, 0
    %vm5644 = vcmp.eq.s32.totalorder %v5588, 0
    %vm5645 = vcmp.eq.s32.totalorder %v5589, 0
    %vm5646 = vcmp.eq.s32.totalorder %v5590, 0
    %vm5647 = vcmp.eq.s32.totalorder %v5591, 0
    %vm5648 = vcmp.eq.s32.totalorder %v5592, 0
    %vm5649 = vcmp.eq.s32.totalorder %v5593, 0
    %vm5650 = vcmp.eq.s32.totalorder %v5594, 0
    %vm5651 = vcmp.eq.s32.totalorder %v5595, 0
    %vm5652 = vcmp.eq.s32.totalorder %v5596, 0
    %vm5653 = vcmp.eq.s32.totalorder %v5597, 0
    %vm5654 = vcmp.eq.s32.totalorder %v5598, 0
    %vm5655 = vcmp.eq.s32.totalorder %v5599, 0
    %vm5656 = vcmp.eq.s32.totalorder %v5600, 0
    %vm5657 = vcmp.eq.s32.totalorder %v5601, 0
    %vm5658 = vcmp.eq.s32.totalorder %v5602, 0
    %vm5659 = vcmp.eq.s32.totalorder %v5603, 0
    %vm5660 = vcmp.eq.s32.totalorder %v5604, 0
    %vm5661 = vcmp.eq.s32.totalorder %v5605, 0
    %vm5662 = vcmp.eq.s32.totalorder %v5606, 0
    %vm5663 = vcmp.eq.s32.totalorder %v5607, 0
    %vm5664 = vcmp.eq.s32.totalorder %v5608, 0
    %vm5665 = vcmp.eq.s32.totalorder %v5609, 0
    %vm5666 = vcmp.eq.s32.totalorder %v5610, 0
    %vm5667 = vcmp.eq.s32.totalorder %v5611, 0
    %vm5668 = vcmp.eq.s32.totalorder %v5612, 0
    %vm5669 = vcmp.eq.s32.totalorder %v5613, 0
    %vm5670 = vcmp.eq.s32.totalorder %v5614, 0
    %vm5671 = vcmp.eq.s32.totalorder %v5615, 0
    %vm5672 = vcmp.eq.s32.totalorder %v5616, 0
    %vm5673 = vcmp.eq.s32.totalorder %v5617, 0
    %vm5674 = vcmp.eq.s32.totalorder %v5618, 0
    %vm5675 = vcmp.eq.s32.totalorder %v5619, 0
    %vm5676 = vcmp.eq.s32.totalorder %v5620, 0
    %vm5677 = vcmp.eq.s32.totalorder %v5621, 0
    %vm5678 = vcmp.eq.s32.totalorder %v5622, 0
    %vm5679 = vcmp.eq.s32.totalorder %v5623, 0
    %vm5680 = vcmp.eq.s32.totalorder %v5624, 0
    %vm5681 = vcmp.eq.s32.totalorder %v5625, 0
    %vm5682 = vcmp.eq.s32.totalorder %v5626, 0
    %vm5683 = vcmp.eq.s32.totalorder %v5627, 0
    %vm5684 = vcmp.eq.s32.totalorder %v5628, 0
    %vm5685 = vcmp.eq.s32.totalorder %v5629, 0
    %vm5686 = vcmp.eq.s32.totalorder %v5630, 0
    %vm5687 = vcmp.eq.s32.totalorder %v5631, 0
    %vm5688 = vcmp.eq.s32.totalorder %v5632, 0
    %vm5689 = vcmp.eq.s32.totalorder %v5633, 0
    %vm5690 = vcmp.eq.s32.totalorder %v5634, 0
    %vm5691 = vcmp.eq.s32.totalorder %v5635, 0
    %vm5692 = vcmp.eq.s32.totalorder %v5636, 0
    %vm5693 = vcmp.eq.s32.totalorder %v5637, 0
    %vm5694 = vcmp.eq.s32.totalorder %v5638, 0
    %vm5695 = vcmp.eq.s32.totalorder %v5639, 0
    %vm5696 = vcmp.eq.s32.totalorder %v5640, 0
    %vm5697 = vcmp.eq.s32.totalorder %v5641, 0
    %v5698 = vsel %vm5642, 1.0, 0.0
    %v5699 = vsel %vm5643, 1.0, 0.0
    %v5700 = vsel %vm5644, 1.0, 0.0
    %v5701 = vsel %vm5645, 1.0, 0.0
    %v5702 = vsel %vm5646, 1.0, 0.0
    %v5703 = vsel %vm5647, 1.0, 0.0
    %v5704 = vsel %vm5648, 1.0, 0.0
    %v5705 = vsel %vm5649, 1.0, 0.0
    %v5706 = vsel %vm5650, 1.0, 0.0
    %v5707 = vsel %vm5651, 1.0, 0.0
    %v5708 = vsel %vm5652, 1.0, 0.0
    %v5709 = vsel %vm5653, 1.0, 0.0
    %v5710 = vsel %vm5654, 1.0, 0.0
    %v5711 = vsel %vm5655, 1.0, 0.0
    %v5712 = vsel %vm5656, 1.0, 0.0
    %v5713 = vsel %vm5657, 1.0, 0.0
    %v5714 = vsel %vm5658, 1.0, 0.0
    %v5715 = vsel %vm5659, 1.0, 0.0
    %v5716 = vsel %vm5660, 1.0, 0.0
    %v5717 = vsel %vm5661, 1.0, 0.0
    %v5718 = vsel %vm5662, 1.0, 0.0
    %v5719 = vsel %vm5663, 1.0, 0.0
    %v5720 = vsel %vm5664, 1.0, 0.0
    %v5721 = vsel %vm5665, 1.0, 0.0
    %v5722 = vsel %vm5666, 1.0, 0.0
    %v5723 = vsel %vm5667, 1.0, 0.0
    %v5724 = vsel %vm5668, 1.0, 0.0
    %v5725 = vsel %vm5669, 1.0, 0.0
    %v5726 = vsel %vm5670, 1.0, 0.0
    %v5727 = vsel %vm5671, 1.0, 0.0
    %v5728 = vsel %vm5672, 1.0, 0.0
    %v5729 = vsel %vm5673, 1.0, 0.0
    %v5730 = vsel %vm5674, 1.0, 0.0
    %v5731 = vsel %vm5675, 1.0, 0.0
    %v5732 = vsel %vm5676, 1.0, 0.0
    %v5733 = vsel %vm5677, 1.0, 0.0
    %v5734 = vsel %vm5678, 1.0, 0.0
    %v5735 = vsel %vm5679, 1.0, 0.0
    %v5736 = vsel %vm5680, 1.0, 0.0
    %v5737 = vsel %vm5681, 1.0, 0.0
    %v5738 = vsel %vm5682, 1.0, 0.0
    %v5739 = vsel %vm5683, 1.0, 0.0
    %v5740 = vsel %vm5684, 1.0, 0.0
    %v5741 = vsel %vm5685, 1.0, 0.0
    %v5742 = vsel %vm5686, 1.0, 0.0
    %v5743 = vsel %vm5687, 1.0, 0.0
    %v5744 = vsel %vm5688, 1.0, 0.0
    %v5745 = vsel %vm5689, 1.0, 0.0
    %v5746 = vsel %vm5690, 1.0, 0.0
    %v5747 = vsel %vm5691, 1.0, 0.0
    %v5748 = vsel %vm5692, 1.0, 0.0
    %v5749 = vsel %vm5693, 1.0, 0.0
    %v5750 = vsel %vm5694, 1.0, 0.0
    %v5751 = vsel %vm5695, 1.0, 0.0
    %v5752 = vsel %vm5696, 1.0, 0.0
    %v5753 = vsel %vm5697, 1.0, 0.0
    %v5754 = vpack.c.bf16 %v5699, %v5698
    %v5755 = vpack.c.bf16 %v5701, %v5700
    %v5756 = vpack.c.bf16 %v5703, %v5702
    %v5757 = vpack.c.bf16 %v5705, %v5704
    %v5758 = vpack.c.bf16 %v5707, %v5706
    %v5759 = vpack.c.bf16 %v5709, %v5708
    %v5760 = vpack.c.bf16 %v5711, %v5710
    %v5761 = vpack.c.bf16 %v5713, %v5712
    %v5762 = vpack.c.bf16 %v5715, %v5714
    %v5763 = vpack.c.bf16 %v5717, %v5716
    %v5764 = vpack.c.bf16 %v5719, %v5718
    %v5765 = vpack.c.bf16 %v5721, %v5720
    %v5766 = vpack.c.bf16 %v5723, %v5722
    %v5767 = vpack.c.bf16 %v5725, %v5724
    %v5768 = vpack.c.bf16 %v5727, %v5726
    %v5769 = vpack.c.bf16 %v5729, %v5728
    %v5770 = vpack.c.bf16 %v5731, %v5730
    %v5771 = vpack.c.bf16 %v5733, %v5732
    %v5772 = vpack.c.bf16 %v5735, %v5734
    %v5773 = vpack.c.bf16 %v5737, %v5736
    %v5774 = vpack.c.bf16 %v5739, %v5738
    %v5775 = vpack.c.bf16 %v5741, %v5740
    %v5776 = vpack.c.bf16 %v5743, %v5742
    %v5777 = vpack.c.bf16 %v5745, %v5744
    %v5778 = vpack.c.bf16 %v5747, %v5746
    %v5779 = vpack.c.bf16 %v5749, %v5748
    %v5780 = vpack.c.bf16 %v5751, %v5750
    %v5781 = vpack.c.bf16 %v5753, %v5752
    %v5783 = vsel %vm5385, %v5525, 0
    %5785 = vmatprep.subr.bf16.mxu0 0
    %5786 = vmatpush1.bf16.msra.mxu0 %v5761
    %5787 = vmatprep.subr.bf16.mxu0 0
    %5788 = vmatpush1.bf16.msra.mxu0 %v5760
    %5789 = vmatprep.subr.bf16.mxu0 0
    %5790 = vmatpush1.bf16.msra.mxu0 %v5759
    %5791 = vmatprep.subr.bf16.mxu0 0
    %5792 = vmatpush1.bf16.msra.mxu0 %v5758
    %5793 = vmatprep.subr.bf16.mxu0 0
    %5794 = vmatpush1.bf16.msra.mxu0 %v5757
    %5795 = vmatprep.subr.bf16.mxu0 0
    %5796 = vmatpush1.bf16.msra.mxu0 %v5756
    %5797 = vmatprep.subr.bf16.mxu0 0
    %5798 = vmatpush1.bf16.msra.mxu0 %v5755
    %5799 = vmatprep.subr.bf16.mxu0 0
    %5800 = vmatpush1.bf16.msra.mxu0 %v5754
    %5801 = vmatprep.subr.bf16.mxu0 0
    %5802 = vmatpush2.bf16.msra.mxu0 %v5769
    %5803 = vmatprep.subr.bf16.mxu0 0
    %5804 = vmatpush2.bf16.msra.mxu0 %v5768
    %5805 = vmatprep.subr.bf16.mxu0 0
    %5806 = vmatpush2.bf16.msra.mxu0 %v5767
    %5807 = vmatprep.subr.bf16.mxu0 0
    %5808 = vmatpush2.bf16.msra.mxu0 %v5766
    %5809 = vmatprep.subr.bf16.mxu0 0
    %5810 = vmatpush2.bf16.msra.mxu0 %v5765
    %5811 = vmatprep.subr.bf16.mxu0 0
    %5812 = vmatpush2.bf16.msra.mxu0 %v5764
    %5813 = vmatprep.subr.bf16.mxu0 0
    %5814 = vmatpush2.bf16.msra.mxu0 %v5763
    %5815 = vmatprep.subr.bf16.mxu0 0
    %5816 = vmatpush2.bf16.msra.mxu0 %v5762
    %5817 = vmatprep.mubr.bf16.mxu0 %v5523
    %5818 = vmatmul.mubr.bf16.gmra.mxu0 %v5522
    %v5819 = vpop.f32.mrf.mxu0
    %v5820 = vadd.f32 0.0, %v5819
    %v5821 = vpop.f32.mrf.mxu0
    %v5822 = vpop.f32.mrf.mxu0
    %v5823 = vadd.f32 0.0, %v5822
    %v5824 = vpop.f32.mrf.mxu0
    %5825 = vdwg.mxu0
    %5826 = vmatprep.subr.bf16.mxu0 0
    %5827 = vmatpush1.bf16.msra.mxu0 %v5777
    %5828 = vmatprep.subr.bf16.mxu0 0
    %5829 = vmatpush1.bf16.msra.mxu0 %v5776
    %5830 = vmatprep.subr.bf16.mxu0 0
    %5831 = vmatpush1.bf16.msra.mxu0 %v5775
    %5832 = vmatprep.subr.bf16.mxu0 0
    %5833 = vmatpush1.bf16.msra.mxu0 %v5774
    %5834 = vmatprep.subr.bf16.mxu0 0
    %5835 = vmatpush1.bf16.msra.mxu0 %v5773
    %5836 = vmatprep.subr.bf16.mxu0 0
    %5837 = vmatpush1.bf16.msra.mxu0 %v5772
    %5838 = vmatprep.subr.bf16.mxu0 0
    %5839 = vmatpush1.bf16.msra.mxu0 %v5771
    %5840 = vmatprep.subr.bf16.mxu0 0
    %5841 = vmatpush1.bf16.msra.mxu0 %v5770
    %5842 = vmatprep.subr.bf16.mxu0 0
    %5843 = vmatpush2.bf16.msra.mxu0 0
    %5844 = vmatprep.subr.bf16.mxu0 0
    %5845 = vmatpush2.bf16.msra.mxu0 0
    %5846 = vmatprep.subr.bf16.mxu0 0
    %5847 = vmatpush2.bf16.msra.mxu0 0
    %5848 = vmatprep.subr.bf16.mxu0 0
    %5849 = vmatpush2.bf16.msra.mxu0 0
    %5850 = vmatprep.subr.bf16.mxu0 0
    %5851 = vmatpush2.bf16.msra.mxu0 %v5781
    %5852 = vmatprep.subr.bf16.mxu0 0
    %5853 = vmatpush2.bf16.msra.mxu0 %v5780
    %5854 = vmatprep.subr.bf16.mxu0 0
    %5855 = vmatpush2.bf16.msra.mxu0 %v5779
    %5856 = vmatprep.subr.bf16.mxu0 0
    %5857 = vmatpush2.bf16.msra.mxu0 %v5778
    %5858 = vmatprep.mubr.bf16.mxu0 %v5783
    %5859 = vmatmul.mubr.bf16.gmra.mxu0 %v5524
    %v5860 = vpop.f32.mrf.mxu0
    %v5861 = vadd.f32 %v5820, %v5860
    %v5862 = vpop.f32.mrf.mxu0
    %v5863 = vpop.f32.mrf.mxu0
    %v5864 = vadd.f32 %v5823, %v5863
    %v5865 = vpop.f32.mrf.mxu0
    %5866 = vdwg.mxu0
    %v5868 = vsel %vm5385, %v5505, 0
    %5870 = vmatprep.subr.bf16.mxu0 0
    %5871 = vmatpush1.bf16.msra.mxu0 %v5761
    %5872 = vmatprep.subr.bf16.mxu0 0
    %5873 = vmatpush1.bf16.msra.mxu0 %v5760
    %5874 = vmatprep.subr.bf16.mxu0 0
    %5875 = vmatpush1.bf16.msra.mxu0 %v5759
    %5876 = vmatprep.subr.bf16.mxu0 0
    %5877 = vmatpush1.bf16.msra.mxu0 %v5758
    %5878 = vmatprep.subr.bf16.mxu0 0
    %5879 = vmatpush1.bf16.msra.mxu0 %v5757
    %5880 = vmatprep.subr.bf16.mxu0 0
    %5881 = vmatpush1.bf16.msra.mxu0 %v5756
    %5882 = vmatprep.subr.bf16.mxu0 0
    %5883 = vmatpush1.bf16.msra.mxu0 %v5755
    %5884 = vmatprep.subr.bf16.mxu0 0
    %5885 = vmatpush1.bf16.msra.mxu0 %v5754
    %5886 = vmatprep.subr.bf16.mxu0 0
    %5887 = vmatpush2.bf16.msra.mxu0 %v5769
    %5888 = vmatprep.subr.bf16.mxu0 0
    %5889 = vmatpush2.bf16.msra.mxu0 %v5768
    %5890 = vmatprep.subr.bf16.mxu0 0
    %5891 = vmatpush2.bf16.msra.mxu0 %v5767
    %5892 = vmatprep.subr.bf16.mxu0 0
    %5893 = vmatpush2.bf16.msra.mxu0 %v5766
    %5894 = vmatprep.subr.bf16.mxu0 0
    %5895 = vmatpush2.bf16.msra.mxu0 %v5765
    %5896 = vmatprep.subr.bf16.mxu0 0
    %5897 = vmatpush2.bf16.msra.mxu0 %v5764
    %5898 = vmatprep.subr.bf16.mxu0 0
    %5899 = vmatpush2.bf16.msra.mxu0 %v5763
    %5900 = vmatprep.subr.bf16.mxu0 0
    %5901 = vmatpush2.bf16.msra.mxu0 %v5762
    %5902 = vmatprep.mubr.bf16.mxu0 %v5503
    %5903 = vmatmul.mubr.bf16.gmra.mxu0 %v5502
    %v5904 = vpop.f32.mrf.mxu0
    %v5905 = vadd.f32 %v5861, %v5904
    %v5906 = vpop.f32.mrf.mxu0
    %v5907 = vpop.f32.mrf.mxu0
    %v5908 = vadd.f32 %v5864, %v5907
    %v5909 = vpop.f32.mrf.mxu0
    %5910 = vdwg.mxu0
    %5911 = vmatprep.subr.bf16.mxu0 0
    %5912 = vmatpush1.bf16.msra.mxu0 %v5777
    %5913 = vmatprep.subr.bf16.mxu0 0
    %5914 = vmatpush1.bf16.msra.mxu0 %v5776
    %5915 = vmatprep.subr.bf16.mxu0 0
    %5916 = vmatpush1.bf16.msra.mxu0 %v5775
    %5917 = vmatprep.subr.bf16.mxu0 0
    %5918 = vmatpush1.bf16.msra.mxu0 %v5774
    %5919 = vmatprep.subr.bf16.mxu0 0
    %5920 = vmatpush1.bf16.msra.mxu0 %v5773
    %5921 = vmatprep.subr.bf16.mxu0 0
    %5922 = vmatpush1.bf16.msra.mxu0 %v5772
    %5923 = vmatprep.subr.bf16.mxu0 0
    %5924 = vmatpush1.bf16.msra.mxu0 %v5771
    %5925 = vmatprep.subr.bf16.mxu0 0
    %5926 = vmatpush1.bf16.msra.mxu0 %v5770
    %5927 = vmatprep.subr.bf16.mxu0 0
    %5928 = vmatpush2.bf16.msra.mxu0 0
    %5929 = vmatprep.subr.bf16.mxu0 0
    %5930 = vmatpush2.bf16.msra.mxu0 0
    %5931 = vmatprep.subr.bf16.mxu0 0
    %5932 = vmatpush2.bf16.msra.mxu0 0
    %5933 = vmatprep.subr.bf16.mxu0 0
    %5934 = vmatpush2.bf16.msra.mxu0 0
    %5935 = vmatprep.subr.bf16.mxu0 0
    %5936 = vmatpush2.bf16.msra.mxu0 %v5781
    %5937 = vmatprep.subr.bf16.mxu0 0
    %5938 = vmatpush2.bf16.msra.mxu0 %v5780
    %5939 = vmatprep.subr.bf16.mxu0 0
    %5940 = vmatpush2.bf16.msra.mxu0 %v5779
    %5941 = vmatprep.subr.bf16.mxu0 0
    %5942 = vmatpush2.bf16.msra.mxu0 %v5778
    %5943 = vmatprep.mubr.bf16.mxu0 %v5868
    %5944 = vmatmul.mubr.bf16.gmra.mxu0 %v5504
    %v5945 = vpop.f32.mrf.mxu0
    %v5946 = vadd.f32 %v5905, %v5945
    %v5947 = vpop.f32.mrf.mxu0
    %v5948 = vpop.f32.mrf.mxu0
    %v5949 = vadd.f32 %v5908, %v5948
    %v5950 = vpop.f32.mrf.mxu0
    %5951 = vdwg.mxu0
    %vm5952 = vcmp.eq.s32.totalorder %v5586, 1
    %vm5953 = vcmp.eq.s32.totalorder %v5587, 1
    %vm5954 = vcmp.eq.s32.totalorder %v5588, 1
    %vm5955 = vcmp.eq.s32.totalorder %v5589, 1
    %vm5956 = vcmp.eq.s32.totalorder %v5590, 1
    %vm5957 = vcmp.eq.s32.totalorder %v5591, 1
    %vm5958 = vcmp.eq.s32.totalorder %v5592, 1
    %vm5959 = vcmp.eq.s32.totalorder %v5593, 1
    %vm5960 = vcmp.eq.s32.totalorder %v5594, 1
    %vm5961 = vcmp.eq.s32.totalorder %v5595, 1
    %vm5962 = vcmp.eq.s32.totalorder %v5596, 1
    %vm5963 = vcmp.eq.s32.totalorder %v5597, 1
    %vm5964 = vcmp.eq.s32.totalorder %v5598, 1
    %vm5965 = vcmp.eq.s32.totalorder %v5599, 1
    %vm5966 = vcmp.eq.s32.totalorder %v5600, 1
    %vm5967 = vcmp.eq.s32.totalorder %v5601, 1
    %vm5968 = vcmp.eq.s32.totalorder %v5602, 1
    %vm5969 = vcmp.eq.s32.totalorder %v5603, 1
    %vm5970 = vcmp.eq.s32.totalorder %v5604, 1
    %vm5971 = vcmp.eq.s32.totalorder %v5605, 1
    %vm5972 = vcmp.eq.s32.totalorder %v5606, 1
    %vm5973 = vcmp.eq.s32.totalorder %v5607, 1
    %vm5974 = vcmp.eq.s32.totalorder %v5608, 1
    %vm5975 = vcmp.eq.s32.totalorder %v5609, 1
    %vm5976 = vcmp.eq.s32.totalorder %v5610, 1
    %vm5977 = vcmp.eq.s32.totalorder %v5611, 1
    %vm5978 = vcmp.eq.s32.totalorder %v5612, 1
    %vm5979 = vcmp.eq.s32.totalorder %v5613, 1
    %vm5980 = vcmp.eq.s32.totalorder %v5614, 1
    %vm5981 = vcmp.eq.s32.totalorder %v5615, 1
    %vm5982 = vcmp.eq.s32.totalorder %v5616, 1
    %vm5983 = vcmp.eq.s32.totalorder %v5617, 1
    %vm5984 = vcmp.eq.s32.totalorder %v5618, 1
    %vm5985 = vcmp.eq.s32.totalorder %v5619, 1
    %vm5986 = vcmp.eq.s32.totalorder %v5620, 1
    %vm5987 = vcmp.eq.s32.totalorder %v5621, 1
    %vm5988 = vcmp.eq.s32.totalorder %v5622, 1
    %vm5989 = vcmp.eq.s32.totalorder %v5623, 1
    %vm5990 = vcmp.eq.s32.totalorder %v5624, 1
    %vm5991 = vcmp.eq.s32.totalorder %v5625, 1
    %vm5992 = vcmp.eq.s32.totalorder %v5626, 1
    %vm5993 = vcmp.eq.s32.totalorder %v5627, 1
    %vm5994 = vcmp.eq.s32.totalorder %v5628, 1
    %vm5995 = vcmp.eq.s32.totalorder %v5629, 1
    %vm5996 = vcmp.eq.s32.totalorder %v5630, 1
    %vm5997 = vcmp.eq.s32.totalorder %v5631, 1
    %vm5998 = vcmp.eq.s32.totalorder %v5632, 1
    %vm5999 = vcmp.eq.s32.totalorder %v5633, 1
    %vm6000 = vcmp.eq.s32.totalorder %v5634, 1
    %vm6001 = vcmp.eq.s32.totalorder %v5635, 1
    %vm6002 = vcmp.eq.s32.totalorder %v5636, 1
    %vm6003 = vcmp.eq.s32.totalorder %v5637, 1
    %vm6004 = vcmp.eq.s32.totalorder %v5638, 1
    %vm6005 = vcmp.eq.s32.totalorder %v5639, 1
    %vm6006 = vcmp.eq.s32.totalorder %v5640, 1
    %vm6007 = vcmp.eq.s32.totalorder %v5641, 1
    %v6008 = vsel %vm5952, 1.0, 0.0
    %v6009 = vsel %vm5953, 1.0, 0.0
    %v6010 = vsel %vm5954, 1.0, 0.0
    %v6011 = vsel %vm5955, 1.0, 0.0
    %v6012 = vsel %vm5956, 1.0, 0.0
    %v6013 = vsel %vm5957, 1.0, 0.0
    %v6014 = vsel %vm5958, 1.0, 0.0
    %v6015 = vsel %vm5959, 1.0, 0.0
    %v6016 = vsel %vm5960, 1.0, 0.0
    %v6017 = vsel %vm5961, 1.0, 0.0
    %v6018 = vsel %vm5962, 1.0, 0.0
    %v6019 = vsel %vm5963, 1.0, 0.0
    %v6020 = vsel %vm5964, 1.0, 0.0
    %v6021 = vsel %vm5965, 1.0, 0.0
    %v6022 = vsel %vm5966, 1.0, 0.0
    %v6023 = vsel %vm5967, 1.0, 0.0
    %v6024 = vsel %vm5968, 1.0, 0.0
    %v6025 = vsel %vm5969, 1.0, 0.0
    %v6026 = vsel %vm5970, 1.0, 0.0
    %v6027 = vsel %vm5971, 1.0, 0.0
    %v6028 = vsel %vm5972, 1.0, 0.0
    %v6029 = vsel %vm5973, 1.0, 0.0
    %v6030 = vsel %vm5974, 1.0, 0.0
    %v6031 = vsel %vm5975, 1.0, 0.0
    %v6032 = vsel %vm5976, 1.0, 0.0
    %v6033 = vsel %vm5977, 1.0, 0.0
    %v6034 = vsel %vm5978, 1.0, 0.0
    %v6035 = vsel %vm5979, 1.0, 0.0
    %v6036 = vsel %vm5980, 1.0, 0.0
    %v6037 = vsel %vm5981, 1.0, 0.0
    %v6038 = vsel %vm5982, 1.0, 0.0
    %v6039 = vsel %vm5983, 1.0, 0.0
    %v6040 = vsel %vm5984, 1.0, 0.0
    %v6041 = vsel %vm5985, 1.0, 0.0
    %v6042 = vsel %vm5986, 1.0, 0.0
    %v6043 = vsel %vm5987, 1.0, 0.0
    %v6044 = vsel %vm5988, 1.0, 0.0
    %v6045 = vsel %vm5989, 1.0, 0.0
    %v6046 = vsel %vm5990, 1.0, 0.0
    %v6047 = vsel %vm5991, 1.0, 0.0
    %v6048 = vsel %vm5992, 1.0, 0.0
    %v6049 = vsel %vm5993, 1.0, 0.0
    %v6050 = vsel %vm5994, 1.0, 0.0
    %v6051 = vsel %vm5995, 1.0, 0.0
    %v6052 = vsel %vm5996, 1.0, 0.0
    %v6053 = vsel %vm5997, 1.0, 0.0
    %v6054 = vsel %vm5998, 1.0, 0.0
    %v6055 = vsel %vm5999, 1.0, 0.0
    %v6056 = vsel %vm6000, 1.0, 0.0
    %v6057 = vsel %vm6001, 1.0, 0.0
    %v6058 = vsel %vm6002, 1.0, 0.0
    %v6059 = vsel %vm6003, 1.0, 0.0
    %v6060 = vsel %vm6004, 1.0, 0.0
    %v6061 = vsel %vm6005, 1.0, 0.0
    %v6062 = vsel %vm6006, 1.0, 0.0
    %v6063 = vsel %vm6007, 1.0, 0.0
    %v6064 = vpack.c.bf16 %v6009, %v6008
    %v6065 = vpack.c.bf16 %v6011, %v6010
    %v6066 = vpack.c.bf16 %v6013, %v6012
    %v6067 = vpack.c.bf16 %v6015, %v6014
    %v6068 = vpack.c.bf16 %v6017, %v6016
    %v6069 = vpack.c.bf16 %v6019, %v6018
    %v6070 = vpack.c.bf16 %v6021, %v6020
    %v6071 = vpack.c.bf16 %v6023, %v6022
    %v6072 = vpack.c.bf16 %v6025, %v6024
    %v6073 = vpack.c.bf16 %v6027, %v6026
    %v6074 = vpack.c.bf16 %v6029, %v6028
    %v6075 = vpack.c.bf16 %v6031, %v6030
    %v6076 = vpack.c.bf16 %v6033, %v6032
    %v6077 = vpack.c.bf16 %v6035, %v6034
    %v6078 = vpack.c.bf16 %v6037, %v6036
    %v6079 = vpack.c.bf16 %v6039, %v6038
    %v6080 = vpack.c.bf16 %v6041, %v6040
    %v6081 = vpack.c.bf16 %v6043, %v6042
    %v6082 = vpack.c.bf16 %v6045, %v6044
    %v6083 = vpack.c.bf16 %v6047, %v6046
    %v6084 = vpack.c.bf16 %v6049, %v6048
    %v6085 = vpack.c.bf16 %v6051, %v6050
    %v6086 = vpack.c.bf16 %v6053, %v6052
    %v6087 = vpack.c.bf16 %v6055, %v6054
    %v6088 = vpack.c.bf16 %v6057, %v6056
    %v6089 = vpack.c.bf16 %v6059, %v6058
    %v6090 = vpack.c.bf16 %v6061, %v6060
    %v6091 = vpack.c.bf16 %v6063, %v6062
    %6092 = vmatprep.subr.bf16.mxu0 0
    %6093 = vmatpush1.bf16.msra.mxu0 %v6071
    %6094 = vmatprep.subr.bf16.mxu0 0
    %6095 = vmatpush1.bf16.msra.mxu0 %v6070
    %6096 = vmatprep.subr.bf16.mxu0 0
    %6097 = vmatpush1.bf16.msra.mxu0 %v6069
    %6098 = vmatprep.subr.bf16.mxu0 0
    %6099 = vmatpush1.bf16.msra.mxu0 %v6068
    %6100 = vmatprep.subr.bf16.mxu0 0
    %6101 = vmatpush1.bf16.msra.mxu0 %v6067
    %6102 = vmatprep.subr.bf16.mxu0 0
    %6103 = vmatpush1.bf16.msra.mxu0 %v6066
    %6104 = vmatprep.subr.bf16.mxu0 0
    %6105 = vmatpush1.bf16.msra.mxu0 %v6065
    %6106 = vmatprep.subr.bf16.mxu0 0
    %6107 = vmatpush1.bf16.msra.mxu0 %v6064
    %6108 = vmatprep.subr.bf16.mxu0 0
    %6109 = vmatpush2.bf16.msra.mxu0 %v6079
    %6110 = vmatprep.subr.bf16.mxu0 0
    %6111 = vmatpush2.bf16.msra.mxu0 %v6078
    %6112 = vmatprep.subr.bf16.mxu0 0
    %6113 = vmatpush2.bf16.msra.mxu0 %v6077
    %6114 = vmatprep.subr.bf16.mxu0 0
    %6115 = vmatpush2.bf16.msra.mxu0 %v6076
    %6116 = vmatprep.subr.bf16.mxu0 0
    %6117 = vmatpush2.bf16.msra.mxu0 %v6075
    %6118 = vmatprep.subr.bf16.mxu0 0
    %6119 = vmatpush2.bf16.msra.mxu0 %v6074
    %6120 = vmatprep.subr.bf16.mxu0 0
    %6121 = vmatpush2.bf16.msra.mxu0 %v6073
    %6122 = vmatprep.subr.bf16.mxu0 0
    %6123 = vmatpush2.bf16.msra.mxu0 %v6072
    %6124 = vmatprep.mubr.bf16.mxu0 %v5523
    %6125 = vmatmul.mubr.bf16.gmra.mxu0 %v5522
    %v6126 = vpop.f32.mrf.mxu0
    %v6127 = vadd.f32 0.0, %v6126
    %v6128 = vpop.f32.mrf.mxu0
    %v6129 = vpop.f32.mrf.mxu0
    %v6130 = vadd.f32 0.0, %v6129
    %v6131 = vpop.f32.mrf.mxu0
    %6132 = vdwg.mxu0
    %6133 = vmatprep.subr.bf16.mxu0 0
    %6134 = vmatpush1.bf16.msra.mxu0 %v6087
    %6135 = vmatprep.subr.bf16.mxu0 0
    %6136 = vmatpush1.bf16.msra.mxu0 %v6086
    %6137 = vmatprep.subr.bf16.mxu0 0
    %6138 = vmatpush1.bf16.msra.mxu0 %v6085
    %6139 = vmatprep.subr.bf16.mxu0 0
    %6140 = vmatpush1.bf16.msra.mxu0 %v6084
    %6141 = vmatprep.subr.bf16.mxu0 0
    %6142 = vmatpush1.bf16.msra.mxu0 %v6083
    %6143 = vmatprep.subr.bf16.mxu0 0
    %6144 = vmatpush1.bf16.msra.mxu0 %v6082
    %6145 = vmatprep.subr.bf16.mxu0 0
    %6146 = vmatpush1.bf16.msra.mxu0 %v6081
    %6147 = vmatprep.subr.bf16.mxu0 0
    %6148 = vmatpush1.bf16.msra.mxu0 %v6080
    %6149 = vmatprep.subr.bf16.mxu0 0
    %6150 = vmatpush2.bf16.msra.mxu0 0
    %6151 = vmatprep.subr.bf16.mxu0 0
    %6152 = vmatpush2.bf16.msra.mxu0 0
    %6153 = vmatprep.subr.bf16.mxu0 0
    %6154 = vmatpush2.bf16.msra.mxu0 0
    %6155 = vmatprep.subr.bf16.mxu0 0
    %6156 = vmatpush2.bf16.msra.mxu0 0
    %6157 = vmatprep.subr.bf16.mxu0 0
    %6158 = vmatpush2.bf16.msra.mxu0 %v6091
    %6159 = vmatprep.subr.bf16.mxu0 0
    %6160 = vmatpush2.bf16.msra.mxu0 %v6090
    %6161 = vmatprep.subr.bf16.mxu0 0
    %6162 = vmatpush2.bf16.msra.mxu0 %v6089
    %6163 = vmatprep.subr.bf16.mxu0 0
    %6164 = vmatpush2.bf16.msra.mxu0 %v6088
    %6165 = vmatprep.mubr.bf16.mxu0 %v5783
    %6166 = vmatmul.mubr.bf16.gmra.mxu0 %v5524
    %v6167 = vpop.f32.mrf.mxu0
    %v6168 = vadd.f32 %v6127, %v6167
    %v6169 = vpop.f32.mrf.mxu0
    %v6170 = vpop.f32.mrf.mxu0
    %v6171 = vadd.f32 %v6130, %v6170
    %v6172 = vpop.f32.mrf.mxu0
    %6173 = vdwg.mxu0
    %6174 = vmatprep.subr.bf16.mxu0 0
    %6175 = vmatpush1.bf16.msra.mxu0 %v6071
    %6176 = vmatprep.subr.bf16.mxu0 0
    %6177 = vmatpush1.bf16.msra.mxu0 %v6070
    %6178 = vmatprep.subr.bf16.mxu0 0
    %6179 = vmatpush1.bf16.msra.mxu0 %v6069
    %6180 = vmatprep.subr.bf16.mxu0 0
    %6181 = vmatpush1.bf16.msra.mxu0 %v6068
    %6182 = vmatprep.subr.bf16.mxu0 0
    %6183 = vmatpush1.bf16.msra.mxu0 %v6067
    %6184 = vmatprep.subr.bf16.mxu0 0
    %6185 = vmatpush1.bf16.msra.mxu0 %v6066
    %6186 = vmatprep.subr.bf16.mxu0 0
    %6187 = vmatpush1.bf16.msra.mxu0 %v6065
    %6188 = vmatprep.subr.bf16.mxu0 0
    %6189 = vmatpush1.bf16.msra.mxu0 %v6064
    %6190 = vmatprep.subr.bf16.mxu0 0
    %6191 = vmatpush2.bf16.msra.mxu0 %v6079
    %6192 = vmatprep.subr.bf16.mxu0 0
    %6193 = vmatpush2.bf16.msra.mxu0 %v6078
    %6194 = vmatprep.subr.bf16.mxu0 0
    %6195 = vmatpush2.bf16.msra.mxu0 %v6077
    %6196 = vmatprep.subr.bf16.mxu0 0
    %6197 = vmatpush2.bf16.msra.mxu0 %v6076
    %6198 = vmatprep.subr.bf16.mxu0 0
    %6199 = vmatpush2.bf16.msra.mxu0 %v6075
    %6200 = vmatprep.subr.bf16.mxu0 0
    %6201 = vmatpush2.bf16.msra.mxu0 %v6074
    %6202 = vmatprep.subr.bf16.mxu0 0
    %6203 = vmatpush2.bf16.msra.mxu0 %v6073
    %6204 = vmatprep.subr.bf16.mxu0 0
    %6205 = vmatpush2.bf16.msra.mxu0 %v6072
    %6206 = vmatprep.mubr.bf16.mxu0 %v5503
    %6207 = vmatmul.mubr.bf16.gmra.mxu0 %v5502
    %v6208 = vpop.f32.mrf.mxu0
    %v6209 = vadd.f32 %v6168, %v6208
    %v6210 = vpop.f32.mrf.mxu0
    %v6211 = vpop.f32.mrf.mxu0
    %v6212 = vadd.f32 %v6171, %v6211
    %v6213 = vpop.f32.mrf.mxu0
    %6214 = vdwg.mxu0
    %6215 = vmatprep.subr.bf16.mxu0 0
    %6216 = vmatpush1.bf16.msra.mxu0 %v6087
    %6217 = vmatprep.subr.bf16.mxu0 0
    %6218 = vmatpush1.bf16.msra.mxu0 %v6086
    %6219 = vmatprep.subr.bf16.mxu0 0
    %6220 = vmatpush1.bf16.msra.mxu0 %v6085
    %6221 = vmatprep.subr.bf16.mxu0 0
    %6222 = vmatpush1.bf16.msra.mxu0 %v6084
    %6223 = vmatprep.subr.bf16.mxu0 0
    %6224 = vmatpush1.bf16.msra.mxu0 %v6083
    %6225 = vmatprep.subr.bf16.mxu0 0
    %6226 = vmatpush1.bf16.msra.mxu0 %v6082
    %6227 = vmatprep.subr.bf16.mxu0 0
    %6228 = vmatpush1.bf16.msra.mxu0 %v6081
    %6229 = vmatprep.subr.bf16.mxu0 0
    %6230 = vmatpush1.bf16.msra.mxu0 %v6080
    %6231 = vmatprep.subr.bf16.mxu0 0
    %6232 = vmatpush2.bf16.msra.mxu0 0
    %6233 = vmatprep.subr.bf16.mxu0 0
    %6234 = vmatpush2.bf16.msra.mxu0 0
    %6235 = vmatprep.subr.bf16.mxu0 0
    %6236 = vmatpush2.bf16.msra.mxu0 0
    %6237 = vmatprep.subr.bf16.mxu0 0
    %6238 = vmatpush2.bf16.msra.mxu0 0
    %6239 = vmatprep.subr.bf16.mxu0 0
    %6240 = vmatpush2.bf16.msra.mxu0 %v6091
    %6241 = vmatprep.subr.bf16.mxu0 0
    %6242 = vmatpush2.bf16.msra.mxu0 %v6090
    %6243 = vmatprep.subr.bf16.mxu0 0
    %6244 = vmatpush2.bf16.msra.mxu0 %v6089
    %6245 = vmatprep.subr.bf16.mxu0 0
    %6246 = vmatpush2.bf16.msra.mxu0 %v6088
    %6247 = vmatprep.mubr.bf16.mxu0 %v5868
    %6248 = vmatmul.mubr.bf16.gmra.mxu0 %v5504
    %v6249 = vpop.f32.mrf.mxu0
    %v6250 = vadd.f32 %v6209, %v6249
    %v6251 = vpop.f32.mrf.mxu0
    %v6252 = vpop.f32.mrf.mxu0
    %v6253 = vadd.f32 %v6212, %v6252
    %v6254 = vpop.f32.mrf.mxu0
    %6255 = vdwg.mxu0
    %v6256 = vmax.f32 %v5946, %v6250
    %v6257 = vmax.f32 %v5949, %v6253
    %vm6258 = vcmp.eq.s32.totalorder %v5586, 2
    %vm6259 = vcmp.eq.s32.totalorder %v5587, 2
    %vm6260 = vcmp.eq.s32.totalorder %v5588, 2
    %vm6261 = vcmp.eq.s32.totalorder %v5589, 2
    %vm6262 = vcmp.eq.s32.totalorder %v5590, 2
    %vm6263 = vcmp.eq.s32.totalorder %v5591, 2
    %vm6264 = vcmp.eq.s32.totalorder %v5592, 2
    %vm6265 = vcmp.eq.s32.totalorder %v5593, 2
    %vm6266 = vcmp.eq.s32.totalorder %v5594, 2
    %vm6267 = vcmp.eq.s32.totalorder %v5595, 2
    %vm6268 = vcmp.eq.s32.totalorder %v5596, 2
    %vm6269 = vcmp.eq.s32.totalorder %v5597, 2
    %vm6270 = vcmp.eq.s32.totalorder %v5598, 2
    %vm6271 = vcmp.eq.s32.totalorder %v5599, 2
    %vm6272 = vcmp.eq.s32.totalorder %v5600, 2
    %vm6273 = vcmp.eq.s32.totalorder %v5601, 2
    %vm6274 = vcmp.eq.s32.totalorder %v5602, 2
    %vm6275 = vcmp.eq.s32.totalorder %v5603, 2
    %vm6276 = vcmp.eq.s32.totalorder %v5604, 2
    %vm6277 = vcmp.eq.s32.totalorder %v5605, 2
    %vm6278 = vcmp.eq.s32.totalorder %v5606, 2
    %vm6279 = vcmp.eq.s32.totalorder %v5607, 2
    %vm6280 = vcmp.eq.s32.totalorder %v5608, 2
    %vm6281 = vcmp.eq.s32.totalorder %v5609, 2
    %vm6282 = vcmp.eq.s32.totalorder %v5610, 2
    %vm6283 = vcmp.eq.s32.totalorder %v5611, 2
    %vm6284 = vcmp.eq.s32.totalorder %v5612, 2
    %vm6285 = vcmp.eq.s32.totalorder %v5613, 2
    %vm6286 = vcmp.eq.s32.totalorder %v5614, 2
    %vm6287 = vcmp.eq.s32.totalorder %v5615, 2
    %vm6288 = vcmp.eq.s32.totalorder %v5616, 2
    %vm6289 = vcmp.eq.s32.totalorder %v5617, 2
    %vm6290 = vcmp.eq.s32.totalorder %v5618, 2
    %vm6291 = vcmp.eq.s32.totalorder %v5619, 2
    %vm6292 = vcmp.eq.s32.totalorder %v5620, 2
    %vm6293 = vcmp.eq.s32.totalorder %v5621, 2
    %vm6294 = vcmp.eq.s32.totalorder %v5622, 2
    %vm6295 = vcmp.eq.s32.totalorder %v5623, 2
    %vm6296 = vcmp.eq.s32.totalorder %v5624, 2
    %vm6297 = vcmp.eq.s32.totalorder %v5625, 2
    %vm6298 = vcmp.eq.s32.totalorder %v5626, 2
    %vm6299 = vcmp.eq.s32.totalorder %v5627, 2
    %vm6300 = vcmp.eq.s32.totalorder %v5628, 2
    %vm6301 = vcmp.eq.s32.totalorder %v5629, 2
    %vm6302 = vcmp.eq.s32.totalorder %v5630, 2
    %vm6303 = vcmp.eq.s32.totalorder %v5631, 2
    %vm6304 = vcmp.eq.s32.totalorder %v5632, 2
    %vm6305 = vcmp.eq.s32.totalorder %v5633, 2
    %vm6306 = vcmp.eq.s32.totalorder %v5634, 2
    %vm6307 = vcmp.eq.s32.totalorder %v5635, 2
    %vm6308 = vcmp.eq.s32.totalorder %v5636, 2
    %vm6309 = vcmp.eq.s32.totalorder %v5637, 2
    %vm6310 = vcmp.eq.s32.totalorder %v5638, 2
    %vm6311 = vcmp.eq.s32.totalorder %v5639, 2
    %vm6312 = vcmp.eq.s32.totalorder %v5640, 2
    %vm6313 = vcmp.eq.s32.totalorder %v5641, 2
    %v6314 = vsel %vm6258, 1.0, 0.0
    %v6315 = vsel %vm6259, 1.0, 0.0
    %v6316 = vsel %vm6260, 1.0, 0.0
    %v6317 = vsel %vm6261, 1.0, 0.0
    %v6318 = vsel %vm6262, 1.0, 0.0
    %v6319 = vsel %vm6263, 1.0, 0.0
    %v6320 = vsel %vm6264, 1.0, 0.0
    %v6321 = vsel %vm6265, 1.0, 0.0
    %v6322 = vsel %vm6266, 1.0, 0.0
    %v6323 = vsel %vm6267, 1.0, 0.0
    %v6324 = vsel %vm6268, 1.0, 0.0
    %v6325 = vsel %vm6269, 1.0, 0.0
    %v6326 = vsel %vm6270, 1.0, 0.0
    %v6327 = vsel %vm6271, 1.0, 0.0
    %v6328 = vsel %vm6272, 1.0, 0.0
    %v6329 = vsel %vm6273, 1.0, 0.0
    %v6330 = vsel %vm6274, 1.0, 0.0
    %v6331 = vsel %vm6275, 1.0, 0.0
    %v6332 = vsel %vm6276, 1.0, 0.0
    %v6333 = vsel %vm6277, 1.0, 0.0
    %v6334 = vsel %vm6278, 1.0, 0.0
    %v6335 = vsel %vm6279, 1.0, 0.0
    %v6336 = vsel %vm6280, 1.0, 0.0
    %v6337 = vsel %vm6281, 1.0, 0.0
    %v6338 = vsel %vm6282, 1.0, 0.0
    %v6339 = vsel %vm6283, 1.0, 0.0
    %v6340 = vsel %vm6284, 1.0, 0.0
    %v6341 = vsel %vm6285, 1.0, 0.0
    %v6342 = vsel %vm6286, 1.0, 0.0
    %v6343 = vsel %vm6287, 1.0, 0.0
    %v6344 = vsel %vm6288, 1.0, 0.0
    %v6345 = vsel %vm6289, 1.0, 0.0
    %v6346 = vsel %vm6290, 1.0, 0.0
    %v6347 = vsel %vm6291, 1.0, 0.0
    %v6348 = vsel %vm6292, 1.0, 0.0
    %v6349 = vsel %vm6293, 1.0, 0.0
    %v6350 = vsel %vm6294, 1.0, 0.0
    %v6351 = vsel %vm6295, 1.0, 0.0
    %v6352 = vsel %vm6296, 1.0, 0.0
    %v6353 = vsel %vm6297, 1.0, 0.0
    %v6354 = vsel %vm6298, 1.0, 0.0
    %v6355 = vsel %vm6299, 1.0, 0.0
    %v6356 = vsel %vm6300, 1.0, 0.0
    %v6357 = vsel %vm6301, 1.0, 0.0
    %v6358 = vsel %vm6302, 1.0, 0.0
    %v6359 = vsel %vm6303, 1.0, 0.0
    %v6360 = vsel %vm6304, 1.0, 0.0
    %v6361 = vsel %vm6305, 1.0, 0.0
    %v6362 = vsel %vm6306, 1.0, 0.0
    %v6363 = vsel %vm6307, 1.0, 0.0
    %v6364 = vsel %vm6308, 1.0, 0.0
    %v6365 = vsel %vm6309, 1.0, 0.0
    %v6366 = vsel %vm6310, 1.0, 0.0
    %v6367 = vsel %vm6311, 1.0, 0.0
    %v6368 = vsel %vm6312, 1.0, 0.0
    %v6369 = vsel %vm6313, 1.0, 0.0
    %v6370 = vpack.c.bf16 %v6315, %v6314
    %v6371 = vpack.c.bf16 %v6317, %v6316
    %v6372 = vpack.c.bf16 %v6319, %v6318
    %v6373 = vpack.c.bf16 %v6321, %v6320
    %v6374 = vpack.c.bf16 %v6323, %v6322
    %v6375 = vpack.c.bf16 %v6325, %v6324
    %v6376 = vpack.c.bf16 %v6327, %v6326
    %v6377 = vpack.c.bf16 %v6329, %v6328
    %v6378 = vpack.c.bf16 %v6331, %v6330
    %v6379 = vpack.c.bf16 %v6333, %v6332
    %v6380 = vpack.c.bf16 %v6335, %v6334
    %v6381 = vpack.c.bf16 %v6337, %v6336
    %v6382 = vpack.c.bf16 %v6339, %v6338
    %v6383 = vpack.c.bf16 %v6341, %v6340
    %v6384 = vpack.c.bf16 %v6343, %v6342
    %v6385 = vpack.c.bf16 %v6345, %v6344
    %v6386 = vpack.c.bf16 %v6347, %v6346
    %v6387 = vpack.c.bf16 %v6349, %v6348
    %v6388 = vpack.c.bf16 %v6351, %v6350
    %v6389 = vpack.c.bf16 %v6353, %v6352
    %v6390 = vpack.c.bf16 %v6355, %v6354
    %v6391 = vpack.c.bf16 %v6357, %v6356
    %v6392 = vpack.c.bf16 %v6359, %v6358
    %v6393 = vpack.c.bf16 %v6361, %v6360
    %v6394 = vpack.c.bf16 %v6363, %v6362
    %v6395 = vpack.c.bf16 %v6365, %v6364
    %v6396 = vpack.c.bf16 %v6367, %v6366
    %v6397 = vpack.c.bf16 %v6369, %v6368
    %6398 = vmatprep.subr.bf16.mxu0 0
    %6399 = vmatpush1.bf16.msra.mxu0 %v6377
    %6400 = vmatprep.subr.bf16.mxu0 0
    %6401 = vmatpush1.bf16.msra.mxu0 %v6376
    %6402 = vmatprep.subr.bf16.mxu0 0
    %6403 = vmatpush1.bf16.msra.mxu0 %v6375
    %6404 = vmatprep.subr.bf16.mxu0 0
    %6405 = vmatpush1.bf16.msra.mxu0 %v6374
    %6406 = vmatprep.subr.bf16.mxu0 0
    %6407 = vmatpush1.bf16.msra.mxu0 %v6373
    %6408 = vmatprep.subr.bf16.mxu0 0
    %6409 = vmatpush1.bf16.msra.mxu0 %v6372
    %6410 = vmatprep.subr.bf16.mxu0 0
    %6411 = vmatpush1.bf16.msra.mxu0 %v6371
    %6412 = vmatprep.subr.bf16.mxu0 0
    %6413 = vmatpush1.bf16.msra.mxu0 %v6370
    %6414 = vmatprep.subr.bf16.mxu0 0
    %6415 = vmatpush2.bf16.msra.mxu0 %v6385
    %6416 = vmatprep.subr.bf16.mxu0 0
    %6417 = vmatpush2.bf16.msra.mxu0 %v6384
    %6418 = vmatprep.subr.bf16.mxu0 0
    %6419 = vmatpush2.bf16.msra.mxu0 %v6383
    %6420 = vmatprep.subr.bf16.mxu0 0
    %6421 = vmatpush2.bf16.msra.mxu0 %v6382
    %6422 = vmatprep.subr.bf16.mxu0 0
    %6423 = vmatpush2.bf16.msra.mxu0 %v6381
    %6424 = vmatprep.subr.bf16.mxu0 0
    %6425 = vmatpush2.bf16.msra.mxu0 %v6380
    %6426 = vmatprep.subr.bf16.mxu0 0
    %6427 = vmatpush2.bf16.msra.mxu0 %v6379
    %6428 = vmatprep.subr.bf16.mxu0 0
    %6429 = vmatpush2.bf16.msra.mxu0 %v6378
    %6430 = vmatprep.mubr.bf16.mxu0 %v5523
    %6431 = vmatmul.mubr.bf16.gmra.mxu0 %v5522
    %v6432 = vpop.f32.mrf.mxu0
    %v6433 = vadd.f32 0.0, %v6432
    %v6434 = vpop.f32.mrf.mxu0
    %v6435 = vpop.f32.mrf.mxu0
    %v6436 = vadd.f32 0.0, %v6435
    %v6437 = vpop.f32.mrf.mxu0
    %6438 = vdwg.mxu0
    %6439 = vmatprep.subr.bf16.mxu0 0
    %6440 = vmatpush1.bf16.msra.mxu0 %v6393
    %6441 = vmatprep.subr.bf16.mxu0 0
    %6442 = vmatpush1.bf16.msra.mxu0 %v6392
    %6443 = vmatprep.subr.bf16.mxu0 0
    %6444 = vmatpush1.bf16.msra.mxu0 %v6391
    %6445 = vmatprep.subr.bf16.mxu0 0
    %6446 = vmatpush1.bf16.msra.mxu0 %v6390
    %6447 = vmatprep.subr.bf16.mxu0 0
    %6448 = vmatpush1.bf16.msra.mxu0 %v6389
    %6449 = vmatprep.subr.bf16.mxu0 0
    %6450 = vmatpush1.bf16.msra.mxu0 %v6388
    %6451 = vmatprep.subr.bf16.mxu0 0
    %6452 = vmatpush1.bf16.msra.mxu0 %v6387
    %6453 = vmatprep.subr.bf16.mxu0 0
    %6454 = vmatpush1.bf16.msra.mxu0 %v6386
    %6455 = vmatprep.subr.bf16.mxu0 0
    %6456 = vmatpush2.bf16.msra.mxu0 0
    %6457 = vmatprep.subr.bf16.mxu0 0
    %6458 = vmatpush2.bf16.msra.mxu0 0
    %6459 = vmatprep.subr.bf16.mxu0 0
    %6460 = vmatpush2.bf16.msra.mxu0 0
    %6461 = vmatprep.subr.bf16.mxu0 0
    %6462 = vmatpush2.bf16.msra.mxu0 0
    %6463 = vmatprep.subr.bf16.mxu0 0
    %6464 = vmatpush2.bf16.msra.mxu0 %v6397
    %6465 = vmatprep.subr.bf16.mxu0 0
    %6466 = vmatpush2.bf16.msra.mxu0 %v6396
    %6467 = vmatprep.subr.bf16.mxu0 0
    %6468 = vmatpush2.bf16.msra.mxu0 %v6395
    %6469 = vmatprep.subr.bf16.mxu0 0
    %6470 = vmatpush2.bf16.msra.mxu0 %v6394
    %6471 = vmatprep.mubr.bf16.mxu0 %v5783
    %6472 = vmatmul.mubr.bf16.gmra.mxu0 %v5524
    %v6473 = vpop.f32.mrf.mxu0
    %v6474 = vadd.f32 %v6433, %v6473
    %v6475 = vpop.f32.mrf.mxu0
    %v6476 = vpop.f32.mrf.mxu0
    %v6477 = vadd.f32 %v6436, %v6476
    %v6478 = vpop.f32.mrf.mxu0
    %6479 = vdwg.mxu0
    %6480 = vmatprep.subr.bf16.mxu0 0
    %6481 = vmatpush1.bf16.msra.mxu0 %v6377
    %6482 = vmatprep.subr.bf16.mxu0 0
    %6483 = vmatpush1.bf16.msra.mxu0 %v6376
    %6484 = vmatprep.subr.bf16.mxu0 0
    %6485 = vmatpush1.bf16.msra.mxu0 %v6375
    %6486 = vmatprep.subr.bf16.mxu0 0
    %6487 = vmatpush1.bf16.msra.mxu0 %v6374
    %6488 = vmatprep.subr.bf16.mxu0 0
    %6489 = vmatpush1.bf16.msra.mxu0 %v6373
    %6490 = vmatprep.subr.bf16.mxu0 0
    %6491 = vmatpush1.bf16.msra.mxu0 %v6372
    %6492 = vmatprep.subr.bf16.mxu0 0
    %6493 = vmatpush1.bf16.msra.mxu0 %v6371
    %6494 = vmatprep.subr.bf16.mxu0 0
    %6495 = vmatpush1.bf16.msra.mxu0 %v6370
    %6496 = vmatprep.subr.bf16.mxu0 0
    %6497 = vmatpush2.bf16.msra.mxu0 %v6385
    %6498 = vmatprep.subr.bf16.mxu0 0
    %6499 = vmatpush2.bf16.msra.mxu0 %v6384
    %6500 = vmatprep.subr.bf16.mxu0 0
    %6501 = vmatpush2.bf16.msra.mxu0 %v6383
    %6502 = vmatprep.subr.bf16.mxu0 0
    %6503 = vmatpush2.bf16.msra.mxu0 %v6382
    %6504 = vmatprep.subr.bf16.mxu0 0
    %6505 = vmatpush2.bf16.msra.mxu0 %v6381
    %6506 = vmatprep.subr.bf16.mxu0 0
    %6507 = vmatpush2.bf16.msra.mxu0 %v6380
    %6508 = vmatprep.subr.bf16.mxu0 0
    %6509 = vmatpush2.bf16.msra.mxu0 %v6379
    %6510 = vmatprep.subr.bf16.mxu0 0
    %6511 = vmatpush2.bf16.msra.mxu0 %v6378
    %6512 = vmatprep.mubr.bf16.mxu0 %v5503
    %6513 = vmatmul.mubr.bf16.gmra.mxu0 %v5502
    %v6514 = vpop.f32.mrf.mxu0
    %v6515 = vadd.f32 %v6474, %v6514
    %v6516 = vpop.f32.mrf.mxu0
    %v6517 = vpop.f32.mrf.mxu0
    %v6518 = vadd.f32 %v6477, %v6517
    %v6519 = vpop.f32.mrf.mxu0
    %6520 = vdwg.mxu0
    %6521 = vmatprep.subr.bf16.mxu0 0
    %6522 = vmatpush1.bf16.msra.mxu0 %v6393
    %6523 = vmatprep.subr.bf16.mxu0 0
    %6524 = vmatpush1.bf16.msra.mxu0 %v6392
    %6525 = vmatprep.subr.bf16.mxu0 0
    %6526 = vmatpush1.bf16.msra.mxu0 %v6391
    %6527 = vmatprep.subr.bf16.mxu0 0
    %6528 = vmatpush1.bf16.msra.mxu0 %v6390
    %6529 = vmatprep.subr.bf16.mxu0 0
    %6530 = vmatpush1.bf16.msra.mxu0 %v6389
    %6531 = vmatprep.subr.bf16.mxu0 0
    %6532 = vmatpush1.bf16.msra.mxu0 %v6388
    %6533 = vmatprep.subr.bf16.mxu0 0
    %6534 = vmatpush1.bf16.msra.mxu0 %v6387
    %6535 = vmatprep.subr.bf16.mxu0 0
    %6536 = vmatpush1.bf16.msra.mxu0 %v6386
    %6537 = vmatprep.subr.bf16.mxu0 0
    %6538 = vmatpush2.bf16.msra.mxu0 0
    %6539 = vmatprep.subr.bf16.mxu0 0
    %6540 = vmatpush2.bf16.msra.mxu0 0
    %6541 = vmatprep.subr.bf16.mxu0 0
    %6542 = vmatpush2.bf16.msra.mxu0 0
    %6543 = vmatprep.subr.bf16.mxu0 0
    %6544 = vmatpush2.bf16.msra.mxu0 0
    %6545 = vmatprep.subr.bf16.mxu0 0
    %6546 = vmatpush2.bf16.msra.mxu0 %v6397
    %6547 = vmatprep.subr.bf16.mxu0 0
    %6548 = vmatpush2.bf16.msra.mxu0 %v6396
    %6549 = vmatprep.subr.bf16.mxu0 0
    %6550 = vmatpush2.bf16.msra.mxu0 %v6395
    %6551 = vmatprep.subr.bf16.mxu0 0
    %6552 = vmatpush2.bf16.msra.mxu0 %v6394
    %6553 = vmatprep.mubr.bf16.mxu0 %v5868
    %6554 = vmatmul.mubr.bf16.gmra.mxu0 %v5504
    %v6555 = vpop.f32.mrf.mxu0
    %v6556 = vadd.f32 %v6515, %v6555
    %v6557 = vpop.f32.mrf.mxu0
    %v6558 = vpop.f32.mrf.mxu0
    %v6559 = vadd.f32 %v6518, %v6558
    %v6560 = vpop.f32.mrf.mxu0
    %6561 = vdwg.mxu0
    %v6562 = vmax.f32 %v6256, %v6556
    %v6563 = vmax.f32 %v6257, %v6559
    %vm6564 = vcmp.eq.s32.totalorder %v5586, 3
    %vm6565 = vcmp.eq.s32.totalorder %v5587, 3
    %vm6566 = vcmp.eq.s32.totalorder %v5588, 3
    %vm6567 = vcmp.eq.s32.totalorder %v5589, 3
    %vm6568 = vcmp.eq.s32.totalorder %v5590, 3
    %vm6569 = vcmp.eq.s32.totalorder %v5591, 3
    %vm6570 = vcmp.eq.s32.totalorder %v5592, 3
    %vm6571 = vcmp.eq.s32.totalorder %v5593, 3
    %vm6572 = vcmp.eq.s32.totalorder %v5594, 3
    %vm6573 = vcmp.eq.s32.totalorder %v5595, 3
    %vm6574 = vcmp.eq.s32.totalorder %v5596, 3
    %vm6575 = vcmp.eq.s32.totalorder %v5597, 3
    %vm6576 = vcmp.eq.s32.totalorder %v5598, 3
    %vm6577 = vcmp.eq.s32.totalorder %v5599, 3
    %vm6578 = vcmp.eq.s32.totalorder %v5600, 3
    %vm6579 = vcmp.eq.s32.totalorder %v5601, 3
    %vm6580 = vcmp.eq.s32.totalorder %v5602, 3
    %vm6581 = vcmp.eq.s32.totalorder %v5603, 3
    %vm6582 = vcmp.eq.s32.totalorder %v5604, 3
    %vm6583 = vcmp.eq.s32.totalorder %v5605, 3
    %vm6584 = vcmp.eq.s32.totalorder %v5606, 3
    %vm6585 = vcmp.eq.s32.totalorder %v5607, 3
    %vm6586 = vcmp.eq.s32.totalorder %v5608, 3
    %vm6587 = vcmp.eq.s32.totalorder %v5609, 3
    %vm6588 = vcmp.eq.s32.totalorder %v5610, 3
    %vm6589 = vcmp.eq.s32.totalorder %v5611, 3
    %vm6590 = vcmp.eq.s32.totalorder %v5612, 3
    %vm6591 = vcmp.eq.s32.totalorder %v5613, 3
    %vm6592 = vcmp.eq.s32.totalorder %v5614, 3
    %vm6593 = vcmp.eq.s32.totalorder %v5615, 3
    %vm6594 = vcmp.eq.s32.totalorder %v5616, 3
    %vm6595 = vcmp.eq.s32.totalorder %v5617, 3
    %vm6596 = vcmp.eq.s32.totalorder %v5618, 3
    %vm6597 = vcmp.eq.s32.totalorder %v5619, 3
    %vm6598 = vcmp.eq.s32.totalorder %v5620, 3
    %vm6599 = vcmp.eq.s32.totalorder %v5621, 3
    %vm6600 = vcmp.eq.s32.totalorder %v5622, 3
    %vm6601 = vcmp.eq.s32.totalorder %v5623, 3
    %vm6602 = vcmp.eq.s32.totalorder %v5624, 3
    %vm6603 = vcmp.eq.s32.totalorder %v5625, 3
    %vm6604 = vcmp.eq.s32.totalorder %v5626, 3
    %vm6605 = vcmp.eq.s32.totalorder %v5627, 3
    %vm6606 = vcmp.eq.s32.totalorder %v5628, 3
    %vm6607 = vcmp.eq.s32.totalorder %v5629, 3
    %vm6608 = vcmp.eq.s32.totalorder %v5630, 3
    %vm6609 = vcmp.eq.s32.totalorder %v5631, 3
    %vm6610 = vcmp.eq.s32.totalorder %v5632, 3
    %vm6611 = vcmp.eq.s32.totalorder %v5633, 3
    %vm6612 = vcmp.eq.s32.totalorder %v5634, 3
    %vm6613 = vcmp.eq.s32.totalorder %v5635, 3
    %vm6614 = vcmp.eq.s32.totalorder %v5636, 3
    %vm6615 = vcmp.eq.s32.totalorder %v5637, 3
    %vm6616 = vcmp.eq.s32.totalorder %v5638, 3
    %vm6617 = vcmp.eq.s32.totalorder %v5639, 3
    %vm6618 = vcmp.eq.s32.totalorder %v5640, 3
    %vm6619 = vcmp.eq.s32.totalorder %v5641, 3
    %v6620 = vsel %vm6564, 1.0, 0.0
    %v6621 = vsel %vm6565, 1.0, 0.0
    %v6622 = vsel %vm6566, 1.0, 0.0
    %v6623 = vsel %vm6567, 1.0, 0.0
    %v6624 = vsel %vm6568, 1.0, 0.0
    %v6625 = vsel %vm6569, 1.0, 0.0
    %v6626 = vsel %vm6570, 1.0, 0.0
    %v6627 = vsel %vm6571, 1.0, 0.0
    %v6628 = vsel %vm6572, 1.0, 0.0
    %v6629 = vsel %vm6573, 1.0, 0.0
    %v6630 = vsel %vm6574, 1.0, 0.0
    %v6631 = vsel %vm6575, 1.0, 0.0
    %v6632 = vsel %vm6576, 1.0, 0.0
    %v6633 = vsel %vm6577, 1.0, 0.0
    %v6634 = vsel %vm6578, 1.0, 0.0
    %v6635 = vsel %vm6579, 1.0, 0.0
    %v6636 = vsel %vm6580, 1.0, 0.0
    %v6637 = vsel %vm6581, 1.0, 0.0
    %v6638 = vsel %vm6582, 1.0, 0.0
    %v6639 = vsel %vm6583, 1.0, 0.0
    %v6640 = vsel %vm6584, 1.0, 0.0
    %v6641 = vsel %vm6585, 1.0, 0.0
    %v6642 = vsel %vm6586, 1.0, 0.0
    %v6643 = vsel %vm6587, 1.0, 0.0
    %v6644 = vsel %vm6588, 1.0, 0.0
    %v6645 = vsel %vm6589, 1.0, 0.0
    %v6646 = vsel %vm6590, 1.0, 0.0
    %v6647 = vsel %vm6591, 1.0, 0.0
    %v6648 = vsel %vm6592, 1.0, 0.0
    %v6649 = vsel %vm6593, 1.0, 0.0
    %v6650 = vsel %vm6594, 1.0, 0.0
    %v6651 = vsel %vm6595, 1.0, 0.0
    %v6652 = vsel %vm6596, 1.0, 0.0
    %v6653 = vsel %vm6597, 1.0, 0.0
    %v6654 = vsel %vm6598, 1.0, 0.0
    %v6655 = vsel %vm6599, 1.0, 0.0
    %v6656 = vsel %vm6600, 1.0, 0.0
    %v6657 = vsel %vm6601, 1.0, 0.0
    %v6658 = vsel %vm6602, 1.0, 0.0
    %v6659 = vsel %vm6603, 1.0, 0.0
    %v6660 = vsel %vm6604, 1.0, 0.0
    %v6661 = vsel %vm6605, 1.0, 0.0
    %v6662 = vsel %vm6606, 1.0, 0.0
    %v6663 = vsel %vm6607, 1.0, 0.0
    %v6664 = vsel %vm6608, 1.0, 0.0
    %v6665 = vsel %vm6609, 1.0, 0.0
    %v6666 = vsel %vm6610, 1.0, 0.0
    %v6667 = vsel %vm6611, 1.0, 0.0
    %v6668 = vsel %vm6612, 1.0, 0.0
    %v6669 = vsel %vm6613, 1.0, 0.0
    %v6670 = vsel %vm6614, 1.0, 0.0
    %v6671 = vsel %vm6615, 1.0, 0.0
    %v6672 = vsel %vm6616, 1.0, 0.0
    %v6673 = vsel %vm6617, 1.0, 0.0
    %v6674 = vsel %vm6618, 1.0, 0.0
    %v6675 = vsel %vm6619, 1.0, 0.0
    %v6676 = vpack.c.bf16 %v6621, %v6620
    %v6677 = vpack.c.bf16 %v6623, %v6622
    %v6678 = vpack.c.bf16 %v6625, %v6624
    %v6679 = vpack.c.bf16 %v6627, %v6626
    %v6680 = vpack.c.bf16 %v6629, %v6628
    %v6681 = vpack.c.bf16 %v6631, %v6630
    %v6682 = vpack.c.bf16 %v6633, %v6632
    %v6683 = vpack.c.bf16 %v6635, %v6634
    %v6684 = vpack.c.bf16 %v6637, %v6636
    %v6685 = vpack.c.bf16 %v6639, %v6638
    %v6686 = vpack.c.bf16 %v6641, %v6640
    %v6687 = vpack.c.bf16 %v6643, %v6642
    %v6688 = vpack.c.bf16 %v6645, %v6644
    %v6689 = vpack.c.bf16 %v6647, %v6646
    %v6690 = vpack.c.bf16 %v6649, %v6648
    %v6691 = vpack.c.bf16 %v6651, %v6650
    %v6692 = vpack.c.bf16 %v6653, %v6652
    %v6693 = vpack.c.bf16 %v6655, %v6654
    %v6694 = vpack.c.bf16 %v6657, %v6656
    %v6695 = vpack.c.bf16 %v6659, %v6658
    %v6696 = vpack.c.bf16 %v6661, %v6660
    %v6697 = vpack.c.bf16 %v6663, %v6662
    %v6698 = vpack.c.bf16 %v6665, %v6664
    %v6699 = vpack.c.bf16 %v6667, %v6666
    %v6700 = vpack.c.bf16 %v6669, %v6668
    %v6701 = vpack.c.bf16 %v6671, %v6670
    %v6702 = vpack.c.bf16 %v6673, %v6672
    %v6703 = vpack.c.bf16 %v6675, %v6674
    %6704 = vmatprep.subr.bf16.mxu0 0
    %6705 = vmatpush1.bf16.msra.mxu0 %v6683
    %6706 = vmatprep.subr.bf16.mxu0 0
    %6707 = vmatpush1.bf16.msra.mxu0 %v6682
    %6708 = vmatprep.subr.bf16.mxu0 0
    %6709 = vmatpush1.bf16.msra.mxu0 %v6681
    %6710 = vmatprep.subr.bf16.mxu0 0
    %6711 = vmatpush1.bf16.msra.mxu0 %v6680
    %6712 = vmatprep.subr.bf16.mxu0 0
    %6713 = vmatpush1.bf16.msra.mxu0 %v6679
    %6714 = vmatprep.subr.bf16.mxu0 0
    %6715 = vmatpush1.bf16.msra.mxu0 %v6678
    %6716 = vmatprep.subr.bf16.mxu0 0
    %6717 = vmatpush1.bf16.msra.mxu0 %v6677
    %6718 = vmatprep.subr.bf16.mxu0 0
    %6719 = vmatpush1.bf16.msra.mxu0 %v6676
    %6720 = vmatprep.subr.bf16.mxu0 0
    %6721 = vmatpush2.bf16.msra.mxu0 %v6691
    %6722 = vmatprep.subr.bf16.mxu0 0
    %6723 = vmatpush2.bf16.msra.mxu0 %v6690
    %6724 = vmatprep.subr.bf16.mxu0 0
    %6725 = vmatpush2.bf16.msra.mxu0 %v6689
    %6726 = vmatprep.subr.bf16.mxu0 0
    %6727 = vmatpush2.bf16.msra.mxu0 %v6688
    %6728 = vmatprep.subr.bf16.mxu0 0
    %6729 = vmatpush2.bf16.msra.mxu0 %v6687
    %6730 = vmatprep.subr.bf16.mxu0 0
    %6731 = vmatpush2.bf16.msra.mxu0 %v6686
    %6732 = vmatprep.subr.bf16.mxu0 0
    %6733 = vmatpush2.bf16.msra.mxu0 %v6685
    %6734 = vmatprep.subr.bf16.mxu0 0
    %6735 = vmatpush2.bf16.msra.mxu0 %v6684
    %6736 = vmatprep.mubr.bf16.mxu0 %v5523
    %6737 = vmatmul.mubr.bf16.gmra.mxu0 %v5522
    %v6738 = vpop.f32.mrf.mxu0
    %v6739 = vadd.f32 0.0, %v6738
    %v6740 = vpop.f32.mrf.mxu0
    %v6741 = vpop.f32.mrf.mxu0
    %v6742 = vadd.f32 0.0, %v6741
    %v6743 = vpop.f32.mrf.mxu0
    %6744 = vdwg.mxu0
    %6745 = vmatprep.subr.bf16.mxu0 0
    %6746 = vmatpush1.bf16.msra.mxu0 %v6699
    %6747 = vmatprep.subr.bf16.mxu0 0
    %6748 = vmatpush1.bf16.msra.mxu0 %v6698
    %6749 = vmatprep.subr.bf16.mxu0 0
    %6750 = vmatpush1.bf16.msra.mxu0 %v6697
    %6751 = vmatprep.subr.bf16.mxu0 0
    %6752 = vmatpush1.bf16.msra.mxu0 %v6696
    %6753 = vmatprep.subr.bf16.mxu0 0
    %6754 = vmatpush1.bf16.msra.mxu0 %v6695
    %6755 = vmatprep.subr.bf16.mxu0 0
    %6756 = vmatpush1.bf16.msra.mxu0 %v6694
    %6757 = vmatprep.subr.bf16.mxu0 0
    %6758 = vmatpush1.bf16.msra.mxu0 %v6693
    %6759 = vmatprep.subr.bf16.mxu0 0
    %6760 = vmatpush1.bf16.msra.mxu0 %v6692
    %6761 = vmatprep.subr.bf16.mxu0 0
    %6762 = vmatpush2.bf16.msra.mxu0 0
    %6763 = vmatprep.subr.bf16.mxu0 0
    %6764 = vmatpush2.bf16.msra.mxu0 0
    %6765 = vmatprep.subr.bf16.mxu0 0
    %6766 = vmatpush2.bf16.msra.mxu0 0
    %6767 = vmatprep.subr.bf16.mxu0 0
    %6768 = vmatpush2.bf16.msra.mxu0 0
    %6769 = vmatprep.subr.bf16.mxu0 0
    %6770 = vmatpush2.bf16.msra.mxu0 %v6703
    %6771 = vmatprep.subr.bf16.mxu0 0
    %6772 = vmatpush2.bf16.msra.mxu0 %v6702
    %6773 = vmatprep.subr.bf16.mxu0 0
    %6774 = vmatpush2.bf16.msra.mxu0 %v6701
    %6775 = vmatprep.subr.bf16.mxu0 0
    %6776 = vmatpush2.bf16.msra.mxu0 %v6700
    %6777 = vmatprep.mubr.bf16.mxu0 %v5783
    %6778 = vmatmul.mubr.bf16.gmra.mxu0 %v5524
    %v6779 = vpop.f32.mrf.mxu0
    %v6780 = vadd.f32 %v6739, %v6779
    %v6781 = vpop.f32.mrf.mxu0
    %v6782 = vpop.f32.mrf.mxu0
    %v6783 = vadd.f32 %v6742, %v6782
    %v6784 = vpop.f32.mrf.mxu0
    %6785 = vdwg.mxu0
    %6786 = vmatprep.subr.bf16.mxu0 0
    %6787 = vmatpush1.bf16.msra.mxu0 %v6683
    %6788 = vmatprep.subr.bf16.mxu0 0
    %6789 = vmatpush1.bf16.msra.mxu0 %v6682
    %6790 = vmatprep.subr.bf16.mxu0 0
    %6791 = vmatpush1.bf16.msra.mxu0 %v6681
    %6792 = vmatprep.subr.bf16.mxu0 0
    %6793 = vmatpush1.bf16.msra.mxu0 %v6680
    %6794 = vmatprep.subr.bf16.mxu0 0
    %6795 = vmatpush1.bf16.msra.mxu0 %v6679
    %6796 = vmatprep.subr.bf16.mxu0 0
    %6797 = vmatpush1.bf16.msra.mxu0 %v6678
    %6798 = vmatprep.subr.bf16.mxu0 0
    %6799 = vmatpush1.bf16.msra.mxu0 %v6677
    %6800 = vmatprep.subr.bf16.mxu0 0
    %6801 = vmatpush1.bf16.msra.mxu0 %v6676
    %6802 = vmatprep.subr.bf16.mxu0 0
    %6803 = vmatpush2.bf16.msra.mxu0 %v6691
    %6804 = vmatprep.subr.bf16.mxu0 0
    %6805 = vmatpush2.bf16.msra.mxu0 %v6690
    %6806 = vmatprep.subr.bf16.mxu0 0
    %6807 = vmatpush2.bf16.msra.mxu0 %v6689
    %6808 = vmatprep.subr.bf16.mxu0 0
    %6809 = vmatpush2.bf16.msra.mxu0 %v6688
    %6810 = vmatprep.subr.bf16.mxu0 0
    %6811 = vmatpush2.bf16.msra.mxu0 %v6687
    %6812 = vmatprep.subr.bf16.mxu0 0
    %6813 = vmatpush2.bf16.msra.mxu0 %v6686
    %6814 = vmatprep.subr.bf16.mxu0 0
    %6815 = vmatpush2.bf16.msra.mxu0 %v6685
    %6816 = vmatprep.subr.bf16.mxu0 0
    %6817 = vmatpush2.bf16.msra.mxu0 %v6684
    %6818 = vmatprep.mubr.bf16.mxu0 %v5503
    %6819 = vmatmul.mubr.bf16.gmra.mxu0 %v5502
    %v6820 = vpop.f32.mrf.mxu0
    %v6821 = vadd.f32 %v6780, %v6820
    %v6822 = vpop.f32.mrf.mxu0
    %v6823 = vpop.f32.mrf.mxu0
    %v6824 = vadd.f32 %v6783, %v6823
    %v6825 = vpop.f32.mrf.mxu0
    %6826 = vdwg.mxu0
    %6827 = vmatprep.subr.bf16.mxu0 0
    %6828 = vmatpush1.bf16.msra.mxu0 %v6699
    %6829 = vmatprep.subr.bf16.mxu0 0
    %6830 = vmatpush1.bf16.msra.mxu0 %v6698
    %6831 = vmatprep.subr.bf16.mxu0 0
    %6832 = vmatpush1.bf16.msra.mxu0 %v6697
    %6833 = vmatprep.subr.bf16.mxu0 0
    %6834 = vmatpush1.bf16.msra.mxu0 %v6696
    %6835 = vmatprep.subr.bf16.mxu0 0
    %6836 = vmatpush1.bf16.msra.mxu0 %v6695
    %6837 = vmatprep.subr.bf16.mxu0 0
    %6838 = vmatpush1.bf16.msra.mxu0 %v6694
    %6839 = vmatprep.subr.bf16.mxu0 0
    %6840 = vmatpush1.bf16.msra.mxu0 %v6693
    %6841 = vmatprep.subr.bf16.mxu0 0
    %6842 = vmatpush1.bf16.msra.mxu0 %v6692
    %6843 = vmatprep.subr.bf16.mxu0 0
    %6844 = vmatpush2.bf16.msra.mxu0 0
    %6845 = vmatprep.subr.bf16.mxu0 0
    %6846 = vmatpush2.bf16.msra.mxu0 0
    %6847 = vmatprep.subr.bf16.mxu0 0
    %6848 = vmatpush2.bf16.msra.mxu0 0
    %6849 = vmatprep.subr.bf16.mxu0 0
    %6850 = vmatpush2.bf16.msra.mxu0 0
    %6851 = vmatprep.subr.bf16.mxu0 0
    %6852 = vmatpush2.bf16.msra.mxu0 %v6703
    %6853 = vmatprep.subr.bf16.mxu0 0
    %6854 = vmatpush2.bf16.msra.mxu0 %v6702
    %6855 = vmatprep.subr.bf16.mxu0 0
    %6856 = vmatpush2.bf16.msra.mxu0 %v6701
    %6857 = vmatprep.subr.bf16.mxu0 0
    %6858 = vmatpush2.bf16.msra.mxu0 %v6700
    %6859 = vmatprep.mubr.bf16.mxu0 %v5868
    %6860 = vmatmul.mubr.bf16.gmra.mxu0 %v5504
    %v6861 = vpop.f32.mrf.mxu0
    %v6862 = vadd.f32 %v6821, %v6861
    %v6863 = vpop.f32.mrf.mxu0
    %v6864 = vpop.f32.mrf.mxu0
    %v6865 = vadd.f32 %v6824, %v6864
    %v6866 = vpop.f32.mrf.mxu0
    %6867 = vdwg.mxu0
    %v6868 = vmax.f32 %v6562, %v6862
    %v6869 = vmax.f32 %v6563, %v6865
    %v6870 = vld [vmem:[#allocation10] sm:$0xff]
    %v6871 = vld [vmem:[#allocation11] sm:$0xff]
    %v6872 = vsel %vm1609, %v6868, 0.0
    %6873 = vadd.xlane.f32.xlu0 %v6872
    %v6874 = vpop.xlane.xlu0 %6873
    %v6875 = vsel %vm1609, %v6869, 0.0
    %6876 = vadd.xlane.f32.xlu0 %v6875
    %v6877 = vpop.xlane.xlu0 %6876
    %v6878 = vmul.f32 %v6874, 0.008928572
    %v6879 = vmul.f32 %v6877, 0.008928572
    %v6880 = vsub.f32 %v6868, %v6878
    %v6881 = vsub.f32 %v6869, %v6879
    %v6882 = vmul.f32 %v6880, %v6880
    %v6883 = vmul.f32 %v6881, %v6881
    %v6884 = vsel %vm1609, %v6882, 0.0
    %6885 = vadd.xlane.f32.xlu0 %v6884
    %v6886 = vpop.xlane.xlu0 %6885
    %v6887 = vsel %vm1609, %v6883, 0.0
    %6888 = vadd.xlane.f32.xlu0 %v6887
    %v6889 = vpop.xlane.xlu0 %6888
    %v6890 = vmul.f32 %v6886, 0.009009009
    %v6891 = vmul.f32 %v6889, 0.009009009
    %v6892 = vrsqrt.pop %v6890
    %v6893 = vmul.f32 %v6890, %v6892
    %vm6894 = vcmp.eq.f32.partialorder %v6890, inf
    %v6895 = vsel %vm6894, %v6890, %v6893
    %vm6896 = vcmp.eq.f32.partialorder %v6890, 0.0
    %v6897 = vand.u32 %v6890, 2147483648
    %v6898 = vsel %vm6896, %v6897, %v6895
    %v6899 = vrsqrt.pop %v6891
    %v6900 = vmul.f32 %v6891, %v6899
    %vm6901 = vcmp.eq.f32.partialorder %v6891, inf
    %v6902 = vsel %vm6901, %v6891, %v6900
    %vm6903 = vcmp.eq.f32.partialorder %v6891, 0.0
    %v6904 = vand.u32 %v6891, 2147483648
    %v6905 = vsel %vm6903, %v6904, %v6902
    %v6906 = vadd.f32 %v6898, 1e-06
    %v6907 = vadd.f32 %v6905, 1e-06
    %v6908 = vrcp.pop %v6906
    %v6909 = vrcp.pop %v6907
    %v6910 = vmul.f32 %v6906, %v6908
    %v6911 = vmul.f32 %v6907, %v6909
    %v6912 = vsub.f32 2.0, %v6910
    %v6913 = vsub.f32 2.0, %v6911
    %v6914 = vmul.f32 %v6908, %v6912
    %v6915 = vmul.f32 %v6909, %v6913
    %v6916 = vmul.f32 %v6880, %v6914
    %v6917 = vmul.f32 %v6881, %v6915
    %v6918 = vmul.f32 %v6870, %v6916
    %v6919 = vmul.f32 %v6870, %v6917
    %v6920 = vadd.f32 %v6918, %v6871
    %v6921 = vadd.f32 %v6919, %v6871
    %v6922 = vmax.f32 %v6920, 0.0
    %v6923 = vmax.f32 %v6921, 0.0
    %v6924 = vlaneseq
    %v6925 = vshrl.u32 %v6924, 7
    %v6926 = vsub.s32 0, %v6925
    %v6927 = vrot.slane %v6922, %v6926
    %v6928 = vlaneseq
    %v6929 = vshrl.u32 %v6928, 7
    %v6930 = vsub.s32 0, %v6929
    %v6931 = vrot.slane %v6923, %v6930
    %v6932 = vld [vmem:[#allocation13] sm:$0xff]
    %v6933 = vmul.f32 %v6927, %v6932
    %v6934 = vmul.f32 %v6931, %v6932
    %s6935 = scalar_lea.vmem [#allocation13], 8
    %v6936 = vld [vmem:[%s6935] sm:$0xff]
    %6938 = vrot.lane.b32.xlu0 %v6936, 1
    %v6939 = vpop.permute.xlu0 %6938
    %v6941 = vmul.f32 %v6927, %v6939
    %v6942 = vmul.f32 %v6931, %v6939
    %s6943 = scalar_lea.vmem [#allocation13], 16
    %v6944 = vld [vmem:[%s6943] sm:$0xff]
    %6946 = vrot.lane.b32.xlu0 %v6944, 2
    %v6947 = vpop.permute.xlu0 %6946
    %v6949 = vmul.f32 %v6927, %v6947
    %v6950 = vmul.f32 %v6931, %v6947
    %s6951 = scalar_lea.vmem [#allocation13], 24
    %v6952 = vld [vmem:[%s6951] sm:$0xff]
    %6954 = vrot.lane.b32.xlu0 %v6952, 3
    %v6955 = vpop.permute.xlu0 %6954
    %v6957 = vmul.f32 %v6927, %v6955
    %v6958 = vmul.f32 %v6931, %v6955
    %s6959 = scalar_lea.vmem [#allocation13], 32
    %v6960 = vld [vmem:[%s6959] sm:$0xff]
    %6962 = vrot.lane.b32.xlu0 %v6960, 4
    %v6963 = vpop.permute.xlu0 %6962
    %v6965 = vmul.f32 %v6927, %v6963
    %v6966 = vmul.f32 %v6931, %v6963
    %6969 = vrot.lane.b32.xlu0 %v6965, 124
    %v6970 = vpop.permute.xlu0 %6969
    %6971 = vrot.lane.b32.xlu0 %v6966, 124
    %v6972 = vpop.permute.xlu0 %6971
    %v6975 = vadd.f32 %v6933, %v6970
    %v6976 = vadd.f32 %v6934, %v6972
    %v6977 = vlaneseq
    %v6978 = vshrl.u32 %v6977, 7
    %v6979 = vsub.s32 1, %v6978
    %v6980 = vrot.slane %v6922, %v6979
    %v6981 = vlaneseq
    %v6982 = vshrl.u32 %v6981, 7
    %v6983 = vsub.s32 1, %v6982
    %v6984 = vrot.slane %v6923, %v6983
    %s6985 = scalar_lea.vmem [#allocation13], 40
    %v6986 = vld [vmem:[%s6985] sm:$0xff]
    %v6987 = vmul.f32 %v6980, %v6986
    %v6988 = vmul.f32 %v6984, %v6986
    %6991 = vrot.lane.b32.xlu0 %v6987, 1
    %v6992 = vpop.permute.xlu0 %6991
    %6993 = vrot.lane.b32.xlu0 %v6988, 1
    %v6994 = vpop.permute.xlu0 %6993
    %v6997 = vadd.f32 %v6941, %v6992
    %v6998 = vadd.f32 %v6942, %v6994
    %s6999 = scalar_lea.vmem [#allocation13], 48
    %v7000 = vld [vmem:[%s6999] sm:$0xff]
    %7002 = vrot.lane.b32.xlu0 %v7000, 1
    %v7003 = vpop.permute.xlu0 %7002
    %v7005 = vmul.f32 %v6980, %v7003
    %v7006 = vmul.f32 %v6984, %v7003
    %7009 = vrot.lane.b32.xlu0 %v7005, 1
    %v7010 = vpop.permute.xlu0 %7009
    %7011 = vrot.lane.b32.xlu0 %v7006, 1
    %v7012 = vpop.permute.xlu0 %7011
    %v7015 = vadd.f32 %v6949, %v7010
    %v7016 = vadd.f32 %v6950, %v7012
    %s7017 = scalar_lea.vmem [#allocation13], 56
    %v7018 = vld [vmem:[%s7017] sm:$0xff]
    %7020 = vrot.lane.b32.xlu0 %v7018, 2
    %v7021 = vpop.permute.xlu0 %7020
    %v7023 = vmul.f32 %v6980, %v7021
    %v7024 = vmul.f32 %v6984, %v7021
    %7027 = vrot.lane.b32.xlu0 %v7023, 1
    %v7028 = vpop.permute.xlu0 %7027
    %7029 = vrot.lane.b32.xlu0 %v7024, 1
    %v7030 = vpop.permute.xlu0 %7029
    %v7033 = vadd.f32 %v6957, %v7028
    %v7034 = vadd.f32 %v6958, %v7030
    %s7035 = scalar_lea.vmem [#allocation13], 64
    %v7036 = vld [vmem:[%s7035] sm:$0xff]
    %7038 = vrot.lane.b32.xlu0 %v7036, 3
    %v7039 = vpop.permute.xlu0 %7038
    %v7041 = vmul.f32 %v6980, %v7039
    %v7042 = vmul.f32 %v6984, %v7039
    %7045 = vrot.lane.b32.xlu0 %v7041, 125
    %v7046 = vpop.permute.xlu0 %7045
    %7047 = vrot.lane.b32.xlu0 %v7042, 125
    %v7048 = vpop.permute.xlu0 %7047
    %v7051 = vadd.f32 %v6975, %v7046
    %v7052 = vadd.f32 %v6976, %v7048
    %s7053 = scalar_lea.vmem [#allocation13], 72
    %v7054 = vld [vmem:[%s7053] sm:$0xff]
    %7056 = vrot.lane.b32.xlu0 %v7054, 4
    %v7057 = vpop.permute.xlu0 %7056
    %v7059 = vmul.f32 %v6980, %v7057
    %v7060 = vmul.f32 %v6984, %v7057
    %7063 = vrot.lane.b32.xlu0 %v7059, 125
    %v7064 = vpop.permute.xlu0 %7063
    %7065 = vrot.lane.b32.xlu0 %v7060, 125
    %v7066 = vpop.permute.xlu0 %7065
    %v7069 = vadd.f32 %v6997, %v7064
    %v7070 = vadd.f32 %v6998, %v7066
    %v7071 = vlaneseq
    %v7072 = vshrl.u32 %v7071, 7
    %v7073 = vsub.s32 2, %v7072
    %v7074 = vrot.slane %v6922, %v7073
    %v7075 = vlaneseq
    %v7076 = vshrl.u32 %v7075, 7
    %v7077 = vsub.s32 2, %v7076
    %v7078 = vrot.slane %v6923, %v7077
    %s7079 = scalar_lea.vmem [#allocation13], 80
    %v7080 = vld [vmem:[%s7079] sm:$0xff]
    %v7081 = vmul.f32 %v7074, %v7080
    %v7082 = vmul.f32 %v7078, %v7080
    %7085 = vrot.lane.b32.xlu0 %v7081, 2
    %v7086 = vpop.permute.xlu0 %7085
    %7087 = vrot.lane.b32.xlu0 %v7082, 2
    %v7088 = vpop.permute.xlu0 %7087
    %v7091 = vadd.f32 %v7015, %v7086
    %v7092 = vadd.f32 %v7016, %v7088
    %s7093 = scalar_lea.vmem [#allocation13], 88
    %v7094 = vld [vmem:[%s7093] sm:$0xff]
    %7096 = vrot.lane.b32.xlu0 %v7094, 1
    %v7097 = vpop.permute.xlu0 %7096
    %v7099 = vmul.f32 %v7074, %v7097
    %v7100 = vmul.f32 %v7078, %v7097
    %7103 = vrot.lane.b32.xlu0 %v7099, 2
    %v7104 = vpop.permute.xlu0 %7103
    %7105 = vrot.lane.b32.xlu0 %v7100, 2
    %v7106 = vpop.permute.xlu0 %7105
    %v7109 = vadd.f32 %v7033, %v7104
    %v7110 = vadd.f32 %v7034, %v7106
    %s7111 = scalar_lea.vmem [#allocation13], 96
    %v7112 = vld [vmem:[%s7111] sm:$0xff]
    %7114 = vrot.lane.b32.xlu0 %v7112, 2
    %v7115 = vpop.permute.xlu0 %7114
    %v7117 = vmul.f32 %v7074, %v7115
    %v7118 = vmul.f32 %v7078, %v7115
    %7121 = vrot.lane.b32.xlu0 %v7117, 126
    %v7122 = vpop.permute.xlu0 %7121
    %7123 = vrot.lane.b32.xlu0 %v7118, 126
    %v7124 = vpop.permute.xlu0 %7123
    %v7127 = vadd.f32 %v7051, %v7122
    %v7128 = vadd.f32 %v7052, %v7124
    %s7129 = scalar_lea.vmem [#allocation13], 104
    %v7130 = vld [vmem:[%s7129] sm:$0xff]
    %7132 = vrot.lane.b32.xlu0 %v7130, 3
    %v7133 = vpop.permute.xlu0 %7132
    %v7135 = vmul.f32 %v7074, %v7133
    %v7136 = vmul.f32 %v7078, %v7133
    %7139 = vrot.lane.b32.xlu0 %v7135, 126
    %v7140 = vpop.permute.xlu0 %7139
    %7141 = vrot.lane.b32.xlu0 %v7136, 126
    %v7142 = vpop.permute.xlu0 %7141
    %v7145 = vadd.f32 %v7069, %v7140
    %v7146 = vadd.f32 %v7070, %v7142
    %s7147 = scalar_lea.vmem [#allocation13], 112
    %v7148 = vld [vmem:[%s7147] sm:$0xff]
    %7150 = vrot.lane.b32.xlu0 %v7148, 4
    %v7151 = vpop.permute.xlu0 %7150
    %v7153 = vmul.f32 %v7074, %v7151
    %v7154 = vmul.f32 %v7078, %v7151
    %7157 = vrot.lane.b32.xlu0 %v7153, 126
    %v7158 = vpop.permute.xlu0 %7157
    %7159 = vrot.lane.b32.xlu0 %v7154, 126
    %v7160 = vpop.permute.xlu0 %7159
    %v7163 = vadd.f32 %v7091, %v7158
    %v7164 = vadd.f32 %v7092, %v7160
    %v7165 = vlaneseq
    %v7166 = vshrl.u32 %v7165, 7
    %v7167 = vsub.s32 3, %v7166
    %v7168 = vrot.slane %v6922, %v7167
    %v7169 = vlaneseq
    %v7170 = vshrl.u32 %v7169, 7
    %v7171 = vsub.s32 3, %v7170
    %v7172 = vrot.slane %v6923, %v7171
    %s7173 = scalar_lea.vmem [#allocation13], 120
    %v7174 = vld [vmem:[%s7173] sm:$0xff]
    %v7175 = vmul.f32 %v7168, %v7174
    %v7176 = vmul.f32 %v7172, %v7174
    %7179 = vrot.lane.b32.xlu0 %v7175, 3
    %v7180 = vpop.permute.xlu0 %7179
    %7181 = vrot.lane.b32.xlu0 %v7176, 3
    %v7182 = vpop.permute.xlu0 %7181
    %v7185 = vadd.f32 %v7109, %v7180
    %v7186 = vadd.f32 %v7110, %v7182
    %s7187 = scalar_lea.vmem [#allocation13], 128
    %v7188 = vld [vmem:[%s7187] sm:$0xff]
    %7190 = vrot.lane.b32.xlu0 %v7188, 1
    %v7191 = vpop.permute.xlu0 %7190
    %v7193 = vmul.f32 %v7168, %v7191
    %v7194 = vmul.f32 %v7172, %v7191
    %7197 = vrot.lane.b32.xlu0 %v7193, 127
    %v7198 = vpop.permute.xlu0 %7197
    %7199 = vrot.lane.b32.xlu0 %v7194, 127
    %v7200 = vpop.permute.xlu0 %7199
    %v7203 = vadd.f32 %v7127, %v7198
    %v7204 = vadd.f32 %v7128, %v7200
    %s7205 = scalar_lea.vmem [#allocation13], 136
    %v7206 = vld [vmem:[%s7205] sm:$0xff]
    %7208 = vrot.lane.b32.xlu0 %v7206, 2
    %v7209 = vpop.permute.xlu0 %7208
    %v7211 = vmul.f32 %v7168, %v7209
    %v7212 = vmul.f32 %v7172, %v7209
    %7215 = vrot.lane.b32.xlu0 %v7211, 127
    %v7216 = vpop.permute.xlu0 %7215
    %7217 = vrot.lane.b32.xlu0 %v7212, 127
    %v7218 = vpop.permute.xlu0 %7217
    %v7221 = vadd.f32 %v7145, %v7216
    %v7222 = vadd.f32 %v7146, %v7218
    %s7223 = scalar_lea.vmem [#allocation13], 144
    %v7224 = vld [vmem:[%s7223] sm:$0xff]
    %7226 = vrot.lane.b32.xlu0 %v7224, 3
    %v7227 = vpop.permute.xlu0 %7226
    %v7229 = vmul.f32 %v7168, %v7227
    %v7230 = vmul.f32 %v7172, %v7227
    %7233 = vrot.lane.b32.xlu0 %v7229, 127
    %v7234 = vpop.permute.xlu0 %7233
    %7235 = vrot.lane.b32.xlu0 %v7230, 127
    %v7236 = vpop.permute.xlu0 %7235
    %v7239 = vadd.f32 %v7163, %v7234
    %v7240 = vadd.f32 %v7164, %v7236
    %s7241 = scalar_lea.vmem [#allocation13], 152
    %v7242 = vld [vmem:[%s7241] sm:$0xff]
    %7244 = vrot.lane.b32.xlu0 %v7242, 4
    %v7245 = vpop.permute.xlu0 %7244
    %v7247 = vmul.f32 %v7168, %v7245
    %v7248 = vmul.f32 %v7172, %v7245
    %7251 = vrot.lane.b32.xlu0 %v7247, 127
    %v7252 = vpop.permute.xlu0 %7251
    %7253 = vrot.lane.b32.xlu0 %v7248, 127
    %v7254 = vpop.permute.xlu0 %7253
    %v7257 = vadd.f32 %v7185, %v7252
    %v7258 = vadd.f32 %v7186, %v7254
    %v7259 = vlaneseq
    %v7260 = vshrl.u32 %v7259, 7
    %v7261 = vsub.s32 4, %v7260
    %v7262 = vrot.slane %v6922, %v7261
    %v7263 = vlaneseq
    %v7264 = vshrl.u32 %v7263, 7
    %v7265 = vsub.s32 4, %v7264
    %v7266 = vrot.slane %v6923, %v7265
    %s7267 = scalar_lea.vmem [#allocation13], 160
    %v7268 = vld [vmem:[%s7267] sm:$0xff]
    %v7269 = vmul.f32 %v7262, %v7268
    %v7270 = vmul.f32 %v7266, %v7268
    %v7271 = vadd.f32 %v7203, %v7269
    %v7272 = vadd.f32 %v7204, %v7270
    %s7273 = scalar_lea.vmem [#allocation13], 168
    %v7274 = vld [vmem:[%s7273] sm:$0xff]
    %7276 = vrot.lane.b32.xlu0 %v7274, 1
    %v7277 = vpop.permute.xlu0 %7276
    %v7279 = vmul.f32 %v7262, %v7277
    %v7280 = vmul.f32 %v7266, %v7277
    %v7281 = vadd.f32 %v7221, %v7279
    %v7282 = vadd.f32 %v7222, %v7280
    %s7283 = scalar_lea.vmem [#allocation13], 176
    %v7284 = vld [vmem:[%s7283] sm:$0xff]
    %7286 = vrot.lane.b32.xlu0 %v7284, 2
    %v7287 = vpop.permute.xlu0 %7286
    %v7289 = vmul.f32 %v7262, %v7287
    %v7290 = vmul.f32 %v7266, %v7287
    %v7291 = vadd.f32 %v7239, %v7289
    %v7292 = vadd.f32 %v7240, %v7290
    %s7293 = scalar_lea.vmem [#allocation13], 184
    %v7294 = vld [vmem:[%s7293] sm:$0xff]
    %7296 = vrot.lane.b32.xlu0 %v7294, 3
    %v7297 = vpop.permute.xlu0 %7296
    %v7299 = vmul.f32 %v7262, %v7297
    %v7300 = vmul.f32 %v7266, %v7297
    %v7301 = vadd.f32 %v7257, %v7299
    %v7302 = vadd.f32 %v7258, %v7300
    %s7303 = scalar_lea.vmem [#allocation13], 192
    %v7304 = vld [vmem:[%s7303] sm:$0xff]
    %7306 = vrot.lane.b32.xlu0 %v7304, 4
    %v7307 = vpop.permute.xlu0 %7306
    %v7309 = vmul.f32 %v7262, %v7307
    %v7310 = vmul.f32 %v7266, %v7307
    %7313 = vrot.lane.b32.xlu0 %v7309, 124
    %v7314 = vpop.permute.xlu0 %7313
    %7315 = vrot.lane.b32.xlu0 %v7310, 124
    %v7316 = vpop.permute.xlu0 %7315
    %v7319 = vadd.f32 %v7271, %v7314
    %v7320 = vadd.f32 %v7272, %v7316
    %v7321 = vlaneseq
    %v7322 = vshrl.u32 %v7321, 7
    %v7323 = vsub.s32 5, %v7322
    %v7324 = vrot.slane %v6922, %v7323
    %v7325 = vlaneseq
    %v7326 = vshrl.u32 %v7325, 7
    %v7327 = vsub.s32 5, %v7326
    %v7328 = vrot.slane %v6923, %v7327
    %s7329 = scalar_lea.vmem [#allocation13], 200
    %v7330 = vld [vmem:[%s7329] sm:$0xff]
    %v7331 = vmul.f32 %v7324, %v7330
    %v7332 = vmul.f32 %v7328, %v7330
    %7335 = vrot.lane.b32.xlu0 %v7331, 1
    %v7336 = vpop.permute.xlu0 %7335
    %7337 = vrot.lane.b32.xlu0 %v7332, 1
    %v7338 = vpop.permute.xlu0 %7337
    %v7341 = vadd.f32 %v7281, %v7336
    %v7342 = vadd.f32 %v7282, %v7338
    %s7343 = scalar_lea.vmem [#allocation13], 208
    %v7344 = vld [vmem:[%s7343] sm:$0xff]
    %7346 = vrot.lane.b32.xlu0 %v7344, 1
    %v7347 = vpop.permute.xlu0 %7346
    %v7349 = vmul.f32 %v7324, %v7347
    %v7350 = vmul.f32 %v7328, %v7347
    %7353 = vrot.lane.b32.xlu0 %v7349, 1
    %v7354 = vpop.permute.xlu0 %7353
    %7355 = vrot.lane.b32.xlu0 %v7350, 1
    %v7356 = vpop.permute.xlu0 %7355
    %v7359 = vadd.f32 %v7291, %v7354
    %v7360 = vadd.f32 %v7292, %v7356
    %s7361 = scalar_lea.vmem [#allocation13], 216
    %v7362 = vld [vmem:[%s7361] sm:$0xff]
    %7364 = vrot.lane.b32.xlu0 %v7362, 2
    %v7365 = vpop.permute.xlu0 %7364
    %v7367 = vmul.f32 %v7324, %v7365
    %v7368 = vmul.f32 %v7328, %v7365
    %7371 = vrot.lane.b32.xlu0 %v7367, 1
    %v7372 = vpop.permute.xlu0 %7371
    %7373 = vrot.lane.b32.xlu0 %v7368, 1
    %v7374 = vpop.permute.xlu0 %7373
    %v7377 = vadd.f32 %v7301, %v7372
    %v7378 = vadd.f32 %v7302, %v7374
    %s7379 = scalar_lea.vmem [#allocation13], 224
    %v7380 = vld [vmem:[%s7379] sm:$0xff]
    %7382 = vrot.lane.b32.xlu0 %v7380, 3
    %v7383 = vpop.permute.xlu0 %7382
    %v7385 = vmul.f32 %v7324, %v7383
    %v7386 = vmul.f32 %v7328, %v7383
    %7389 = vrot.lane.b32.xlu0 %v7385, 125
    %v7390 = vpop.permute.xlu0 %7389
    %7391 = vrot.lane.b32.xlu0 %v7386, 125
    %v7392 = vpop.permute.xlu0 %7391
    %v7395 = vadd.f32 %v7319, %v7390
    %v7396 = vadd.f32 %v7320, %v7392
    %s7397 = scalar_lea.vmem [#allocation13], 232
    %v7398 = vld [vmem:[%s7397] sm:$0xff]
    %7400 = vrot.lane.b32.xlu0 %v7398, 4
    %v7401 = vpop.permute.xlu0 %7400
    %v7403 = vmul.f32 %v7324, %v7401
    %v7404 = vmul.f32 %v7328, %v7401
    %7407 = vrot.lane.b32.xlu0 %v7403, 125
    %v7408 = vpop.permute.xlu0 %7407
    %7409 = vrot.lane.b32.xlu0 %v7404, 125
    %v7410 = vpop.permute.xlu0 %7409
    %v7413 = vadd.f32 %v7341, %v7408
    %v7414 = vadd.f32 %v7342, %v7410
    %v7415 = vlaneseq
    %v7416 = vshrl.u32 %v7415, 7
    %v7417 = vsub.s32 6, %v7416
    %v7418 = vrot.slane %v6922, %v7417
    %v7419 = vlaneseq
    %v7420 = vshrl.u32 %v7419, 7
    %v7421 = vsub.s32 6, %v7420
    %v7422 = vrot.slane %v6923, %v7421
    %s7423 = scalar_lea.vmem [#allocation13], 240
    %v7424 = vld [vmem:[%s7423] sm:$0xff]
    %v7425 = vmul.f32 %v7418, %v7424
    %v7426 = vmul.f32 %v7422, %v7424
    %7429 = vrot.lane.b32.xlu0 %v7425, 2
    %v7430 = vpop.permute.xlu0 %7429
    %7431 = vrot.lane.b32.xlu0 %v7426, 2
    %v7432 = vpop.permute.xlu0 %7431
    %v7435 = vadd.f32 %v7359, %v7430
    %v7436 = vadd.f32 %v7360, %v7432
    %s7437 = scalar_lea.vmem [#allocation13], 248
    %v7438 = vld [vmem:[%s7437] sm:$0xff]
    %7440 = vrot.lane.b32.xlu0 %v7438, 1
    %v7441 = vpop.permute.xlu0 %7440
    %v7443 = vmul.f32 %v7418, %v7441
    %v7444 = vmul.f32 %v7422, %v7441
    %7447 = vrot.lane.b32.xlu0 %v7443, 2
    %v7448 = vpop.permute.xlu0 %7447
    %7449 = vrot.lane.b32.xlu0 %v7444, 2
    %v7450 = vpop.permute.xlu0 %7449
    %v7453 = vadd.f32 %v7377, %v7448
    %v7454 = vadd.f32 %v7378, %v7450
    %s7455 = scalar_lea.vmem [#allocation13], 256
    %v7456 = vld [vmem:[%s7455] sm:$0xff]
    %7458 = vrot.lane.b32.xlu0 %v7456, 2
    %v7459 = vpop.permute.xlu0 %7458
    %v7461 = vmul.f32 %v7418, %v7459
    %v7462 = vmul.f32 %v7422, %v7459
    %7465 = vrot.lane.b32.xlu0 %v7461, 126
    %v7466 = vpop.permute.xlu0 %7465
    %7467 = vrot.lane.b32.xlu0 %v7462, 126
    %v7468 = vpop.permute.xlu0 %7467
    %v7471 = vadd.f32 %v7395, %v7466
    %v7472 = vadd.f32 %v7396, %v7468
    %s7473 = scalar_lea.vmem [#allocation13], 264
    %v7474 = vld [vmem:[%s7473] sm:$0xff]
    %7476 = vrot.lane.b32.xlu0 %v7474, 3
    %v7477 = vpop.permute.xlu0 %7476
    %v7479 = vmul.f32 %v7418, %v7477
    %v7480 = vmul.f32 %v7422, %v7477
    %7483 = vrot.lane.b32.xlu0 %v7479, 126
    %v7484 = vpop.permute.xlu0 %7483
    %7485 = vrot.lane.b32.xlu0 %v7480, 126
    %v7486 = vpop.permute.xlu0 %7485
    %v7489 = vadd.f32 %v7413, %v7484
    %v7490 = vadd.f32 %v7414, %v7486
    %s7491 = scalar_lea.vmem [#allocation13], 272
    %v7492 = vld [vmem:[%s7491] sm:$0xff]
    %7494 = vrot.lane.b32.xlu0 %v7492, 4
    %v7495 = vpop.permute.xlu0 %7494
    %v7497 = vmul.f32 %v7418, %v7495
    %v7498 = vmul.f32 %v7422, %v7495
    %7501 = vrot.lane.b32.xlu0 %v7497, 126
    %v7502 = vpop.permute.xlu0 %7501
    %7503 = vrot.lane.b32.xlu0 %v7498, 126
    %v7504 = vpop.permute.xlu0 %7503
    %v7507 = vadd.f32 %v7435, %v7502
    %v7508 = vadd.f32 %v7436, %v7504
    %v7509 = vlaneseq
    %v7510 = vshrl.u32 %v7509, 7
    %v7511 = vsub.s32 7, %v7510
    %v7512 = vrot.slane %v6922, %v7511
    %v7513 = vlaneseq
    %v7514 = vshrl.u32 %v7513, 7
    %v7515 = vsub.s32 7, %v7514
    %v7516 = vrot.slane %v6923, %v7515
    %s7517 = scalar_lea.vmem [#allocation13], 280
    %v7518 = vld [vmem:[%s7517] sm:$0xff]
    %v7519 = vmul.f32 %v7512, %v7518
    %v7520 = vmul.f32 %v7516, %v7518
    %7523 = vrot.lane.b32.xlu0 %v7519, 3
    %v7524 = vpop.permute.xlu0 %7523
    %7525 = vrot.lane.b32.xlu0 %v7520, 3
    %v7526 = vpop.permute.xlu0 %7525
    %v7529 = vadd.f32 %v7453, %v7524
    %v7530 = vadd.f32 %v7454, %v7526
    %s7531 = scalar_lea.vmem [#allocation13], 288
    %v7532 = vld [vmem:[%s7531] sm:$0xff]
    %7534 = vrot.lane.b32.xlu0 %v7532, 1
    %v7535 = vpop.permute.xlu0 %7534
    %v7537 = vmul.f32 %v7512, %v7535
    %v7538 = vmul.f32 %v7516, %v7535
    %7541 = vrot.lane.b32.xlu0 %v7537, 127
    %v7542 = vpop.permute.xlu0 %7541
    %7543 = vrot.lane.b32.xlu0 %v7538, 127
    %v7544 = vpop.permute.xlu0 %7543
    %v7547 = vadd.f32 %v7471, %v7542
    %v7548 = vadd.f32 %v7472, %v7544
    %s7549 = scalar_lea.vmem [#allocation13], 296
    %v7550 = vld [vmem:[%s7549] sm:$0xff]
    %7552 = vrot.lane.b32.xlu0 %v7550, 2
    %v7553 = vpop.permute.xlu0 %7552
    %v7555 = vmul.f32 %v7512, %v7553
    %v7556 = vmul.f32 %v7516, %v7553
    %7559 = vrot.lane.b32.xlu0 %v7555, 127
    %v7560 = vpop.permute.xlu0 %7559
    %7561 = vrot.lane.b32.xlu0 %v7556, 127
    %v7562 = vpop.permute.xlu0 %7561
    %v7565 = vadd.f32 %v7489, %v7560
    %v7566 = vadd.f32 %v7490, %v7562
    %s7567 = scalar_lea.vmem [#allocation13], 304
    %v7568 = vld [vmem:[%s7567] sm:$0xff]
    %7570 = vrot.lane.b32.xlu0 %v7568, 3
    %v7571 = vpop.permute.xlu0 %7570
    %v7573 = vmul.f32 %v7512, %v7571
    %v7574 = vmul.f32 %v7516, %v7571
    %7577 = vrot.lane.b32.xlu0 %v7573, 127
    %v7578 = vpop.permute.xlu0 %7577
    %7579 = vrot.lane.b32.xlu0 %v7574, 127
    %v7580 = vpop.permute.xlu0 %7579
    %v7583 = vadd.f32 %v7507, %v7578
    %v7584 = vadd.f32 %v7508, %v7580
    %s7585 = scalar_lea.vmem [#allocation13], 312
    %v7586 = vld [vmem:[%s7585] sm:$0xff]
    %7588 = vrot.lane.b32.xlu0 %v7586, 4
    %v7589 = vpop.permute.xlu0 %7588
    %v7591 = vmul.f32 %v7512, %v7589
    %v7592 = vmul.f32 %v7516, %v7589
    %7595 = vrot.lane.b32.xlu0 %v7591, 127
    %v7596 = vpop.permute.xlu0 %7595
    %7597 = vrot.lane.b32.xlu0 %v7592, 127
    %v7598 = vpop.permute.xlu0 %7597
    %v7601 = vadd.f32 %v7529, %v7596
    %v7602 = vadd.f32 %v7530, %v7598
    %7605 = vrot.lane.b32.xlu0 %v7565, 127
    %v7606 = vpop.permute.xlu0 %7605
    %7607 = vrot.lane.b32.xlu0 %v7566, 127
    %v7608 = vpop.permute.xlu0 %7607
    %v7611 = vadd.f32 %v7547, %v7606
    %v7612 = vadd.f32 %v7548, %v7608
    %7615 = vrot.lane.b32.xlu0 %v7601, 127
    %v7616 = vpop.permute.xlu0 %7615
    %7617 = vrot.lane.b32.xlu0 %v7602, 127
    %v7618 = vpop.permute.xlu0 %7617
    %v7621 = vadd.f32 %v7583, %v7616
    %v7622 = vadd.f32 %v7584, %v7618
    %7625 = vrot.lane.b32.xlu0 %v7621, 126
    %v7626 = vpop.permute.xlu0 %7625
    %7627 = vrot.lane.b32.xlu0 %v7622, 126
    %v7628 = vpop.permute.xlu0 %7627
    %v7631 = vadd.f32 %v7611, %v7626
    %v7632 = vadd.f32 %v7612, %v7628
    %v7633 = vld [vmem:[%s7] sm:$0xff]
    %7635 = vset.pattern.permute.xlu0 0
    %7636 = vperm.xlu0 %7635, %v7633
    %v7637 = vpop.permute.xlu0 %7636
    %v7639 = vadd.f32 %v7631, %v7637
    %v7640 = vadd.f32 %v7632, %v7637
    %v7641 = vpack.c.bf16 %v7640, %v7639
    %v7642 = vunpack.c.l.bf16 %v7641
    %v7643 = vunpack.c.h.bf16 %v7641
    %v7644 = vsub.f32 %v7639, %v7642
    %v7645 = vsub.f32 %v7640, %v7643
    %v7646 = vpack.c.bf16 %v7645, %v7644
    %v7648 = vsel %vm1927, %v7646, 0
    %vm7650 = vcmask 1045504
    %v7652 = vsel %vm7650, %v5760, 0
    %7654 = vmatprep.subr.bf16.mxu0 0
    %7655 = vmatpush1.bf16.msra.mxu0 0
    %7656 = vmatprep.subr.bf16.mxu0 0
    %7657 = vmatpush1.bf16.msra.mxu0 %v7652
    %7658 = vmatprep.subr.bf16.mxu0 0
    %7659 = vmatpush1.bf16.msra.mxu0 %v5759
    %7660 = vmatprep.subr.bf16.mxu0 0
    %7661 = vmatpush1.bf16.msra.mxu0 %v5758
    %7662 = vmatprep.subr.bf16.mxu0 0
    %7663 = vmatpush1.bf16.msra.mxu0 %v5757
    %7664 = vmatprep.subr.bf16.mxu0 0
    %7665 = vmatpush1.bf16.msra.mxu0 %v5756
    %7666 = vmatprep.subr.bf16.mxu0 0
    %7667 = vmatpush1.bf16.msra.mxu0 %v5755
    %7668 = vmatprep.subr.bf16.mxu0 0
    %7669 = vmatpush1.bf16.msra.mxu0 %v5754
    %7670 = vmatprep.subr.bf16.mxu0 0
    %7671 = vmatpush2.bf16.msra.mxu0 0
    %7672 = vmatprep.subr.bf16.mxu0 0
    %7673 = vmatpush2.bf16.msra.mxu0 0
    %7674 = vmatprep.subr.bf16.mxu0 0
    %7675 = vmatpush2.bf16.msra.mxu0 0
    %7676 = vmatprep.subr.bf16.mxu0 0
    %7677 = vmatpush2.bf16.msra.mxu0 0
    %7678 = vmatprep.subr.bf16.mxu0 0
    %7679 = vmatpush2.bf16.msra.mxu0 0
    %7680 = vmatprep.subr.bf16.mxu0 0
    %7681 = vmatpush2.bf16.msra.mxu0 0
    %7682 = vmatprep.subr.bf16.mxu0 0
    %7683 = vmatpush2.bf16.msra.mxu0 0
    %7684 = vmatprep.subr.bf16.mxu0 0
    %7685 = vmatpush2.bf16.msra.mxu0 0
    %7686 = vmatprep.mubr.bf16.mxu0 0
    %7687 = vmatmul.mubr.bf16.gmra.mxu0 %v7648
    %v7688 = vpop.f32.mrf.mxu0
    %v7689 = vadd.f32 0.0, %v7688
    %v7690 = vpop.f32.mrf.mxu0
    %v7691 = vpop.f32.mrf.mxu0
    %v7692 = vadd.f32 0.0, %v7691
    %v7693 = vpop.f32.mrf.mxu0
    %7694 = vdwg.mxu0
    %v7696 = vsel %vm1927, %v7641, 0
    %7698 = vmatprep.subr.bf16.mxu0 0
    %7699 = vmatpush1.bf16.msra.mxu0 0
    %7700 = vmatprep.subr.bf16.mxu0 0
    %7701 = vmatpush1.bf16.msra.mxu0 %v7652
    %7702 = vmatprep.subr.bf16.mxu0 0
    %7703 = vmatpush1.bf16.msra.mxu0 %v5759
    %7704 = vmatprep.subr.bf16.mxu0 0
    %7705 = vmatpush1.bf16.msra.mxu0 %v5758
    %7706 = vmatprep.subr.bf16.mxu0 0
    %7707 = vmatpush1.bf16.msra.mxu0 %v5757
    %7708 = vmatprep.subr.bf16.mxu0 0
    %7709 = vmatpush1.bf16.msra.mxu0 %v5756
    %7710 = vmatprep.subr.bf16.mxu0 0
    %7711 = vmatpush1.bf16.msra.mxu0 %v5755
    %7712 = vmatprep.subr.bf16.mxu0 0
    %7713 = vmatpush1.bf16.msra.mxu0 %v5754
    %7714 = vmatprep.subr.bf16.mxu0 0
    %7715 = vmatpush2.bf16.msra.mxu0 0
    %7716 = vmatprep.subr.bf16.mxu0 0
    %7717 = vmatpush2.bf16.msra.mxu0 0
    %7718 = vmatprep.subr.bf16.mxu0 0
    %7719 = vmatpush2.bf16.msra.mxu0 0
    %7720 = vmatprep.subr.bf16.mxu0 0
    %7721 = vmatpush2.bf16.msra.mxu0 0
    %7722 = vmatprep.subr.bf16.mxu0 0
    %7723 = vmatpush2.bf16.msra.mxu0 0
    %7724 = vmatprep.subr.bf16.mxu0 0
    %7725 = vmatpush2.bf16.msra.mxu0 0
    %7726 = vmatprep.subr.bf16.mxu0 0
    %7727 = vmatpush2.bf16.msra.mxu0 0
    %7728 = vmatprep.subr.bf16.mxu0 0
    %7729 = vmatpush2.bf16.msra.mxu0 0
    %7730 = vmatprep.mubr.bf16.mxu0 0
    %7731 = vmatmul.mubr.bf16.gmra.mxu0 %v7696
    %v7732 = vpop.f32.mrf.mxu0
    %v7733 = vadd.f32 %v7689, %v7732
    %v7734 = vpop.f32.mrf.mxu0
    %v7735 = vpop.f32.mrf.mxu0
    %v7736 = vadd.f32 %v7692, %v7735
    %v7737 = vpop.f32.mrf.mxu0
    %7738 = vdwg.mxu0
    %v7740 = vsel %vm7650, %v6070, 0
    %7742 = vmatprep.subr.bf16.mxu0 0
    %7743 = vmatpush1.bf16.msra.mxu0 0
    %7744 = vmatprep.subr.bf16.mxu0 0
    %7745 = vmatpush1.bf16.msra.mxu0 %v7740
    %7746 = vmatprep.subr.bf16.mxu0 0
    %7747 = vmatpush1.bf16.msra.mxu0 %v6069
    %7748 = vmatprep.subr.bf16.mxu0 0
    %7749 = vmatpush1.bf16.msra.mxu0 %v6068
    %7750 = vmatprep.subr.bf16.mxu0 0
    %7751 = vmatpush1.bf16.msra.mxu0 %v6067
    %7752 = vmatprep.subr.bf16.mxu0 0
    %7753 = vmatpush1.bf16.msra.mxu0 %v6066
    %7754 = vmatprep.subr.bf16.mxu0 0
    %7755 = vmatpush1.bf16.msra.mxu0 %v6065
    %7756 = vmatprep.subr.bf16.mxu0 0
    %7757 = vmatpush1.bf16.msra.mxu0 %v6064
    %7758 = vmatprep.subr.bf16.mxu0 0
    %7759 = vmatpush2.bf16.msra.mxu0 0
    %7760 = vmatprep.subr.bf16.mxu0 0
    %7761 = vmatpush2.bf16.msra.mxu0 0
    %7762 = vmatprep.subr.bf16.mxu0 0
    %7763 = vmatpush2.bf16.msra.mxu0 0
    %7764 = vmatprep.subr.bf16.mxu0 0
    %7765 = vmatpush2.bf16.msra.mxu0 0
    %7766 = vmatprep.subr.bf16.mxu0 0
    %7767 = vmatpush2.bf16.msra.mxu0 0
    %7768 = vmatprep.subr.bf16.mxu0 0
    %7769 = vmatpush2.bf16.msra.mxu0 0
    %7770 = vmatprep.subr.bf16.mxu0 0
    %7771 = vmatpush2.bf16.msra.mxu0 0
    %7772 = vmatprep.subr.bf16.mxu0 0
    %7773 = vmatpush2.bf16.msra.mxu0 0
    %7774 = vmatprep.mubr.bf16.mxu0 0
    %7775 = vmatmul.mubr.bf16.gmra.mxu0 %v7648
    %v7776 = vpop.f32.mrf.mxu0
    %v7777 = vadd.f32 0.0, %v7776
    %v7778 = vpop.f32.mrf.mxu0
    %v7779 = vpop.f32.mrf.mxu0
    %v7780 = vadd.f32 0.0, %v7779
    %v7781 = vpop.f32.mrf.mxu0
    %7782 = vdwg.mxu0
    %7783 = vmatprep.subr.bf16.mxu0 0
    %7784 = vmatpush1.bf16.msra.mxu0 0
    %7785 = vmatprep.subr.bf16.mxu0 0
    %7786 = vmatpush1.bf16.msra.mxu0 %v7740
    %7787 = vmatprep.subr.bf16.mxu0 0
    %7788 = vmatpush1.bf16.msra.mxu0 %v6069
    %7789 = vmatprep.subr.bf16.mxu0 0
    %7790 = vmatpush1.bf16.msra.mxu0 %v6068
    %7791 = vmatprep.subr.bf16.mxu0 0
    %7792 = vmatpush1.bf16.msra.mxu0 %v6067
    %7793 = vmatprep.subr.bf16.mxu0 0
    %7794 = vmatpush1.bf16.msra.mxu0 %v6066
    %7795 = vmatprep.subr.bf16.mxu0 0
    %7796 = vmatpush1.bf16.msra.mxu0 %v6065
    %7797 = vmatprep.subr.bf16.mxu0 0
    %7798 = vmatpush1.bf16.msra.mxu0 %v6064
    %7799 = vmatprep.subr.bf16.mxu0 0
    %7800 = vmatpush2.bf16.msra.mxu0 0
    %7801 = vmatprep.subr.bf16.mxu0 0
    %7802 = vmatpush2.bf16.msra.mxu0 0
    %7803 = vmatprep.subr.bf16.mxu0 0
    %7804 = vmatpush2.bf16.msra.mxu0 0
    %7805 = vmatprep.subr.bf16.mxu0 0
    %7806 = vmatpush2.bf16.msra.mxu0 0
    %7807 = vmatprep.subr.bf16.mxu0 0
    %7808 = vmatpush2.bf16.msra.mxu0 0
    %7809 = vmatprep.subr.bf16.mxu0 0
    %7810 = vmatpush2.bf16.msra.mxu0 0
    %7811 = vmatprep.subr.bf16.mxu0 0
    %7812 = vmatpush2.bf16.msra.mxu0 0
    %7813 = vmatprep.subr.bf16.mxu0 0
    %7814 = vmatpush2.bf16.msra.mxu0 0
    %7815 = vmatprep.mubr.bf16.mxu0 0
    %7816 = vmatmul.mubr.bf16.gmra.mxu0 %v7696
    %v7817 = vpop.f32.mrf.mxu0
    %v7818 = vadd.f32 %v7777, %v7817
    %v7819 = vpop.f32.mrf.mxu0
    %v7820 = vpop.f32.mrf.mxu0
    %v7821 = vadd.f32 %v7780, %v7820
    %v7822 = vpop.f32.mrf.mxu0
    %7823 = vdwg.mxu0
    %v7824 = vmax.f32 %v7733, %v7818
    %v7825 = vmax.f32 %v7736, %v7821
    %v7827 = vsel %vm7650, %v6376, 0
    %7829 = vmatprep.subr.bf16.mxu0 0
    %7830 = vmatpush1.bf16.msra.mxu0 0
    %7831 = vmatprep.subr.bf16.mxu0 0
    %7832 = vmatpush1.bf16.msra.mxu0 %v7827
    %7833 = vmatprep.subr.bf16.mxu0 0
    %7834 = vmatpush1.bf16.msra.mxu0 %v6375
    %7835 = vmatprep.subr.bf16.mxu0 0
    %7836 = vmatpush1.bf16.msra.mxu0 %v6374
    %7837 = vmatprep.subr.bf16.mxu0 0
    %7838 = vmatpush1.bf16.msra.mxu0 %v6373
    %7839 = vmatprep.subr.bf16.mxu0 0
    %7840 = vmatpush1.bf16.msra.mxu0 %v6372
    %7841 = vmatprep.subr.bf16.mxu0 0
    %7842 = vmatpush1.bf16.msra.mxu0 %v6371
    %7843 = vmatprep.subr.bf16.mxu0 0
    %7844 = vmatpush1.bf16.msra.mxu0 %v6370
    %7845 = vmatprep.subr.bf16.mxu0 0
    %7846 = vmatpush2.bf16.msra.mxu0 0
    %7847 = vmatprep.subr.bf16.mxu0 0
    %7848 = vmatpush2.bf16.msra.mxu0 0
    %7849 = vmatprep.subr.bf16.mxu0 0
    %7850 = vmatpush2.bf16.msra.mxu0 0
    %7851 = vmatprep.subr.bf16.mxu0 0
    %7852 = vmatpush2.bf16.msra.mxu0 0
    %7853 = vmatprep.subr.bf16.mxu0 0
    %7854 = vmatpush2.bf16.msra.mxu0 0
    %7855 = vmatprep.subr.bf16.mxu0 0
    %7856 = vmatpush2.bf16.msra.mxu0 0
    %7857 = vmatprep.subr.bf16.mxu0 0
    %7858 = vmatpush2.bf16.msra.mxu0 0
    %7859 = vmatprep.subr.bf16.mxu0 0
    %7860 = vmatpush2.bf16.msra.mxu0 0
    %7861 = vmatprep.mubr.bf16.mxu0 0
    %7862 = vmatmul.mubr.bf16.gmra.mxu0 %v7648
    %v7863 = vpop.f32.mrf.mxu0
    %v7864 = vadd.f32 0.0, %v7863
    %v7865 = vpop.f32.mrf.mxu0
    %v7866 = vpop.f32.mrf.mxu0
    %v7867 = vadd.f32 0.0, %v7866
    %v7868 = vpop.f32.mrf.mxu0
    %7869 = vdwg.mxu0
    %7870 = vmatprep.subr.bf16.mxu0 0
    %7871 = vmatpush1.bf16.msra.mxu0 0
    %7872 = vmatprep.subr.bf16.mxu0 0
    %7873 = vmatpush1.bf16.msra.mxu0 %v7827
    %7874 = vmatprep.subr.bf16.mxu0 0
    %7875 = vmatpush1.bf16.msra.mxu0 %v6375
    %7876 = vmatprep.subr.bf16.mxu0 0
    %7877 = vmatpush1.bf16.msra.mxu0 %v6374
    %7878 = vmatprep.subr.bf16.mxu0 0
    %7879 = vmatpush1.bf16.msra.mxu0 %v6373
    %7880 = vmatprep.subr.bf16.mxu0 0
    %7881 = vmatpush1.bf16.msra.mxu0 %v6372
    %7882 = vmatprep.subr.bf16.mxu0 0
    %7883 = vmatpush1.bf16.msra.mxu0 %v6371
    %7884 = vmatprep.subr.bf16.mxu0 0
    %7885 = vmatpush1.bf16.msra.mxu0 %v6370
    %7886 = vmatprep.subr.bf16.mxu0 0
    %7887 = vmatpush2.bf16.msra.mxu0 0
    %7888 = vmatprep.subr.bf16.mxu0 0
    %7889 = vmatpush2.bf16.msra.mxu0 0
    %7890 = vmatprep.subr.bf16.mxu0 0
    %7891 = vmatpush2.bf16.msra.mxu0 0
    %7892 = vmatprep.subr.bf16.mxu0 0
    %7893 = vmatpush2.bf16.msra.mxu0 0
    %7894 = vmatprep.subr.bf16.mxu0 0
    %7895 = vmatpush2.bf16.msra.mxu0 0
    %7896 = vmatprep.subr.bf16.mxu0 0
    %7897 = vmatpush2.bf16.msra.mxu0 0
    %7898 = vmatprep.subr.bf16.mxu0 0
    %7899 = vmatpush2.bf16.msra.mxu0 0
    %7900 = vmatprep.subr.bf16.mxu0 0
    %7901 = vmatpush2.bf16.msra.mxu0 0
    %7902 = vmatprep.mubr.bf16.mxu0 0
    %7903 = vmatmul.mubr.bf16.gmra.mxu0 %v7696
    %v7904 = vpop.f32.mrf.mxu0
    %v7905 = vadd.f32 %v7864, %v7904
    %v7906 = vpop.f32.mrf.mxu0
    %v7907 = vpop.f32.mrf.mxu0
    %v7908 = vadd.f32 %v7867, %v7907
    %v7909 = vpop.f32.mrf.mxu0
    %7910 = vdwg.mxu0
    %v7911 = vmax.f32 %v7824, %v7905
    %v7912 = vmax.f32 %v7825, %v7908
    %v7914 = vsel %vm7650, %v6682, 0
    %7916 = vmatprep.subr.bf16.mxu0 0
    %7917 = vmatpush1.bf16.msra.mxu0 0
    %7918 = vmatprep.subr.bf16.mxu0 0
    %7919 = vmatpush1.bf16.msra.mxu0 %v7914
    %7920 = vmatprep.subr.bf16.mxu0 0
    %7921 = vmatpush1.bf16.msra.mxu0 %v6681
    %7922 = vmatprep.subr.bf16.mxu0 0
    %7923 = vmatpush1.bf16.msra.mxu0 %v6680
    %7924 = vmatprep.subr.bf16.mxu0 0
    %7925 = vmatpush1.bf16.msra.mxu0 %v6679
    %7926 = vmatprep.subr.bf16.mxu0 0
    %7927 = vmatpush1.bf16.msra.mxu0 %v6678
    %7928 = vmatprep.subr.bf16.mxu0 0
    %7929 = vmatpush1.bf16.msra.mxu0 %v6677
    %7930 = vmatprep.subr.bf16.mxu0 0
    %7931 = vmatpush1.bf16.msra.mxu0 %v6676
    %7932 = vmatprep.subr.bf16.mxu0 0
    %7933 = vmatpush2.bf16.msra.mxu0 0
    %7934 = vmatprep.subr.bf16.mxu0 0
    %7935 = vmatpush2.bf16.msra.mxu0 0
    %7936 = vmatprep.subr.bf16.mxu0 0
    %7937 = vmatpush2.bf16.msra.mxu0 0
    %7938 = vmatprep.subr.bf16.mxu0 0
    %7939 = vmatpush2.bf16.msra.mxu0 0
    %7940 = vmatprep.subr.bf16.mxu0 0
    %7941 = vmatpush2.bf16.msra.mxu0 0
    %7942 = vmatprep.subr.bf16.mxu0 0
    %7943 = vmatpush2.bf16.msra.mxu0 0
    %7944 = vmatprep.subr.bf16.mxu0 0
    %7945 = vmatpush2.bf16.msra.mxu0 0
    %7946 = vmatprep.subr.bf16.mxu0 0
    %7947 = vmatpush2.bf16.msra.mxu0 0
    %7948 = vmatprep.mubr.bf16.mxu0 0
    %7949 = vmatmul.mubr.bf16.gmra.mxu0 %v7648
    %v7950 = vpop.f32.mrf.mxu0
    %v7951 = vadd.f32 0.0, %v7950
    %v7952 = vpop.f32.mrf.mxu0
    %v7953 = vpop.f32.mrf.mxu0
    %v7954 = vadd.f32 0.0, %v7953
    %v7955 = vpop.f32.mrf.mxu0
    %7956 = vdwg.mxu0
    %7957 = vmatprep.subr.bf16.mxu0 0
    %7958 = vmatpush1.bf16.msra.mxu0 0
    %7959 = vmatprep.subr.bf16.mxu0 0
    %7960 = vmatpush1.bf16.msra.mxu0 %v7914
    %7961 = vmatprep.subr.bf16.mxu0 0
    %7962 = vmatpush1.bf16.msra.mxu0 %v6681
    %7963 = vmatprep.subr.bf16.mxu0 0
    %7964 = vmatpush1.bf16.msra.mxu0 %v6680
    %7965 = vmatprep.subr.bf16.mxu0 0
    %7966 = vmatpush1.bf16.msra.mxu0 %v6679
    %7967 = vmatprep.subr.bf16.mxu0 0
    %7968 = vmatpush1.bf16.msra.mxu0 %v6678
    %7969 = vmatprep.subr.bf16.mxu0 0
    %7970 = vmatpush1.bf16.msra.mxu0 %v6677
    %7971 = vmatprep.subr.bf16.mxu0 0
    %7972 = vmatpush1.bf16.msra.mxu0 %v6676
    %7973 = vmatprep.subr.bf16.mxu0 0
    %7974 = vmatpush2.bf16.msra.mxu0 0
    %7975 = vmatprep.subr.bf16.mxu0 0
    %7976 = vmatpush2.bf16.msra.mxu0 0
    %7977 = vmatprep.subr.bf16.mxu0 0
    %7978 = vmatpush2.bf16.msra.mxu0 0
    %7979 = vmatprep.subr.bf16.mxu0 0
    %7980 = vmatpush2.bf16.msra.mxu0 0
    %7981 = vmatprep.subr.bf16.mxu0 0
    %7982 = vmatpush2.bf16.msra.mxu0 0
    %7983 = vmatprep.subr.bf16.mxu0 0
    %7984 = vmatpush2.bf16.msra.mxu0 0
    %7985 = vmatprep.subr.bf16.mxu0 0
    %7986 = vmatpush2.bf16.msra.mxu0 0
    %7987 = vmatprep.subr.bf16.mxu0 0
    %7988 = vmatpush2.bf16.msra.mxu0 0
    %7989 = vmatprep.mubr.bf16.mxu0 0
    %7990 = vmatmul.mubr.bf16.gmra.mxu0 %v7696
    %v7991 = vpop.f32.mrf.mxu0
    %v7992 = vadd.f32 %v7951, %v7991
    %v7993 = vpop.f32.mrf.mxu0
    %v7994 = vpop.f32.mrf.mxu0
    %v7995 = vadd.f32 %v7954, %v7994
    %v7996 = vpop.f32.mrf.mxu0
    %7997 = vdwg.mxu0
    %v7998 = vmax.f32 %v7911, %v7992
    %v7999 = vmax.f32 %v7912, %v7995
    %v8000 = vld [vmem:[#allocation14] sm:$0xff]
    %v8001 = vld [vmem:[#allocation16] sm:$0xff]
    %v8002 = vsel %vm2444, %v7998, 0.0
    %8003 = vadd.xlane.f32.xlu0 %v8002
    %v8004 = vpop.xlane.xlu0 %8003
    %v8005 = vsel %vm2444, %v7999, 0.0
    %8006 = vadd.xlane.f32.xlu0 %v8005
    %v8007 = vpop.xlane.xlu0 %8006
    %v8008 = vmul.f32 %v8004, 0.037037037
    %v8009 = vmul.f32 %v8007, 0.037037037
    %v8010 = vsub.f32 %v7998, %v8008
    %v8011 = vsub.f32 %v7999, %v8009
    %v8012 = vmul.f32 %v8010, %v8010
    %v8013 = vmul.f32 %v8011, %v8011
    %v8014 = vsel %vm2444, %v8012, 0.0
    %8015 = vadd.xlane.f32.xlu0 %v8014
    %v8016 = vpop.xlane.xlu0 %8015
    %v8017 = vsel %vm2444, %v8013, 0.0
    %8018 = vadd.xlane.f32.xlu0 %v8017
    %v8019 = vpop.xlane.xlu0 %8018
    %v8020 = vmul.f32 %v8016, 0.03846154
    %v8021 = vmul.f32 %v8019, 0.03846154
    %v8022 = vrsqrt.pop %v8020
    %v8023 = vmul.f32 %v8020, %v8022
    %vm8024 = vcmp.eq.f32.partialorder %v8020, inf
    %v8025 = vsel %vm8024, %v8020, %v8023
    %vm8026 = vcmp.eq.f32.partialorder %v8020, 0.0
    %v8027 = vand.u32 %v8020, 2147483648
    %v8028 = vsel %vm8026, %v8027, %v8025
    %v8029 = vrsqrt.pop %v8021
    %v8030 = vmul.f32 %v8021, %v8029
    %vm8031 = vcmp.eq.f32.partialorder %v8021, inf
    %v8032 = vsel %vm8031, %v8021, %v8030
    %vm8033 = vcmp.eq.f32.partialorder %v8021, 0.0
    %v8034 = vand.u32 %v8021, 2147483648
    %v8035 = vsel %vm8033, %v8034, %v8032
    %v8036 = vadd.f32 %v8028, 1e-06
    %v8037 = vadd.f32 %v8035, 1e-06
    %v8038 = vrcp.pop %v8036
    %v8039 = vrcp.pop %v8037
    %v8040 = vmul.f32 %v8036, %v8038
    %v8041 = vmul.f32 %v8037, %v8039
    %v8042 = vsub.f32 2.0, %v8040
    %v8043 = vsub.f32 2.0, %v8041
    %v8044 = vmul.f32 %v8038, %v8042
    %v8045 = vmul.f32 %v8039, %v8043
    %v8046 = vmul.f32 %v8010, %v8044
    %v8047 = vmul.f32 %v8011, %v8045
    %v8048 = vmul.f32 %v8000, %v8046
    %v8049 = vmul.f32 %v8000, %v8047
    %v8050 = vadd.f32 %v8048, %v8001
    %v8051 = vadd.f32 %v8049, %v8001
    %v8052 = vmax.f32 %v8050, 0.0
    %v8053 = vmax.f32 %v8051, 0.0
    %8054 = vst.msk [vmem:[#allocation17] sm:$0xff] %vm2444, %v8052
    %8055 = vst.msk [vmem:[#allocation17 + $0x8] sm:$0xff] %vm2444, %v8053
    // Predicated region
    $region78: #{tpu_custom_call.1} parent=1 // pred_check
      _
    $region79: #{tpu_custom_call.1} parent=1 // pred_check_branch
      %8057 = sbr.rel (0) target = $region81
    $region80: #{tpu_custom_call.1} parent=1 // pred_region
      %s8059 = ssub.s32 256, 256
      %8060 = vsyncadd [#allocation4], %s8059
      %s8061 = sshll.u32 [#allocation17], 4
      %s8062 = int_to_ptr.vmem [resolvable:$true] %s8061
      %8067 = dma.vmem_to_hbm [thread:$0]  %s8062, 256, %s10, [#allocation4], 128, 128, 8
    $region81: #{tpu_custom_call.1} parent=1 // pred_fallthru
      _
    // Predicated region
    $region82: #{tpu_custom_call.1} parent=1 // pred_check
      _
    $region83: #{tpu_custom_call.1} parent=1 // pred_check_branch
      %8069 = sbr.rel (0) target = $region85
    $region84: #{tpu_custom_call.1} parent=1 // pred_region
      %8070 = dma.done [#allocation4], 256
    $region85: #{tpu_custom_call.1} parent=1 // pred_fallthru
      _
    %8071 = vsyncpa [#allocation3], 1
    %8072 = vsyncpa [#allocation6], 1
    %8073 = vsyncpa [#allocation9], 1
    %8074 = vsyncpa [#allocation12], 1
    %8075 = vsyncpa [#allocation15], 1
    %8076 = vsyncpa [#allocation4], 1

</llo_original>
